<compile_context>
chip_gen: v7x
topology: tpu7x:2x2x1
jax: 0.10.0
libtpu: 0.0.40
codegen_flags: <defaults>
</compile_context>

<pallas_src>
import math

import jax
import jax.numpy as jnp
from jax import lax
from jax.experimental import pallas as pl
from jax.experimental.pallas import tpu as pltpu

EPS = 1e-5
LANE = 128                       # channel dims padded to the TPU lane width
MXU_DTYPE = jnp.bfloat16         # MXU operand / intermediate-activation dtype


def _round_up(x, m):
    return ((x + m - 1) // m) * m


# ---------------------------------------------------------------------------
# Kernel 1: BatchNorm training statistics (per-channel sum / sum of squares).
# Per-image partial sums, "parallel" grid (megacore-friendly); the tiny (N,1,C)
# reduction happens in the wrapper.
# ---------------------------------------------------------------------------
def _bn_stats_kernel(x_ref, sum_ref, sq_ref):
    x = x_ref[0].astype(jnp.float32)                       # (R, C)
    sum_ref[0] = jnp.sum(x, axis=0, keepdims=True)
    sq_ref[0] = jnp.sum(x * x, axis=0, keepdims=True)


def bn_stats(x3):
    """x3: (N, R, C) -> (sum, sumsq), each (1, C) float32."""
    n, r, c = x3.shape
    s, q = pl.pallas_call(
        _bn_stats_kernel,
        out_shape=(jax.ShapeDtypeStruct((n, 1, c), jnp.float32),
                   jax.ShapeDtypeStruct((n, 1, c), jnp.float32)),
        grid=(n,),
        in_specs=[pl.BlockSpec((1, r, c), lambda i: (i, 0, 0))],
        out_specs=(pl.BlockSpec((1, 1, c), lambda i: (i, 0, 0)),
                   pl.BlockSpec((1, 1, c), lambda i: (i, 0, 0))),
        compiler_params=pltpu.CompilerParams(
            dimension_semantics=("parallel",)),
    )(x3)
    return jnp.sum(s, axis=0), jnp.sum(q, axis=0)          # (1, C) each


def _bn_scale_shift(s, sq, count, gamma, beta):
    """Fold batch statistics into per-channel scale/shift (tiny (1, C) math)."""
    # TODO(synk): E[x^2]-E[x]^2 can cancel for very large batches; switch to a
    # shifted two-pass computation if |mean| >> std in real training use.
    mean = s / count
    var = jnp.maximum(sq / count - mean * mean, 0.0)       # biased variance (train mode)
    scale = gamma * lax.rsqrt(var + EPS)
    shift = beta - mean * scale
    return scale, shift


# ---------------------------------------------------------------------------
# Kernel 2: fused  relu(scale*x + shift)  ->  3x3 conv (stride=1, pad=1)  as a
# single im2col matmul per image.  The 1-pixel halo is synthesized in-kernel
# (input block is the UNPADDED image).  The bf16 (H*W, 9*C) patch is built one
# padded row at a time into a VMEM scratch (bounded live ranges, aligned stores).
# If the 1x1 projection shortcut is active, its weight is folded into extra
# output columns of w_ref so one matmul yields both results.  Optional residual
# add is fused before the store.
# ---------------------------------------------------------------------------
def _make_fused_conv_kernel(has_shortcut, has_residual, h, w):
    hp = h + 2

    def kernel(*refs):
        it = iter(refs)
        x_ref = next(it)                                   # (1, H, W, C)
        scale_ref = next(it)                               # (1, C) f32
        shift_ref = next(it)                               # (1, C) f32
        w_ref = next(it)                                   # (9C, Cout_total) bf16
        res_ref = next(it) if has_residual else None       # (1, H*W, Cout) bf16
        out_ref = next(it)                                 # (1, H*W, Cout)
        sc_ref = next(it) if has_shortcut else None        # (1, H*W, Cout)
        patch_ref = next(it)                               # VMEM (H*W, 9C) bf16

        c = x_ref.shape[3]
        cout = out_ref.shape[2]

        # hoisted broadcasts (JAX does not CSE broadcast_in_dim inside the loop)
        scale = jnp.broadcast_to(scale_ref[...], (w, c))
        shift = jnp.broadcast_to(shift_ref[...], (w, c))

        zero_seg = jnp.zeros((w, c), MXU_DTYPE)
        zero_col = jnp.zeros((1, c), MXU_DTYPE)

        # Build the im2col patch row-band by row-band.  Padded input row i
        # contributes (shifted by kw) to output rows r = i - kh for kh in 0..2.
        # Every (r, tap) region of the scratch is rewritten each grid step.
        for i in range(hp):
            if i == 0 or i == hp - 1:
                segs = (zero_seg, zero_seg, zero_seg)      # synthesized top/bottom halo
            else:
                xr = x_ref[0, i - 1].astype(jnp.float32)   # (W, C)
                nr = jnp.maximum(xr * scale + shift, 0.0).astype(MXU_DTYPE)
                prow = jnp.concatenate([zero_col, nr, zero_col], axis=0)   # (W+2, C)
                segs = tuple(prow[kw:kw + w, :] for kw in range(3))
            for kh in range(3):
                r = i - kh
                if 0 <= r < h:
                    for kw in range(3):
                        t = kh * 3 + kw
                        patch_ref[r * w:(r + 1) * w, t * c:(t + 1) * c] = segs[kw]

        # single MXU matmul, K = 9*C, bf16 operands, f32 accumulation
        acc = jnp.dot(patch_ref[...], w_ref[...],
                      preferred_element_type=jnp.float32)  # (H*W, Cout_total)

        out = acc[:, :cout]
        if has_residual:
            out = out + res_ref[0].astype(jnp.float32)
        out_ref[0] = out.astype(out_ref.dtype)

        if has_shortcut:
            # extra weight columns = 1x1 projection of the center tap (relu(bn(x)))
            sc_ref[0] = acc[:, cout:2 * cout].astype(sc_ref.dtype)

    return kernel


def fused_bn_conv3x3(x_nhwc, scale, shift, w9, *, has_shortcut=False,
                     residual=None, out_dtype=MXU_DTYPE):
    """x_nhwc: (N, H, W, C) unpadded pre-normalization input (f32 or bf16).
    w9: (9*C, Cout_total) bf16 (Cout_total = 2*Cout when has_shortcut).
    Returns out (N, H*W, Cout) [, shortcut (N, H*W, Cout)]."""
    n, h, w, c = x_nhwc.shape
    hw = h * w
    ktot, cout_total = w9.shape
    assert ktot == 9 * c
    cout = cout_total // 2 if has_shortcut else cout_total

    in_specs = [pl.BlockSpec((1, h, w, c), lambda i: (i, 0, 0, 0)),
                pl.BlockSpec((1, c), lambda i: (0, 0)),
                pl.BlockSpec((1, c), lambda i: (0, 0)),
                pl.BlockSpec((ktot, cout_total), lambda i: (0, 0))]
    args = [x_nhwc, scale, shift, w9]
    if residual is not None:
        in_specs.append(pl.BlockSpec((1, hw, cout), lambda i: (i, 0, 0)))
        args.append(residual)

    out_shape = [jax.ShapeDtypeStruct((n, hw, cout), out_dtype)]
    out_specs = [pl.BlockSpec((1, hw, cout), lambda i: (i, 0, 0))]
    if has_shortcut:
        out_shape.append(jax.ShapeDtypeStruct((n, hw, cout), MXU_DTYPE))
        out_specs.append(pl.BlockSpec((1, hw, cout), lambda i: (i, 0, 0)))

    kernel = _make_fused_conv_kernel(has_shortcut, residual is not None, h, w)
    # TODO(synk): for real ResNet spatial sizes (>=32x32, C>=128) add a grid axis
    # over H row-bands (with a 1-row halo via the index_map) to bound VMEM on v7x.
    outs = pl.pallas_call(
        kernel,
        out_shape=tuple(out_shape),
        grid=(n,),
        in_specs=in_specs,
        out_specs=tuple(out_specs),
        scratch_shapes=[pltpu.VMEM((hw, 9 * c), MXU_DTYPE)],
        compiler_params=pltpu.CompilerParams(
            dimension_semantics=("parallel",)),            # shards across v7x's 2 TCs
    )(*args)
    if has_shortcut:
        return outs[0], outs[1]
    return outs[0]


# ---------------------------------------------------------------------------
# Weight / parameter padding helpers (wrapper glue, one-time cost).
# Padded channels of gamma/beta/weights MUST stay zero so the padded lanes of
# every activation remain exactly zero end-to-end.
# ---------------------------------------------------------------------------
def _pad_conv3x3_weight(w_hwio, cp):
    """(3, 3, Cin, Cout) HWIO -> (9*Cp, Cp) bf16 with zero-padded channels."""
    kh, kw, ci, co = w_hwio.shape
    wpad = jnp.pad(w_hwio.astype(jnp.float32),
                   ((0, 0), (0, 0), (0, cp - ci), (0, cp - co)))
    return wpad.reshape(kh * kw * cp, cp).astype(MXU_DTYPE)


def _pad_matrix(wm, cp):
    ci, co = wm.shape
    return jnp.pad(wm.astype(jnp.float32),
                   ((0, cp - ci), (0, cp - co))).astype(MXU_DTYPE)


def _pad_vec(v, cp):
    return jnp.pad(v.astype(jnp.float32), (0, cp - v.shape[0])).reshape(1, cp)


def _fold_shortcut_weight(w9, wsc, cp):
    """Fold the 1x1 projection weight into extra output columns of the 3x3 weight:
    nonzero only in the center-tap (kh=1, kw=1) row block -> one combined matmul."""
    sc_cols = jnp.zeros_like(w9).at[4 * cp:5 * cp, :].set(wsc)
    return jnp.concatenate([w9, sc_cols], axis=1)          # (9*Cp, 2*Cp)


# ---------------------------------------------------------------------------
# PreActBlock forward (wrapper).
# ---------------------------------------------------------------------------
def preact_block(x_nchw, params, in_planes, planes, stride=1):
    # TODO(synk): stride > 1 (strided conv1 / strided 1x1 shortcut) not implemented.
    assert stride == 1, "only stride=1 implemented in the Pallas kernels"
    n, cin, h, w = x_nchw.shape
    assert cin == in_planes
    cp = _round_up(max(in_planes, planes), LANE)

    # Layout plumbing: NCHW -> NHWC, channel-pad to the lane width (zeros only).
    # No spatial halo in HBM — the conv kernel synthesizes it.
    x_nhwc = jnp.transpose(x_nchw, (0, 2, 3, 1)).astype(jnp.float32)
    x_c = jnp.pad(x_nhwc, ((0, 0), (0, 0), (0, 0), (0, cp - in_planes)))

    count = n * h * w

    # --- bn1 statistics (unpadded activation) -> folded scale/shift ----------
    s1, q1 = bn_stats(x_c.reshape(n, h * w, cp))
    scale1, shift1 = _bn_scale_shift(s1, q1, count,
                                     _pad_vec(params["bn1_gamma"], cp),
                                     _pad_vec(params["bn1_beta"], cp))

    # --- conv1 (+ fused 1x1 projection shortcut via folded weight columns) ---
    w1 = _pad_conv3x3_weight(params["conv1_w"], cp)
    use_projection = (stride != 1) or (in_planes != planes)
    if use_projection:
        wsc = _pad_matrix(params["shortcut_w"], cp)
        w1 = _fold_shortcut_weight(w1, wsc, cp)
        out1, shortcut = fused_bn_conv3x3(x_c, scale1, shift1, w1,
                                          has_shortcut=True)
    else:
        out1 = fused_bn_conv3x3(x_c, scale1, shift1, w1)
        shortcut = x_c.reshape(n, h * w, cp).astype(MXU_DTYPE)   # identity = x

    # --- bn2 statistics (out1 is bf16; accumulation in f32) -------------------
    # TODO(synk): on v5e/v6e these stats could be accumulated in conv1's epilogue
    # (saves one HBM read of out1); kept separate here to preserve 2-TC sharding.
    s2, q2 = bn_stats(out1)
    scale2, shift2 = _bn_scale_shift(s2, q2, count,
                                     _pad_vec(params["bn2_gamma"], cp),
                                     _pad_vec(params["bn2_beta"], cp))

    # --- conv2 (+ fused residual add), final output in f32 --------------------
    w2 = _pad_conv3x3_weight(params["conv2_w"], cp)
    out2 = fused_bn_conv3x3(out1.reshape(n, h, w, cp), scale2, shift2, w2,
                            residual=shortcut, out_dtype=jnp.float32)

    y = out2.reshape(n, h, w, cp)[..., :planes]            # drop lane padding
    return jnp.transpose(y, (0, 3, 1, 2))                  # NHWC -> NCHW


# ---------------------------------------------------------------------------
# Plain-JAX float32 reference (for correctness check).
# ---------------------------------------------------------------------------
def _ref_bn_relu(x, gamma, beta):
    mean = jnp.mean(x, axis=(0, 1, 2), keepdims=True)
    var = jnp.mean((x - mean) ** 2, axis=(0, 1, 2), keepdims=True)
    y = (x - mean) * lax.rsqrt(var + EPS) * gamma.reshape(1, 1, 1, -1) \
        + beta.reshape(1, 1, 1, -1)
    return jnp.maximum(y, 0.0)


def _ref_conv(x, wk, pad):
    return lax.conv_general_dilated(
        x, wk, window_strides=(1, 1), padding=pad,
        dimension_numbers=("NHWC", "HWIO", "NHWC"))


def preact_block_reference(x_nchw, params, in_planes, planes):
    x = jnp.transpose(x_nchw, (0, 2, 3, 1)).astype(jnp.float32)
    out = _ref_bn_relu(x, params["bn1_gamma"], params["bn1_beta"])
    if in_planes != planes:
        w_sc = params["shortcut_w"].reshape(1, 1, in_planes, planes)
        shortcut = _ref_conv(out, w_sc, [(0, 0), (0, 0)])
    else:
        shortcut = x
    out = _ref_conv(out, params["conv1_w"], [(1, 1), (1, 1)])
    out = _ref_bn_relu(out, params["bn2_gamma"], params["bn2_beta"])
    out = _ref_conv(out, params["conv2_w"], [(1, 1), (1, 1)]) + shortcut
    return jnp.transpose(out, (0, 3, 1, 2))


# ---------------------------------------------------------------------------
# Deterministic parameter init (shapes from the module's __init__; HWIO conv weights).
# ---------------------------------------------------------------------------
def init_params(key, in_planes, planes):
    k1, k2, k3, k4, k5, k6, k7 = jax.random.split(key, 7)
    s1 = 1.0 / math.sqrt(9 * in_planes)
    s2 = 1.0 / math.sqrt(9 * planes)
    s3 = 1.0 / math.sqrt(in_planes)
    return {
        "bn1_gamma": 1.0 + 0.1 * jax.random.normal(k1, (in_planes,), jnp.float32),
        "bn1_beta": 0.1 * jax.random.normal(k2, (in_planes,), jnp.float32),
        "conv1_w": s1 * jax.random.normal(k3, (3, 3, in_planes, planes), jnp.float32),
        "bn2_gamma": 1.0 + 0.1 * jax.random.normal(k4, (planes,), jnp.float32),
        "bn2_beta": 0.1 * jax.random.normal(k5, (planes,), jnp.float32),
        "conv2_w": s2 * jax.random.normal(k6, (3, 3, planes, planes), jnp.float32),
        "shortcut_w": s3 * jax.random.normal(k7, (in_planes, planes), jnp.float32),
    }


if __name__ == "__main__":
    N, H, W = 2, 16, 16
    key = jax.random.PRNGKey(0)
    block_fn = jax.jit(preact_block, static_argnums=(2, 3, 4))

    # Config 1: in_planes != planes -> 1x1 projection shortcut (folded into conv1's matmul).
    in_planes, planes = 4, 8
    kx, kp, key = jax.random.split(key, 3)
    x = jax.random.normal(kx, (N, in_planes, H, W), jnp.float32)   # NCHW like PyTorch
    params = init_params(kp, in_planes, planes)
    y = jax.block_until_ready(block_fn(x, params, in_planes, planes, 1))
    assert y.shape == (N, planes, H, W), y.shape
    y_ref = preact_block_reference(x, params, in_planes, planes)
    tol = 3e-2 * max(1.0, float(jnp.max(jnp.abs(y_ref))))   # bf16 operands/intermediates, f32 accum
    err = float(jnp.max(jnp.abs(y - y_ref)))
    assert err < tol, f"projection config mismatch: max abs err {err} (tol {tol})"

    # Config 2: in_planes == planes -> identity shortcut.
    in_planes2 = planes2 = 4
    kx2, kp2, key = jax.random.split(key, 3)
    x2 = jax.random.normal(kx2, (N, in_planes2, H, W), jnp.float32)
    params2 = init_params(kp2, in_planes2, planes2)
    y2 = jax.block_until_ready(block_fn(x2, params2, in_planes2, planes2, 1))
    assert y2.shape == (N, planes2, H, W), y2.shape
    y2_ref = preact_block_reference(x2, params2, in_planes2, planes2)
    tol2 = 3e-2 * max(1.0, float(jnp.max(jnp.abs(y2_ref))))
    err2 = float(jnp.max(jnp.abs(y2 - y2_ref)))
    assert err2 < tol2, f"identity config mismatch: max abs err {err2} (tol {tol2})"

    print("KERNEL_OK")
</pallas_src>

<mosaic_0001>
module attributes {stable_mosaic.version = 11 : i64} {
  func.func @_bn_stats_kernel(%arg0: i32, %arg1: memref<1x256x128xf32, #tpu.memory_space<vmem>>, %arg2: memref<1x1x128xf32, #tpu.memory_space<vmem>>, %arg3: memref<1x1x128xf32, #tpu.memory_space<vmem>>) attributes {dimension_semantics = [#tpu.dimension_semantics<parallel>], iteration_bounds = array<i64: 2>, scalar_prefetch = 0 : i64, scratch_operands = 0 : i64, tpu.core_type = #tpu.core_type<tc>, window_params = [{transform_indices = @transform_0, window_bounds = array<i64: 1, 256, 128>}, {transform_indices = @transform_1, window_bounds = array<i64: 1, 1, 128>}, {transform_indices = @transform_2, window_bounds = array<i64: 1, 1, 128>}]} {
    %c0 = arith.constant 0 : index
    %c0_0 = arith.constant 0 : index
    %c0_1 = arith.constant 0 : index
    %0 = vector.load %arg1[%c0, %c0_0, %c0_1] : memref<1x256x128xf32, #tpu.memory_space<vmem>>, vector<1x256x128xf32>
    %1 = vector.shape_cast %0 : vector<1x256x128xf32> to vector<256x128xf32>
    %cst = arith.constant dense<0.000000e+00> : vector<128xf32>
    %2 = vector.multi_reduction <add>, %1, %cst [0] : vector<256x128xf32> to vector<128xf32>
    %3 = vector.shape_cast %2 : vector<128xf32> to vector<1x128xf32>
    %c0_2 = arith.constant 0 : index
    %c0_3 = arith.constant 0 : index
    %c0_4 = arith.constant 0 : index
    %4 = vector.load %arg2[%c0_2, %c0_3, %c0_4] : memref<1x1x128xf32, #tpu.memory_space<vmem>>, vector<1x1x128xf32>
    %5 = vector.shape_cast %4 : vector<1x1x128xf32> to vector<1x128xf32>
    %6 = vector.shape_cast %3 : vector<1x128xf32> to vector<1x1x128xf32>
    tpu.vector_store %arg2[%c0_2, %c0_3, %c0_4], %6 {strides = array<i32>} : memref<1x1x128xf32, #tpu.memory_space<vmem>>, vector<1x1x128xf32>,
    %7 = arith.mulf %1, %1 : vector<256x128xf32>
    %cst_5 = arith.constant dense<0.000000e+00> : vector<128xf32>
    %8 = vector.multi_reduction <add>, %7, %cst_5 [0] : vector<256x128xf32> to vector<128xf32>
    %9 = vector.shape_cast %8 : vector<128xf32> to vector<1x128xf32>
    %c0_6 = arith.constant 0 : index
    %c0_7 = arith.constant 0 : index
    %c0_8 = arith.constant 0 : index
    %10 = vector.load %arg3[%c0_6, %c0_7, %c0_8] : memref<1x1x128xf32, #tpu.memory_space<vmem>>, vector<1x1x128xf32>
    %11 = vector.shape_cast %10 : vector<1x1x128xf32> to vector<1x128xf32>
    %12 = vector.shape_cast %9 : vector<1x128xf32> to vector<1x1x128xf32>
    tpu.vector_store %arg3[%c0_6, %c0_7, %c0_8], %12 {strides = array<i32>} : memref<1x1x128xf32, #tpu.memory_space<vmem>>, vector<1x1x128xf32>,
    return
  }
  func.func @transform_0(%arg0: i32) -> (i32, i32, i32) {
    %c0_i32 = arith.constant 0 : i32
    %c0_i32_0 = arith.constant 0 : i32
    %c0_i32_1 = arith.constant 0 : i32
    return %arg0, %c0_i32, %c0_i32_0 : i32, i32, i32
  }
  func.func @transform_1(%arg0: i32) -> (i32, i32, i32) {
    %c0_i32 = arith.constant 0 : i32
    %c0_i32_0 = arith.constant 0 : i32
    %c0_i32_1 = arith.constant 0 : i32
    return %arg0, %c0_i32, %c0_i32_0 : i32, i32, i32
  }
  func.func @transform_2(%arg0: i32) -> (i32, i32, i32) {
    %c0_i32 = arith.constant 0 : i32
    %c0_i32_0 = arith.constant 0 : i32
    %c0_i32_1 = arith.constant 0 : i32
    return %arg0, %c0_i32, %c0_i32_0 : i32, i32, i32
  }
}

module attributes {stable_mosaic.version = 11 : i64} {
  func.func @_bn_stats_kernel(%arg0: i32, %arg1: memref<1x256x128xbf16, #tpu.memory_space<vmem>>, %arg2: memref<1x1x128xf32, #tpu.memory_space<vmem>>, %arg3: memref<1x1x128xf32, #tpu.memory_space<vmem>>) attributes {dimension_semantics = [#tpu.dimension_semantics<parallel>], iteration_bounds = array<i64: 2>, scalar_prefetch = 0 : i64, scratch_operands = 0 : i64, tpu.core_type = #tpu.core_type<tc>, window_params = [{transform_indices = @transform_0, window_bounds = array<i64: 1, 256, 128>}, {transform_indices = @transform_1, window_bounds = array<i64: 1, 1, 128>}, {transform_indices = @transform_2, window_bounds = array<i64: 1, 1, 128>}]} {
    %c0 = arith.constant 0 : index
    %c0_0 = arith.constant 0 : index
    %c0_1 = arith.constant 0 : index
    %0 = vector.load %arg1[%c0, %c0_0, %c0_1] : memref<1x256x128xbf16, #tpu.memory_space<vmem>>, vector<1x256x128xbf16>
    %1 = vector.shape_cast %0 : vector<1x256x128xbf16> to vector<256x128xbf16>
    %2 = arith.extf %1 : vector<256x128xbf16> to vector<256x128xf32>
    %cst = arith.constant dense<0.000000e+00> : vector<128xf32>
    %3 = vector.multi_reduction <add>, %2, %cst [0] : vector<256x128xf32> to vector<128xf32>
    %4 = vector.shape_cast %3 : vector<128xf32> to vector<1x128xf32>
    %c0_2 = arith.constant 0 : index
    %c0_3 = arith.constant 0 : index
    %c0_4 = arith.constant 0 : index
    %5 = vector.load %arg2[%c0_2, %c0_3, %c0_4] : memref<1x1x128xf32, #tpu.memory_space<vmem>>, vector<1x1x128xf32>
    %6 = vector.shape_cast %5 : vector<1x1x128xf32> to vector<1x128xf32>
    %7 = vector.shape_cast %4 : vector<1x128xf32> to vector<1x1x128xf32>
    tpu.vector_store %arg2[%c0_2, %c0_3, %c0_4], %7 {strides = array<i32>} : memref<1x1x128xf32, #tpu.memory_space<vmem>>, vector<1x1x128xf32>,
    %8 = arith.mulf %2, %2 : vector<256x128xf32>
    %cst_5 = arith.constant dense<0.000000e+00> : vector<128xf32>
    %9 = vector.multi_reduction <add>, %8, %cst_5 [0] : vector<256x128xf32> to vector<128xf32>
    %10 = vector.shape_cast %9 : vector<128xf32> to vector<1x128xf32>
    %c0_6 = arith.constant 0 : index
    %c0_7 = arith.constant 0 : index
    %c0_8 = arith.constant 0 : index
    %11 = vector.load %arg3[%c0_6, %c0_7, %c0_8] : memref<1x1x128xf32, #tpu.memory_space<vmem>>, vector<1x1x128xf32>
    %12 = vector.shape_cast %11 : vector<1x1x128xf32> to vector<1x128xf32>
    %13 = vector.shape_cast %10 : vector<1x128xf32> to vector<1x1x128xf32>
    tpu.vector_store %arg3[%c0_6, %c0_7, %c0_8], %13 {strides = array<i32>} : memref<1x1x128xf32, #tpu.memory_space<vmem>>, vector<1x1x128xf32>,
    return
  }
  func.func @transform_0(%arg0: i32) -> (i32, i32, i32) {
    %c0_i32 = arith.constant 0 : i32
    %c0_i32_0 = arith.constant 0 : i32
    %c0_i32_1 = arith.constant 0 : i32
    return %arg0, %c0_i32, %c0_i32_0 : i32, i32, i32
  }
  func.func @transform_1(%arg0: i32) -> (i32, i32, i32) {
    %c0_i32 = arith.constant 0 : i32
    %c0_i32_0 = arith.constant 0 : i32
    %c0_i32_1 = arith.constant 0 : i32
    return %arg0, %c0_i32, %c0_i32_0 : i32, i32, i32
  }
  func.func @transform_2(%arg0: i32) -> (i32, i32, i32) {
    %c0_i32 = arith.constant 0 : i32
    %c0_i32_0 = arith.constant 0 : i32
    %c0_i32_1 = arith.constant 0 : i32
    return %arg0, %c0_i32, %c0_i32_0 : i32, i32, i32
  }
}

module attributes {stable_mosaic.version = 11 : i64} {
  func.func @kernel(%arg0: i32, %arg1: memref<1x16x16x128xf32, #tpu.memory_space<vmem>>, %arg2: memref<1x128xf32, #tpu.memory_space<vmem>>, %arg3: memref<1x128xf32, #tpu.memory_space<vmem>>, %arg4: memref<1152x256xbf16, #tpu.memory_space<vmem>>, %arg5: memref<1x256x128xbf16, #tpu.memory_space<vmem>>, %arg6: memref<1x256x128xbf16, #tpu.memory_space<vmem>>, %arg7: memref<256x1152xbf16, #tpu.memory_space<vmem>>) attributes {dimension_semantics = [#tpu.dimension_semantics<parallel>], iteration_bounds = array<i64: 2>, scalar_prefetch = 0 : i64, scratch_operands = 1 : i64, tpu.core_type = #tpu.core_type<tc>, window_params = [{transform_indices = @transform_0, window_bounds = array<i64: 1, 16, 16, 128>}, {pipeline_mode = #tpu.pipeline_mode<synchronous>, transform_indices = @transform_1, window_bounds = array<i64: 1, 128>}, {pipeline_mode = #tpu.pipeline_mode<synchronous>, transform_indices = @transform_2, window_bounds = array<i64: 1, 128>}, {pipeline_mode = #tpu.pipeline_mode<synchronous>, transform_indices = @transform_3, window_bounds = array<i64: 1152, 256>}, {transform_indices = @transform_4, window_bounds = array<i64: 1, 256, 128>}, {transform_indices = @transform_5, window_bounds = array<i64: 1, 256, 128>}]} {
    %c0 = arith.constant 0 : index
    %c0_0 = arith.constant 0 : index
    %0 = vector.load %arg2[%c0, %c0_0] : memref<1x128xf32, #tpu.memory_space<vmem>>, vector<1x128xf32>
    %1 = vector.shape_cast %0 : vector<1x128xf32> to vector<1x128xf32>
    %2 = vector.broadcast %1 : vector<1x128xf32> to vector<16x128xf32>
    %c0_1 = arith.constant 0 : index
    %c0_2 = arith.constant 0 : index
    %3 = vector.load %arg3[%c0_1, %c0_2] : memref<1x128xf32, #tpu.memory_space<vmem>>, vector<1x128xf32>
    %4 = vector.shape_cast %3 : vector<1x128xf32> to vector<1x128xf32>
    %5 = vector.broadcast %4 : vector<1x128xf32> to vector<16x128xf32>
    %cst = arith.constant 0.000000e+00 : bf16
    %6 = vector.broadcast %cst : bf16 to vector<16x128xbf16>
    %cst_3 = arith.constant 0.000000e+00 : bf16
    %7 = vector.broadcast %cst_3 : bf16 to vector<1x128xbf16>
    %c0_4 = arith.constant 0 : index
    %c0_5 = arith.constant 0 : index
    %8 = vector.load %arg7[%c0_4, %c0_5] : memref<256x1152xbf16, #tpu.memory_space<vmem>>, vector<16x128xbf16>
    tpu.vector_store %arg7[%c0_4, %c0_5], %6 {strides = array<i32>} : memref<256x1152xbf16, #tpu.memory_space<vmem>>, vector<16x128xbf16>,
    %c0_6 = arith.constant 0 : index
    %c128 = arith.constant 128 : index
    %9 = vector.load %arg7[%c0_6, %c128] : memref<256x1152xbf16, #tpu.memory_space<vmem>>, vector<16x128xbf16>
    tpu.vector_store %arg7[%c0_6, %c128], %6 {strides = array<i32>} : memref<256x1152xbf16, #tpu.memory_space<vmem>>, vector<16x128xbf16>,
    %c0_7 = arith.constant 0 : index
    %c256 = arith.constant 256 : index
    %10 = vector.load %arg7[%c0_7, %c256] : memref<256x1152xbf16, #tpu.memory_space<vmem>>, vector<16x128xbf16>
    tpu.vector_store %arg7[%c0_7, %c256], %6 {strides = array<i32>} : memref<256x1152xbf16, #tpu.memory_space<vmem>>, vector<16x128xbf16>,
    %c0_8 = arith.constant 0 : index
    %c0_9 = arith.constant 0 : index
    %c0_10 = arith.constant 0 : index
    %c0_11 = arith.constant 0 : index
    %11 = vector.load %arg1[%c0_8, %c0_9, %c0_10, %c0_11] : memref<1x16x16x128xf32, #tpu.memory_space<vmem>>, vector<1x1x16x128xf32>
    %12 = vector.shape_cast %11 : vector<1x1x16x128xf32> to vector<16x128xf32>
    %13 = arith.mulf %12, %2 : vector<16x128xf32>
    %14 = arith.addf %13, %5 : vector<16x128xf32>
    %cst_12 = arith.constant 0.000000e+00 : f32
    %15 = vector.broadcast %cst_12 : f32 to vector<16x128xf32>
    %16 = arith.maximumf %14, %15 : vector<16x128xf32>
    %17 = arith.truncf %16 : vector<16x128xf32> to vector<16x128xbf16>
    %18 = tpu.concatenate %7, %17, %7 in 0 : vector<1x128xbf16>, vector<16x128xbf16>, vector<1x128xbf16> -> vector<18x128xbf16>
    %19 = vector.extract_strided_slice %18 {offsets = [0, 0], sizes = [16, 128], strides = [1, 1]} : vector<18x128xbf16> to vector<16x128xbf16>
    %20 = vector.extract_strided_slice %18 {offsets = [1, 0], sizes = [16, 128], strides = [1, 1]} : vector<18x128xbf16> to vector<16x128xbf16>
    %21 = vector.extract_strided_slice %18 {offsets = [2, 0], sizes = [16, 128], strides = [1, 1]} : vector<18x128xbf16> to vector<16x128xbf16>
    %c16 = arith.constant 16 : index
    %c0_13 = arith.constant 0 : index
    %22 = vector.load %arg7[%c16, %c0_13] : memref<256x1152xbf16, #tpu.memory_space<vmem>>, vector<16x128xbf16>
    tpu.vector_store %arg7[%c16, %c0_13], %19 {strides = array<i32>} : memref<256x1152xbf16, #tpu.memory_space<vmem>>, vector<16x128xbf16>,
    %c16_14 = arith.constant 16 : index
    %c128_15 = arith.constant 128 : index
    %23 = vector.load %arg7[%c16_14, %c128_15] : memref<256x1152xbf16, #tpu.memory_space<vmem>>, vector<16x128xbf16>
    tpu.vector_store %arg7[%c16_14, %c128_15], %20 {strides = array<i32>} : memref<256x1152xbf16, #tpu.memory_space<vmem>>, vector<16x128xbf16>,
    %c16_16 = arith.constant 16 : index
    %c256_17 = arith.constant 256 : index
    %24 = vector.load %arg7[%c16_16, %c256_17] : memref<256x1152xbf16, #tpu.memory_space<vmem>>, vector<16x128xbf16>
    tpu.vector_store %arg7[%c16_16, %c256_17], %21 {strides = array<i32>} : memref<256x1152xbf16, #tpu.memory_space<vmem>>, vector<16x128xbf16>,
    %c0_18 = arith.constant 0 : index
    %c384 = arith.constant 384 : index
    %25 = vector.load %arg7[%c0_18, %c384] : memref<256x1152xbf16, #tpu.memory_space<vmem>>, vector<16x128xbf16>
    tpu.vector_store %arg7[%c0_18, %c384], %19 {strides = array<i32>} : memref<256x1152xbf16, #tpu.memory_space<vmem>>, vector<16x128xbf16>,
    %c0_19 = arith.constant 0 : index
    %c512 = arith.constant 512 : index
    %26 = vector.load %arg7[%c0_19, %c512] : memref<256x1152xbf16, #tpu.memory_space<vmem>>, vector<16x128xbf16>
    tpu.vector_store %arg7[%c0_19, %c512], %20 {strides = array<i32>} : memref<256x1152xbf16, #tpu.memory_space<vmem>>, vector<16x128xbf16>,
    %c0_20 = arith.constant 0 : index
    %c640 = arith.constant 640 : index
    %27 = vector.load %arg7[%c0_20, %c640] : memref<256x1152xbf16, #tpu.memory_space<vmem>>, vector<16x128xbf16>
    tpu.vector_store %arg7[%c0_20, %c640], %21 {strides = array<i32>} : memref<256x1152xbf16, #tpu.memory_space<vmem>>, vector<16x128xbf16>,
    %c0_21 = arith.constant 0 : index
    %c1 = arith.constant 1 : index
    %c0_22 = arith.constant 0 : index
    %c0_23 = arith.constant 0 : index
    %28 = vector.load %arg1[%c0_21, %c1, %c0_22, %c0_23] : memref<1x16x16x128xf32, #tpu.memory_space<vmem>>, vector<1x1x16x128xf32>
    %29 = vector.shape_cast %28 : vector<1x1x16x128xf32> to vector<16x128xf32>
    %30 = arith.mulf %29, %2 : vector<16x128xf32>
    %31 = arith.addf %30, %5 : vector<16x128xf32>
    %cst_24 = arith.constant 0.000000e+00 : f32
    %32 = vector.broadcast %cst_24 : f32 to vector<16x128xf32>
    %33 = arith.maximumf %31, %32 : vector<16x128xf32>
    %34 = arith.truncf %33 : vector<16x128xf32> to vector<16x128xbf16>
    %35 = tpu.concatenate %7, %34, %7 in 0 : vector<1x128xbf16>, vector<16x128xbf16>, vector<1x128xbf16> -> vector<18x128xbf16>
    %36 = vector.extract_strided_slice %35 {offsets = [0, 0], sizes = [16, 128], strides = [1, 1]} : vector<18x128xbf16> to vector<16x128xbf16>
    %37 = vector.extract_strided_slice %35 {offsets = [1, 0], sizes = [16, 128], strides = [1, 1]} : vector<18x128xbf16> to vector<16x128xbf16>
    %38 = vector.extract_strided_slice %35 {offsets = [2, 0], sizes = [16, 128], strides = [1, 1]} : vector<18x128xbf16> to vector<16x128xbf16>
    %c32 = arith.constant 32 : index
    %c0_25 = arith.constant 0 : index
    %39 = vector.load %arg7[%c32, %c0_25] : memref<256x1152xbf16, #tpu.memory_space<vmem>>, vector<16x128xbf16>
    tpu.vector_store %arg7[%c32, %c0_25], %36 {strides = array<i32>} : memref<256x1152xbf16, #tpu.memory_space<vmem>>, vector<16x128xbf16>,
    %c32_26 = arith.constant 32 : index
    %c128_27 = arith.constant 128 : index
    %40 = vector.load %arg7[%c32_26, %c128_27] : memref<256x1152xbf16, #tpu.memory_space<vmem>>, vector<16x128xbf16>
    tpu.vector_store %arg7[%c32_26, %c128_27], %37 {strides = array<i32>} : memref<256x1152xbf16, #tpu.memory_space<vmem>>, vector<16x128xbf16>,
    %c32_28 = arith.constant 32 : index
    %c256_29 = arith.constant 256 : index
    %41 = vector.load %arg7[%c32_28, %c256_29] : memref<256x1152xbf16, #tpu.memory_space<vmem>>, vector<16x128xbf16>
    tpu.vector_store %arg7[%c32_28, %c256_29], %38 {strides = array<i32>} : memref<256x1152xbf16, #tpu.memory_space<vmem>>, vector<16x128xbf16>,
    %c16_30 = arith.constant 16 : index
    %c384_31 = arith.constant 384 : index
    %42 = vector.load %arg7[%c16_30, %c384_31] : memref<256x1152xbf16, #tpu.memory_space<vmem>>, vector<16x128xbf16>
    tpu.vector_store %arg7[%c16_30, %c384_31], %36 {strides = array<i32>} : memref<256x1152xbf16, #tpu.memory_space<vmem>>, vector<16x128xbf16>,
    %c16_32 = arith.constant 16 : index
    %c512_33 = arith.constant 512 : index
    %43 = vector.load %arg7[%c16_32, %c512_33] : memref<256x1152xbf16, #tpu.memory_space<vmem>>, vector<16x128xbf16>
    tpu.vector_store %arg7[%c16_32, %c512_33], %37 {strides = array<i32>} : memref<256x1152xbf16, #tpu.memory_space<vmem>>, vector<16x128xbf16>,
    %c16_34 = arith.constant 16 : index
    %c640_35 = arith.constant 640 : index
    %44 = vector.load %arg7[%c16_34, %c640_35] : memref<256x1152xbf16, #tpu.memory_space<vmem>>, vector<16x128xbf16>
    tpu.vector_store %arg7[%c16_34, %c640_35], %38 {strides = array<i32>} : memref<256x1152xbf16, #tpu.memory_space<vmem>>, vector<16x128xbf16>,
    %c0_36 = arith.constant 0 : index
    %c768 = arith.constant 768 : index
    %45 = vector.load %arg7[%c0_36, %c768] : memref<256x1152xbf16, #tpu.memory_space<vmem>>, vector<16x128xbf16>
    tpu.vector_store %arg7[%c0_36, %c768], %36 {strides = array<i32>} : memref<256x1152xbf16, #tpu.memory_space<vmem>>, vector<16x128xbf16>,
    %c0_37 = arith.constant 0 : index
    %c896 = arith.constant 896 : index
    %46 = vector.load %arg7[%c0_37, %c896] : memref<256x1152xbf16, #tpu.memory_space<vmem>>, vector<16x128xbf16>
    tpu.vector_store %arg7[%c0_37, %c896], %37 {strides = array<i32>} : memref<256x1152xbf16, #tpu.memory_space<vmem>>, vector<16x128xbf16>,
    %c0_38 = arith.constant 0 : index
    %c1024 = arith.constant 1024 : index
    %47 = vector.load %arg7[%c0_38, %c1024] : memref<256x1152xbf16, #tpu.memory_space<vmem>>, vector<16x128xbf16>
    tpu.vector_store %arg7[%c0_38, %c1024], %38 {strides = array<i32>} : memref<256x1152xbf16, #tpu.memory_space<vmem>>, vector<16x128xbf16>,
    %c0_39 = arith.constant 0 : index
    %c2 = arith.constant 2 : index
    %c0_40 = arith.constant 0 : index
    %c0_41 = arith.constant 0 : index
    %48 = vector.load %arg1[%c0_39, %c2, %c0_40, %c0_41] : memref<1x16x16x128xf32, #tpu.memory_space<vmem>>, vector<1x1x16x128xf32>
    %49 = vector.shape_cast %48 : vector<1x1x16x128xf32> to vector<16x128xf32>
    %50 = arith.mulf %49, %2 : vector<16x128xf32>
    %51 = arith.addf %50, %5 : vector<16x128xf32>
    %cst_42 = arith.constant 0.000000e+00 : f32
    %52 = vector.broadcast %cst_42 : f32 to vector<16x128xf32>
    %53 = arith.maximumf %51, %52 : vector<16x128xf32>
    %54 = arith.truncf %53 : vector<16x128xf32> to vector<16x128xbf16>
    %55 = tpu.concatenate %7, %54, %7 in 0 : vector<1x128xbf16>, vector<16x128xbf16>, vector<1x128xbf16> -> vector<18x128xbf16>
    %56 = vector.extract_strided_slice %55 {offsets = [0, 0], sizes = [16, 128], strides = [1, 1]} : vector<18x128xbf16> to vector<16x128xbf16>
    %57 = vector.extract_strided_slice %55 {offsets = [1, 0], sizes = [16, 128], strides = [1, 1]} : vector<18x128xbf16> to vector<16x128xbf16>
    %58 = vector.extract_strided_slice %55 {offsets = [2, 0], sizes = [16, 128], strides = [1, 1]} : vector<18x128xbf16> to vector<16x128xbf16>
    %c48 = arith.constant 48 : index
    %c0_43 = arith.constant 0 : index
    %59 = vector.load %arg7[%c48, %c0_43] : memref<256x1152xbf16, #tpu.memory_space<vmem>>, vector<16x128xbf16>
    tpu.vector_store %arg7[%c48, %c0_43], %56 {strides = array<i32>} : memref<256x1152xbf16, #tpu.memory_space<vmem>>, vector<16x128xbf16>,
    %c48_44 = arith.constant 48 : index
    %c128_45 = arith.constant 128 : index
    %60 = vector.load %arg7[%c48_44, %c128_45] : memref<256x1152xbf16, #tpu.memory_space<vmem>>, vector<16x128xbf16>
    tpu.vector_store %arg7[%c48_44, %c128_45], %57 {strides = array<i32>} : memref<256x1152xbf16, #tpu.memory_space<vmem>>, vector<16x128xbf16>,
    %c48_46 = arith.constant 48 : index
    %c256_47 = arith.constant 256 : index
    %61 = vector.load %arg7[%c48_46, %c256_47] : memref<256x1152xbf16, #tpu.memory_space<vmem>>, vector<16x128xbf16>
    tpu.vector_store %arg7[%c48_46, %c256_47], %58 {strides = array<i32>} : memref<256x1152xbf16, #tpu.memory_space<vmem>>, vector<16x128xbf16>,
    %c32_48 = arith.constant 32 : index
    %c384_49 = arith.constant 384 : index
    %62 = vector.load %arg7[%c32_48, %c384_49] : memref<256x1152xbf16, #tpu.memory_space<vmem>>, vector<16x128xbf16>
    tpu.vector_store %arg7[%c32_48, %c384_49], %56 {strides = array<i32>} : memref<256x1152xbf16, #tpu.memory_space<vmem>>, vector<16x128xbf16>,
    %c32_50 = arith.constant 32 : index
    %c512_51 = arith.constant 512 : index
    %63 = vector.load %arg7[%c32_50, %c512_51] : memref<256x1152xbf16, #tpu.memory_space<vmem>>, vector<16x128xbf16>
    tpu.vector_store %arg7[%c32_50, %c512_51], %57 {strides = array<i32>} : memref<256x1152xbf16, #tpu.memory_space<vmem>>, vector<16x128xbf16>,
    %c32_52 = arith.constant 32 : index
    %c640_53 = arith.constant 640 : index
    %64 = vector.load %arg7[%c32_52, %c640_53] : memref<256x1152xbf16, #tpu.memory_space<vmem>>, vector<16x128xbf16>
    tpu.vector_store %arg7[%c32_52, %c640_53], %58 {strides = array<i32>} : memref<256x1152xbf16, #tpu.memory_space<vmem>>, vector<16x128xbf16>,
    %c16_54 = arith.constant 16 : index
    %c768_55 = arith.constant 768 : index
    %65 = vector.load %arg7[%c16_54, %c768_55] : memref<256x1152xbf16, #tpu.memory_space<vmem>>, vector<16x128xbf16>
    tpu.vector_store %arg7[%c16_54, %c768_55], %56 {strides = array<i32>} : memref<256x1152xbf16, #tpu.memory_space<vmem>>, vector<16x128xbf16>,
    %c16_56 = arith.constant 16 : index
    %c896_57 = arith.constant 896 : index
    %66 = vector.load %arg7[%c16_56, %c896_57] : memref<256x1152xbf16, #tpu.memory_space<vmem>>, vector<16x128xbf16>
    tpu.vector_store %arg7[%c16_56, %c896_57], %57 {strides = array<i32>} : memref<256x1152xbf16, #tpu.memory_space<vmem>>, vector<16x128xbf16>,
    %c16_58 = arith.constant 16 : index
    %c1024_59 = arith.constant 1024 : index
    %67 = vector.load %arg7[%c16_58, %c1024_59] : memref<256x1152xbf16, #tpu.memory_space<vmem>>, vector<16x128xbf16>
    tpu.vector_store %arg7[%c16_58, %c1024_59], %58 {strides = array<i32>} : memref<256x1152xbf16, #tpu.memory_space<vmem>>, vector<16x128xbf16>,
    %c0_60 = arith.constant 0 : index
    %c3 = arith.constant 3 : index
    %c0_61 = arith.constant 0 : index
    %c0_62 = arith.constant 0 : index
    %68 = vector.load %arg1[%c0_60, %c3, %c0_61, %c0_62] : memref<1x16x16x128xf32, #tpu.memory_space<vmem>>, vector<1x1x16x128xf32>
    %69 = vector.shape_cast %68 : vector<1x1x16x128xf32> to vector<16x128xf32>
    %70 = arith.mulf %69, %2 : vector<16x128xf32>
    %71 = arith.addf %70, %5 : vector<16x128xf32>
    %cst_63 = arith.constant 0.000000e+00 : f32
    %72 = vector.broadcast %cst_63 : f32 to vector<16x128xf32>
    %73 = arith.maximumf %71, %72 : vector<16x128xf32>
    %74 = arith.truncf %73 : vector<16x128xf32> to vector<16x128xbf16>
    %75 = tpu.concatenate %7, %74, %7 in 0 : vector<1x128xbf16>, vector<16x128xbf16>, vector<1x128xbf16> -> vector<18x128xbf16>
    %76 = vector.extract_strided_slice %75 {offsets = [0, 0], sizes = [16, 128], strides = [1, 1]} : vector<18x128xbf16> to vector<16x128xbf16>
    %77 = vector.extract_strided_slice %75 {offsets = [1, 0], sizes = [16, 128], strides = [1, 1]} : vector<18x128xbf16> to vector<16x128xbf16>
    %78 = vector.extract_strided_slice %75 {offsets = [2, 0], sizes = [16, 128], strides = [1, 1]} : vector<18x128xbf16> to vector<16x128xbf16>
    %c64 = arith.constant 64 : index
    %c0_64 = arith.constant 0 : index
    %79 = vector.load %arg7[%c64, %c0_64] : memref<256x1152xbf16, #tpu.memory_space<vmem>>, vector<16x128xbf16>
    tpu.vector_store %arg7[%c64, %c0_64], %76 {strides = array<i32>} : memref<256x1152xbf16, #tpu.memory_space<vmem>>, vector<16x128xbf16>,
    %c64_65 = arith.constant 64 : index
    %c128_66 = arith.constant 128 : index
    %80 = vector.load %arg7[%c64_65, %c128_66] : memref<256x1152xbf16, #tpu.memory_space<vmem>>, vector<16x128xbf16>
    tpu.vector_store %arg7[%c64_65, %c128_66], %77 {strides = array<i32>} : memref<256x1152xbf16, #tpu.memory_space<vmem>>, vector<16x128xbf16>,
    %c64_67 = arith.constant 64 : index
    %c256_68 = arith.constant 256 : index
    %81 = vector.load %arg7[%c64_67, %c256_68] : memref<256x1152xbf16, #tpu.memory_space<vmem>>, vector<16x128xbf16>
    tpu.vector_store %arg7[%c64_67, %c256_68], %78 {strides = array<i32>} : memref<256x1152xbf16, #tpu.memory_space<vmem>>, vector<16x128xbf16>,
    %c48_69 = arith.constant 48 : index
    %c384_70 = arith.constant 384 : index
    %82 = vector.load %arg7[%c48_69, %c384_70] : memref<256x1152xbf16, #tpu.memory_space<vmem>>, vector<16x128xbf16>
    tpu.vector_store %arg7[%c48_69, %c384_70], %76 {strides = array<i32>} : memref<256x1152xbf16, #tpu.memory_space<vmem>>, vector<16x128xbf16>,
    %c48_71 = arith.constant 48 : index
    %c512_72 = arith.constant 512 : index
    %83 = vector.load %arg7[%c48_71, %c512_72] : memref<256x1152xbf16, #tpu.memory_space<vmem>>, vector<16x128xbf16>
    tpu.vector_store %arg7[%c48_71, %c512_72], %77 {strides = array<i32>} : memref<256x1152xbf16, #tpu.memory_space<vmem>>, vector<16x128xbf16>,
    %c48_73 = arith.constant 48 : index
    %c640_74 = arith.constant 640 : index
    %84 = vector.load %arg7[%c48_73, %c640_74] : memref<256x1152xbf16, #tpu.memory_space<vmem>>, vector<16x128xbf16>
    tpu.vector_store %arg7[%c48_73, %c640_74], %78 {strides = array<i32>} : memref<256x1152xbf16, #tpu.memory_space<vmem>>, vector<16x128xbf16>,
    %c32_75 = arith.constant 32 : index
    %c768_76 = arith.constant 768 : index
    %85 = vector.load %arg7[%c32_75, %c768_76] : memref<256x1152xbf16, #tpu.memory_space<vmem>>, vector<16x128xbf16>
    tpu.vector_store %arg7[%c32_75, %c768_76], %76 {strides = array<i32>} : memref<256x1152xbf16, #tpu.memory_space<vmem>>, vector<16x128xbf16>,
    %c32_77 = arith.constant 32 : index
    %c896_78 = arith.constant 896 : index
    %86 = vector.load %arg7[%c32_77, %c896_78] : memref<256x1152xbf16, #tpu.memory_space<vmem>>, vector<16x128xbf16>
    tpu.vector_store %arg7[%c32_77, %c896_78], %77 {strides = array<i32>} : memref<256x1152xbf16, #tpu.memory_space<vmem>>, vector<16x128xbf16>,
    %c32_79 = arith.constant 32 : index
    %c1024_80 = arith.constant 1024 : index
    %87 = vector.load %arg7[%c32_79, %c1024_80] : memref<256x1152xbf16, #tpu.memory_space<vmem>>, vector<16x128xbf16>
    tpu.vector_store %arg7[%c32_79, %c1024_80], %78 {strides = array<i32>} : memref<256x1152xbf16, #tpu.memory_space<vmem>>, vector<16x128xbf16>,
    %c0_81 = arith.constant 0 : index
    %c4 = arith.constant 4 : index
    %c0_82 = arith.constant 0 : index
    %c0_83 = arith.constant 0 : index
    %88 = vector.load %arg1[%c0_81, %c4, %c0_82, %c0_83] : memref<1x16x16x128xf32, #tpu.memory_space<vmem>>, vector<1x1x16x128xf32>
    %89 = vector.shape_cast %88 : vector<1x1x16x128xf32> to vector<16x128xf32>
    %90 = arith.mulf %89, %2 : vector<16x128xf32>
    %91 = arith.addf %90, %5 : vector<16x128xf32>
    %cst_84 = arith.constant 0.000000e+00 : f32
    %92 = vector.broadcast %cst_84 : f32 to vector<16x128xf32>
    %93 = arith.maximumf %91, %92 : vector<16x128xf32>
    %94 = arith.truncf %93 : vector<16x128xf32> to vector<16x128xbf16>
    %95 = tpu.concatenate %7, %94, %7 in 0 : vector<1x128xbf16>, vector<16x128xbf16>, vector<1x128xbf16> -> vector<18x128xbf16>
    %96 = vector.extract_strided_slice %95 {offsets = [0, 0], sizes = [16, 128], strides = [1, 1]} : vector<18x128xbf16> to vector<16x128xbf16>
    %97 = vector.extract_strided_slice %95 {offsets = [1, 0], sizes = [16, 128], strides = [1, 1]} : vector<18x128xbf16> to vector<16x128xbf16>
    %98 = vector.extract_strided_slice %95 {offsets = [2, 0], sizes = [16, 128], strides = [1, 1]} : vector<18x128xbf16> to vector<16x128xbf16>
    %c80 = arith.constant 80 : index
    %c0_85 = arith.constant 0 : index
    %99 = vector.load %arg7[%c80, %c0_85] : memref<256x1152xbf16, #tpu.memory_space<vmem>>, vector<16x128xbf16>
    tpu.vector_store %arg7[%c80, %c0_85], %96 {strides = array<i32>} : memref<256x1152xbf16, #tpu.memory_space<vmem>>, vector<16x128xbf16>,
    %c80_86 = arith.constant 80 : index
    %c128_87 = arith.constant 128 : index
    %100 = vector.load %arg7[%c80_86, %c128_87] : memref<256x1152xbf16, #tpu.memory_space<vmem>>, vector<16x128xbf16>
    tpu.vector_store %arg7[%c80_86, %c128_87], %97 {strides = array<i32>} : memref<256x1152xbf16, #tpu.memory_space<vmem>>, vector<16x128xbf16>,
    %c80_88 = arith.constant 80 : index
    %c256_89 = arith.constant 256 : index
    %101 = vector.load %arg7[%c80_88, %c256_89] : memref<256x1152xbf16, #tpu.memory_space<vmem>>, vector<16x128xbf16>
    tpu.vector_store %arg7[%c80_88, %c256_89], %98 {strides = array<i32>} : memref<256x1152xbf16, #tpu.memory_space<vmem>>, vector<16x128xbf16>,
    %c64_90 = arith.constant 64 : index
    %c384_91 = arith.constant 384 : index
    %102 = vector.load %arg7[%c64_90, %c384_91] : memref<256x1152xbf16, #tpu.memory_space<vmem>>, vector<16x128xbf16>
    tpu.vector_store %arg7[%c64_90, %c384_91], %96 {strides = array<i32>} : memref<256x1152xbf16, #tpu.memory_space<vmem>>, vector<16x128xbf16>,
    %c64_92 = arith.constant 64 : index
    %c512_93 = arith.constant 512 : index
    %103 = vector.load %arg7[%c64_92, %c512_93] : memref<256x1152xbf16, #tpu.memory_space<vmem>>, vector<16x128xbf16>
    tpu.vector_store %arg7[%c64_92, %c512_93], %97 {strides = array<i32>} : memref<256x1152xbf16, #tpu.memory_space<vmem>>, vector<16x128xbf16>,
    %c64_94 = arith.constant 64 : index
    %c640_95 = arith.constant 640 : index
    %104 = vector.load %arg7[%c64_94, %c640_95] : memref<256x1152xbf16, #tpu.memory_space<vmem>>, vector<16x128xbf16>
    tpu.vector_store %arg7[%c64_94, %c640_95], %98 {strides = array<i32>} : memref<256x1152xbf16, #tpu.memory_space<vmem>>, vector<16x128xbf16>,
    %c48_96 = arith.constant 48 : index
    %c768_97 = arith.constant 768 : index
    %105 = vector.load %arg7[%c48_96, %c768_97] : memref<256x1152xbf16, #tpu.memory_space<vmem>>, vector<16x128xbf16>
    tpu.vector_store %arg7[%c48_96, %c768_97], %96 {strides = array<i32>} : memref<256x1152xbf16, #tpu.memory_space<vmem>>, vector<16x128xbf16>,
    %c48_98 = arith.constant 48 : index
    %c896_99 = arith.constant 896 : index
    %106 = vector.load %arg7[%c48_98, %c896_99] : memref<256x1152xbf16, #tpu.memory_space<vmem>>, vector<16x128xbf16>
    tpu.vector_store %arg7[%c48_98, %c896_99], %97 {strides = array<i32>} : memref<256x1152xbf16, #tpu.memory_space<vmem>>, vector<16x128xbf16>,
    %c48_100 = arith.constant 48 : index
    %c1024_101 = arith.constant 1024 : index
    %107 = vector.load %arg7[%c48_100, %c1024_101] : memref<256x1152xbf16, #tpu.memory_space<vmem>>, vector<16x128xbf16>
    tpu.vector_store %arg7[%c48_100, %c1024_101], %98 {strides = array<i32>} : memref<256x1152xbf16, #tpu.memory_space<vmem>>, vector<16x128xbf16>,
    %c0_102 = arith.constant 0 : index
    %c5 = arith.constant 5 : index
    %c0_103 = arith.constant 0 : index
    %c0_104 = arith.constant 0 : index
    %108 = vector.load %arg1[%c0_102, %c5, %c0_103, %c0_104] : memref<1x16x16x128xf32, #tpu.memory_space<vmem>>, vector<1x1x16x128xf32>
    %109 = vector.shape_cast %108 : vector<1x1x16x128xf32> to vector<16x128xf32>
    %110 = arith.mulf %109, %2 : vector<16x128xf32>
    %111 = arith.addf %110, %5 : vector<16x128xf32>
    %cst_105 = arith.constant 0.000000e+00 : f32
    %112 = vector.broadcast %cst_105 : f32 to vector<16x128xf32>
    %113 = arith.maximumf %111, %112 : vector<16x128xf32>
    %114 = arith.truncf %113 : vector<16x128xf32> to vector<16x128xbf16>
    %115 = tpu.concatenate %7, %114, %7 in 0 : vector<1x128xbf16>, vector<16x128xbf16>, vector<1x128xbf16> -> vector<18x128xbf16>
    %116 = vector.extract_strided_slice %115 {offsets = [0, 0], sizes = [16, 128], strides = [1, 1]} : vector<18x128xbf16> to vector<16x128xbf16>
    %117 = vector.extract_strided_slice %115 {offsets = [1, 0], sizes = [16, 128], strides = [1, 1]} : vector<18x128xbf16> to vector<16x128xbf16>
    %118 = vector.extract_strided_slice %115 {offsets = [2, 0], sizes = [16, 128], strides = [1, 1]} : vector<18x128xbf16> to vector<16x128xbf16>
    %c96 = arith.constant 96 : index
    %c0_106 = arith.constant 0 : index
    %119 = vector.load %arg7[%c96, %c0_106] : memref<256x1152xbf16, #tpu.memory_space<vmem>>, vector<16x128xbf16>
    tpu.vector_store %arg7[%c96, %c0_106], %116 {strides = array<i32>} : memref<256x1152xbf16, #tpu.memory_space<vmem>>, vector<16x128xbf16>,
    %c96_107 = arith.constant 96 : index
    %c128_108 = arith.constant 128 : index
    %120 = vector.load %arg7[%c96_107, %c128_108] : memref<256x1152xbf16, #tpu.memory_space<vmem>>, vector<16x128xbf16>
    tpu.vector_store %arg7[%c96_107, %c128_108], %117 {strides = array<i32>} : memref<256x1152xbf16, #tpu.memory_space<vmem>>, vector<16x128xbf16>,
    %c96_109 = arith.constant 96 : index
    %c256_110 = arith.constant 256 : index
    %121 = vector.load %arg7[%c96_109, %c256_110] : memref<256x1152xbf16, #tpu.memory_space<vmem>>, vector<16x128xbf16>
    tpu.vector_store %arg7[%c96_109, %c256_110], %118 {strides = array<i32>} : memref<256x1152xbf16, #tpu.memory_space<vmem>>, vector<16x128xbf16>,
    %c80_111 = arith.constant 80 : index
    %c384_112 = arith.constant 384 : index
    %122 = vector.load %arg7[%c80_111, %c384_112] : memref<256x1152xbf16, #tpu.memory_space<vmem>>, vector<16x128xbf16>
    tpu.vector_store %arg7[%c80_111, %c384_112], %116 {strides = array<i32>} : memref<256x1152xbf16, #tpu.memory_space<vmem>>, vector<16x128xbf16>,
    %c80_113 = arith.constant 80 : index
    %c512_114 = arith.constant 512 : index
    %123 = vector.load %arg7[%c80_113, %c512_114] : memref<256x1152xbf16, #tpu.memory_space<vmem>>, vector<16x128xbf16>
    tpu.vector_store %arg7[%c80_113, %c512_114], %117 {strides = array<i32>} : memref<256x1152xbf16, #tpu.memory_space<vmem>>, vector<16x128xbf16>,
    %c80_115 = arith.constant 80 : index
    %c640_116 = arith.constant 640 : index
    %124 = vector.load %arg7[%c80_115, %c640_116] : memref<256x1152xbf16, #tpu.memory_space<vmem>>, vector<16x128xbf16>
    tpu.vector_store %arg7[%c80_115, %c640_116], %118 {strides = array<i32>} : memref<256x1152xbf16, #tpu.memory_space<vmem>>, vector<16x128xbf16>,
    %c64_117 = arith.constant 64 : index
    %c768_118 = arith.constant 768 : index
    %125 = vector.load %arg7[%c64_117, %c768_118] : memref<256x1152xbf16, #tpu.memory_space<vmem>>, vector<16x128xbf16>
    tpu.vector_store %arg7[%c64_117, %c768_118], %116 {strides = array<i32>} : memref<256x1152xbf16, #tpu.memory_space<vmem>>, vector<16x128xbf16>,
    %c64_119 = arith.constant 64 : index
    %c896_120 = arith.constant 896 : index
    %126 = vector.load %arg7[%c64_119, %c896_120] : memref<256x1152xbf16, #tpu.memory_space<vmem>>, vector<16x128xbf16>
    tpu.vector_store %arg7[%c64_119, %c896_120], %117 {strides = array<i32>} : memref<256x1152xbf16, #tpu.memory_space<vmem>>, vector<16x128xbf16>,
    %c64_121 = arith.constant 64 : index
    %c1024_122 = arith.constant 1024 : index
    %127 = vector.load %arg7[%c64_121, %c1024_122] : memref<256x1152xbf16, #tpu.memory_space<vmem>>, vector<16x128xbf16>
    tpu.vector_store %arg7[%c64_121, %c1024_122], %118 {strides = array<i32>} : memref<256x1152xbf16, #tpu.memory_space<vmem>>, vector<16x128xbf16>,
    %c0_123 = arith.constant 0 : index
    %c6 = arith.constant 6 : index
    %c0_124 = arith.constant 0 : index
    %c0_125 = arith.constant 0 : index
    %128 = vector.load %arg1[%c0_123, %c6, %c0_124, %c0_125] : memref<1x16x16x128xf32, #tpu.memory_space<vmem>>, vector<1x1x16x128xf32>
    %129 = vector.shape_cast %128 : vector<1x1x16x128xf32> to vector<16x128xf32>
    %130 = arith.mulf %129, %2 : vector<16x128xf32>
    %131 = arith.addf %130, %5 : vector<16x128xf32>
    %cst_126 = arith.constant 0.000000e+00 : f32
    %132 = vector.broadcast %cst_126 : f32 to vector<16x128xf32>
    %133 = arith.maximumf %131, %132 : vector<16x128xf32>
    %134 = arith.truncf %133 : vector<16x128xf32> to vector<16x128xbf16>
    %135 = tpu.concatenate %7, %134, %7 in 0 : vector<1x128xbf16>, vector<16x128xbf16>, vector<1x128xbf16> -> vector<18x128xbf16>
    %136 = vector.extract_strided_slice %135 {offsets = [0, 0], sizes = [16, 128], strides = [1, 1]} : vector<18x128xbf16> to vector<16x128xbf16>
    %137 = vector.extract_strided_slice %135 {offsets = [1, 0], sizes = [16, 128], strides = [1, 1]} : vector<18x128xbf16> to vector<16x128xbf16>
    %138 = vector.extract_strided_slice %135 {offsets = [2, 0], sizes = [16, 128], strides = [1, 1]} : vector<18x128xbf16> to vector<16x128xbf16>
    %c112 = arith.constant 112 : index
    %c0_127 = arith.constant 0 : index
    %139 = vector.load %arg7[%c112, %c0_127] : memref<256x1152xbf16, #tpu.memory_space<vmem>>, vector<16x128xbf16>
    tpu.vector_store %arg7[%c112, %c0_127], %136 {strides = array<i32>} : memref<256x1152xbf16, #tpu.memory_space<vmem>>, vector<16x128xbf16>,
    %c112_128 = arith.constant 112 : index
    %c128_129 = arith.constant 128 : index
    %140 = vector.load %arg7[%c112_128, %c128_129] : memref<256x1152xbf16, #tpu.memory_space<vmem>>, vector<16x128xbf16>
    tpu.vector_store %arg7[%c112_128, %c128_129], %137 {strides = array<i32>} : memref<256x1152xbf16, #tpu.memory_space<vmem>>, vector<16x128xbf16>,
    %c112_130 = arith.constant 112 : index
    %c256_131 = arith.constant 256 : index
    %141 = vector.load %arg7[%c112_130, %c256_131] : memref<256x1152xbf16, #tpu.memory_space<vmem>>, vector<16x128xbf16>
    tpu.vector_store %arg7[%c112_130, %c256_131], %138 {strides = array<i32>} : memref<256x1152xbf16, #tpu.memory_space<vmem>>, vector<16x128xbf16>,
    %c96_132 = arith.constant 96 : index
    %c384_133 = arith.constant 384 : index
    %142 = vector.load %arg7[%c96_132, %c384_133] : memref<256x1152xbf16, #tpu.memory_space<vmem>>, vector<16x128xbf16>
    tpu.vector_store %arg7[%c96_132, %c384_133], %136 {strides = array<i32>} : memref<256x1152xbf16, #tpu.memory_space<vmem>>, vector<16x128xbf16>,
    %c96_134 = arith.constant 96 : index
    %c512_135 = arith.constant 512 : index
    %143 = vector.load %arg7[%c96_134, %c512_135] : memref<256x1152xbf16, #tpu.memory_space<vmem>>, vector<16x128xbf16>
    tpu.vector_store %arg7[%c96_134, %c512_135], %137 {strides = array<i32>} : memref<256x1152xbf16, #tpu.memory_space<vmem>>, vector<16x128xbf16>,
    %c96_136 = arith.constant 96 : index
    %c640_137 = arith.constant 640 : index
    %144 = vector.load %arg7[%c96_136, %c640_137] : memref<256x1152xbf16, #tpu.memory_space<vmem>>, vector<16x128xbf16>
    tpu.vector_store %arg7[%c96_136, %c640_137], %138 {strides = array<i32>} : memref<256x1152xbf16, #tpu.memory_space<vmem>>, vector<16x128xbf16>,
    %c80_138 = arith.constant 80 : index
    %c768_139 = arith.constant 768 : index
    %145 = vector.load %arg7[%c80_138, %c768_139] : memref<256x1152xbf16, #tpu.memory_space<vmem>>, vector<16x128xbf16>
    tpu.vector_store %arg7[%c80_138, %c768_139], %136 {strides = array<i32>} : memref<256x1152xbf16, #tpu.memory_space<vmem>>, vector<16x128xbf16>,
    %c80_140 = arith.constant 80 : index
    %c896_141 = arith.constant 896 : index
    %146 = vector.load %arg7[%c80_140, %c896_141] : memref<256x1152xbf16, #tpu.memory_space<vmem>>, vector<16x128xbf16>
    tpu.vector_store %arg7[%c80_140, %c896_141], %137 {strides = array<i32>} : memref<256x1152xbf16, #tpu.memory_space<vmem>>, vector<16x128xbf16>,
    %c80_142 = arith.constant 80 : index
    %c1024_143 = arith.constant 1024 : index
    %147 = vector.load %arg7[%c80_142, %c1024_143] : memref<256x1152xbf16, #tpu.memory_space<vmem>>, vector<16x128xbf16>
    tpu.vector_store %arg7[%c80_142, %c1024_143], %138 {strides = array<i32>} : memref<256x1152xbf16, #tpu.memory_space<vmem>>, vector<16x128xbf16>,
    %c0_144 = arith.constant 0 : index
    %c7 = arith.constant 7 : index
    %c0_145 = arith.constant 0 : index
    %c0_146 = arith.constant 0 : index
    %148 = vector.load %arg1[%c0_144, %c7, %c0_145, %c0_146] : memref<1x16x16x128xf32, #tpu.memory_space<vmem>>, vector<1x1x16x128xf32>
    %149 = vector.shape_cast %148 : vector<1x1x16x128xf32> to vector<16x128xf32>
    %150 = arith.mulf %149, %2 : vector<16x128xf32>
    %151 = arith.addf %150, %5 : vector<16x128xf32>
    %cst_147 = arith.constant 0.000000e+00 : f32
    %152 = vector.broadcast %cst_147 : f32 to vector<16x128xf32>
    %153 = arith.maximumf %151, %152 : vector<16x128xf32>
    %154 = arith.truncf %153 : vector<16x128xf32> to vector<16x128xbf16>
    %155 = tpu.concatenate %7, %154, %7 in 0 : vector<1x128xbf16>, vector<16x128xbf16>, vector<1x128xbf16> -> vector<18x128xbf16>
    %156 = vector.extract_strided_slice %155 {offsets = [0, 0], sizes = [16, 128], strides = [1, 1]} : vector<18x128xbf16> to vector<16x128xbf16>
    %157 = vector.extract_strided_slice %155 {offsets = [1, 0], sizes = [16, 128], strides = [1, 1]} : vector<18x128xbf16> to vector<16x128xbf16>
    %158 = vector.extract_strided_slice %155 {offsets = [2, 0], sizes = [16, 128], strides = [1, 1]} : vector<18x128xbf16> to vector<16x128xbf16>
    %c128_148 = arith.constant 128 : index
    %c0_149 = arith.constant 0 : index
    %159 = vector.load %arg7[%c128_148, %c0_149] : memref<256x1152xbf16, #tpu.memory_space<vmem>>, vector<16x128xbf16>
    tpu.vector_store %arg7[%c128_148, %c0_149], %156 {strides = array<i32>} : memref<256x1152xbf16, #tpu.memory_space<vmem>>, vector<16x128xbf16>,
    %c128_150 = arith.constant 128 : index
    %c128_151 = arith.constant 128 : index
    %160 = vector.load %arg7[%c128_150, %c128_151] : memref<256x1152xbf16, #tpu.memory_space<vmem>>, vector<16x128xbf16>
    tpu.vector_store %arg7[%c128_150, %c128_151], %157 {strides = array<i32>} : memref<256x1152xbf16, #tpu.memory_space<vmem>>, vector<16x128xbf16>,
    %c128_152 = arith.constant 128 : index
    %c256_153 = arith.constant 256 : index
    %161 = vector.load %arg7[%c128_152, %c256_153] : memref<256x1152xbf16, #tpu.memory_space<vmem>>, vector<16x128xbf16>
    tpu.vector_store %arg7[%c128_152, %c256_153], %158 {strides = array<i32>} : memref<256x1152xbf16, #tpu.memory_space<vmem>>, vector<16x128xbf16>,
    %c112_154 = arith.constant 112 : index
    %c384_155 = arith.constant 384 : index
    %162 = vector.load %arg7[%c112_154, %c384_155] : memref<256x1152xbf16, #tpu.memory_space<vmem>>, vector<16x128xbf16>
    tpu.vector_store %arg7[%c112_154, %c384_155], %156 {strides = array<i32>} : memref<256x1152xbf16, #tpu.memory_space<vmem>>, vector<16x128xbf16>,
    %c112_156 = arith.constant 112 : index
    %c512_157 = arith.constant 512 : index
    %163 = vector.load %arg7[%c112_156, %c512_157] : memref<256x1152xbf16, #tpu.memory_space<vmem>>, vector<16x128xbf16>
    tpu.vector_store %arg7[%c112_156, %c512_157], %157 {strides = array<i32>} : memref<256x1152xbf16, #tpu.memory_space<vmem>>, vector<16x128xbf16>,
    %c112_158 = arith.constant 112 : index
    %c640_159 = arith.constant 640 : index
    %164 = vector.load %arg7[%c112_158, %c640_159] : memref<256x1152xbf16, #tpu.memory_space<vmem>>, vector<16x128xbf16>
    tpu.vector_store %arg7[%c112_158, %c640_159], %158 {strides = array<i32>} : memref<256x1152xbf16, #tpu.memory_space<vmem>>, vector<16x128xbf16>,
    %c96_160 = arith.constant 96 : index
    %c768_161 = arith.constant 768 : index
    %165 = vector.load %arg7[%c96_160, %c768_161] : memref<256x1152xbf16, #tpu.memory_space<vmem>>, vector<16x128xbf16>
    tpu.vector_store %arg7[%c96_160, %c768_161], %156 {strides = array<i32>} : memref<256x1152xbf16, #tpu.memory_space<vmem>>, vector<16x128xbf16>,
    %c96_162 = arith.constant 96 : index
    %c896_163 = arith.constant 896 : index
    %166 = vector.load %arg7[%c96_162, %c896_163] : memref<256x1152xbf16, #tpu.memory_space<vmem>>, vector<16x128xbf16>
    tpu.vector_store %arg7[%c96_162, %c896_163], %157 {strides = array<i32>} : memref<256x1152xbf16, #tpu.memory_space<vmem>>, vector<16x128xbf16>,
    %c96_164 = arith.constant 96 : index
    %c1024_165 = arith.constant 1024 : index
    %167 = vector.load %arg7[%c96_164, %c1024_165] : memref<256x1152xbf16, #tpu.memory_space<vmem>>, vector<16x128xbf16>
    tpu.vector_store %arg7[%c96_164, %c1024_165], %158 {strides = array<i32>} : memref<256x1152xbf16, #tpu.memory_space<vmem>>, vector<16x128xbf16>,
    %c0_166 = arith.constant 0 : index
    %c8 = arith.constant 8 : index
    %c0_167 = arith.constant 0 : index
    %c0_168 = arith.constant 0 : index
    %168 = vector.load %arg1[%c0_166, %c8, %c0_167, %c0_168] : memref<1x16x16x128xf32, #tpu.memory_space<vmem>>, vector<1x1x16x128xf32>
    %169 = vector.shape_cast %168 : vector<1x1x16x128xf32> to vector<16x128xf32>
    %170 = arith.mulf %169, %2 : vector<16x128xf32>
    %171 = arith.addf %170, %5 : vector<16x128xf32>
    %cst_169 = arith.constant 0.000000e+00 : f32
    %172 = vector.broadcast %cst_169 : f32 to vector<16x128xf32>
    %173 = arith.maximumf %171, %172 : vector<16x128xf32>
    %174 = arith.truncf %173 : vector<16x128xf32> to vector<16x128xbf16>
    %175 = tpu.concatenate %7, %174, %7 in 0 : vector<1x128xbf16>, vector<16x128xbf16>, vector<1x128xbf16> -> vector<18x128xbf16>
    %176 = vector.extract_strided_slice %175 {offsets = [0, 0], sizes = [16, 128], strides = [1, 1]} : vector<18x128xbf16> to vector<16x128xbf16>
    %177 = vector.extract_strided_slice %175 {offsets = [1, 0], sizes = [16, 128], strides = [1, 1]} : vector<18x128xbf16> to vector<16x128xbf16>
    %178 = vector.extract_strided_slice %175 {offsets = [2, 0], sizes = [16, 128], strides = [1, 1]} : vector<18x128xbf16> to vector<16x128xbf16>
    %c144 = arith.constant 144 : index
    %c0_170 = arith.constant 0 : index
    %179 = vector.load %arg7[%c144, %c0_170] : memref<256x1152xbf16, #tpu.memory_space<vmem>>, vector<16x128xbf16>
    tpu.vector_store %arg7[%c144, %c0_170], %176 {strides = array<i32>} : memref<256x1152xbf16, #tpu.memory_space<vmem>>, vector<16x128xbf16>,
    %c144_171 = arith.constant 144 : index
    %c128_172 = arith.constant 128 : index
    %180 = vector.load %arg7[%c144_171, %c128_172] : memref<256x1152xbf16, #tpu.memory_space<vmem>>, vector<16x128xbf16>
    tpu.vector_store %arg7[%c144_171, %c128_172], %177 {strides = array<i32>} : memref<256x1152xbf16, #tpu.memory_space<vmem>>, vector<16x128xbf16>,
    %c144_173 = arith.constant 144 : index
    %c256_174 = arith.constant 256 : index
    %181 = vector.load %arg7[%c144_173, %c256_174] : memref<256x1152xbf16, #tpu.memory_space<vmem>>, vector<16x128xbf16>
    tpu.vector_store %arg7[%c144_173, %c256_174], %178 {strides = array<i32>} : memref<256x1152xbf16, #tpu.memory_space<vmem>>, vector<16x128xbf16>,
    %c128_175 = arith.constant 128 : index
    %c384_176 = arith.constant 384 : index
    %182 = vector.load %arg7[%c128_175, %c384_176] : memref<256x1152xbf16, #tpu.memory_space<vmem>>, vector<16x128xbf16>
    tpu.vector_store %arg7[%c128_175, %c384_176], %176 {strides = array<i32>} : memref<256x1152xbf16, #tpu.memory_space<vmem>>, vector<16x128xbf16>,
    %c128_177 = arith.constant 128 : index
    %c512_178 = arith.constant 512 : index
    %183 = vector.load %arg7[%c128_177, %c512_178] : memref<256x1152xbf16, #tpu.memory_space<vmem>>, vector<16x128xbf16>
    tpu.vector_store %arg7[%c128_177, %c512_178], %177 {strides = array<i32>} : memref<256x1152xbf16, #tpu.memory_space<vmem>>, vector<16x128xbf16>,
    %c128_179 = arith.constant 128 : index
    %c640_180 = arith.constant 640 : index
    %184 = vector.load %arg7[%c128_179, %c640_180] : memref<256x1152xbf16, #tpu.memory_space<vmem>>, vector<16x128xbf16>
    tpu.vector_store %arg7[%c128_179, %c640_180], %178 {strides = array<i32>} : memref<256x1152xbf16, #tpu.memory_space<vmem>>, vector<16x128xbf16>,
    %c112_181 = arith.constant 112 : index
    %c768_182 = arith.constant 768 : index
    %185 = vector.load %arg7[%c112_181, %c768_182] : memref<256x1152xbf16, #tpu.memory_space<vmem>>, vector<16x128xbf16>
    tpu.vector_store %arg7[%c112_181, %c768_182], %176 {strides = array<i32>} : memref<256x1152xbf16, #tpu.memory_space<vmem>>, vector<16x128xbf16>,
    %c112_183 = arith.constant 112 : index
    %c896_184 = arith.constant 896 : index
    %186 = vector.load %arg7[%c112_183, %c896_184] : memref<256x1152xbf16, #tpu.memory_space<vmem>>, vector<16x128xbf16>
    tpu.vector_store %arg7[%c112_183, %c896_184], %177 {strides = array<i32>} : memref<256x1152xbf16, #tpu.memory_space<vmem>>, vector<16x128xbf16>,
    %c112_185 = arith.constant 112 : index
    %c1024_186 = arith.constant 1024 : index
    %187 = vector.load %arg7[%c112_185, %c1024_186] : memref<256x1152xbf16, #tpu.memory_space<vmem>>, vector<16x128xbf16>
    tpu.vector_store %arg7[%c112_185, %c1024_186], %178 {strides = array<i32>} : memref<256x1152xbf16, #tpu.memory_space<vmem>>, vector<16x128xbf16>,
    %c0_187 = arith.constant 0 : index
    %c9 = arith.constant 9 : index
    %c0_188 = arith.constant 0 : index
    %c0_189 = arith.constant 0 : index
    %188 = vector.load %arg1[%c0_187, %c9, %c0_188, %c0_189] : memref<1x16x16x128xf32, #tpu.memory_space<vmem>>, vector<1x1x16x128xf32>
    %189 = vector.shape_cast %188 : vector<1x1x16x128xf32> to vector<16x128xf32>
    %190 = arith.mulf %189, %2 : vector<16x128xf32>
    %191 = arith.addf %190, %5 : vector<16x128xf32>
    %cst_190 = arith.constant 0.000000e+00 : f32
    %192 = vector.broadcast %cst_190 : f32 to vector<16x128xf32>
    %193 = arith.maximumf %191, %192 : vector<16x128xf32>
    %194 = arith.truncf %193 : vector<16x128xf32> to vector<16x128xbf16>
    %195 = tpu.concatenate %7, %194, %7 in 0 : vector<1x128xbf16>, vector<16x128xbf16>, vector<1x128xbf16> -> vector<18x128xbf16>
    %196 = vector.extract_strided_slice %195 {offsets = [0, 0], sizes = [16, 128], strides = [1, 1]} : vector<18x128xbf16> to vector<16x128xbf16>
    %197 = vector.extract_strided_slice %195 {offsets = [1, 0], sizes = [16, 128], strides = [1, 1]} : vector<18x128xbf16> to vector<16x128xbf16>
    %198 = vector.extract_strided_slice %195 {offsets = [2, 0], sizes = [16, 128], strides = [1, 1]} : vector<18x128xbf16> to vector<16x128xbf16>
    %c160 = arith.constant 160 : index
    %c0_191 = arith.constant 0 : index
    %199 = vector.load %arg7[%c160, %c0_191] : memref<256x1152xbf16, #tpu.memory_space<vmem>>, vector<16x128xbf16>
    tpu.vector_store %arg7[%c160, %c0_191], %196 {strides = array<i32>} : memref<256x1152xbf16, #tpu.memory_space<vmem>>, vector<16x128xbf16>,
    %c160_192 = arith.constant 160 : index
    %c128_193 = arith.constant 128 : index
    %200 = vector.load %arg7[%c160_192, %c128_193] : memref<256x1152xbf16, #tpu.memory_space<vmem>>, vector<16x128xbf16>
    tpu.vector_store %arg7[%c160_192, %c128_193], %197 {strides = array<i32>} : memref<256x1152xbf16, #tpu.memory_space<vmem>>, vector<16x128xbf16>,
    %c160_194 = arith.constant 160 : index
    %c256_195 = arith.constant 256 : index
    %201 = vector.load %arg7[%c160_194, %c256_195] : memref<256x1152xbf16, #tpu.memory_space<vmem>>, vector<16x128xbf16>
    tpu.vector_store %arg7[%c160_194, %c256_195], %198 {strides = array<i32>} : memref<256x1152xbf16, #tpu.memory_space<vmem>>, vector<16x128xbf16>,
    %c144_196 = arith.constant 144 : index
    %c384_197 = arith.constant 384 : index
    %202 = vector.load %arg7[%c144_196, %c384_197] : memref<256x1152xbf16, #tpu.memory_space<vmem>>, vector<16x128xbf16>
    tpu.vector_store %arg7[%c144_196, %c384_197], %196 {strides = array<i32>} : memref<256x1152xbf16, #tpu.memory_space<vmem>>, vector<16x128xbf16>,
    %c144_198 = arith.constant 144 : index
    %c512_199 = arith.constant 512 : index
    %203 = vector.load %arg7[%c144_198, %c512_199] : memref<256x1152xbf16, #tpu.memory_space<vmem>>, vector<16x128xbf16>
    tpu.vector_store %arg7[%c144_198, %c512_199], %197 {strides = array<i32>} : memref<256x1152xbf16, #tpu.memory_space<vmem>>, vector<16x128xbf16>,
    %c144_200 = arith.constant 144 : index
    %c640_201 = arith.constant 640 : index
    %204 = vector.load %arg7[%c144_200, %c640_201] : memref<256x1152xbf16, #tpu.memory_space<vmem>>, vector<16x128xbf16>
    tpu.vector_store %arg7[%c144_200, %c640_201], %198 {strides = array<i32>} : memref<256x1152xbf16, #tpu.memory_space<vmem>>, vector<16x128xbf16>,
    %c128_202 = arith.constant 128 : index
    %c768_203 = arith.constant 768 : index
    %205 = vector.load %arg7[%c128_202, %c768_203] : memref<256x1152xbf16, #tpu.memory_space<vmem>>, vector<16x128xbf16>
    tpu.vector_store %arg7[%c128_202, %c768_203], %196 {strides = array<i32>} : memref<256x1152xbf16, #tpu.memory_space<vmem>>, vector<16x128xbf16>,
    %c128_204 = arith.constant 128 : index
    %c896_205 = arith.constant 896 : index
    %206 = vector.load %arg7[%c128_204, %c896_205] : memref<256x1152xbf16, #tpu.memory_space<vmem>>, vector<16x128xbf16>
    tpu.vector_store %arg7[%c128_204, %c896_205], %197 {strides = array<i32>} : memref<256x1152xbf16, #tpu.memory_space<vmem>>, vector<16x128xbf16>,
    %c128_206 = arith.constant 128 : index
    %c1024_207 = arith.constant 1024 : index
    %207 = vector.load %arg7[%c128_206, %c1024_207] : memref<256x1152xbf16, #tpu.memory_space<vmem>>, vector<16x128xbf16>
    tpu.vector_store %arg7[%c128_206, %c1024_207], %198 {strides = array<i32>} : memref<256x1152xbf16, #tpu.memory_space<vmem>>, vector<16x128xbf16>,
    %c0_208 = arith.constant 0 : index
    %c10 = arith.constant 10 : index
    %c0_209 = arith.constant 0 : index
    %c0_210 = arith.constant 0 : index
    %208 = vector.load %arg1[%c0_208, %c10, %c0_209, %c0_210] : memref<1x16x16x128xf32, #tpu.memory_space<vmem>>, vector<1x1x16x128xf32>
    %209 = vector.shape_cast %208 : vector<1x1x16x128xf32> to vector<16x128xf32>
    %210 = arith.mulf %209, %2 : vector<16x128xf32>
    %211 = arith.addf %210, %5 : vector<16x128xf32>
    %cst_211 = arith.constant 0.000000e+00 : f32
    %212 = vector.broadcast %cst_211 : f32 to vector<16x128xf32>
    %213 = arith.maximumf %211, %212 : vector<16x128xf32>
    %214 = arith.truncf %213 : vector<16x128xf32> to vector<16x128xbf16>
    %215 = tpu.concatenate %7, %214, %7 in 0 : vector<1x128xbf16>, vector<16x128xbf16>, vector<1x128xbf16> -> vector<18x128xbf16>
    %216 = vector.extract_strided_slice %215 {offsets = [0, 0], sizes = [16, 128], strides = [1, 1]} : vector<18x128xbf16> to vector<16x128xbf16>
    %217 = vector.extract_strided_slice %215 {offsets = [1, 0], sizes = [16, 128], strides = [1, 1]} : vector<18x128xbf16> to vector<16x128xbf16>
    %218 = vector.extract_strided_slice %215 {offsets = [2, 0], sizes = [16, 128], strides = [1, 1]} : vector<18x128xbf16> to vector<16x128xbf16>
    %c176 = arith.constant 176 : index
    %c0_212 = arith.constant 0 : index
    %219 = vector.load %arg7[%c176, %c0_212] : memref<256x1152xbf16, #tpu.memory_space<vmem>>, vector<16x128xbf16>
    tpu.vector_store %arg7[%c176, %c0_212], %216 {strides = array<i32>} : memref<256x1152xbf16, #tpu.memory_space<vmem>>, vector<16x128xbf16>,
    %c176_213 = arith.constant 176 : index
    %c128_214 = arith.constant 128 : index
    %220 = vector.load %arg7[%c176_213, %c128_214] : memref<256x1152xbf16, #tpu.memory_space<vmem>>, vector<16x128xbf16>
    tpu.vector_store %arg7[%c176_213, %c128_214], %217 {strides = array<i32>} : memref<256x1152xbf16, #tpu.memory_space<vmem>>, vector<16x128xbf16>,
    %c176_215 = arith.constant 176 : index
    %c256_216 = arith.constant 256 : index
    %221 = vector.load %arg7[%c176_215, %c256_216] : memref<256x1152xbf16, #tpu.memory_space<vmem>>, vector<16x128xbf16>
    tpu.vector_store %arg7[%c176_215, %c256_216], %218 {strides = array<i32>} : memref<256x1152xbf16, #tpu.memory_space<vmem>>, vector<16x128xbf16>,
    %c160_217 = arith.constant 160 : index
    %c384_218 = arith.constant 384 : index
    %222 = vector.load %arg7[%c160_217, %c384_218] : memref<256x1152xbf16, #tpu.memory_space<vmem>>, vector<16x128xbf16>
    tpu.vector_store %arg7[%c160_217, %c384_218], %216 {strides = array<i32>} : memref<256x1152xbf16, #tpu.memory_space<vmem>>, vector<16x128xbf16>,
    %c160_219 = arith.constant 160 : index
    %c512_220 = arith.constant 512 : index
    %223 = vector.load %arg7[%c160_219, %c512_220] : memref<256x1152xbf16, #tpu.memory_space<vmem>>, vector<16x128xbf16>
    tpu.vector_store %arg7[%c160_219, %c512_220], %217 {strides = array<i32>} : memref<256x1152xbf16, #tpu.memory_space<vmem>>, vector<16x128xbf16>,
    %c160_221 = arith.constant 160 : index
    %c640_222 = arith.constant 640 : index
    %224 = vector.load %arg7[%c160_221, %c640_222] : memref<256x1152xbf16, #tpu.memory_space<vmem>>, vector<16x128xbf16>
    tpu.vector_store %arg7[%c160_221, %c640_222], %218 {strides = array<i32>} : memref<256x1152xbf16, #tpu.memory_space<vmem>>, vector<16x128xbf16>,
    %c144_223 = arith.constant 144 : index
    %c768_224 = arith.constant 768 : index
    %225 = vector.load %arg7[%c144_223, %c768_224] : memref<256x1152xbf16, #tpu.memory_space<vmem>>, vector<16x128xbf16>
    tpu.vector_store %arg7[%c144_223, %c768_224], %216 {strides = array<i32>} : memref<256x1152xbf16, #tpu.memory_space<vmem>>, vector<16x128xbf16>,
    %c144_225 = arith.constant 144 : index
    %c896_226 = arith.constant 896 : index
    %226 = vector.load %arg7[%c144_225, %c896_226] : memref<256x1152xbf16, #tpu.memory_space<vmem>>, vector<16x128xbf16>
    tpu.vector_store %arg7[%c144_225, %c896_226], %217 {strides = array<i32>} : memref<256x1152xbf16, #tpu.memory_space<vmem>>, vector<16x128xbf16>,
    %c144_227 = arith.constant 144 : index
    %c1024_228 = arith.constant 1024 : index
    %227 = vector.load %arg7[%c144_227, %c1024_228] : memref<256x1152xbf16, #tpu.memory_space<vmem>>, vector<16x128xbf16>
    tpu.vector_store %arg7[%c144_227, %c1024_228], %218 {strides = array<i32>} : memref<256x1152xbf16, #tpu.memory_space<vmem>>, vector<16x128xbf16>,
    %c0_229 = arith.constant 0 : index
    %c11 = arith.constant 11 : index
    %c0_230 = arith.constant 0 : index
    %c0_231 = arith.constant 0 : index
    %228 = vector.load %arg1[%c0_229, %c11, %c0_230, %c0_231] : memref<1x16x16x128xf32, #tpu.memory_space<vmem>>, vector<1x1x16x128xf32>
    %229 = vector.shape_cast %228 : vector<1x1x16x128xf32> to vector<16x128xf32>
    %230 = arith.mulf %229, %2 : vector<16x128xf32>
    %231 = arith.addf %230, %5 : vector<16x128xf32>
    %cst_232 = arith.constant 0.000000e+00 : f32
    %232 = vector.broadcast %cst_232 : f32 to vector<16x128xf32>
    %233 = arith.maximumf %231, %232 : vector<16x128xf32>
    %234 = arith.truncf %233 : vector<16x128xf32> to vector<16x128xbf16>
    %235 = tpu.concatenate %7, %234, %7 in 0 : vector<1x128xbf16>, vector<16x128xbf16>, vector<1x128xbf16> -> vector<18x128xbf16>
    %236 = vector.extract_strided_slice %235 {offsets = [0, 0], sizes = [16, 128], strides = [1, 1]} : vector<18x128xbf16> to vector<16x128xbf16>
    %237 = vector.extract_strided_slice %235 {offsets = [1, 0], sizes = [16, 128], strides = [1, 1]} : vector<18x128xbf16> to vector<16x128xbf16>
    %238 = vector.extract_strided_slice %235 {offsets = [2, 0], sizes = [16, 128], strides = [1, 1]} : vector<18x128xbf16> to vector<16x128xbf16>
    %c192 = arith.constant 192 : index
    %c0_233 = arith.constant 0 : index
    %239 = vector.load %arg7[%c192, %c0_233] : memref<256x1152xbf16, #tpu.memory_space<vmem>>, vector<16x128xbf16>
    tpu.vector_store %arg7[%c192, %c0_233], %236 {strides = array<i32>} : memref<256x1152xbf16, #tpu.memory_space<vmem>>, vector<16x128xbf16>,
    %c192_234 = arith.constant 192 : index
    %c128_235 = arith.constant 128 : index
    %240 = vector.load %arg7[%c192_234, %c128_235] : memref<256x1152xbf16, #tpu.memory_space<vmem>>, vector<16x128xbf16>
    tpu.vector_store %arg7[%c192_234, %c128_235], %237 {strides = array<i32>} : memref<256x1152xbf16, #tpu.memory_space<vmem>>, vector<16x128xbf16>,
    %c192_236 = arith.constant 192 : index
    %c256_237 = arith.constant 256 : index
    %241 = vector.load %arg7[%c192_236, %c256_237] : memref<256x1152xbf16, #tpu.memory_space<vmem>>, vector<16x128xbf16>
    tpu.vector_store %arg7[%c192_236, %c256_237], %238 {strides = array<i32>} : memref<256x1152xbf16, #tpu.memory_space<vmem>>, vector<16x128xbf16>,
    %c176_238 = arith.constant 176 : index
    %c384_239 = arith.constant 384 : index
    %242 = vector.load %arg7[%c176_238, %c384_239] : memref<256x1152xbf16, #tpu.memory_space<vmem>>, vector<16x128xbf16>
    tpu.vector_store %arg7[%c176_238, %c384_239], %236 {strides = array<i32>} : memref<256x1152xbf16, #tpu.memory_space<vmem>>, vector<16x128xbf16>,
    %c176_240 = arith.constant 176 : index
    %c512_241 = arith.constant 512 : index
    %243 = vector.load %arg7[%c176_240, %c512_241] : memref<256x1152xbf16, #tpu.memory_space<vmem>>, vector<16x128xbf16>
    tpu.vector_store %arg7[%c176_240, %c512_241], %237 {strides = array<i32>} : memref<256x1152xbf16, #tpu.memory_space<vmem>>, vector<16x128xbf16>,
    %c176_242 = arith.constant 176 : index
    %c640_243 = arith.constant 640 : index
    %244 = vector.load %arg7[%c176_242, %c640_243] : memref<256x1152xbf16, #tpu.memory_space<vmem>>, vector<16x128xbf16>
    tpu.vector_store %arg7[%c176_242, %c640_243], %238 {strides = array<i32>} : memref<256x1152xbf16, #tpu.memory_space<vmem>>, vector<16x128xbf16>,
    %c160_244 = arith.constant 160 : index
    %c768_245 = arith.constant 768 : index
    %245 = vector.load %arg7[%c160_244, %c768_245] : memref<256x1152xbf16, #tpu.memory_space<vmem>>, vector<16x128xbf16>
    tpu.vector_store %arg7[%c160_244, %c768_245], %236 {strides = array<i32>} : memref<256x1152xbf16, #tpu.memory_space<vmem>>, vector<16x128xbf16>,
    %c160_246 = arith.constant 160 : index
    %c896_247 = arith.constant 896 : index
    %246 = vector.load %arg7[%c160_246, %c896_247] : memref<256x1152xbf16, #tpu.memory_space<vmem>>, vector<16x128xbf16>
    tpu.vector_store %arg7[%c160_246, %c896_247], %237 {strides = array<i32>} : memref<256x1152xbf16, #tpu.memory_space<vmem>>, vector<16x128xbf16>,
    %c160_248 = arith.constant 160 : index
    %c1024_249 = arith.constant 1024 : index
    %247 = vector.load %arg7[%c160_248, %c1024_249] : memref<256x1152xbf16, #tpu.memory_space<vmem>>, vector<16x128xbf16>
    tpu.vector_store %arg7[%c160_248, %c1024_249], %238 {strides = array<i32>} : memref<256x1152xbf16, #tpu.memory_space<vmem>>, vector<16x128xbf16>,
    %c0_250 = arith.constant 0 : index
    %c12 = arith.constant 12 : index
    %c0_251 = arith.constant 0 : index
    %c0_252 = arith.constant 0 : index
    %248 = vector.load %arg1[%c0_250, %c12, %c0_251, %c0_252] : memref<1x16x16x128xf32, #tpu.memory_space<vmem>>, vector<1x1x16x128xf32>
    %249 = vector.shape_cast %248 : vector<1x1x16x128xf32> to vector<16x128xf32>
    %250 = arith.mulf %249, %2 : vector<16x128xf32>
    %251 = arith.addf %250, %5 : vector<16x128xf32>
    %cst_253 = arith.constant 0.000000e+00 : f32
    %252 = vector.broadcast %cst_253 : f32 to vector<16x128xf32>
    %253 = arith.maximumf %251, %252 : vector<16x128xf32>
    %254 = arith.truncf %253 : vector<16x128xf32> to vector<16x128xbf16>
    %255 = tpu.concatenate %7, %254, %7 in 0 : vector<1x128xbf16>, vector<16x128xbf16>, vector<1x128xbf16> -> vector<18x128xbf16>
    %256 = vector.extract_strided_slice %255 {offsets = [0, 0], sizes = [16, 128], strides = [1, 1]} : vector<18x128xbf16> to vector<16x128xbf16>
    %257 = vector.extract_strided_slice %255 {offsets = [1, 0], sizes = [16, 128], strides = [1, 1]} : vector<18x128xbf16> to vector<16x128xbf16>
    %258 = vector.extract_strided_slice %255 {offsets = [2, 0], sizes = [16, 128], strides = [1, 1]} : vector<18x128xbf16> to vector<16x128xbf16>
    %c208 = arith.constant 208 : index
    %c0_254 = arith.constant 0 : index
    %259 = vector.load %arg7[%c208, %c0_254] : memref<256x1152xbf16, #tpu.memory_space<vmem>>, vector<16x128xbf16>
    tpu.vector_store %arg7[%c208, %c0_254], %256 {strides = array<i32>} : memref<256x1152xbf16, #tpu.memory_space<vmem>>, vector<16x128xbf16>,
    %c208_255 = arith.constant 208 : index
    %c128_256 = arith.constant 128 : index
    %260 = vector.load %arg7[%c208_255, %c128_256] : memref<256x1152xbf16, #tpu.memory_space<vmem>>, vector<16x128xbf16>
    tpu.vector_store %arg7[%c208_255, %c128_256], %257 {strides = array<i32>} : memref<256x1152xbf16, #tpu.memory_space<vmem>>, vector<16x128xbf16>,
    %c208_257 = arith.constant 208 : index
    %c256_258 = arith.constant 256 : index
    %261 = vector.load %arg7[%c208_257, %c256_258] : memref<256x1152xbf16, #tpu.memory_space<vmem>>, vector<16x128xbf16>
    tpu.vector_store %arg7[%c208_257, %c256_258], %258 {strides = array<i32>} : memref<256x1152xbf16, #tpu.memory_space<vmem>>, vector<16x128xbf16>,
    %c192_259 = arith.constant 192 : index
    %c384_260 = arith.constant 384 : index
    %262 = vector.load %arg7[%c192_259, %c384_260] : memref<256x1152xbf16, #tpu.memory_space<vmem>>, vector<16x128xbf16>
    tpu.vector_store %arg7[%c192_259, %c384_260], %256 {strides = array<i32>} : memref<256x1152xbf16, #tpu.memory_space<vmem>>, vector<16x128xbf16>,
    %c192_261 = arith.constant 192 : index
    %c512_262 = arith.constant 512 : index
    %263 = vector.load %arg7[%c192_261, %c512_262] : memref<256x1152xbf16, #tpu.memory_space<vmem>>, vector<16x128xbf16>
    tpu.vector_store %arg7[%c192_261, %c512_262], %257 {strides = array<i32>} : memref<256x1152xbf16, #tpu.memory_space<vmem>>, vector<16x128xbf16>,
    %c192_263 = arith.constant 192 : index
    %c640_264 = arith.constant 640 : index
    %264 = vector.load %arg7[%c192_263, %c640_264] : memref<256x1152xbf16, #tpu.memory_space<vmem>>, vector<16x128xbf16>
    tpu.vector_store %arg7[%c192_263, %c640_264], %258 {strides = array<i32>} : memref<256x1152xbf16, #tpu.memory_space<vmem>>, vector<16x128xbf16>,
    %c176_265 = arith.constant 176 : index
    %c768_266 = arith.constant 768 : index
    %265 = vector.load %arg7[%c176_265, %c768_266] : memref<256x1152xbf16, #tpu.memory_space<vmem>>, vector<16x128xbf16>
    tpu.vector_store %arg7[%c176_265, %c768_266], %256 {strides = array<i32>} : memref<256x1152xbf16, #tpu.memory_space<vmem>>, vector<16x128xbf16>,
    %c176_267 = arith.constant 176 : index
    %c896_268 = arith.constant 896 : index
    %266 = vector.load %arg7[%c176_267, %c896_268] : memref<256x1152xbf16, #tpu.memory_space<vmem>>, vector<16x128xbf16>
    tpu.vector_store %arg7[%c176_267, %c896_268], %257 {strides = array<i32>} : memref<256x1152xbf16, #tpu.memory_space<vmem>>, vector<16x128xbf16>,
    %c176_269 = arith.constant 176 : index
    %c1024_270 = arith.constant 1024 : index
    %267 = vector.load %arg7[%c176_269, %c1024_270] : memref<256x1152xbf16, #tpu.memory_space<vmem>>, vector<16x128xbf16>
    tpu.vector_store %arg7[%c176_269, %c1024_270], %258 {strides = array<i32>} : memref<256x1152xbf16, #tpu.memory_space<vmem>>, vector<16x128xbf16>,
    %c0_271 = arith.constant 0 : index
    %c13 = arith.constant 13 : index
    %c0_272 = arith.constant 0 : index
    %c0_273 = arith.constant 0 : index
    %268 = vector.load %arg1[%c0_271, %c13, %c0_272, %c0_273] : memref<1x16x16x128xf32, #tpu.memory_space<vmem>>, vector<1x1x16x128xf32>
    %269 = vector.shape_cast %268 : vector<1x1x16x128xf32> to vector<16x128xf32>
    %270 = arith.mulf %269, %2 : vector<16x128xf32>
    %271 = arith.addf %270, %5 : vector<16x128xf32>
    %cst_274 = arith.constant 0.000000e+00 : f32
    %272 = vector.broadcast %cst_274 : f32 to vector<16x128xf32>
    %273 = arith.maximumf %271, %272 : vector<16x128xf32>
    %274 = arith.truncf %273 : vector<16x128xf32> to vector<16x128xbf16>
    %275 = tpu.concatenate %7, %274, %7 in 0 : vector<1x128xbf16>, vector<16x128xbf16>, vector<1x128xbf16> -> vector<18x128xbf16>
    %276 = vector.extract_strided_slice %275 {offsets = [0, 0], sizes = [16, 128], strides = [1, 1]} : vector<18x128xbf16> to vector<16x128xbf16>
    %277 = vector.extract_strided_slice %275 {offsets = [1, 0], sizes = [16, 128], strides = [1, 1]} : vector<18x128xbf16> to vector<16x128xbf16>
    %278 = vector.extract_strided_slice %275 {offsets = [2, 0], sizes = [16, 128], strides = [1, 1]} : vector<18x128xbf16> to vector<16x128xbf16>
    %c224 = arith.constant 224 : index
    %c0_275 = arith.constant 0 : index
    %279 = vector.load %arg7[%c224, %c0_275] : memref<256x1152xbf16, #tpu.memory_space<vmem>>, vector<16x128xbf16>
    tpu.vector_store %arg7[%c224, %c0_275], %276 {strides = array<i32>} : memref<256x1152xbf16, #tpu.memory_space<vmem>>, vector<16x128xbf16>,
    %c224_276 = arith.constant 224 : index
    %c128_277 = arith.constant 128 : index
    %280 = vector.load %arg7[%c224_276, %c128_277] : memref<256x1152xbf16, #tpu.memory_space<vmem>>, vector<16x128xbf16>
    tpu.vector_store %arg7[%c224_276, %c128_277], %277 {strides = array<i32>} : memref<256x1152xbf16, #tpu.memory_space<vmem>>, vector<16x128xbf16>,
    %c224_278 = arith.constant 224 : index
    %c256_279 = arith.constant 256 : index
    %281 = vector.load %arg7[%c224_278, %c256_279] : memref<256x1152xbf16, #tpu.memory_space<vmem>>, vector<16x128xbf16>
    tpu.vector_store %arg7[%c224_278, %c256_279], %278 {strides = array<i32>} : memref<256x1152xbf16, #tpu.memory_space<vmem>>, vector<16x128xbf16>,
    %c208_280 = arith.constant 208 : index
    %c384_281 = arith.constant 384 : index
    %282 = vector.load %arg7[%c208_280, %c384_281] : memref<256x1152xbf16, #tpu.memory_space<vmem>>, vector<16x128xbf16>
    tpu.vector_store %arg7[%c208_280, %c384_281], %276 {strides = array<i32>} : memref<256x1152xbf16, #tpu.memory_space<vmem>>, vector<16x128xbf16>,
    %c208_282 = arith.constant 208 : index
    %c512_283 = arith.constant 512 : index
    %283 = vector.load %arg7[%c208_282, %c512_283] : memref<256x1152xbf16, #tpu.memory_space<vmem>>, vector<16x128xbf16>
    tpu.vector_store %arg7[%c208_282, %c512_283], %277 {strides = array<i32>} : memref<256x1152xbf16, #tpu.memory_space<vmem>>, vector<16x128xbf16>,
    %c208_284 = arith.constant 208 : index
    %c640_285 = arith.constant 640 : index
    %284 = vector.load %arg7[%c208_284, %c640_285] : memref<256x1152xbf16, #tpu.memory_space<vmem>>, vector<16x128xbf16>
    tpu.vector_store %arg7[%c208_284, %c640_285], %278 {strides = array<i32>} : memref<256x1152xbf16, #tpu.memory_space<vmem>>, vector<16x128xbf16>,
    %c192_286 = arith.constant 192 : index
    %c768_287 = arith.constant 768 : index
    %285 = vector.load %arg7[%c192_286, %c768_287] : memref<256x1152xbf16, #tpu.memory_space<vmem>>, vector<16x128xbf16>
    tpu.vector_store %arg7[%c192_286, %c768_287], %276 {strides = array<i32>} : memref<256x1152xbf16, #tpu.memory_space<vmem>>, vector<16x128xbf16>,
    %c192_288 = arith.constant 192 : index
    %c896_289 = arith.constant 896 : index
    %286 = vector.load %arg7[%c192_288, %c896_289] : memref<256x1152xbf16, #tpu.memory_space<vmem>>, vector<16x128xbf16>
    tpu.vector_store %arg7[%c192_288, %c896_289], %277 {strides = array<i32>} : memref<256x1152xbf16, #tpu.memory_space<vmem>>, vector<16x128xbf16>,
    %c192_290 = arith.constant 192 : index
    %c1024_291 = arith.constant 1024 : index
    %287 = vector.load %arg7[%c192_290, %c1024_291] : memref<256x1152xbf16, #tpu.memory_space<vmem>>, vector<16x128xbf16>
    tpu.vector_store %arg7[%c192_290, %c1024_291], %278 {strides = array<i32>} : memref<256x1152xbf16, #tpu.memory_space<vmem>>, vector<16x128xbf16>,
    %c0_292 = arith.constant 0 : index
    %c14 = arith.constant 14 : index
    %c0_293 = arith.constant 0 : index
    %c0_294 = arith.constant 0 : index
    %288 = vector.load %arg1[%c0_292, %c14, %c0_293, %c0_294] : memref<1x16x16x128xf32, #tpu.memory_space<vmem>>, vector<1x1x16x128xf32>
    %289 = vector.shape_cast %288 : vector<1x1x16x128xf32> to vector<16x128xf32>
    %290 = arith.mulf %289, %2 : vector<16x128xf32>
    %291 = arith.addf %290, %5 : vector<16x128xf32>
    %cst_295 = arith.constant 0.000000e+00 : f32
    %292 = vector.broadcast %cst_295 : f32 to vector<16x128xf32>
    %293 = arith.maximumf %291, %292 : vector<16x128xf32>
    %294 = arith.truncf %293 : vector<16x128xf32> to vector<16x128xbf16>
    %295 = tpu.concatenate %7, %294, %7 in 0 : vector<1x128xbf16>, vector<16x128xbf16>, vector<1x128xbf16> -> vector<18x128xbf16>
    %296 = vector.extract_strided_slice %295 {offsets = [0, 0], sizes = [16, 128], strides = [1, 1]} : vector<18x128xbf16> to vector<16x128xbf16>
    %297 = vector.extract_strided_slice %295 {offsets = [1, 0], sizes = [16, 128], strides = [1, 1]} : vector<18x128xbf16> to vector<16x128xbf16>
    %298 = vector.extract_strided_slice %295 {offsets = [2, 0], sizes = [16, 128], strides = [1, 1]} : vector<18x128xbf16> to vector<16x128xbf16>
    %c240 = arith.constant 240 : index
    %c0_296 = arith.constant 0 : index
    %299 = vector.load %arg7[%c240, %c0_296] : memref<256x1152xbf16, #tpu.memory_space<vmem>>, vector<16x128xbf16>
    tpu.vector_store %arg7[%c240, %c0_296], %296 {strides = array<i32>} : memref<256x1152xbf16, #tpu.memory_space<vmem>>, vector<16x128xbf16>,
    %c240_297 = arith.constant 240 : index
    %c128_298 = arith.constant 128 : index
    %300 = vector.load %arg7[%c240_297, %c128_298] : memref<256x1152xbf16, #tpu.memory_space<vmem>>, vector<16x128xbf16>
    tpu.vector_store %arg7[%c240_297, %c128_298], %297 {strides = array<i32>} : memref<256x1152xbf16, #tpu.memory_space<vmem>>, vector<16x128xbf16>,
    %c240_299 = arith.constant 240 : index
    %c256_300 = arith.constant 256 : index
    %301 = vector.load %arg7[%c240_299, %c256_300] : memref<256x1152xbf16, #tpu.memory_space<vmem>>, vector<16x128xbf16>
    tpu.vector_store %arg7[%c240_299, %c256_300], %298 {strides = array<i32>} : memref<256x1152xbf16, #tpu.memory_space<vmem>>, vector<16x128xbf16>,
    %c224_301 = arith.constant 224 : index
    %c384_302 = arith.constant 384 : index
    %302 = vector.load %arg7[%c224_301, %c384_302] : memref<256x1152xbf16, #tpu.memory_space<vmem>>, vector<16x128xbf16>
    tpu.vector_store %arg7[%c224_301, %c384_302], %296 {strides = array<i32>} : memref<256x1152xbf16, #tpu.memory_space<vmem>>, vector<16x128xbf16>,
    %c224_303 = arith.constant 224 : index
    %c512_304 = arith.constant 512 : index
    %303 = vector.load %arg7[%c224_303, %c512_304] : memref<256x1152xbf16, #tpu.memory_space<vmem>>, vector<16x128xbf16>
    tpu.vector_store %arg7[%c224_303, %c512_304], %297 {strides = array<i32>} : memref<256x1152xbf16, #tpu.memory_space<vmem>>, vector<16x128xbf16>,
    %c224_305 = arith.constant 224 : index
    %c640_306 = arith.constant 640 : index
    %304 = vector.load %arg7[%c224_305, %c640_306] : memref<256x1152xbf16, #tpu.memory_space<vmem>>, vector<16x128xbf16>
    tpu.vector_store %arg7[%c224_305, %c640_306], %298 {strides = array<i32>} : memref<256x1152xbf16, #tpu.memory_space<vmem>>, vector<16x128xbf16>,
    %c208_307 = arith.constant 208 : index
    %c768_308 = arith.constant 768 : index
    %305 = vector.load %arg7[%c208_307, %c768_308] : memref<256x1152xbf16, #tpu.memory_space<vmem>>, vector<16x128xbf16>
    tpu.vector_store %arg7[%c208_307, %c768_308], %296 {strides = array<i32>} : memref<256x1152xbf16, #tpu.memory_space<vmem>>, vector<16x128xbf16>,
    %c208_309 = arith.constant 208 : index
    %c896_310 = arith.constant 896 : index
    %306 = vector.load %arg7[%c208_309, %c896_310] : memref<256x1152xbf16, #tpu.memory_space<vmem>>, vector<16x128xbf16>
    tpu.vector_store %arg7[%c208_309, %c896_310], %297 {strides = array<i32>} : memref<256x1152xbf16, #tpu.memory_space<vmem>>, vector<16x128xbf16>,
    %c208_311 = arith.constant 208 : index
    %c1024_312 = arith.constant 1024 : index
    %307 = vector.load %arg7[%c208_311, %c1024_312] : memref<256x1152xbf16, #tpu.memory_space<vmem>>, vector<16x128xbf16>
    tpu.vector_store %arg7[%c208_311, %c1024_312], %298 {strides = array<i32>} : memref<256x1152xbf16, #tpu.memory_space<vmem>>, vector<16x128xbf16>,
    %c0_313 = arith.constant 0 : index
    %c15 = arith.constant 15 : index
    %c0_314 = arith.constant 0 : index
    %c0_315 = arith.constant 0 : index
    %308 = vector.load %arg1[%c0_313, %c15, %c0_314, %c0_315] : memref<1x16x16x128xf32, #tpu.memory_space<vmem>>, vector<1x1x16x128xf32>
    %309 = vector.shape_cast %308 : vector<1x1x16x128xf32> to vector<16x128xf32>
    %310 = arith.mulf %309, %2 : vector<16x128xf32>
    %311 = arith.addf %310, %5 : vector<16x128xf32>
    %cst_316 = arith.constant 0.000000e+00 : f32
    %312 = vector.broadcast %cst_316 : f32 to vector<16x128xf32>
    %313 = arith.maximumf %311, %312 : vector<16x128xf32>
    %314 = arith.truncf %313 : vector<16x128xf32> to vector<16x128xbf16>
    %315 = tpu.concatenate %7, %314, %7 in 0 : vector<1x128xbf16>, vector<16x128xbf16>, vector<1x128xbf16> -> vector<18x128xbf16>
    %316 = vector.extract_strided_slice %315 {offsets = [0, 0], sizes = [16, 128], strides = [1, 1]} : vector<18x128xbf16> to vector<16x128xbf16>
    %317 = vector.extract_strided_slice %315 {offsets = [1, 0], sizes = [16, 128], strides = [1, 1]} : vector<18x128xbf16> to vector<16x128xbf16>
    %318 = vector.extract_strided_slice %315 {offsets = [2, 0], sizes = [16, 128], strides = [1, 1]} : vector<18x128xbf16> to vector<16x128xbf16>
    %c240_317 = arith.constant 240 : index
    %c384_318 = arith.constant 384 : index
    %319 = vector.load %arg7[%c240_317, %c384_318] : memref<256x1152xbf16, #tpu.memory_space<vmem>>, vector<16x128xbf16>
    tpu.vector_store %arg7[%c240_317, %c384_318], %316 {strides = array<i32>} : memref<256x1152xbf16, #tpu.memory_space<vmem>>, vector<16x128xbf16>,
    %c240_319 = arith.constant 240 : index
    %c512_320 = arith.constant 512 : index
    %320 = vector.load %arg7[%c240_319, %c512_320] : memref<256x1152xbf16, #tpu.memory_space<vmem>>, vector<16x128xbf16>
    tpu.vector_store %arg7[%c240_319, %c512_320], %317 {strides = array<i32>} : memref<256x1152xbf16, #tpu.memory_space<vmem>>, vector<16x128xbf16>,
    %c240_321 = arith.constant 240 : index
    %c640_322 = arith.constant 640 : index
    %321 = vector.load %arg7[%c240_321, %c640_322] : memref<256x1152xbf16, #tpu.memory_space<vmem>>, vector<16x128xbf16>
    tpu.vector_store %arg7[%c240_321, %c640_322], %318 {strides = array<i32>} : memref<256x1152xbf16, #tpu.memory_space<vmem>>, vector<16x128xbf16>,
    %c224_323 = arith.constant 224 : index
    %c768_324 = arith.constant 768 : index
    %322 = vector.load %arg7[%c224_323, %c768_324] : memref<256x1152xbf16, #tpu.memory_space<vmem>>, vector<16x128xbf16>
    tpu.vector_store %arg7[%c224_323, %c768_324], %316 {strides = array<i32>} : memref<256x1152xbf16, #tpu.memory_space<vmem>>, vector<16x128xbf16>,
    %c224_325 = arith.constant 224 : index
    %c896_326 = arith.constant 896 : index
    %323 = vector.load %arg7[%c224_325, %c896_326] : memref<256x1152xbf16, #tpu.memory_space<vmem>>, vector<16x128xbf16>
    tpu.vector_store %arg7[%c224_325, %c896_326], %317 {strides = array<i32>} : memref<256x1152xbf16, #tpu.memory_space<vmem>>, vector<16x128xbf16>,
    %c224_327 = arith.constant 224 : index
    %c1024_328 = arith.constant 1024 : index
    %324 = vector.load %arg7[%c224_327, %c1024_328] : memref<256x1152xbf16, #tpu.memory_space<vmem>>, vector<16x128xbf16>
    tpu.vector_store %arg7[%c224_327, %c1024_328], %318 {strides = array<i32>} : memref<256x1152xbf16, #tpu.memory_space<vmem>>, vector<16x128xbf16>,
    %c240_329 = arith.constant 240 : index
    %c768_330 = arith.constant 768 : index
    %325 = vector.load %arg7[%c240_329, %c768_330] : memref<256x1152xbf16, #tpu.memory_space<vmem>>, vector<16x128xbf16>
    tpu.vector_store %arg7[%c240_329, %c768_330], %6 {strides = array<i32>} : memref<256x1152xbf16, #tpu.memory_space<vmem>>, vector<16x128xbf16>,
    %c240_331 = arith.constant 240 : index
    %c896_332 = arith.constant 896 : index
    %326 = vector.load %arg7[%c240_331, %c896_332] : memref<256x1152xbf16, #tpu.memory_space<vmem>>, vector<16x128xbf16>
    tpu.vector_store %arg7[%c240_331, %c896_332], %6 {strides = array<i32>} : memref<256x1152xbf16, #tpu.memory_space<vmem>>, vector<16x128xbf16>,
    %c240_333 = arith.constant 240 : index
    %c1024_334 = arith.constant 1024 : index
    %327 = vector.load %arg7[%c240_333, %c1024_334] : memref<256x1152xbf16, #tpu.memory_space<vmem>>, vector<16x128xbf16>
    tpu.vector_store %arg7[%c240_333, %c1024_334], %6 {strides = array<i32>} : memref<256x1152xbf16, #tpu.memory_space<vmem>>, vector<16x128xbf16>,
    %c0_335 = arith.constant 0 : index
    %c0_336 = arith.constant 0 : index
    %328 = vector.load %arg7[%c0_335, %c0_336] : memref<256x1152xbf16, #tpu.memory_space<vmem>>, vector<256x1152xbf16>
    %c0_337 = arith.constant 0 : index
    %c0_338 = arith.constant 0 : index
    %329 = vector.load %arg4[%c0_337, %c0_338] : memref<1152x256xbf16, #tpu.memory_space<vmem>>, vector<1152x256xbf16>
    %cst_339 = arith.constant dense<0.000000e+00> : vector<256x256xf32>
    %330 = tpu.matmul %328, %329, %cst_339 {dimension_numbers = #tpu.dot_dimension_numbers<[1], [0], [0], [1], [0, 0, 1, 1], [], []>} : vector<256x1152xbf16>, vector<1152x256xbf16>, vector<256x256xf32> -> vector<256x256xf32>
    %331 = vector.extract_strided_slice %330 {offsets = [0, 0], sizes = [256, 128], strides = [1, 1]} : vector<256x256xf32> to vector<256x128xf32>
    %332 = arith.truncf %331 : vector<256x128xf32> to vector<256x128xbf16>
    %c0_340 = arith.constant 0 : index
    %c0_341 = arith.constant 0 : index
    %c0_342 = arith.constant 0 : index
    %333 = vector.load %arg5[%c0_340, %c0_341, %c0_342] : memref<1x256x128xbf16, #tpu.memory_space<vmem>>, vector<1x256x128xbf16>
    %334 = vector.shape_cast %333 : vector<1x256x128xbf16> to vector<256x128xbf16>
    %335 = vector.shape_cast %332 : vector<256x128xbf16> to vector<1x256x128xbf16>
    tpu.vector_store %arg5[%c0_340, %c0_341, %c0_342], %335 {strides = array<i32>} : memref<1x256x128xbf16, #tpu.memory_space<vmem>>, vector<1x256x128xbf16>,
    %336 = vector.extract_strided_slice %330 {offsets = [0, 128], sizes = [256, 128], strides = [1, 1]} : vector<256x256xf32> to vector<256x128xf32>
    %337 = arith.truncf %336 : vector<256x128xf32> to vector<256x128xbf16>
    %c0_343 = arith.constant 0 : index
    %c0_344 = arith.constant 0 : index
    %c0_345 = arith.constant 0 : index
    %338 = vector.load %arg6[%c0_343, %c0_344, %c0_345] : memref<1x256x128xbf16, #tpu.memory_space<vmem>>, vector<1x256x128xbf16>
    %339 = vector.shape_cast %338 : vector<1x256x128xbf16> to vector<256x128xbf16>
    %340 = vector.shape_cast %337 : vector<256x128xbf16> to vector<1x256x128xbf16>
    tpu.vector_store %arg6[%c0_343, %c0_344, %c0_345], %340 {strides = array<i32>} : memref<1x256x128xbf16, #tpu.memory_space<vmem>>, vector<1x256x128xbf16>,
    return
  }
  func.func @transform_0(%arg0: i32) -> (i32, i32, i32, i32) {
    %c0_i32 = arith.constant 0 : i32
    %c0_i32_0 = arith.constant 0 : i32
    %c0_i32_1 = arith.constant 0 : i32
    %c0_i32_2 = arith.constant 0 : i32
    return %arg0, %c0_i32, %c0_i32_0, %c0_i32_1 : i32, i32, i32, i32
  }
  func.func @transform_1(%arg0: i32) -> (i32, i32) {
    %c0_i32 = arith.constant 0 : i32
    %c0_i32_0 = arith.constant 0 : i32
    %c0_i32_1 = arith.constant 0 : i32
    return %c0_i32, %c0_i32_0 : i32, i32
  }
  func.func @transform_2(%arg0: i32) -> (i32, i32) {
    %c0_i32 = arith.constant 0 : i32
    %c0_i32_0 = arith.constant 0 : i32
    %c0_i32_1 = arith.constant 0 : i32
    return %c0_i32, %c0_i32_0 : i32, i32
  }
  func.func @transform_3(%arg0: i32) -> (i32, i32) {
    %c0_i32 = arith.constant 0 : i32
    %c0_i32_0 = arith.constant 0 : i32
    %c0_i32_1 = arith.constant 0 : i32
    return %c0_i32, %c0_i32_0 : i32, i32
  }
  func.func @transform_4(%arg0: i32) -> (i32, i32, i32) {
    %c0_i32 = arith.constant 0 : i32
    %c0_i32_0 = arith.constant 0 : i32
    %c0_i32_1 = arith.constant 0 : i32
    return %arg0, %c0_i32, %c0_i32_0 : i32, i32, i32
  }
  func.func @transform_5(%arg0: i32) -> (i32, i32, i32) {
    %c0_i32 = arith.constant 0 : i32
    %c0_i32_0 = arith.constant 0 : i32
    %c0_i32_1 = arith.constant 0 : i32
    return %arg0, %c0_i32, %c0_i32_0 : i32, i32, i32
  }
}

module attributes {stable_mosaic.version = 11 : i64} {
  func.func @kernel(%arg0: i32, %arg1: memref<1x16x16x128xbf16, #tpu.memory_space<vmem>>, %arg2: memref<1x128xf32, #tpu.memory_space<vmem>>, %arg3: memref<1x128xf32, #tpu.memory_space<vmem>>, %arg4: memref<1152x128xbf16, #tpu.memory_space<vmem>>, %arg5: memref<1x256x128xbf16, #tpu.memory_space<vmem>>, %arg6: memref<1x256x128xf32, #tpu.memory_space<vmem>>, %arg7: memref<256x1152xbf16, #tpu.memory_space<vmem>>) attributes {dimension_semantics = [#tpu.dimension_semantics<parallel>], iteration_bounds = array<i64: 2>, scalar_prefetch = 0 : i64, scratch_operands = 1 : i64, tpu.core_type = #tpu.core_type<tc>, window_params = [{transform_indices = @transform_0, window_bounds = array<i64: 1, 16, 16, 128>}, {pipeline_mode = #tpu.pipeline_mode<synchronous>, transform_indices = @transform_1, window_bounds = array<i64: 1, 128>}, {pipeline_mode = #tpu.pipeline_mode<synchronous>, transform_indices = @transform_2, window_bounds = array<i64: 1, 128>}, {pipeline_mode = #tpu.pipeline_mode<synchronous>, transform_indices = @transform_3, window_bounds = array<i64: 1152, 128>}, {transform_indices = @transform_4, window_bounds = array<i64: 1, 256, 128>}, {transform_indices = @transform_5, window_bounds = array<i64: 1, 256, 128>}]} {
    %c0 = arith.constant 0 : index
    %c0_0 = arith.constant 0 : index
    %0 = vector.load %arg2[%c0, %c0_0] : memref<1x128xf32, #tpu.memory_space<vmem>>, vector<1x128xf32>
    %1 = vector.shape_cast %0 : vector<1x128xf32> to vector<1x128xf32>
    %2 = vector.broadcast %1 : vector<1x128xf32> to vector<16x128xf32>
    %c0_1 = arith.constant 0 : index
    %c0_2 = arith.constant 0 : index
    %3 = vector.load %arg3[%c0_1, %c0_2] : memref<1x128xf32, #tpu.memory_space<vmem>>, vector<1x128xf32>
    %4 = vector.shape_cast %3 : vector<1x128xf32> to vector<1x128xf32>
    %5 = vector.broadcast %4 : vector<1x128xf32> to vector<16x128xf32>
    %cst = arith.constant 0.000000e+00 : bf16
    %6 = vector.broadcast %cst : bf16 to vector<16x128xbf16>
    %cst_3 = arith.constant 0.000000e+00 : bf16
    %7 = vector.broadcast %cst_3 : bf16 to vector<1x128xbf16>
    %c0_4 = arith.constant 0 : index
    %c0_5 = arith.constant 0 : index
    %8 = vector.load %arg7[%c0_4, %c0_5] : memref<256x1152xbf16, #tpu.memory_space<vmem>>, vector<16x128xbf16>
    tpu.vector_store %arg7[%c0_4, %c0_5], %6 {strides = array<i32>} : memref<256x1152xbf16, #tpu.memory_space<vmem>>, vector<16x128xbf16>,
    %c0_6 = arith.constant 0 : index
    %c128 = arith.constant 128 : index
    %9 = vector.load %arg7[%c0_6, %c128] : memref<256x1152xbf16, #tpu.memory_space<vmem>>, vector<16x128xbf16>
    tpu.vector_store %arg7[%c0_6, %c128], %6 {strides = array<i32>} : memref<256x1152xbf16, #tpu.memory_space<vmem>>, vector<16x128xbf16>,
    %c0_7 = arith.constant 0 : index
    %c256 = arith.constant 256 : index
    %10 = vector.load %arg7[%c0_7, %c256] : memref<256x1152xbf16, #tpu.memory_space<vmem>>, vector<16x128xbf16>
    tpu.vector_store %arg7[%c0_7, %c256], %6 {strides = array<i32>} : memref<256x1152xbf16, #tpu.memory_space<vmem>>, vector<16x128xbf16>,
    %c0_8 = arith.constant 0 : index
    %c0_9 = arith.constant 0 : index
    %c0_10 = arith.constant 0 : index
    %c0_11 = arith.constant 0 : index
    %11 = vector.load %arg1[%c0_8, %c0_9, %c0_10, %c0_11] : memref<1x16x16x128xbf16, #tpu.memory_space<vmem>>, vector<1x1x16x128xbf16>
    %12 = vector.shape_cast %11 : vector<1x1x16x128xbf16> to vector<16x128xbf16>
    %13 = arith.extf %12 : vector<16x128xbf16> to vector<16x128xf32>
    %14 = arith.mulf %13, %2 : vector<16x128xf32>
    %15 = arith.addf %14, %5 : vector<16x128xf32>
    %cst_12 = arith.constant 0.000000e+00 : f32
    %16 = vector.broadcast %cst_12 : f32 to vector<16x128xf32>
    %17 = arith.maximumf %15, %16 : vector<16x128xf32>
    %18 = arith.truncf %17 : vector<16x128xf32> to vector<16x128xbf16>
    %19 = tpu.concatenate %7, %18, %7 in 0 : vector<1x128xbf16>, vector<16x128xbf16>, vector<1x128xbf16> -> vector<18x128xbf16>
    %20 = vector.extract_strided_slice %19 {offsets = [0, 0], sizes = [16, 128], strides = [1, 1]} : vector<18x128xbf16> to vector<16x128xbf16>
    %21 = vector.extract_strided_slice %19 {offsets = [1, 0], sizes = [16, 128], strides = [1, 1]} : vector<18x128xbf16> to vector<16x128xbf16>
    %22 = vector.extract_strided_slice %19 {offsets = [2, 0], sizes = [16, 128], strides = [1, 1]} : vector<18x128xbf16> to vector<16x128xbf16>
    %c16 = arith.constant 16 : index
    %c0_13 = arith.constant 0 : index
    %23 = vector.load %arg7[%c16, %c0_13] : memref<256x1152xbf16, #tpu.memory_space<vmem>>, vector<16x128xbf16>
    tpu.vector_store %arg7[%c16, %c0_13], %20 {strides = array<i32>} : memref<256x1152xbf16, #tpu.memory_space<vmem>>, vector<16x128xbf16>,
    %c16_14 = arith.constant 16 : index
    %c128_15 = arith.constant 128 : index
    %24 = vector.load %arg7[%c16_14, %c128_15] : memref<256x1152xbf16, #tpu.memory_space<vmem>>, vector<16x128xbf16>
    tpu.vector_store %arg7[%c16_14, %c128_15], %21 {strides = array<i32>} : memref<256x1152xbf16, #tpu.memory_space<vmem>>, vector<16x128xbf16>,
    %c16_16 = arith.constant 16 : index
    %c256_17 = arith.constant 256 : index
    %25 = vector.load %arg7[%c16_16, %c256_17] : memref<256x1152xbf16, #tpu.memory_space<vmem>>, vector<16x128xbf16>
    tpu.vector_store %arg7[%c16_16, %c256_17], %22 {strides = array<i32>} : memref<256x1152xbf16, #tpu.memory_space<vmem>>, vector<16x128xbf16>,
    %c0_18 = arith.constant 0 : index
    %c384 = arith.constant 384 : index
    %26 = vector.load %arg7[%c0_18, %c384] : memref<256x1152xbf16, #tpu.memory_space<vmem>>, vector<16x128xbf16>
    tpu.vector_store %arg7[%c0_18, %c384], %20 {strides = array<i32>} : memref<256x1152xbf16, #tpu.memory_space<vmem>>, vector<16x128xbf16>,
    %c0_19 = arith.constant 0 : index
    %c512 = arith.constant 512 : index
    %27 = vector.load %arg7[%c0_19, %c512] : memref<256x1152xbf16, #tpu.memory_space<vmem>>, vector<16x128xbf16>
    tpu.vector_store %arg7[%c0_19, %c512], %21 {strides = array<i32>} : memref<256x1152xbf16, #tpu.memory_space<vmem>>, vector<16x128xbf16>,
    %c0_20 = arith.constant 0 : index
    %c640 = arith.constant 640 : index
    %28 = vector.load %arg7[%c0_20, %c640] : memref<256x1152xbf16, #tpu.memory_space<vmem>>, vector<16x128xbf16>
    tpu.vector_store %arg7[%c0_20, %c640], %22 {strides = array<i32>} : memref<256x1152xbf16, #tpu.memory_space<vmem>>, vector<16x128xbf16>,
    %c0_21 = arith.constant 0 : index
    %c1 = arith.constant 1 : index
    %c0_22 = arith.constant 0 : index
    %c0_23 = arith.constant 0 : index
    %29 = vector.load %arg1[%c0_21, %c1, %c0_22, %c0_23] : memref<1x16x16x128xbf16, #tpu.memory_space<vmem>>, vector<1x1x16x128xbf16>
    %30 = vector.shape_cast %29 : vector<1x1x16x128xbf16> to vector<16x128xbf16>
    %31 = arith.extf %30 : vector<16x128xbf16> to vector<16x128xf32>
    %32 = arith.mulf %31, %2 : vector<16x128xf32>
    %33 = arith.addf %32, %5 : vector<16x128xf32>
    %cst_24 = arith.constant 0.000000e+00 : f32
    %34 = vector.broadcast %cst_24 : f32 to vector<16x128xf32>
    %35 = arith.maximumf %33, %34 : vector<16x128xf32>
    %36 = arith.truncf %35 : vector<16x128xf32> to vector<16x128xbf16>
    %37 = tpu.concatenate %7, %36, %7 in 0 : vector<1x128xbf16>, vector<16x128xbf16>, vector<1x128xbf16> -> vector<18x128xbf16>
    %38 = vector.extract_strided_slice %37 {offsets = [0, 0], sizes = [16, 128], strides = [1, 1]} : vector<18x128xbf16> to vector<16x128xbf16>
    %39 = vector.extract_strided_slice %37 {offsets = [1, 0], sizes = [16, 128], strides = [1, 1]} : vector<18x128xbf16> to vector<16x128xbf16>
    %40 = vector.extract_strided_slice %37 {offsets = [2, 0], sizes = [16, 128], strides = [1, 1]} : vector<18x128xbf16> to vector<16x128xbf16>
    %c32 = arith.constant 32 : index
    %c0_25 = arith.constant 0 : index
    %41 = vector.load %arg7[%c32, %c0_25] : memref<256x1152xbf16, #tpu.memory_space<vmem>>, vector<16x128xbf16>
    tpu.vector_store %arg7[%c32, %c0_25], %38 {strides = array<i32>} : memref<256x1152xbf16, #tpu.memory_space<vmem>>, vector<16x128xbf16>,
    %c32_26 = arith.constant 32 : index
    %c128_27 = arith.constant 128 : index
    %42 = vector.load %arg7[%c32_26, %c128_27] : memref<256x1152xbf16, #tpu.memory_space<vmem>>, vector<16x128xbf16>
    tpu.vector_store %arg7[%c32_26, %c128_27], %39 {strides = array<i32>} : memref<256x1152xbf16, #tpu.memory_space<vmem>>, vector<16x128xbf16>,
    %c32_28 = arith.constant 32 : index
    %c256_29 = arith.constant 256 : index
    %43 = vector.load %arg7[%c32_28, %c256_29] : memref<256x1152xbf16, #tpu.memory_space<vmem>>, vector<16x128xbf16>
    tpu.vector_store %arg7[%c32_28, %c256_29], %40 {strides = array<i32>} : memref<256x1152xbf16, #tpu.memory_space<vmem>>, vector<16x128xbf16>,
    %c16_30 = arith.constant 16 : index
    %c384_31 = arith.constant 384 : index
    %44 = vector.load %arg7[%c16_30, %c384_31] : memref<256x1152xbf16, #tpu.memory_space<vmem>>, vector<16x128xbf16>
    tpu.vector_store %arg7[%c16_30, %c384_31], %38 {strides = array<i32>} : memref<256x1152xbf16, #tpu.memory_space<vmem>>, vector<16x128xbf16>,
    %c16_32 = arith.constant 16 : index
    %c512_33 = arith.constant 512 : index
    %45 = vector.load %arg7[%c16_32, %c512_33] : memref<256x1152xbf16, #tpu.memory_space<vmem>>, vector<16x128xbf16>
    tpu.vector_store %arg7[%c16_32, %c512_33], %39 {strides = array<i32>} : memref<256x1152xbf16, #tpu.memory_space<vmem>>, vector<16x128xbf16>,
    %c16_34 = arith.constant 16 : index
    %c640_35 = arith.constant 640 : index
    %46 = vector.load %arg7[%c16_34, %c640_35] : memref<256x1152xbf16, #tpu.memory_space<vmem>>, vector<16x128xbf16>
    tpu.vector_store %arg7[%c16_34, %c640_35], %40 {strides = array<i32>} : memref<256x1152xbf16, #tpu.memory_space<vmem>>, vector<16x128xbf16>,
    %c0_36 = arith.constant 0 : index
    %c768 = arith.constant 768 : index
    %47 = vector.load %arg7[%c0_36, %c768] : memref<256x1152xbf16, #tpu.memory_space<vmem>>, vector<16x128xbf16>
    tpu.vector_store %arg7[%c0_36, %c768], %38 {strides = array<i32>} : memref<256x1152xbf16, #tpu.memory_space<vmem>>, vector<16x128xbf16>,
    %c0_37 = arith.constant 0 : index
    %c896 = arith.constant 896 : index
    %48 = vector.load %arg7[%c0_37, %c896] : memref<256x1152xbf16, #tpu.memory_space<vmem>>, vector<16x128xbf16>
    tpu.vector_store %arg7[%c0_37, %c896], %39 {strides = array<i32>} : memref<256x1152xbf16, #tpu.memory_space<vmem>>, vector<16x128xbf16>,
    %c0_38 = arith.constant 0 : index
    %c1024 = arith.constant 1024 : index
    %49 = vector.load %arg7[%c0_38, %c1024] : memref<256x1152xbf16, #tpu.memory_space<vmem>>, vector<16x128xbf16>
    tpu.vector_store %arg7[%c0_38, %c1024], %40 {strides = array<i32>} : memref<256x1152xbf16, #tpu.memory_space<vmem>>, vector<16x128xbf16>,
    %c0_39 = arith.constant 0 : index
    %c2 = arith.constant 2 : index
    %c0_40 = arith.constant 0 : index
    %c0_41 = arith.constant 0 : index
    %50 = vector.load %arg1[%c0_39, %c2, %c0_40, %c0_41] : memref<1x16x16x128xbf16, #tpu.memory_space<vmem>>, vector<1x1x16x128xbf16>
    %51 = vector.shape_cast %50 : vector<1x1x16x128xbf16> to vector<16x128xbf16>
    %52 = arith.extf %51 : vector<16x128xbf16> to vector<16x128xf32>
    %53 = arith.mulf %52, %2 : vector<16x128xf32>
    %54 = arith.addf %53, %5 : vector<16x128xf32>
    %cst_42 = arith.constant 0.000000e+00 : f32
    %55 = vector.broadcast %cst_42 : f32 to vector<16x128xf32>
    %56 = arith.maximumf %54, %55 : vector<16x128xf32>
    %57 = arith.truncf %56 : vector<16x128xf32> to vector<16x128xbf16>
    %58 = tpu.concatenate %7, %57, %7 in 0 : vector<1x128xbf16>, vector<16x128xbf16>, vector<1x128xbf16> -> vector<18x128xbf16>
    %59 = vector.extract_strided_slice %58 {offsets = [0, 0], sizes = [16, 128], strides = [1, 1]} : vector<18x128xbf16> to vector<16x128xbf16>
    %60 = vector.extract_strided_slice %58 {offsets = [1, 0], sizes = [16, 128], strides = [1, 1]} : vector<18x128xbf16> to vector<16x128xbf16>
    %61 = vector.extract_strided_slice %58 {offsets = [2, 0], sizes = [16, 128], strides = [1, 1]} : vector<18x128xbf16> to vector<16x128xbf16>
    %c48 = arith.constant 48 : index
    %c0_43 = arith.constant 0 : index
    %62 = vector.load %arg7[%c48, %c0_43] : memref<256x1152xbf16, #tpu.memory_space<vmem>>, vector<16x128xbf16>
    tpu.vector_store %arg7[%c48, %c0_43], %59 {strides = array<i32>} : memref<256x1152xbf16, #tpu.memory_space<vmem>>, vector<16x128xbf16>,
    %c48_44 = arith.constant 48 : index
    %c128_45 = arith.constant 128 : index
    %63 = vector.load %arg7[%c48_44, %c128_45] : memref<256x1152xbf16, #tpu.memory_space<vmem>>, vector<16x128xbf16>
    tpu.vector_store %arg7[%c48_44, %c128_45], %60 {strides = array<i32>} : memref<256x1152xbf16, #tpu.memory_space<vmem>>, vector<16x128xbf16>,
    %c48_46 = arith.constant 48 : index
    %c256_47 = arith.constant 256 : index
    %64 = vector.load %arg7[%c48_46, %c256_47] : memref<256x1152xbf16, #tpu.memory_space<vmem>>, vector<16x128xbf16>
    tpu.vector_store %arg7[%c48_46, %c256_47], %61 {strides = array<i32>} : memref<256x1152xbf16, #tpu.memory_space<vmem>>, vector<16x128xbf16>,
    %c32_48 = arith.constant 32 : index
    %c384_49 = arith.constant 384 : index
    %65 = vector.load %arg7[%c32_48, %c384_49] : memref<256x1152xbf16, #tpu.memory_space<vmem>>, vector<16x128xbf16>
    tpu.vector_store %arg7[%c32_48, %c384_49], %59 {strides = array<i32>} : memref<256x1152xbf16, #tpu.memory_space<vmem>>, vector<16x128xbf16>,
    %c32_50 = arith.constant 32 : index
    %c512_51 = arith.constant 512 : index
    %66 = vector.load %arg7[%c32_50, %c512_51] : memref<256x1152xbf16, #tpu.memory_space<vmem>>, vector<16x128xbf16>
    tpu.vector_store %arg7[%c32_50, %c512_51], %60 {strides = array<i32>} : memref<256x1152xbf16, #tpu.memory_space<vmem>>, vector<16x128xbf16>,
    %c32_52 = arith.constant 32 : index
    %c640_53 = arith.constant 640 : index
    %67 = vector.load %arg7[%c32_52, %c640_53] : memref<256x1152xbf16, #tpu.memory_space<vmem>>, vector<16x128xbf16>
    tpu.vector_store %arg7[%c32_52, %c640_53], %61 {strides = array<i32>} : memref<256x1152xbf16, #tpu.memory_space<vmem>>, vector<16x128xbf16>,
    %c16_54 = arith.constant 16 : index
    %c768_55 = arith.constant 768 : index
    %68 = vector.load %arg7[%c16_54, %c768_55] : memref<256x1152xbf16, #tpu.memory_space<vmem>>, vector<16x128xbf16>
    tpu.vector_store %arg7[%c16_54, %c768_55], %59 {strides = array<i32>} : memref<256x1152xbf16, #tpu.memory_space<vmem>>, vector<16x128xbf16>,
    %c16_56 = arith.constant 16 : index
    %c896_57 = arith.constant 896 : index
    %69 = vector.load %arg7[%c16_56, %c896_57] : memref<256x1152xbf16, #tpu.memory_space<vmem>>, vector<16x128xbf16>
    tpu.vector_store %arg7[%c16_56, %c896_57], %60 {strides = array<i32>} : memref<256x1152xbf16, #tpu.memory_space<vmem>>, vector<16x128xbf16>,
    %c16_58 = arith.constant 16 : index
    %c1024_59 = arith.constant 1024 : index
    %70 = vector.load %arg7[%c16_58, %c1024_59] : memref<256x1152xbf16, #tpu.memory_space<vmem>>, vector<16x128xbf16>
    tpu.vector_store %arg7[%c16_58, %c1024_59], %61 {strides = array<i32>} : memref<256x1152xbf16, #tpu.memory_space<vmem>>, vector<16x128xbf16>,
    %c0_60 = arith.constant 0 : index
    %c3 = arith.constant 3 : index
    %c0_61 = arith.constant 0 : index
    %c0_62 = arith.constant 0 : index
    %71 = vector.load %arg1[%c0_60, %c3, %c0_61, %c0_62] : memref<1x16x16x128xbf16, #tpu.memory_space<vmem>>, vector<1x1x16x128xbf16>
    %72 = vector.shape_cast %71 : vector<1x1x16x128xbf16> to vector<16x128xbf16>
    %73 = arith.extf %72 : vector<16x128xbf16> to vector<16x128xf32>
    %74 = arith.mulf %73, %2 : vector<16x128xf32>
    %75 = arith.addf %74, %5 : vector<16x128xf32>
    %cst_63 = arith.constant 0.000000e+00 : f32
    %76 = vector.broadcast %cst_63 : f32 to vector<16x128xf32>
    %77 = arith.maximumf %75, %76 : vector<16x128xf32>
    %78 = arith.truncf %77 : vector<16x128xf32> to vector<16x128xbf16>
    %79 = tpu.concatenate %7, %78, %7 in 0 : vector<1x128xbf16>, vector<16x128xbf16>, vector<1x128xbf16> -> vector<18x128xbf16>
    %80 = vector.extract_strided_slice %79 {offsets = [0, 0], sizes = [16, 128], strides = [1, 1]} : vector<18x128xbf16> to vector<16x128xbf16>
    %81 = vector.extract_strided_slice %79 {offsets = [1, 0], sizes = [16, 128], strides = [1, 1]} : vector<18x128xbf16> to vector<16x128xbf16>
    %82 = vector.extract_strided_slice %79 {offsets = [2, 0], sizes = [16, 128], strides = [1, 1]} : vector<18x128xbf16> to vector<16x128xbf16>
    %c64 = arith.constant 64 : index
    %c0_64 = arith.constant 0 : index
    %83 = vector.load %arg7[%c64, %c0_64] : memref<256x1152xbf16, #tpu.memory_space<vmem>>, vector<16x128xbf16>
    tpu.vector_store %arg7[%c64, %c0_64], %80 {strides = array<i32>} : memref<256x1152xbf16, #tpu.memory_space<vmem>>, vector<16x128xbf16>,
    %c64_65 = arith.constant 64 : index
    %c128_66 = arith.constant 128 : index
    %84 = vector.load %arg7[%c64_65, %c128_66] : memref<256x1152xbf16, #tpu.memory_space<vmem>>, vector<16x128xbf16>
    tpu.vector_store %arg7[%c64_65, %c128_66], %81 {strides = array<i32>} : memref<256x1152xbf16, #tpu.memory_space<vmem>>, vector<16x128xbf16>,
    %c64_67 = arith.constant 64 : index
    %c256_68 = arith.constant 256 : index
    %85 = vector.load %arg7[%c64_67, %c256_68] : memref<256x1152xbf16, #tpu.memory_space<vmem>>, vector<16x128xbf16>
    tpu.vector_store %arg7[%c64_67, %c256_68], %82 {strides = array<i32>} : memref<256x1152xbf16, #tpu.memory_space<vmem>>, vector<16x128xbf16>,
    %c48_69 = arith.constant 48 : index
    %c384_70 = arith.constant 384 : index
    %86 = vector.load %arg7[%c48_69, %c384_70] : memref<256x1152xbf16, #tpu.memory_space<vmem>>, vector<16x128xbf16>
    tpu.vector_store %arg7[%c48_69, %c384_70], %80 {strides = array<i32>} : memref<256x1152xbf16, #tpu.memory_space<vmem>>, vector<16x128xbf16>,
    %c48_71 = arith.constant 48 : index
    %c512_72 = arith.constant 512 : index
    %87 = vector.load %arg7[%c48_71, %c512_72] : memref<256x1152xbf16, #tpu.memory_space<vmem>>, vector<16x128xbf16>
    tpu.vector_store %arg7[%c48_71, %c512_72], %81 {strides = array<i32>} : memref<256x1152xbf16, #tpu.memory_space<vmem>>, vector<16x128xbf16>,
    %c48_73 = arith.constant 48 : index
    %c640_74 = arith.constant 640 : index
    %88 = vector.load %arg7[%c48_73, %c640_74] : memref<256x1152xbf16, #tpu.memory_space<vmem>>, vector<16x128xbf16>
    tpu.vector_store %arg7[%c48_73, %c640_74], %82 {strides = array<i32>} : memref<256x1152xbf16, #tpu.memory_space<vmem>>, vector<16x128xbf16>,
    %c32_75 = arith.constant 32 : index
    %c768_76 = arith.constant 768 : index
    %89 = vector.load %arg7[%c32_75, %c768_76] : memref<256x1152xbf16, #tpu.memory_space<vmem>>, vector<16x128xbf16>
    tpu.vector_store %arg7[%c32_75, %c768_76], %80 {strides = array<i32>} : memref<256x1152xbf16, #tpu.memory_space<vmem>>, vector<16x128xbf16>,
    %c32_77 = arith.constant 32 : index
    %c896_78 = arith.constant 896 : index
    %90 = vector.load %arg7[%c32_77, %c896_78] : memref<256x1152xbf16, #tpu.memory_space<vmem>>, vector<16x128xbf16>
    tpu.vector_store %arg7[%c32_77, %c896_78], %81 {strides = array<i32>} : memref<256x1152xbf16, #tpu.memory_space<vmem>>, vector<16x128xbf16>,
    %c32_79 = arith.constant 32 : index
    %c1024_80 = arith.constant 1024 : index
    %91 = vector.load %arg7[%c32_79, %c1024_80] : memref<256x1152xbf16, #tpu.memory_space<vmem>>, vector<16x128xbf16>
    tpu.vector_store %arg7[%c32_79, %c1024_80], %82 {strides = array<i32>} : memref<256x1152xbf16, #tpu.memory_space<vmem>>, vector<16x128xbf16>,
    %c0_81 = arith.constant 0 : index
    %c4 = arith.constant 4 : index
    %c0_82 = arith.constant 0 : index
    %c0_83 = arith.constant 0 : index
    %92 = vector.load %arg1[%c0_81, %c4, %c0_82, %c0_83] : memref<1x16x16x128xbf16, #tpu.memory_space<vmem>>, vector<1x1x16x128xbf16>
    %93 = vector.shape_cast %92 : vector<1x1x16x128xbf16> to vector<16x128xbf16>
    %94 = arith.extf %93 : vector<16x128xbf16> to vector<16x128xf32>
    %95 = arith.mulf %94, %2 : vector<16x128xf32>
    %96 = arith.addf %95, %5 : vector<16x128xf32>
    %cst_84 = arith.constant 0.000000e+00 : f32
    %97 = vector.broadcast %cst_84 : f32 to vector<16x128xf32>
    %98 = arith.maximumf %96, %97 : vector<16x128xf32>
    %99 = arith.truncf %98 : vector<16x128xf32> to vector<16x128xbf16>
    %100 = tpu.concatenate %7, %99, %7 in 0 : vector<1x128xbf16>, vector<16x128xbf16>, vector<1x128xbf16> -> vector<18x128xbf16>
    %101 = vector.extract_strided_slice %100 {offsets = [0, 0], sizes = [16, 128], strides = [1, 1]} : vector<18x128xbf16> to vector<16x128xbf16>
    %102 = vector.extract_strided_slice %100 {offsets = [1, 0], sizes = [16, 128], strides = [1, 1]} : vector<18x128xbf16> to vector<16x128xbf16>
    %103 = vector.extract_strided_slice %100 {offsets = [2, 0], sizes = [16, 128], strides = [1, 1]} : vector<18x128xbf16> to vector<16x128xbf16>
    %c80 = arith.constant 80 : index
    %c0_85 = arith.constant 0 : index
    %104 = vector.load %arg7[%c80, %c0_85] : memref<256x1152xbf16, #tpu.memory_space<vmem>>, vector<16x128xbf16>
    tpu.vector_store %arg7[%c80, %c0_85], %101 {strides = array<i32>} : memref<256x1152xbf16, #tpu.memory_space<vmem>>, vector<16x128xbf16>,
    %c80_86 = arith.constant 80 : index
    %c128_87 = arith.constant 128 : index
    %105 = vector.load %arg7[%c80_86, %c128_87] : memref<256x1152xbf16, #tpu.memory_space<vmem>>, vector<16x128xbf16>
    tpu.vector_store %arg7[%c80_86, %c128_87], %102 {strides = array<i32>} : memref<256x1152xbf16, #tpu.memory_space<vmem>>, vector<16x128xbf16>,
    %c80_88 = arith.constant 80 : index
    %c256_89 = arith.constant 256 : index
    %106 = vector.load %arg7[%c80_88, %c256_89] : memref<256x1152xbf16, #tpu.memory_space<vmem>>, vector<16x128xbf16>
    tpu.vector_store %arg7[%c80_88, %c256_89], %103 {strides = array<i32>} : memref<256x1152xbf16, #tpu.memory_space<vmem>>, vector<16x128xbf16>,
    %c64_90 = arith.constant 64 : index
    %c384_91 = arith.constant 384 : index
    %107 = vector.load %arg7[%c64_90, %c384_91] : memref<256x1152xbf16, #tpu.memory_space<vmem>>, vector<16x128xbf16>
    tpu.vector_store %arg7[%c64_90, %c384_91], %101 {strides = array<i32>} : memref<256x1152xbf16, #tpu.memory_space<vmem>>, vector<16x128xbf16>,
    %c64_92 = arith.constant 64 : index
    %c512_93 = arith.constant 512 : index
    %108 = vector.load %arg7[%c64_92, %c512_93] : memref<256x1152xbf16, #tpu.memory_space<vmem>>, vector<16x128xbf16>
    tpu.vector_store %arg7[%c64_92, %c512_93], %102 {strides = array<i32>} : memref<256x1152xbf16, #tpu.memory_space<vmem>>, vector<16x128xbf16>,
    %c64_94 = arith.constant 64 : index
    %c640_95 = arith.constant 640 : index
    %109 = vector.load %arg7[%c64_94, %c640_95] : memref<256x1152xbf16, #tpu.memory_space<vmem>>, vector<16x128xbf16>
    tpu.vector_store %arg7[%c64_94, %c640_95], %103 {strides = array<i32>} : memref<256x1152xbf16, #tpu.memory_space<vmem>>, vector<16x128xbf16>,
    %c48_96 = arith.constant 48 : index
    %c768_97 = arith.constant 768 : index
    %110 = vector.load %arg7[%c48_96, %c768_97] : memref<256x1152xbf16, #tpu.memory_space<vmem>>, vector<16x128xbf16>
    tpu.vector_store %arg7[%c48_96, %c768_97], %101 {strides = array<i32>} : memref<256x1152xbf16, #tpu.memory_space<vmem>>, vector<16x128xbf16>,
    %c48_98 = arith.constant 48 : index
    %c896_99 = arith.constant 896 : index
    %111 = vector.load %arg7[%c48_98, %c896_99] : memref<256x1152xbf16, #tpu.memory_space<vmem>>, vector<16x128xbf16>
    tpu.vector_store %arg7[%c48_98, %c896_99], %102 {strides = array<i32>} : memref<256x1152xbf16, #tpu.memory_space<vmem>>, vector<16x128xbf16>,
    %c48_100 = arith.constant 48 : index
    %c1024_101 = arith.constant 1024 : index
    %112 = vector.load %arg7[%c48_100, %c1024_101] : memref<256x1152xbf16, #tpu.memory_space<vmem>>, vector<16x128xbf16>
    tpu.vector_store %arg7[%c48_100, %c1024_101], %103 {strides = array<i32>} : memref<256x1152xbf16, #tpu.memory_space<vmem>>, vector<16x128xbf16>,
    %c0_102 = arith.constant 0 : index
    %c5 = arith.constant 5 : index
    %c0_103 = arith.constant 0 : index
    %c0_104 = arith.constant 0 : index
    %113 = vector.load %arg1[%c0_102, %c5, %c0_103, %c0_104] : memref<1x16x16x128xbf16, #tpu.memory_space<vmem>>, vector<1x1x16x128xbf16>
    %114 = vector.shape_cast %113 : vector<1x1x16x128xbf16> to vector<16x128xbf16>
    %115 = arith.extf %114 : vector<16x128xbf16> to vector<16x128xf32>
    %116 = arith.mulf %115, %2 : vector<16x128xf32>
    %117 = arith.addf %116, %5 : vector<16x128xf32>
    %cst_105 = arith.constant 0.000000e+00 : f32
    %118 = vector.broadcast %cst_105 : f32 to vector<16x128xf32>
    %119 = arith.maximumf %117, %118 : vector<16x128xf32>
    %120 = arith.truncf %119 : vector<16x128xf32> to vector<16x128xbf16>
    %121 = tpu.concatenate %7, %120, %7 in 0 : vector<1x128xbf16>, vector<16x128xbf16>, vector<1x128xbf16> -> vector<18x128xbf16>
    %122 = vector.extract_strided_slice %121 {offsets = [0, 0], sizes = [16, 128], strides = [1, 1]} : vector<18x128xbf16> to vector<16x128xbf16>
    %123 = vector.extract_strided_slice %121 {offsets = [1, 0], sizes = [16, 128], strides = [1, 1]} : vector<18x128xbf16> to vector<16x128xbf16>
    %124 = vector.extract_strided_slice %121 {offsets = [2, 0], sizes = [16, 128], strides = [1, 1]} : vector<18x128xbf16> to vector<16x128xbf16>
    %c96 = arith.constant 96 : index
    %c0_106 = arith.constant 0 : index
    %125 = vector.load %arg7[%c96, %c0_106] : memref<256x1152xbf16, #tpu.memory_space<vmem>>, vector<16x128xbf16>
    tpu.vector_store %arg7[%c96, %c0_106], %122 {strides = array<i32>} : memref<256x1152xbf16, #tpu.memory_space<vmem>>, vector<16x128xbf16>,
    %c96_107 = arith.constant 96 : index
    %c128_108 = arith.constant 128 : index
    %126 = vector.load %arg7[%c96_107, %c128_108] : memref<256x1152xbf16, #tpu.memory_space<vmem>>, vector<16x128xbf16>
    tpu.vector_store %arg7[%c96_107, %c128_108], %123 {strides = array<i32>} : memref<256x1152xbf16, #tpu.memory_space<vmem>>, vector<16x128xbf16>,
    %c96_109 = arith.constant 96 : index
    %c256_110 = arith.constant 256 : index
    %127 = vector.load %arg7[%c96_109, %c256_110] : memref<256x1152xbf16, #tpu.memory_space<vmem>>, vector<16x128xbf16>
    tpu.vector_store %arg7[%c96_109, %c256_110], %124 {strides = array<i32>} : memref<256x1152xbf16, #tpu.memory_space<vmem>>, vector<16x128xbf16>,
    %c80_111 = arith.constant 80 : index
    %c384_112 = arith.constant 384 : index
    %128 = vector.load %arg7[%c80_111, %c384_112] : memref<256x1152xbf16, #tpu.memory_space<vmem>>, vector<16x128xbf16>
    tpu.vector_store %arg7[%c80_111, %c384_112], %122 {strides = array<i32>} : memref<256x1152xbf16, #tpu.memory_space<vmem>>, vector<16x128xbf16>,
    %c80_113 = arith.constant 80 : index
    %c512_114 = arith.constant 512 : index
    %129 = vector.load %arg7[%c80_113, %c512_114] : memref<256x1152xbf16, #tpu.memory_space<vmem>>, vector<16x128xbf16>
    tpu.vector_store %arg7[%c80_113, %c512_114], %123 {strides = array<i32>} : memref<256x1152xbf16, #tpu.memory_space<vmem>>, vector<16x128xbf16>,
    %c80_115 = arith.constant 80 : index
    %c640_116 = arith.constant 640 : index
    %130 = vector.load %arg7[%c80_115, %c640_116] : memref<256x1152xbf16, #tpu.memory_space<vmem>>, vector<16x128xbf16>
    tpu.vector_store %arg7[%c80_115, %c640_116], %124 {strides = array<i32>} : memref<256x1152xbf16, #tpu.memory_space<vmem>>, vector<16x128xbf16>,
    %c64_117 = arith.constant 64 : index
    %c768_118 = arith.constant 768 : index
    %131 = vector.load %arg7[%c64_117, %c768_118] : memref<256x1152xbf16, #tpu.memory_space<vmem>>, vector<16x128xbf16>
    tpu.vector_store %arg7[%c64_117, %c768_118], %122 {strides = array<i32>} : memref<256x1152xbf16, #tpu.memory_space<vmem>>, vector<16x128xbf16>,
    %c64_119 = arith.constant 64 : index
    %c896_120 = arith.constant 896 : index
    %132 = vector.load %arg7[%c64_119, %c896_120] : memref<256x1152xbf16, #tpu.memory_space<vmem>>, vector<16x128xbf16>
    tpu.vector_store %arg7[%c64_119, %c896_120], %123 {strides = array<i32>} : memref<256x1152xbf16, #tpu.memory_space<vmem>>, vector<16x128xbf16>,
    %c64_121 = arith.constant 64 : index
    %c1024_122 = arith.constant 1024 : index
    %133 = vector.load %arg7[%c64_121, %c1024_122] : memref<256x1152xbf16, #tpu.memory_space<vmem>>, vector<16x128xbf16>
    tpu.vector_store %arg7[%c64_121, %c1024_122], %124 {strides = array<i32>} : memref<256x1152xbf16, #tpu.memory_space<vmem>>, vector<16x128xbf16>,
    %c0_123 = arith.constant 0 : index
    %c6 = arith.constant 6 : index
    %c0_124 = arith.constant 0 : index
    %c0_125 = arith.constant 0 : index
    %134 = vector.load %arg1[%c0_123, %c6, %c0_124, %c0_125] : memref<1x16x16x128xbf16, #tpu.memory_space<vmem>>, vector<1x1x16x128xbf16>
    %135 = vector.shape_cast %134 : vector<1x1x16x128xbf16> to vector<16x128xbf16>
    %136 = arith.extf %135 : vector<16x128xbf16> to vector<16x128xf32>
    %137 = arith.mulf %136, %2 : vector<16x128xf32>
    %138 = arith.addf %137, %5 : vector<16x128xf32>
    %cst_126 = arith.constant 0.000000e+00 : f32
    %139 = vector.broadcast %cst_126 : f32 to vector<16x128xf32>
    %140 = arith.maximumf %138, %139 : vector<16x128xf32>
    %141 = arith.truncf %140 : vector<16x128xf32> to vector<16x128xbf16>
    %142 = tpu.concatenate %7, %141, %7 in 0 : vector<1x128xbf16>, vector<16x128xbf16>, vector<1x128xbf16> -> vector<18x128xbf16>
    %143 = vector.extract_strided_slice %142 {offsets = [0, 0], sizes = [16, 128], strides = [1, 1]} : vector<18x128xbf16> to vector<16x128xbf16>
    %144 = vector.extract_strided_slice %142 {offsets = [1, 0], sizes = [16, 128], strides = [1, 1]} : vector<18x128xbf16> to vector<16x128xbf16>
    %145 = vector.extract_strided_slice %142 {offsets = [2, 0], sizes = [16, 128], strides = [1, 1]} : vector<18x128xbf16> to vector<16x128xbf16>
    %c112 = arith.constant 112 : index
    %c0_127 = arith.constant 0 : index
    %146 = vector.load %arg7[%c112, %c0_127] : memref<256x1152xbf16, #tpu.memory_space<vmem>>, vector<16x128xbf16>
    tpu.vector_store %arg7[%c112, %c0_127], %143 {strides = array<i32>} : memref<256x1152xbf16, #tpu.memory_space<vmem>>, vector<16x128xbf16>,
    %c112_128 = arith.constant 112 : index
    %c128_129 = arith.constant 128 : index
    %147 = vector.load %arg7[%c112_128, %c128_129] : memref<256x1152xbf16, #tpu.memory_space<vmem>>, vector<16x128xbf16>
    tpu.vector_store %arg7[%c112_128, %c128_129], %144 {strides = array<i32>} : memref<256x1152xbf16, #tpu.memory_space<vmem>>, vector<16x128xbf16>,
    %c112_130 = arith.constant 112 : index
    %c256_131 = arith.constant 256 : index
    %148 = vector.load %arg7[%c112_130, %c256_131] : memref<256x1152xbf16, #tpu.memory_space<vmem>>, vector<16x128xbf16>
    tpu.vector_store %arg7[%c112_130, %c256_131], %145 {strides = array<i32>} : memref<256x1152xbf16, #tpu.memory_space<vmem>>, vector<16x128xbf16>,
    %c96_132 = arith.constant 96 : index
    %c384_133 = arith.constant 384 : index
    %149 = vector.load %arg7[%c96_132, %c384_133] : memref<256x1152xbf16, #tpu.memory_space<vmem>>, vector<16x128xbf16>
    tpu.vector_store %arg7[%c96_132, %c384_133], %143 {strides = array<i32>} : memref<256x1152xbf16, #tpu.memory_space<vmem>>, vector<16x128xbf16>,
    %c96_134 = arith.constant 96 : index
    %c512_135 = arith.constant 512 : index
    %150 = vector.load %arg7[%c96_134, %c512_135] : memref<256x1152xbf16, #tpu.memory_space<vmem>>, vector<16x128xbf16>
    tpu.vector_store %arg7[%c96_134, %c512_135], %144 {strides = array<i32>} : memref<256x1152xbf16, #tpu.memory_space<vmem>>, vector<16x128xbf16>,
    %c96_136 = arith.constant 96 : index
    %c640_137 = arith.constant 640 : index
    %151 = vector.load %arg7[%c96_136, %c640_137] : memref<256x1152xbf16, #tpu.memory_space<vmem>>, vector<16x128xbf16>
    tpu.vector_store %arg7[%c96_136, %c640_137], %145 {strides = array<i32>} : memref<256x1152xbf16, #tpu.memory_space<vmem>>, vector<16x128xbf16>,
    %c80_138 = arith.constant 80 : index
    %c768_139 = arith.constant 768 : index
    %152 = vector.load %arg7[%c80_138, %c768_139] : memref<256x1152xbf16, #tpu.memory_space<vmem>>, vector<16x128xbf16>
    tpu.vector_store %arg7[%c80_138, %c768_139], %143 {strides = array<i32>} : memref<256x1152xbf16, #tpu.memory_space<vmem>>, vector<16x128xbf16>,
    %c80_140 = arith.constant 80 : index
    %c896_141 = arith.constant 896 : index
    %153 = vector.load %arg7[%c80_140, %c896_141] : memref<256x1152xbf16, #tpu.memory_space<vmem>>, vector<16x128xbf16>
    tpu.vector_store %arg7[%c80_140, %c896_141], %144 {strides = array<i32>} : memref<256x1152xbf16, #tpu.memory_space<vmem>>, vector<16x128xbf16>,
    %c80_142 = arith.constant 80 : index
    %c1024_143 = arith.constant 1024 : index
    %154 = vector.load %arg7[%c80_142, %c1024_143] : memref<256x1152xbf16, #tpu.memory_space<vmem>>, vector<16x128xbf16>
    tpu.vector_store %arg7[%c80_142, %c1024_143], %145 {strides = array<i32>} : memref<256x1152xbf16, #tpu.memory_space<vmem>>, vector<16x128xbf16>,
    %c0_144 = arith.constant 0 : index
    %c7 = arith.constant 7 : index
    %c0_145 = arith.constant 0 : index
    %c0_146 = arith.constant 0 : index
    %155 = vector.load %arg1[%c0_144, %c7, %c0_145, %c0_146] : memref<1x16x16x128xbf16, #tpu.memory_space<vmem>>, vector<1x1x16x128xbf16>
    %156 = vector.shape_cast %155 : vector<1x1x16x128xbf16> to vector<16x128xbf16>
    %157 = arith.extf %156 : vector<16x128xbf16> to vector<16x128xf32>
    %158 = arith.mulf %157, %2 : vector<16x128xf32>
    %159 = arith.addf %158, %5 : vector<16x128xf32>
    %cst_147 = arith.constant 0.000000e+00 : f32
    %160 = vector.broadcast %cst_147 : f32 to vector<16x128xf32>
    %161 = arith.maximumf %159, %160 : vector<16x128xf32>
    %162 = arith.truncf %161 : vector<16x128xf32> to vector<16x128xbf16>
    %163 = tpu.concatenate %7, %162, %7 in 0 : vector<1x128xbf16>, vector<16x128xbf16>, vector<1x128xbf16> -> vector<18x128xbf16>
    %164 = vector.extract_strided_slice %163 {offsets = [0, 0], sizes = [16, 128], strides = [1, 1]} : vector<18x128xbf16> to vector<16x128xbf16>
    %165 = vector.extract_strided_slice %163 {offsets = [1, 0], sizes = [16, 128], strides = [1, 1]} : vector<18x128xbf16> to vector<16x128xbf16>
    %166 = vector.extract_strided_slice %163 {offsets = [2, 0], sizes = [16, 128], strides = [1, 1]} : vector<18x128xbf16> to vector<16x128xbf16>
    %c128_148 = arith.constant 128 : index
    %c0_149 = arith.constant 0 : index
    %167 = vector.load %arg7[%c128_148, %c0_149] : memref<256x1152xbf16, #tpu.memory_space<vmem>>, vector<16x128xbf16>
    tpu.vector_store %arg7[%c128_148, %c0_149], %164 {strides = array<i32>} : memref<256x1152xbf16, #tpu.memory_space<vmem>>, vector<16x128xbf16>,
    %c128_150 = arith.constant 128 : index
    %c128_151 = arith.constant 128 : index
    %168 = vector.load %arg7[%c128_150, %c128_151] : memref<256x1152xbf16, #tpu.memory_space<vmem>>, vector<16x128xbf16>
    tpu.vector_store %arg7[%c128_150, %c128_151], %165 {strides = array<i32>} : memref<256x1152xbf16, #tpu.memory_space<vmem>>, vector<16x128xbf16>,
    %c128_152 = arith.constant 128 : index
    %c256_153 = arith.constant 256 : index
    %169 = vector.load %arg7[%c128_152, %c256_153] : memref<256x1152xbf16, #tpu.memory_space<vmem>>, vector<16x128xbf16>
    tpu.vector_store %arg7[%c128_152, %c256_153], %166 {strides = array<i32>} : memref<256x1152xbf16, #tpu.memory_space<vmem>>, vector<16x128xbf16>,
    %c112_154 = arith.constant 112 : index
    %c384_155 = arith.constant 384 : index
    %170 = vector.load %arg7[%c112_154, %c384_155] : memref<256x1152xbf16, #tpu.memory_space<vmem>>, vector<16x128xbf16>
    tpu.vector_store %arg7[%c112_154, %c384_155], %164 {strides = array<i32>} : memref<256x1152xbf16, #tpu.memory_space<vmem>>, vector<16x128xbf16>,
    %c112_156 = arith.constant 112 : index
    %c512_157 = arith.constant 512 : index
    %171 = vector.load %arg7[%c112_156, %c512_157] : memref<256x1152xbf16, #tpu.memory_space<vmem>>, vector<16x128xbf16>
    tpu.vector_store %arg7[%c112_156, %c512_157], %165 {strides = array<i32>} : memref<256x1152xbf16, #tpu.memory_space<vmem>>, vector<16x128xbf16>,
    %c112_158 = arith.constant 112 : index
    %c640_159 = arith.constant 640 : index
    %172 = vector.load %arg7[%c112_158, %c640_159] : memref<256x1152xbf16, #tpu.memory_space<vmem>>, vector<16x128xbf16>
    tpu.vector_store %arg7[%c112_158, %c640_159], %166 {strides = array<i32>} : memref<256x1152xbf16, #tpu.memory_space<vmem>>, vector<16x128xbf16>,
    %c96_160 = arith.constant 96 : index
    %c768_161 = arith.constant 768 : index
    %173 = vector.load %arg7[%c96_160, %c768_161] : memref<256x1152xbf16, #tpu.memory_space<vmem>>, vector<16x128xbf16>
    tpu.vector_store %arg7[%c96_160, %c768_161], %164 {strides = array<i32>} : memref<256x1152xbf16, #tpu.memory_space<vmem>>, vector<16x128xbf16>,
    %c96_162 = arith.constant 96 : index
    %c896_163 = arith.constant 896 : index
    %174 = vector.load %arg7[%c96_162, %c896_163] : memref<256x1152xbf16, #tpu.memory_space<vmem>>, vector<16x128xbf16>
    tpu.vector_store %arg7[%c96_162, %c896_163], %165 {strides = array<i32>} : memref<256x1152xbf16, #tpu.memory_space<vmem>>, vector<16x128xbf16>,
    %c96_164 = arith.constant 96 : index
    %c1024_165 = arith.constant 1024 : index
    %175 = vector.load %arg7[%c96_164, %c1024_165] : memref<256x1152xbf16, #tpu.memory_space<vmem>>, vector<16x128xbf16>
    tpu.vector_store %arg7[%c96_164, %c1024_165], %166 {strides = array<i32>} : memref<256x1152xbf16, #tpu.memory_space<vmem>>, vector<16x128xbf16>,
    %c0_166 = arith.constant 0 : index
    %c8 = arith.constant 8 : index
    %c0_167 = arith.constant 0 : index
    %c0_168 = arith.constant 0 : index
    %176 = vector.load %arg1[%c0_166, %c8, %c0_167, %c0_168] : memref<1x16x16x128xbf16, #tpu.memory_space<vmem>>, vector<1x1x16x128xbf16>
    %177 = vector.shape_cast %176 : vector<1x1x16x128xbf16> to vector<16x128xbf16>
    %178 = arith.extf %177 : vector<16x128xbf16> to vector<16x128xf32>
    %179 = arith.mulf %178, %2 : vector<16x128xf32>
    %180 = arith.addf %179, %5 : vector<16x128xf32>
    %cst_169 = arith.constant 0.000000e+00 : f32
    %181 = vector.broadcast %cst_169 : f32 to vector<16x128xf32>
    %182 = arith.maximumf %180, %181 : vector<16x128xf32>
    %183 = arith.truncf %182 : vector<16x128xf32> to vector<16x128xbf16>
    %184 = tpu.concatenate %7, %183, %7 in 0 : vector<1x128xbf16>, vector<16x128xbf16>, vector<1x128xbf16> -> vector<18x128xbf16>
    %185 = vector.extract_strided_slice %184 {offsets = [0, 0], sizes = [16, 128], strides = [1, 1]} : vector<18x128xbf16> to vector<16x128xbf16>
    %186 = vector.extract_strided_slice %184 {offsets = [1, 0], sizes = [16, 128], strides = [1, 1]} : vector<18x128xbf16> to vector<16x128xbf16>
    %187 = vector.extract_strided_slice %184 {offsets = [2, 0], sizes = [16, 128], strides = [1, 1]} : vector<18x128xbf16> to vector<16x128xbf16>
    %c144 = arith.constant 144 : index
    %c0_170 = arith.constant 0 : index
    %188 = vector.load %arg7[%c144, %c0_170] : memref<256x1152xbf16, #tpu.memory_space<vmem>>, vector<16x128xbf16>
    tpu.vector_store %arg7[%c144, %c0_170], %185 {strides = array<i32>} : memref<256x1152xbf16, #tpu.memory_space<vmem>>, vector<16x128xbf16>,
    %c144_171 = arith.constant 144 : index
    %c128_172 = arith.constant 128 : index
    %189 = vector.load %arg7[%c144_171, %c128_172] : memref<256x1152xbf16, #tpu.memory_space<vmem>>, vector<16x128xbf16>
    tpu.vector_store %arg7[%c144_171, %c128_172], %186 {strides = array<i32>} : memref<256x1152xbf16, #tpu.memory_space<vmem>>, vector<16x128xbf16>,
    %c144_173 = arith.constant 144 : index
    %c256_174 = arith.constant 256 : index
    %190 = vector.load %arg7[%c144_173, %c256_174] : memref<256x1152xbf16, #tpu.memory_space<vmem>>, vector<16x128xbf16>
    tpu.vector_store %arg7[%c144_173, %c256_174], %187 {strides = array<i32>} : memref<256x1152xbf16, #tpu.memory_space<vmem>>, vector<16x128xbf16>,
    %c128_175 = arith.constant 128 : index
    %c384_176 = arith.constant 384 : index
    %191 = vector.load %arg7[%c128_175, %c384_176] : memref<256x1152xbf16, #tpu.memory_space<vmem>>, vector<16x128xbf16>
    tpu.vector_store %arg7[%c128_175, %c384_176], %185 {strides = array<i32>} : memref<256x1152xbf16, #tpu.memory_space<vmem>>, vector<16x128xbf16>,
    %c128_177 = arith.constant 128 : index
    %c512_178 = arith.constant 512 : index
    %192 = vector.load %arg7[%c128_177, %c512_178] : memref<256x1152xbf16, #tpu.memory_space<vmem>>, vector<16x128xbf16>
    tpu.vector_store %arg7[%c128_177, %c512_178], %186 {strides = array<i32>} : memref<256x1152xbf16, #tpu.memory_space<vmem>>, vector<16x128xbf16>,
    %c128_179 = arith.constant 128 : index
    %c640_180 = arith.constant 640 : index
    %193 = vector.load %arg7[%c128_179, %c640_180] : memref<256x1152xbf16, #tpu.memory_space<vmem>>, vector<16x128xbf16>
    tpu.vector_store %arg7[%c128_179, %c640_180], %187 {strides = array<i32>} : memref<256x1152xbf16, #tpu.memory_space<vmem>>, vector<16x128xbf16>,
    %c112_181 = arith.constant 112 : index
    %c768_182 = arith.constant 768 : index
    %194 = vector.load %arg7[%c112_181, %c768_182] : memref<256x1152xbf16, #tpu.memory_space<vmem>>, vector<16x128xbf16>
    tpu.vector_store %arg7[%c112_181, %c768_182], %185 {strides = array<i32>} : memref<256x1152xbf16, #tpu.memory_space<vmem>>, vector<16x128xbf16>,
    %c112_183 = arith.constant 112 : index
    %c896_184 = arith.constant 896 : index
    %195 = vector.load %arg7[%c112_183, %c896_184] : memref<256x1152xbf16, #tpu.memory_space<vmem>>, vector<16x128xbf16>
    tpu.vector_store %arg7[%c112_183, %c896_184], %186 {strides = array<i32>} : memref<256x1152xbf16, #tpu.memory_space<vmem>>, vector<16x128xbf16>,
    %c112_185 = arith.constant 112 : index
    %c1024_186 = arith.constant 1024 : index
    %196 = vector.load %arg7[%c112_185, %c1024_186] : memref<256x1152xbf16, #tpu.memory_space<vmem>>, vector<16x128xbf16>
    tpu.vector_store %arg7[%c112_185, %c1024_186], %187 {strides = array<i32>} : memref<256x1152xbf16, #tpu.memory_space<vmem>>, vector<16x128xbf16>,
    %c0_187 = arith.constant 0 : index
    %c9 = arith.constant 9 : index
    %c0_188 = arith.constant 0 : index
    %c0_189 = arith.constant 0 : index
    %197 = vector.load %arg1[%c0_187, %c9, %c0_188, %c0_189] : memref<1x16x16x128xbf16, #tpu.memory_space<vmem>>, vector<1x1x16x128xbf16>
    %198 = vector.shape_cast %197 : vector<1x1x16x128xbf16> to vector<16x128xbf16>
    %199 = arith.extf %198 : vector<16x128xbf16> to vector<16x128xf32>
    %200 = arith.mulf %199, %2 : vector<16x128xf32>
    %201 = arith.addf %200, %5 : vector<16x128xf32>
    %cst_190 = arith.constant 0.000000e+00 : f32
    %202 = vector.broadcast %cst_190 : f32 to vector<16x128xf32>
    %203 = arith.maximumf %201, %202 : vector<16x128xf32>
    %204 = arith.truncf %203 : vector<16x128xf32> to vector<16x128xbf16>
    %205 = tpu.concatenate %7, %204, %7 in 0 : vector<1x128xbf16>, vector<16x128xbf16>, vector<1x128xbf16> -> vector<18x128xbf16>
    %206 = vector.extract_strided_slice %205 {offsets = [0, 0], sizes = [16, 128], strides = [1, 1]} : vector<18x128xbf16> to vector<16x128xbf16>
    %207 = vector.extract_strided_slice %205 {offsets = [1, 0], sizes = [16, 128], strides = [1, 1]} : vector<18x128xbf16> to vector<16x128xbf16>
    %208 = vector.extract_strided_slice %205 {offsets = [2, 0], sizes = [16, 128], strides = [1, 1]} : vector<18x128xbf16> to vector<16x128xbf16>
    %c160 = arith.constant 160 : index
    %c0_191 = arith.constant 0 : index
    %209 = vector.load %arg7[%c160, %c0_191] : memref<256x1152xbf16, #tpu.memory_space<vmem>>, vector<16x128xbf16>
    tpu.vector_store %arg7[%c160, %c0_191], %206 {strides = array<i32>} : memref<256x1152xbf16, #tpu.memory_space<vmem>>, vector<16x128xbf16>,
    %c160_192 = arith.constant 160 : index
    %c128_193 = arith.constant 128 : index
    %210 = vector.load %arg7[%c160_192, %c128_193] : memref<256x1152xbf16, #tpu.memory_space<vmem>>, vector<16x128xbf16>
    tpu.vector_store %arg7[%c160_192, %c128_193], %207 {strides = array<i32>} : memref<256x1152xbf16, #tpu.memory_space<vmem>>, vector<16x128xbf16>,
    %c160_194 = arith.constant 160 : index
    %c256_195 = arith.constant 256 : index
    %211 = vector.load %arg7[%c160_194, %c256_195] : memref<256x1152xbf16, #tpu.memory_space<vmem>>, vector<16x128xbf16>
    tpu.vector_store %arg7[%c160_194, %c256_195], %208 {strides = array<i32>} : memref<256x1152xbf16, #tpu.memory_space<vmem>>, vector<16x128xbf16>,
    %c144_196 = arith.constant 144 : index
    %c384_197 = arith.constant 384 : index
    %212 = vector.load %arg7[%c144_196, %c384_197] : memref<256x1152xbf16, #tpu.memory_space<vmem>>, vector<16x128xbf16>
    tpu.vector_store %arg7[%c144_196, %c384_197], %206 {strides = array<i32>} : memref<256x1152xbf16, #tpu.memory_space<vmem>>, vector<16x128xbf16>,
    %c144_198 = arith.constant 144 : index
    %c512_199 = arith.constant 512 : index
    %213 = vector.load %arg7[%c144_198, %c512_199] : memref<256x1152xbf16, #tpu.memory_space<vmem>>, vector<16x128xbf16>
    tpu.vector_store %arg7[%c144_198, %c512_199], %207 {strides = array<i32>} : memref<256x1152xbf16, #tpu.memory_space<vmem>>, vector<16x128xbf16>,
    %c144_200 = arith.constant 144 : index
    %c640_201 = arith.constant 640 : index
    %214 = vector.load %arg7[%c144_200, %c640_201] : memref<256x1152xbf16, #tpu.memory_space<vmem>>, vector<16x128xbf16>
    tpu.vector_store %arg7[%c144_200, %c640_201], %208 {strides = array<i32>} : memref<256x1152xbf16, #tpu.memory_space<vmem>>, vector<16x128xbf16>,
    %c128_202 = arith.constant 128 : index
    %c768_203 = arith.constant 768 : index
    %215 = vector.load %arg7[%c128_202, %c768_203] : memref<256x1152xbf16, #tpu.memory_space<vmem>>, vector<16x128xbf16>
    tpu.vector_store %arg7[%c128_202, %c768_203], %206 {strides = array<i32>} : memref<256x1152xbf16, #tpu.memory_space<vmem>>, vector<16x128xbf16>,
    %c128_204 = arith.constant 128 : index
    %c896_205 = arith.constant 896 : index
    %216 = vector.load %arg7[%c128_204, %c896_205] : memref<256x1152xbf16, #tpu.memory_space<vmem>>, vector<16x128xbf16>
    tpu.vector_store %arg7[%c128_204, %c896_205], %207 {strides = array<i32>} : memref<256x1152xbf16, #tpu.memory_space<vmem>>, vector<16x128xbf16>,
    %c128_206 = arith.constant 128 : index
    %c1024_207 = arith.constant 1024 : index
    %217 = vector.load %arg7[%c128_206, %c1024_207] : memref<256x1152xbf16, #tpu.memory_space<vmem>>, vector<16x128xbf16>
    tpu.vector_store %arg7[%c128_206, %c1024_207], %208 {strides = array<i32>} : memref<256x1152xbf16, #tpu.memory_space<vmem>>, vector<16x128xbf16>,
    %c0_208 = arith.constant 0 : index
    %c10 = arith.constant 10 : index
    %c0_209 = arith.constant 0 : index
    %c0_210 = arith.constant 0 : index
    %218 = vector.load %arg1[%c0_208, %c10, %c0_209, %c0_210] : memref<1x16x16x128xbf16, #tpu.memory_space<vmem>>, vector<1x1x16x128xbf16>
    %219 = vector.shape_cast %218 : vector<1x1x16x128xbf16> to vector<16x128xbf16>
    %220 = arith.extf %219 : vector<16x128xbf16> to vector<16x128xf32>
    %221 = arith.mulf %220, %2 : vector<16x128xf32>
    %222 = arith.addf %221, %5 : vector<16x128xf32>
    %cst_211 = arith.constant 0.000000e+00 : f32
    %223 = vector.broadcast %cst_211 : f32 to vector<16x128xf32>
    %224 = arith.maximumf %222, %223 : vector<16x128xf32>
    %225 = arith.truncf %224 : vector<16x128xf32> to vector<16x128xbf16>
    %226 = tpu.concatenate %7, %225, %7 in 0 : vector<1x128xbf16>, vector<16x128xbf16>, vector<1x128xbf16> -> vector<18x128xbf16>
    %227 = vector.extract_strided_slice %226 {offsets = [0, 0], sizes = [16, 128], strides = [1, 1]} : vector<18x128xbf16> to vector<16x128xbf16>
    %228 = vector.extract_strided_slice %226 {offsets = [1, 0], sizes = [16, 128], strides = [1, 1]} : vector<18x128xbf16> to vector<16x128xbf16>
    %229 = vector.extract_strided_slice %226 {offsets = [2, 0], sizes = [16, 128], strides = [1, 1]} : vector<18x128xbf16> to vector<16x128xbf16>
    %c176 = arith.constant 176 : index
    %c0_212 = arith.constant 0 : index
    %230 = vector.load %arg7[%c176, %c0_212] : memref<256x1152xbf16, #tpu.memory_space<vmem>>, vector<16x128xbf16>
    tpu.vector_store %arg7[%c176, %c0_212], %227 {strides = array<i32>} : memref<256x1152xbf16, #tpu.memory_space<vmem>>, vector<16x128xbf16>,
    %c176_213 = arith.constant 176 : index
    %c128_214 = arith.constant 128 : index
    %231 = vector.load %arg7[%c176_213, %c128_214] : memref<256x1152xbf16, #tpu.memory_space<vmem>>, vector<16x128xbf16>
    tpu.vector_store %arg7[%c176_213, %c128_214], %228 {strides = array<i32>} : memref<256x1152xbf16, #tpu.memory_space<vmem>>, vector<16x128xbf16>,
    %c176_215 = arith.constant 176 : index
    %c256_216 = arith.constant 256 : index
    %232 = vector.load %arg7[%c176_215, %c256_216] : memref<256x1152xbf16, #tpu.memory_space<vmem>>, vector<16x128xbf16>
    tpu.vector_store %arg7[%c176_215, %c256_216], %229 {strides = array<i32>} : memref<256x1152xbf16, #tpu.memory_space<vmem>>, vector<16x128xbf16>,
    %c160_217 = arith.constant 160 : index
    %c384_218 = arith.constant 384 : index
    %233 = vector.load %arg7[%c160_217, %c384_218] : memref<256x1152xbf16, #tpu.memory_space<vmem>>, vector<16x128xbf16>
    tpu.vector_store %arg7[%c160_217, %c384_218], %227 {strides = array<i32>} : memref<256x1152xbf16, #tpu.memory_space<vmem>>, vector<16x128xbf16>,
    %c160_219 = arith.constant 160 : index
    %c512_220 = arith.constant 512 : index
    %234 = vector.load %arg7[%c160_219, %c512_220] : memref<256x1152xbf16, #tpu.memory_space<vmem>>, vector<16x128xbf16>
    tpu.vector_store %arg7[%c160_219, %c512_220], %228 {strides = array<i32>} : memref<256x1152xbf16, #tpu.memory_space<vmem>>, vector<16x128xbf16>,
    %c160_221 = arith.constant 160 : index
    %c640_222 = arith.constant 640 : index
    %235 = vector.load %arg7[%c160_221, %c640_222] : memref<256x1152xbf16, #tpu.memory_space<vmem>>, vector<16x128xbf16>
    tpu.vector_store %arg7[%c160_221, %c640_222], %229 {strides = array<i32>} : memref<256x1152xbf16, #tpu.memory_space<vmem>>, vector<16x128xbf16>,
    %c144_223 = arith.constant 144 : index
    %c768_224 = arith.constant 768 : index
    %236 = vector.load %arg7[%c144_223, %c768_224] : memref<256x1152xbf16, #tpu.memory_space<vmem>>, vector<16x128xbf16>
    tpu.vector_store %arg7[%c144_223, %c768_224], %227 {strides = array<i32>} : memref<256x1152xbf16, #tpu.memory_space<vmem>>, vector<16x128xbf16>,
    %c144_225 = arith.constant 144 : index
    %c896_226 = arith.constant 896 : index
    %237 = vector.load %arg7[%c144_225, %c896_226] : memref<256x1152xbf16, #tpu.memory_space<vmem>>, vector<16x128xbf16>
    tpu.vector_store %arg7[%c144_225, %c896_226], %228 {strides = array<i32>} : memref<256x1152xbf16, #tpu.memory_space<vmem>>, vector<16x128xbf16>,
    %c144_227 = arith.constant 144 : index
    %c1024_228 = arith.constant 1024 : index
    %238 = vector.load %arg7[%c144_227, %c1024_228] : memref<256x1152xbf16, #tpu.memory_space<vmem>>, vector<16x128xbf16>
    tpu.vector_store %arg7[%c144_227, %c1024_228], %229 {strides = array<i32>} : memref<256x1152xbf16, #tpu.memory_space<vmem>>, vector<16x128xbf16>,
    %c0_229 = arith.constant 0 : index
    %c11 = arith.constant 11 : index
    %c0_230 = arith.constant 0 : index
    %c0_231 = arith.constant 0 : index
    %239 = vector.load %arg1[%c0_229, %c11, %c0_230, %c0_231] : memref<1x16x16x128xbf16, #tpu.memory_space<vmem>>, vector<1x1x16x128xbf16>
    %240 = vector.shape_cast %239 : vector<1x1x16x128xbf16> to vector<16x128xbf16>
    %241 = arith.extf %240 : vector<16x128xbf16> to vector<16x128xf32>
    %242 = arith.mulf %241, %2 : vector<16x128xf32>
    %243 = arith.addf %242, %5 : vector<16x128xf32>
    %cst_232 = arith.constant 0.000000e+00 : f32
    %244 = vector.broadcast %cst_232 : f32 to vector<16x128xf32>
    %245 = arith.maximumf %243, %244 : vector<16x128xf32>
    %246 = arith.truncf %245 : vector<16x128xf32> to vector<16x128xbf16>
    %247 = tpu.concatenate %7, %246, %7 in 0 : vector<1x128xbf16>, vector<16x128xbf16>, vector<1x128xbf16> -> vector<18x128xbf16>
    %248 = vector.extract_strided_slice %247 {offsets = [0, 0], sizes = [16, 128], strides = [1, 1]} : vector<18x128xbf16> to vector<16x128xbf16>
    %249 = vector.extract_strided_slice %247 {offsets = [1, 0], sizes = [16, 128], strides = [1, 1]} : vector<18x128xbf16> to vector<16x128xbf16>
    %250 = vector.extract_strided_slice %247 {offsets = [2, 0], sizes = [16, 128], strides = [1, 1]} : vector<18x128xbf16> to vector<16x128xbf16>
    %c192 = arith.constant 192 : index
    %c0_233 = arith.constant 0 : index
    %251 = vector.load %arg7[%c192, %c0_233] : memref<256x1152xbf16, #tpu.memory_space<vmem>>, vector<16x128xbf16>
    tpu.vector_store %arg7[%c192, %c0_233], %248 {strides = array<i32>} : memref<256x1152xbf16, #tpu.memory_space<vmem>>, vector<16x128xbf16>,
    %c192_234 = arith.constant 192 : index
    %c128_235 = arith.constant 128 : index
    %252 = vector.load %arg7[%c192_234, %c128_235] : memref<256x1152xbf16, #tpu.memory_space<vmem>>, vector<16x128xbf16>
    tpu.vector_store %arg7[%c192_234, %c128_235], %249 {strides = array<i32>} : memref<256x1152xbf16, #tpu.memory_space<vmem>>, vector<16x128xbf16>,
    %c192_236 = arith.constant 192 : index
    %c256_237 = arith.constant 256 : index
    %253 = vector.load %arg7[%c192_236, %c256_237] : memref<256x1152xbf16, #tpu.memory_space<vmem>>, vector<16x128xbf16>
    tpu.vector_store %arg7[%c192_236, %c256_237], %250 {strides = array<i32>} : memref<256x1152xbf16, #tpu.memory_space<vmem>>, vector<16x128xbf16>,
    %c176_238 = arith.constant 176 : index
    %c384_239 = arith.constant 384 : index
    %254 = vector.load %arg7[%c176_238, %c384_239] : memref<256x1152xbf16, #tpu.memory_space<vmem>>, vector<16x128xbf16>
    tpu.vector_store %arg7[%c176_238, %c384_239], %248 {strides = array<i32>} : memref<256x1152xbf16, #tpu.memory_space<vmem>>, vector<16x128xbf16>,
    %c176_240 = arith.constant 176 : index
    %c512_241 = arith.constant 512 : index
    %255 = vector.load %arg7[%c176_240, %c512_241] : memref<256x1152xbf16, #tpu.memory_space<vmem>>, vector<16x128xbf16>
    tpu.vector_store %arg7[%c176_240, %c512_241], %249 {strides = array<i32>} : memref<256x1152xbf16, #tpu.memory_space<vmem>>, vector<16x128xbf16>,
    %c176_242 = arith.constant 176 : index
    %c640_243 = arith.constant 640 : index
    %256 = vector.load %arg7[%c176_242, %c640_243] : memref<256x1152xbf16, #tpu.memory_space<vmem>>, vector<16x128xbf16>
    tpu.vector_store %arg7[%c176_242, %c640_243], %250 {strides = array<i32>} : memref<256x1152xbf16, #tpu.memory_space<vmem>>, vector<16x128xbf16>,
    %c160_244 = arith.constant 160 : index
    %c768_245 = arith.constant 768 : index
    %257 = vector.load %arg7[%c160_244, %c768_245] : memref<256x1152xbf16, #tpu.memory_space<vmem>>, vector<16x128xbf16>
    tpu.vector_store %arg7[%c160_244, %c768_245], %248 {strides = array<i32>} : memref<256x1152xbf16, #tpu.memory_space<vmem>>, vector<16x128xbf16>,
    %c160_246 = arith.constant 160 : index
    %c896_247 = arith.constant 896 : index
    %258 = vector.load %arg7[%c160_246, %c896_247] : memref<256x1152xbf16, #tpu.memory_space<vmem>>, vector<16x128xbf16>
    tpu.vector_store %arg7[%c160_246, %c896_247], %249 {strides = array<i32>} : memref<256x1152xbf16, #tpu.memory_space<vmem>>, vector<16x128xbf16>,
    %c160_248 = arith.constant 160 : index
    %c1024_249 = arith.constant 1024 : index
    %259 = vector.load %arg7[%c160_248, %c1024_249] : memref<256x1152xbf16, #tpu.memory_space<vmem>>, vector<16x128xbf16>
    tpu.vector_store %arg7[%c160_248, %c1024_249], %250 {strides = array<i32>} : memref<256x1152xbf16, #tpu.memory_space<vmem>>, vector<16x128xbf16>,
    %c0_250 = arith.constant 0 : index
    %c12 = arith.constant 12 : index
    %c0_251 = arith.constant 0 : index
    %c0_252 = arith.constant 0 : index
    %260 = vector.load %arg1[%c0_250, %c12, %c0_251, %c0_252] : memref<1x16x16x128xbf16, #tpu.memory_space<vmem>>, vector<1x1x16x128xbf16>
    %261 = vector.shape_cast %260 : vector<1x1x16x128xbf16> to vector<16x128xbf16>
    %262 = arith.extf %261 : vector<16x128xbf16> to vector<16x128xf32>
    %263 = arith.mulf %262, %2 : vector<16x128xf32>
    %264 = arith.addf %263, %5 : vector<16x128xf32>
    %cst_253 = arith.constant 0.000000e+00 : f32
    %265 = vector.broadcast %cst_253 : f32 to vector<16x128xf32>
    %266 = arith.maximumf %264, %265 : vector<16x128xf32>
    %267 = arith.truncf %266 : vector<16x128xf32> to vector<16x128xbf16>
    %268 = tpu.concatenate %7, %267, %7 in 0 : vector<1x128xbf16>, vector<16x128xbf16>, vector<1x128xbf16> -> vector<18x128xbf16>
    %269 = vector.extract_strided_slice %268 {offsets = [0, 0], sizes = [16, 128], strides = [1, 1]} : vector<18x128xbf16> to vector<16x128xbf16>
    %270 = vector.extract_strided_slice %268 {offsets = [1, 0], sizes = [16, 128], strides = [1, 1]} : vector<18x128xbf16> to vector<16x128xbf16>
    %271 = vector.extract_strided_slice %268 {offsets = [2, 0], sizes = [16, 128], strides = [1, 1]} : vector<18x128xbf16> to vector<16x128xbf16>
    %c208 = arith.constant 208 : index
    %c0_254 = arith.constant 0 : index
    %272 = vector.load %arg7[%c208, %c0_254] : memref<256x1152xbf16, #tpu.memory_space<vmem>>, vector<16x128xbf16>
    tpu.vector_store %arg7[%c208, %c0_254], %269 {strides = array<i32>} : memref<256x1152xbf16, #tpu.memory_space<vmem>>, vector<16x128xbf16>,
    %c208_255 = arith.constant 208 : index
    %c128_256 = arith.constant 128 : index
    %273 = vector.load %arg7[%c208_255, %c128_256] : memref<256x1152xbf16, #tpu.memory_space<vmem>>, vector<16x128xbf16>
    tpu.vector_store %arg7[%c208_255, %c128_256], %270 {strides = array<i32>} : memref<256x1152xbf16, #tpu.memory_space<vmem>>, vector<16x128xbf16>,
    %c208_257 = arith.constant 208 : index
    %c256_258 = arith.constant 256 : index
    %274 = vector.load %arg7[%c208_257, %c256_258] : memref<256x1152xbf16, #tpu.memory_space<vmem>>, vector<16x128xbf16>
    tpu.vector_store %arg7[%c208_257, %c256_258], %271 {strides = array<i32>} : memref<256x1152xbf16, #tpu.memory_space<vmem>>, vector<16x128xbf16>,
    %c192_259 = arith.constant 192 : index
    %c384_260 = arith.constant 384 : index
    %275 = vector.load %arg7[%c192_259, %c384_260] : memref<256x1152xbf16, #tpu.memory_space<vmem>>, vector<16x128xbf16>
    tpu.vector_store %arg7[%c192_259, %c384_260], %269 {strides = array<i32>} : memref<256x1152xbf16, #tpu.memory_space<vmem>>, vector<16x128xbf16>,
    %c192_261 = arith.constant 192 : index
    %c512_262 = arith.constant 512 : index
    %276 = vector.load %arg7[%c192_261, %c512_262] : memref<256x1152xbf16, #tpu.memory_space<vmem>>, vector<16x128xbf16>
    tpu.vector_store %arg7[%c192_261, %c512_262], %270 {strides = array<i32>} : memref<256x1152xbf16, #tpu.memory_space<vmem>>, vector<16x128xbf16>,
    %c192_263 = arith.constant 192 : index
    %c640_264 = arith.constant 640 : index
    %277 = vector.load %arg7[%c192_263, %c640_264] : memref<256x1152xbf16, #tpu.memory_space<vmem>>, vector<16x128xbf16>
    tpu.vector_store %arg7[%c192_263, %c640_264], %271 {strides = array<i32>} : memref<256x1152xbf16, #tpu.memory_space<vmem>>, vector<16x128xbf16>,
    %c176_265 = arith.constant 176 : index
    %c768_266 = arith.constant 768 : index
    %278 = vector.load %arg7[%c176_265, %c768_266] : memref<256x1152xbf16, #tpu.memory_space<vmem>>, vector<16x128xbf16>
    tpu.vector_store %arg7[%c176_265, %c768_266], %269 {strides = array<i32>} : memref<256x1152xbf16, #tpu.memory_space<vmem>>, vector<16x128xbf16>,
    %c176_267 = arith.constant 176 : index
    %c896_268 = arith.constant 896 : index
    %279 = vector.load %arg7[%c176_267, %c896_268] : memref<256x1152xbf16, #tpu.memory_space<vmem>>, vector<16x128xbf16>
    tpu.vector_store %arg7[%c176_267, %c896_268], %270 {strides = array<i32>} : memref<256x1152xbf16, #tpu.memory_space<vmem>>, vector<16x128xbf16>,
    %c176_269 = arith.constant 176 : index
    %c1024_270 = arith.constant 1024 : index
    %280 = vector.load %arg7[%c176_269, %c1024_270] : memref<256x1152xbf16, #tpu.memory_space<vmem>>, vector<16x128xbf16>
    tpu.vector_store %arg7[%c176_269, %c1024_270], %271 {strides = array<i32>} : memref<256x1152xbf16, #tpu.memory_space<vmem>>, vector<16x128xbf16>,
    %c0_271 = arith.constant 0 : index
    %c13 = arith.constant 13 : index
    %c0_272 = arith.constant 0 : index
    %c0_273 = arith.constant 0 : index
    %281 = vector.load %arg1[%c0_271, %c13, %c0_272, %c0_273] : memref<1x16x16x128xbf16, #tpu.memory_space<vmem>>, vector<1x1x16x128xbf16>
    %282 = vector.shape_cast %281 : vector<1x1x16x128xbf16> to vector<16x128xbf16>
    %283 = arith.extf %282 : vector<16x128xbf16> to vector<16x128xf32>
    %284 = arith.mulf %283, %2 : vector<16x128xf32>
    %285 = arith.addf %284, %5 : vector<16x128xf32>
    %cst_274 = arith.constant 0.000000e+00 : f32
    %286 = vector.broadcast %cst_274 : f32 to vector<16x128xf32>
    %287 = arith.maximumf %285, %286 : vector<16x128xf32>
    %288 = arith.truncf %287 : vector<16x128xf32> to vector<16x128xbf16>
    %289 = tpu.concatenate %7, %288, %7 in 0 : vector<1x128xbf16>, vector<16x128xbf16>, vector<1x128xbf16> -> vector<18x128xbf16>
    %290 = vector.extract_strided_slice %289 {offsets = [0, 0], sizes = [16, 128], strides = [1, 1]} : vector<18x128xbf16> to vector<16x128xbf16>
    %291 = vector.extract_strided_slice %289 {offsets = [1, 0], sizes = [16, 128], strides = [1, 1]} : vector<18x128xbf16> to vector<16x128xbf16>
    %292 = vector.extract_strided_slice %289 {offsets = [2, 0], sizes = [16, 128], strides = [1, 1]} : vector<18x128xbf16> to vector<16x128xbf16>
    %c224 = arith.constant 224 : index
    %c0_275 = arith.constant 0 : index
    %293 = vector.load %arg7[%c224, %c0_275] : memref<256x1152xbf16, #tpu.memory_space<vmem>>, vector<16x128xbf16>
    tpu.vector_store %arg7[%c224, %c0_275], %290 {strides = array<i32>} : memref<256x1152xbf16, #tpu.memory_space<vmem>>, vector<16x128xbf16>,
    %c224_276 = arith.constant 224 : index
    %c128_277 = arith.constant 128 : index
    %294 = vector.load %arg7[%c224_276, %c128_277] : memref<256x1152xbf16, #tpu.memory_space<vmem>>, vector<16x128xbf16>
    tpu.vector_store %arg7[%c224_276, %c128_277], %291 {strides = array<i32>} : memref<256x1152xbf16, #tpu.memory_space<vmem>>, vector<16x128xbf16>,
    %c224_278 = arith.constant 224 : index
    %c256_279 = arith.constant 256 : index
    %295 = vector.load %arg7[%c224_278, %c256_279] : memref<256x1152xbf16, #tpu.memory_space<vmem>>, vector<16x128xbf16>
    tpu.vector_store %arg7[%c224_278, %c256_279], %292 {strides = array<i32>} : memref<256x1152xbf16, #tpu.memory_space<vmem>>, vector<16x128xbf16>,
    %c208_280 = arith.constant 208 : index
    %c384_281 = arith.constant 384 : index
    %296 = vector.load %arg7[%c208_280, %c384_281] : memref<256x1152xbf16, #tpu.memory_space<vmem>>, vector<16x128xbf16>
    tpu.vector_store %arg7[%c208_280, %c384_281], %290 {strides = array<i32>} : memref<256x1152xbf16, #tpu.memory_space<vmem>>, vector<16x128xbf16>,
    %c208_282 = arith.constant 208 : index
    %c512_283 = arith.constant 512 : index
    %297 = vector.load %arg7[%c208_282, %c512_283] : memref<256x1152xbf16, #tpu.memory_space<vmem>>, vector<16x128xbf16>
    tpu.vector_store %arg7[%c208_282, %c512_283], %291 {strides = array<i32>} : memref<256x1152xbf16, #tpu.memory_space<vmem>>, vector<16x128xbf16>,
    %c208_284 = arith.constant 208 : index
    %c640_285 = arith.constant 640 : index
    %298 = vector.load %arg7[%c208_284, %c640_285] : memref<256x1152xbf16, #tpu.memory_space<vmem>>, vector<16x128xbf16>
    tpu.vector_store %arg7[%c208_284, %c640_285], %292 {strides = array<i32>} : memref<256x1152xbf16, #tpu.memory_space<vmem>>, vector<16x128xbf16>,
    %c192_286 = arith.constant 192 : index
    %c768_287 = arith.constant 768 : index
    %299 = vector.load %arg7[%c192_286, %c768_287] : memref<256x1152xbf16, #tpu.memory_space<vmem>>, vector<16x128xbf16>
    tpu.vector_store %arg7[%c192_286, %c768_287], %290 {strides = array<i32>} : memref<256x1152xbf16, #tpu.memory_space<vmem>>, vector<16x128xbf16>,
    %c192_288 = arith.constant 192 : index
    %c896_289 = arith.constant 896 : index
    %300 = vector.load %arg7[%c192_288, %c896_289] : memref<256x1152xbf16, #tpu.memory_space<vmem>>, vector<16x128xbf16>
    tpu.vector_store %arg7[%c192_288, %c896_289], %291 {strides = array<i32>} : memref<256x1152xbf16, #tpu.memory_space<vmem>>, vector<16x128xbf16>,
    %c192_290 = arith.constant 192 : index
    %c1024_291 = arith.constant 1024 : index
    %301 = vector.load %arg7[%c192_290, %c1024_291] : memref<256x1152xbf16, #tpu.memory_space<vmem>>, vector<16x128xbf16>
    tpu.vector_store %arg7[%c192_290, %c1024_291], %292 {strides = array<i32>} : memref<256x1152xbf16, #tpu.memory_space<vmem>>, vector<16x128xbf16>,
    %c0_292 = arith.constant 0 : index
    %c14 = arith.constant 14 : index
    %c0_293 = arith.constant 0 : index
    %c0_294 = arith.constant 0 : index
    %302 = vector.load %arg1[%c0_292, %c14, %c0_293, %c0_294] : memref<1x16x16x128xbf16, #tpu.memory_space<vmem>>, vector<1x1x16x128xbf16>
    %303 = vector.shape_cast %302 : vector<1x1x16x128xbf16> to vector<16x128xbf16>
    %304 = arith.extf %303 : vector<16x128xbf16> to vector<16x128xf32>
    %305 = arith.mulf %304, %2 : vector<16x128xf32>
    %306 = arith.addf %305, %5 : vector<16x128xf32>
    %cst_295 = arith.constant 0.000000e+00 : f32
    %307 = vector.broadcast %cst_295 : f32 to vector<16x128xf32>
    %308 = arith.maximumf %306, %307 : vector<16x128xf32>
    %309 = arith.truncf %308 : vector<16x128xf32> to vector<16x128xbf16>
    %310 = tpu.concatenate %7, %309, %7 in 0 : vector<1x128xbf16>, vector<16x128xbf16>, vector<1x128xbf16> -> vector<18x128xbf16>
    %311 = vector.extract_strided_slice %310 {offsets = [0, 0], sizes = [16, 128], strides = [1, 1]} : vector<18x128xbf16> to vector<16x128xbf16>
    %312 = vector.extract_strided_slice %310 {offsets = [1, 0], sizes = [16, 128], strides = [1, 1]} : vector<18x128xbf16> to vector<16x128xbf16>
    %313 = vector.extract_strided_slice %310 {offsets = [2, 0], sizes = [16, 128], strides = [1, 1]} : vector<18x128xbf16> to vector<16x128xbf16>
    %c240 = arith.constant 240 : index
    %c0_296 = arith.constant 0 : index
    %314 = vector.load %arg7[%c240, %c0_296] : memref<256x1152xbf16, #tpu.memory_space<vmem>>, vector<16x128xbf16>
    tpu.vector_store %arg7[%c240, %c0_296], %311 {strides = array<i32>} : memref<256x1152xbf16, #tpu.memory_space<vmem>>, vector<16x128xbf16>,
    %c240_297 = arith.constant 240 : index
    %c128_298 = arith.constant 128 : index
    %315 = vector.load %arg7[%c240_297, %c128_298] : memref<256x1152xbf16, #tpu.memory_space<vmem>>, vector<16x128xbf16>
    tpu.vector_store %arg7[%c240_297, %c128_298], %312 {strides = array<i32>} : memref<256x1152xbf16, #tpu.memory_space<vmem>>, vector<16x128xbf16>,
    %c240_299 = arith.constant 240 : index
    %c256_300 = arith.constant 256 : index
    %316 = vector.load %arg7[%c240_299, %c256_300] : memref<256x1152xbf16, #tpu.memory_space<vmem>>, vector<16x128xbf16>
    tpu.vector_store %arg7[%c240_299, %c256_300], %313 {strides = array<i32>} : memref<256x1152xbf16, #tpu.memory_space<vmem>>, vector<16x128xbf16>,
    %c224_301 = arith.constant 224 : index
    %c384_302 = arith.constant 384 : index
    %317 = vector.load %arg7[%c224_301, %c384_302] : memref<256x1152xbf16, #tpu.memory_space<vmem>>, vector<16x128xbf16>
    tpu.vector_store %arg7[%c224_301, %c384_302], %311 {strides = array<i32>} : memref<256x1152xbf16, #tpu.memory_space<vmem>>, vector<16x128xbf16>,
    %c224_303 = arith.constant 224 : index
    %c512_304 = arith.constant 512 : index
    %318 = vector.load %arg7[%c224_303, %c512_304] : memref<256x1152xbf16, #tpu.memory_space<vmem>>, vector<16x128xbf16>
    tpu.vector_store %arg7[%c224_303, %c512_304], %312 {strides = array<i32>} : memref<256x1152xbf16, #tpu.memory_space<vmem>>, vector<16x128xbf16>,
    %c224_305 = arith.constant 224 : index
    %c640_306 = arith.constant 640 : index
    %319 = vector.load %arg7[%c224_305, %c640_306] : memref<256x1152xbf16, #tpu.memory_space<vmem>>, vector<16x128xbf16>
    tpu.vector_store %arg7[%c224_305, %c640_306], %313 {strides = array<i32>} : memref<256x1152xbf16, #tpu.memory_space<vmem>>, vector<16x128xbf16>,
    %c208_307 = arith.constant 208 : index
    %c768_308 = arith.constant 768 : index
    %320 = vector.load %arg7[%c208_307, %c768_308] : memref<256x1152xbf16, #tpu.memory_space<vmem>>, vector<16x128xbf16>
    tpu.vector_store %arg7[%c208_307, %c768_308], %311 {strides = array<i32>} : memref<256x1152xbf16, #tpu.memory_space<vmem>>, vector<16x128xbf16>,
    %c208_309 = arith.constant 208 : index
    %c896_310 = arith.constant 896 : index
    %321 = vector.load %arg7[%c208_309, %c896_310] : memref<256x1152xbf16, #tpu.memory_space<vmem>>, vector<16x128xbf16>
    tpu.vector_store %arg7[%c208_309, %c896_310], %312 {strides = array<i32>} : memref<256x1152xbf16, #tpu.memory_space<vmem>>, vector<16x128xbf16>,
    %c208_311 = arith.constant 208 : index
    %c1024_312 = arith.constant 1024 : index
    %322 = vector.load %arg7[%c208_311, %c1024_312] : memref<256x1152xbf16, #tpu.memory_space<vmem>>, vector<16x128xbf16>
    tpu.vector_store %arg7[%c208_311, %c1024_312], %313 {strides = array<i32>} : memref<256x1152xbf16, #tpu.memory_space<vmem>>, vector<16x128xbf16>,
    %c0_313 = arith.constant 0 : index
    %c15 = arith.constant 15 : index
    %c0_314 = arith.constant 0 : index
    %c0_315 = arith.constant 0 : index
    %323 = vector.load %arg1[%c0_313, %c15, %c0_314, %c0_315] : memref<1x16x16x128xbf16, #tpu.memory_space<vmem>>, vector<1x1x16x128xbf16>
    %324 = vector.shape_cast %323 : vector<1x1x16x128xbf16> to vector<16x128xbf16>
    %325 = arith.extf %324 : vector<16x128xbf16> to vector<16x128xf32>
    %326 = arith.mulf %325, %2 : vector<16x128xf32>
    %327 = arith.addf %326, %5 : vector<16x128xf32>
    %cst_316 = arith.constant 0.000000e+00 : f32
    %328 = vector.broadcast %cst_316 : f32 to vector<16x128xf32>
    %329 = arith.maximumf %327, %328 : vector<16x128xf32>
    %330 = arith.truncf %329 : vector<16x128xf32> to vector<16x128xbf16>
    %331 = tpu.concatenate %7, %330, %7 in 0 : vector<1x128xbf16>, vector<16x128xbf16>, vector<1x128xbf16> -> vector<18x128xbf16>
    %332 = vector.extract_strided_slice %331 {offsets = [0, 0], sizes = [16, 128], strides = [1, 1]} : vector<18x128xbf16> to vector<16x128xbf16>
    %333 = vector.extract_strided_slice %331 {offsets = [1, 0], sizes = [16, 128], strides = [1, 1]} : vector<18x128xbf16> to vector<16x128xbf16>
    %334 = vector.extract_strided_slice %331 {offsets = [2, 0], sizes = [16, 128], strides = [1, 1]} : vector<18x128xbf16> to vector<16x128xbf16>
    %c240_317 = arith.constant 240 : index
    %c384_318 = arith.constant 384 : index
    %335 = vector.load %arg7[%c240_317, %c384_318] : memref<256x1152xbf16, #tpu.memory_space<vmem>>, vector<16x128xbf16>
    tpu.vector_store %arg7[%c240_317, %c384_318], %332 {strides = array<i32>} : memref<256x1152xbf16, #tpu.memory_space<vmem>>, vector<16x128xbf16>,
    %c240_319 = arith.constant 240 : index
    %c512_320 = arith.constant 512 : index
    %336 = vector.load %arg7[%c240_319, %c512_320] : memref<256x1152xbf16, #tpu.memory_space<vmem>>, vector<16x128xbf16>
    tpu.vector_store %arg7[%c240_319, %c512_320], %333 {strides = array<i32>} : memref<256x1152xbf16, #tpu.memory_space<vmem>>, vector<16x128xbf16>,
    %c240_321 = arith.constant 240 : index
    %c640_322 = arith.constant 640 : index
    %337 = vector.load %arg7[%c240_321, %c640_322] : memref<256x1152xbf16, #tpu.memory_space<vmem>>, vector<16x128xbf16>
    tpu.vector_store %arg7[%c240_321, %c640_322], %334 {strides = array<i32>} : memref<256x1152xbf16, #tpu.memory_space<vmem>>, vector<16x128xbf16>,
    %c224_323 = arith.constant 224 : index
    %c768_324 = arith.constant 768 : index
    %338 = vector.load %arg7[%c224_323, %c768_324] : memref<256x1152xbf16, #tpu.memory_space<vmem>>, vector<16x128xbf16>
    tpu.vector_store %arg7[%c224_323, %c768_324], %332 {strides = array<i32>} : memref<256x1152xbf16, #tpu.memory_space<vmem>>, vector<16x128xbf16>,
    %c224_325 = arith.constant 224 : index
    %c896_326 = arith.constant 896 : index
    %339 = vector.load %arg7[%c224_325, %c896_326] : memref<256x1152xbf16, #tpu.memory_space<vmem>>, vector<16x128xbf16>
    tpu.vector_store %arg7[%c224_325, %c896_326], %333 {strides = array<i32>} : memref<256x1152xbf16, #tpu.memory_space<vmem>>, vector<16x128xbf16>,
    %c224_327 = arith.constant 224 : index
    %c1024_328 = arith.constant 1024 : index
    %340 = vector.load %arg7[%c224_327, %c1024_328] : memref<256x1152xbf16, #tpu.memory_space<vmem>>, vector<16x128xbf16>
    tpu.vector_store %arg7[%c224_327, %c1024_328], %334 {strides = array<i32>} : memref<256x1152xbf16, #tpu.memory_space<vmem>>, vector<16x128xbf16>,
    %c240_329 = arith.constant 240 : index
    %c768_330 = arith.constant 768 : index
    %341 = vector.load %arg7[%c240_329, %c768_330] : memref<256x1152xbf16, #tpu.memory_space<vmem>>, vector<16x128xbf16>
    tpu.vector_store %arg7[%c240_329, %c768_330], %6 {strides = array<i32>} : memref<256x1152xbf16, #tpu.memory_space<vmem>>, vector<16x128xbf16>,
    %c240_331 = arith.constant 240 : index
    %c896_332 = arith.constant 896 : index
    %342 = vector.load %arg7[%c240_331, %c896_332] : memref<256x1152xbf16, #tpu.memory_space<vmem>>, vector<16x128xbf16>
    tpu.vector_store %arg7[%c240_331, %c896_332], %6 {strides = array<i32>} : memref<256x1152xbf16, #tpu.memory_space<vmem>>, vector<16x128xbf16>,
    %c240_333 = arith.constant 240 : index
    %c1024_334 = arith.constant 1024 : index
    %343 = vector.load %arg7[%c240_333, %c1024_334] : memref<256x1152xbf16, #tpu.memory_space<vmem>>, vector<16x128xbf16>
    tpu.vector_store %arg7[%c240_333, %c1024_334], %6 {strides = array<i32>} : memref<256x1152xbf16, #tpu.memory_space<vmem>>, vector<16x128xbf16>,
    %c0_335 = arith.constant 0 : index
    %c0_336 = arith.constant 0 : index
    %344 = vector.load %arg7[%c0_335, %c0_336] : memref<256x1152xbf16, #tpu.memory_space<vmem>>, vector<256x1152xbf16>
    %c0_337 = arith.constant 0 : index
    %c0_338 = arith.constant 0 : index
    %345 = vector.load %arg4[%c0_337, %c0_338] : memref<1152x128xbf16, #tpu.memory_space<vmem>>, vector<1152x128xbf16>
    %cst_339 = arith.constant dense<0.000000e+00> : vector<256x128xf32>
    %346 = tpu.matmul %344, %345, %cst_339 {dimension_numbers = #tpu.dot_dimension_numbers<[1], [0], [0], [1], [0, 0, 1, 1], [], []>} : vector<256x1152xbf16>, vector<1152x128xbf16>, vector<256x128xf32> -> vector<256x128xf32>
    %c0_340 = arith.constant 0 : index
    %c0_341 = arith.constant 0 : index
    %c0_342 = arith.constant 0 : index
    %347 = vector.load %arg5[%c0_340, %c0_341, %c0_342] : memref<1x256x128xbf16, #tpu.memory_space<vmem>>, vector<1x256x128xbf16>
    %348 = vector.shape_cast %347 : vector<1x256x128xbf16> to vector<256x128xbf16>
    %349 = arith.extf %348 : vector<256x128xbf16> to vector<256x128xf32>
    %350 = arith.addf %346, %349 : vector<256x128xf32>
    %c0_343 = arith.constant 0 : index
    %c0_344 = arith.constant 0 : index
    %c0_345 = arith.constant 0 : index
    %351 = vector.load %arg6[%c0_343, %c0_344, %c0_345] : memref<1x256x128xf32, #tpu.memory_space<vmem>>, vector<1x256x128xf32>
    %352 = vector.shape_cast %351 : vector<1x256x128xf32> to vector<256x128xf32>
    %353 = vector.shape_cast %350 : vector<256x128xf32> to vector<1x256x128xf32>
    tpu.vector_store %arg6[%c0_343, %c0_344, %c0_345], %353 {strides = array<i32>} : memref<1x256x128xf32, #tpu.memory_space<vmem>>, vector<1x256x128xf32>,
    return
  }
  func.func @transform_0(%arg0: i32) -> (i32, i32, i32, i32) {
    %c0_i32 = arith.constant 0 : i32
    %c0_i32_0 = arith.constant 0 : i32
    %c0_i32_1 = arith.constant 0 : i32
    %c0_i32_2 = arith.constant 0 : i32
    return %arg0, %c0_i32, %c0_i32_0, %c0_i32_1 : i32, i32, i32, i32
  }
  func.func @transform_1(%arg0: i32) -> (i32, i32) {
    %c0_i32 = arith.constant 0 : i32
    %c0_i32_0 = arith.constant 0 : i32
    %c0_i32_1 = arith.constant 0 : i32
    return %c0_i32, %c0_i32_0 : i32, i32
  }
  func.func @transform_2(%arg0: i32) -> (i32, i32) {
    %c0_i32 = arith.constant 0 : i32
    %c0_i32_0 = arith.constant 0 : i32
    %c0_i32_1 = arith.constant 0 : i32
    return %c0_i32, %c0_i32_0 : i32, i32
  }
  func.func @transform_3(%arg0: i32) -> (i32, i32) {
    %c0_i32 = arith.constant 0 : i32
    %c0_i32_0 = arith.constant 0 : i32
    %c0_i32_1 = arith.constant 0 : i32
    return %c0_i32, %c0_i32_0 : i32, i32
  }
  func.func @transform_4(%arg0: i32) -> (i32, i32, i32) {
    %c0_i32 = arith.constant 0 : i32
    %c0_i32_0 = arith.constant 0 : i32
    %c0_i32_1 = arith.constant 0 : i32
    return %arg0, %c0_i32, %c0_i32_0 : i32, i32, i32
  }
  func.func @transform_5(%arg0: i32) -> (i32, i32, i32) {
    %c0_i32 = arith.constant 0 : i32
    %c0_i32_0 = arith.constant 0 : i32
    %c0_i32_1 = arith.constant 0 : i32
    return %arg0, %c0_i32, %c0_i32_0 : i32, i32, i32
  }
}

</mosaic_0001>

<llo_original>
// kernel: preact_block.4
$region0: #{preact_block.4}
  #allocation0 [shape = 'u32[]', space=smem, size = 0x4, offset = 0x4, fixed_abs, tag = 'smem constant byte address 0x4 - core index']
  #allocation1 [shape = 'u32[144,128]{1,0:T(1,128)}', space=vmem, size = 0x12000, scoped, tag = 'internal scratch']
  %s0 = inlined_call_operand.vmem [shape: f32[2,256,128], index: 0, kind: input, shape index: {}]
  %s1 = inlined_call_operand.vmem [shape: f32[2,1,128], index: 1, kind: output, shape index: {0}]
  %s2 = inlined_call_operand.vmem [shape: f32[2,1,128], index: 2, kind: output, shape index: {1}]
  %3 = xla_tuple %s1, %s2
  %s4 = sld [smem:[#allocation0]]
  $region45: #{preact_block.4} parent=0
    _
  %s6 = ssub.s32 1, %s4
  %s7 = scalar_select 0, %s6, %s4
  loop: start=0, step=1, limit=4
  $region2: #{preact_block.4} parent=0 // loop_pre_header
    _
  $region3: #{preact_block.4} parent=0 // loop_header
    %s9 = sphi 0, %s13
    %p10 = scmp.ge.s32.totalorder %s9, 4
    %s19 = sphi 0, %s21
    %s22 = sphi 0, %s19
    %s23 = sphi 0, %s22
    %s39 = sphi 0, %s23
    %s45 = sphi 0, %s47
    %s48 = sphi 0, %s45
    %s49 = sphi 0, %s48
    %s65 = sphi 0, %s49
    %s71 = sphi 0, %s73
    %s74 = sphi 0, %s71
    %s75 = sphi 0, %s74
    %s91 = sphi 0, %s75
  $region4: #{preact_block.4} parent=0 // loop_header_branch
    %12 = sbr.rel (%p10) target = $region8
  $region5: #{preact_block.4} parent=0 // loop_body
    %s14 = ssub.s32 %s9, 1
    %s15 = ssub.s32 %s9, 2
    %s16 = sadd.s32 %s9, 1
    %s17 = ssub.s32 %s9, %s16
    %p18 = scmp.eq.s32.totalorder %s17, 0
    %s20 = sadd.s32 %s19, 1
    %s21 = scalar_select %p18, %s19, %s20
    %p24 = pneg %p18
    %p25 = scmp.eq.s32.totalorder %s9, 1
    %p26 = por %p24, %p25
    %p27 = scmp.ne.s32.totalorder %s19, %s22
    %p28 = scmp.eq.s32.totalorder %s9, 0
    %p29 = por %p27, %p28
    %p30 = scmp.ne.s32.totalorder %s19, %s22
    %p31 = scmp.eq.s32.totalorder %s14, 1
    %p32 = por %p30, %p31
    %p33 = scmp.ne.s32.totalorder %s22, %s23
    %p34 = scmp.eq.s32.totalorder %s14, 0
    %p35 = por %p33, %p34
    %p36 = scmp.ne.s32.totalorder %s22, %s23
    %p37 = scmp.eq.s32.totalorder %s15, 1
    %p38 = por %p36, %p37
    %p40 = scmp.ne.s32.totalorder %s23, %s39
    %p41 = scmp.eq.s32.totalorder %s15, 0
    %p42 = por %p40, %p41
    %s43 = ssub.s32 %s9, %s16
    %p44 = scmp.eq.s32.totalorder %s43, 0
    %s46 = sadd.s32 %s45, 1
    %s47 = scalar_select %p44, %s45, %s46
    %p50 = pneg %p44
    %p51 = scmp.eq.s32.totalorder %s9, 1
    %p52 = por %p50, %p51
    %p53 = scmp.ne.s32.totalorder %s45, %s48
    %p54 = scmp.eq.s32.totalorder %s9, 0
    %p55 = por %p53, %p54
    %p56 = scmp.ne.s32.totalorder %s45, %s48
    %p57 = scmp.eq.s32.totalorder %s14, 1
    %p58 = por %p56, %p57
    %p59 = scmp.ne.s32.totalorder %s48, %s49
    %p60 = scmp.eq.s32.totalorder %s14, 0
    %p61 = por %p59, %p60
    %p62 = scmp.ne.s32.totalorder %s48, %s49
    %p63 = scmp.eq.s32.totalorder %s15, 1
    %p64 = por %p62, %p63
    %p66 = scmp.ne.s32.totalorder %s49, %s65
    %p67 = scmp.eq.s32.totalorder %s15, 0
    %p68 = por %p66, %p67
    %s69 = ssub.s32 %s9, %s16
    %p70 = scmp.eq.s32.totalorder %s69, 0
    %s72 = sadd.s32 %s71, 1
    %s73 = scalar_select %p70, %s71, %s72
    %p76 = pneg %p70
    %p77 = scmp.eq.s32.totalorder %s9, 1
    %p78 = por %p76, %p77
    %p79 = scmp.ne.s32.totalorder %s71, %s74
    %p80 = scmp.eq.s32.totalorder %s9, 0
    %p81 = por %p79, %p80
    %p82 = scmp.ne.s32.totalorder %s71, %s74
    %p83 = scmp.eq.s32.totalorder %s14, 1
    %p84 = por %p82, %p83
    %p85 = scmp.ne.s32.totalorder %s74, %s75
    %p86 = scmp.eq.s32.totalorder %s14, 0
    %p87 = por %p85, %p86
    %p88 = scmp.ne.s32.totalorder %s74, %s75
    %p89 = scmp.eq.s32.totalorder %s15, 1
    %p90 = por %p88, %p89
    %p92 = scmp.ne.s32.totalorder %s75, %s91
    %p93 = scmp.eq.s32.totalorder %s15, 0
    %p94 = por %p92, %p93
    %p95 = scmp.le.s32.totalorder 1, %s9
    %p96 = scmp.lt.s32.totalorder %s9, 3
    %p97 = pnand %p95, %p96
    %p98 = pneg %p97
    // Predicated region
    $region9: #{preact_block.4} parent=5 // pred_check
      _
    $region10: #{preact_block.4} parent=5 // pred_check_branch
      %100 = sbr.rel (%p97) target = $region12
    $region11: #{preact_block.4} parent=5 // pred_region
      %s101 = ssub.s32 %s9, 1
    $region12: #{preact_block.4} parent=5 // pred_fallthru
      _
    %p102 = scmp.lt.s32.totalorder %s9, 2
    // Predicated region
    $region13: #{preact_block.4} parent=5 // pred_check
      %p103 = pneg %p102
    $region14: #{preact_block.4} parent=5 // pred_check_branch
      %105 = sbr.rel (%p103) target = $region16
    $region15: #{preact_block.4} parent=5 // pred_region
      // Predicated region
      $region17: #{preact_block.4} parent=15 // pred_check
        %p106 = pneg %p29
      $region18: #{preact_block.4} parent=15 // pred_check_branch
        %108 = sbr.rel (%p106) target = $region20
      $region19: #{preact_block.4} parent=15 // pred_region
        %p109 = scmp.lt.s32.totalorder %s9, 1
        %s110 = scalar_select %p109, %s9, 1
        %s111 = smul.addr %s110, 32
        %s112 = smul.addr %s111, 8
        %s113 = scalar_lea.vmem %s0, %s112
      $region20: #{preact_block.4} parent=15 // pred_fallthru
        _
    $region16: #{preact_block.4} parent=5 // pred_fallthru
      _
    %p114 = scmp.le.s32.totalorder 1, %s9
    %p115 = scmp.lt.s32.totalorder %s9, 3
    %p116 = pnand %p114, %p115
    %p117 = pneg %p116
    // Predicated region
    $region21: #{preact_block.4} parent=5 // pred_check
      _
    $region22: #{preact_block.4} parent=5 // pred_check_branch
      %119 = sbr.rel (%p116) target = $region24
    $region23: #{preact_block.4} parent=5 // pred_region
      %s120 = ssub.s32 %s9, 1
      %p121 = scmp.lt.s32.totalorder %s14, 1
      %s122 = scalar_select %p121, %s14, 1
      %s123 = smul.addr %s122, 32
      %s124 = smul.addr %s123, 8
      %s125 = scalar_lea.vmem %s0, %s124
      %p126 = pneg %p35
      %p127 = pneg %p32
      %p128 = pneg %p61
      %p129 = pneg %p58
      %p130 = scmp.lt.s32.totalorder %s14, 1
      %s131 = scalar_select %p130, %s14, 1
      %s132 = scalar_lea.vmem %s1, %s131
      %p133 = pneg %p87
      %p134 = pneg %p84
      %p135 = scmp.lt.s32.totalorder %s14, 1
      %s136 = scalar_select %p135, %s14, 1
      %s137 = scalar_lea.vmem %s2, %s136
      %p138 = scmp.lt.s32.totalorder %s14, 1
      %s139 = scalar_select %p138, %s14, 1
      %s140 = smul.addr %s139, 32
      %s141 = smul.addr %s140, 8
      %s142 = scalar_lea.vmem %s0, %s141
      %p143 = scmp.lt.s32.totalorder %s14, 1
      %s144 = scalar_select %p143, %s14, 1
      %s145 = scalar_lea.vmem %s1, %s144
      %p146 = scmp.lt.s32.totalorder %s14, 1
      %s147 = scalar_select %p146, %s14, 1
      %s148 = scalar_lea.vmem %s2, %s147
      %v149 = vld [vmem:[%s142] sm:$0xff]
      %v150 = vld [vmem:[%s142 + $0x8] sm:$0xff]
      %v151 = vld [vmem:[%s142 + $0x10] sm:$0xff]
      %v152 = vld [vmem:[%s142 + $0x18] sm:$0xff]
      %v153 = vld [vmem:[%s142 + $0x20] sm:$0xff]
      %v154 = vld [vmem:[%s142 + $0x28] sm:$0xff]
      %v155 = vld [vmem:[%s142 + $0x30] sm:$0xff]
      %v156 = vld [vmem:[%s142 + $0x38] sm:$0xff]
      %v157 = vld [vmem:[%s142 + $0x40] sm:$0xff]
      %v158 = vld [vmem:[%s142 + $0x48] sm:$0xff]
      %v159 = vld [vmem:[%s142 + $0x50] sm:$0xff]
      %v160 = vld [vmem:[%s142 + $0x58] sm:$0xff]
      %v161 = vld [vmem:[%s142 + $0x60] sm:$0xff]
      %v162 = vld [vmem:[%s142 + $0x68] sm:$0xff]
      %v163 = vld [vmem:[%s142 + $0x70] sm:$0xff]
      %v164 = vld [vmem:[%s142 + $0x78] sm:$0xff]
      %v165 = vld [vmem:[%s142 + $0x80] sm:$0xff]
      %v166 = vld [vmem:[%s142 + $0x88] sm:$0xff]
      %v167 = vld [vmem:[%s142 + $0x90] sm:$0xff]
      %v168 = vld [vmem:[%s142 + $0x98] sm:$0xff]
      %v169 = vld [vmem:[%s142 + $0xa0] sm:$0xff]
      %v170 = vld [vmem:[%s142 + $0xa8] sm:$0xff]
      %v171 = vld [vmem:[%s142 + $0xb0] sm:$0xff]
      %v172 = vld [vmem:[%s142 + $0xb8] sm:$0xff]
      %v173 = vld [vmem:[%s142 + $0xc0] sm:$0xff]
      %v174 = vld [vmem:[%s142 + $0xc8] sm:$0xff]
      %v175 = vld [vmem:[%s142 + $0xd0] sm:$0xff]
      %v176 = vld [vmem:[%s142 + $0xd8] sm:$0xff]
      %v177 = vld [vmem:[%s142 + $0xe0] sm:$0xff]
      %v178 = vld [vmem:[%s142 + $0xe8] sm:$0xff]
      %v179 = vld [vmem:[%s142 + $0xf0] sm:$0xff]
      %v180 = vld [vmem:[%s142 + $0xf8] sm:$0xff]
      %v181 = vadd.f32 %v149, %v150
      %v182 = vadd.f32 %v181, %v151
      %v183 = vadd.f32 %v182, %v152
      %v184 = vadd.f32 %v183, %v153
      %v185 = vadd.f32 %v184, %v154
      %v186 = vadd.f32 %v185, %v155
      %v187 = vadd.f32 %v186, %v156
      %v188 = vadd.f32 %v187, %v157
      %v189 = vadd.f32 %v188, %v158
      %v190 = vadd.f32 %v189, %v159
      %v191 = vadd.f32 %v190, %v160
      %v192 = vadd.f32 %v191, %v161
      %v193 = vadd.f32 %v192, %v162
      %v194 = vadd.f32 %v193, %v163
      %v195 = vadd.f32 %v194, %v164
      %v196 = vadd.f32 %v195, %v165
      %v197 = vadd.f32 %v196, %v166
      %v198 = vadd.f32 %v197, %v167
      %v199 = vadd.f32 %v198, %v168
      %v200 = vadd.f32 %v199, %v169
      %v201 = vadd.f32 %v200, %v170
      %v202 = vadd.f32 %v201, %v171
      %v203 = vadd.f32 %v202, %v172
      %v204 = vadd.f32 %v203, %v173
      %v205 = vadd.f32 %v204, %v174
      %v206 = vadd.f32 %v205, %v175
      %v207 = vadd.f32 %v206, %v176
      %v208 = vadd.f32 %v207, %v177
      %v209 = vadd.f32 %v208, %v178
      %v210 = vadd.f32 %v209, %v179
      %v211 = vadd.f32 %v210, %v180
      %v212 = vrot.slane %v211, 4
      %v213 = vadd.f32 %v211, %v212
      %v214 = vrot.slane %v213, 2
      %v215 = vadd.f32 %v213, %v214
      %v216 = vrot.slane %v215, 1
      %v217 = vadd.f32 %v215, %v216
      %218 = vst [vmem:[%s145] sm:$0x1] %v217
      %v219 = vmul.f32 %v149, %v149
      %v220 = vmul.f32 %v150, %v150
      %v221 = vmul.f32 %v151, %v151
      %v222 = vmul.f32 %v152, %v152
      %v223 = vmul.f32 %v153, %v153
      %v224 = vmul.f32 %v154, %v154
      %v225 = vmul.f32 %v155, %v155
      %v226 = vmul.f32 %v156, %v156
      %v227 = vmul.f32 %v157, %v157
      %v228 = vmul.f32 %v158, %v158
      %v229 = vmul.f32 %v159, %v159
      %v230 = vmul.f32 %v160, %v160
      %v231 = vmul.f32 %v161, %v161
      %v232 = vmul.f32 %v162, %v162
      %v233 = vmul.f32 %v163, %v163
      %v234 = vmul.f32 %v164, %v164
      %v235 = vmul.f32 %v165, %v165
      %v236 = vmul.f32 %v166, %v166
      %v237 = vmul.f32 %v167, %v167
      %v238 = vmul.f32 %v168, %v168
      %v239 = vmul.f32 %v169, %v169
      %v240 = vmul.f32 %v170, %v170
      %v241 = vmul.f32 %v171, %v171
      %v242 = vmul.f32 %v172, %v172
      %v243 = vmul.f32 %v173, %v173
      %v244 = vmul.f32 %v174, %v174
      %v245 = vmul.f32 %v175, %v175
      %v246 = vmul.f32 %v176, %v176
      %v247 = vmul.f32 %v177, %v177
      %v248 = vmul.f32 %v178, %v178
      %v249 = vmul.f32 %v179, %v179
      %v250 = vmul.f32 %v180, %v180
      %v251 = vadd.f32 %v219, %v220
      %v252 = vadd.f32 %v251, %v221
      %v253 = vadd.f32 %v252, %v222
      %v254 = vadd.f32 %v253, %v223
      %v255 = vadd.f32 %v254, %v224
      %v256 = vadd.f32 %v255, %v225
      %v257 = vadd.f32 %v256, %v226
      %v258 = vadd.f32 %v257, %v227
      %v259 = vadd.f32 %v258, %v228
      %v260 = vadd.f32 %v259, %v229
      %v261 = vadd.f32 %v260, %v230
      %v262 = vadd.f32 %v261, %v231
      %v263 = vadd.f32 %v262, %v232
      %v264 = vadd.f32 %v263, %v233
      %v265 = vadd.f32 %v264, %v234
      %v266 = vadd.f32 %v265, %v235
      %v267 = vadd.f32 %v266, %v236
      %v268 = vadd.f32 %v267, %v237
      %v269 = vadd.f32 %v268, %v238
      %v270 = vadd.f32 %v269, %v239
      %v271 = vadd.f32 %v270, %v240
      %v272 = vadd.f32 %v271, %v241
      %v273 = vadd.f32 %v272, %v242
      %v274 = vadd.f32 %v273, %v243
      %v275 = vadd.f32 %v274, %v244
      %v276 = vadd.f32 %v275, %v245
      %v277 = vadd.f32 %v276, %v246
      %v278 = vadd.f32 %v277, %v247
      %v279 = vadd.f32 %v278, %v248
      %v280 = vadd.f32 %v279, %v249
      %v281 = vadd.f32 %v280, %v250
      %v282 = vrot.slane %v281, 4
      %v283 = vadd.f32 %v281, %v282
      %v284 = vrot.slane %v283, 2
      %v285 = vadd.f32 %v283, %v284
      %v286 = vrot.slane %v285, 1
      %v287 = vadd.f32 %v285, %v286
      %288 = vst [vmem:[%s148] sm:$0x1] %v287
      %p289 = scmp.lt.s32.totalorder %s14, 1
      %s290 = scalar_select %p289, %s14, 1
      %s291 = scalar_lea.vmem %s1, %s290
      %p292 = scmp.lt.s32.totalorder %s14, 1
      %s293 = scalar_select %p292, %s14, 1
      %s294 = scalar_lea.vmem %s2, %s293
      // Predicated region
      $region25: #{preact_block.4} parent=23 // pred_check
        %p295 = pneg %p58
      $region26: #{preact_block.4} parent=23 // pred_check_branch
        %297 = sbr.rel (%p295) target = $region28
      $region27: #{preact_block.4} parent=23 // pred_region
        _
      $region28: #{preact_block.4} parent=23 // pred_fallthru
        _
      // Predicated region
      $region29: #{preact_block.4} parent=23 // pred_check
        %p298 = pneg %p84
      $region30: #{preact_block.4} parent=23 // pred_check_branch
        %300 = sbr.rel (%p298) target = $region32
      $region31: #{preact_block.4} parent=23 // pred_region
        _
      $region32: #{preact_block.4} parent=23 // pred_fallthru
        _
    $region24: #{preact_block.4} parent=5 // pred_fallthru
      _
    %p301 = scmp.le.s32.totalorder 2, %s9
    // Predicated region
    $region33: #{preact_block.4} parent=5 // pred_check
      %p302 = pneg %p301
    $region34: #{preact_block.4} parent=5 // pred_check_branch
      %304 = sbr.rel (%p302) target = $region36
    $region35: #{preact_block.4} parent=5 // pred_region
      %s305 = ssub.s32 %s9, 2
      // Predicated region
      $region37: #{preact_block.4} parent=35 // pred_check
        %p306 = pneg %p64
      $region38: #{preact_block.4} parent=35 // pred_check_branch
        %308 = sbr.rel (%p306) target = $region40
      $region39: #{preact_block.4} parent=35 // pred_region
        %p309 = scmp.lt.s32.totalorder %s15, 1
        %s310 = scalar_select %p309, %s15, 1
        %s311 = scalar_lea.vmem %s1, %s310
      $region40: #{preact_block.4} parent=35 // pred_fallthru
        _
      // Predicated region
      $region41: #{preact_block.4} parent=35 // pred_check
        %p312 = pneg %p90
      $region42: #{preact_block.4} parent=35 // pred_check_branch
        %314 = sbr.rel (%p312) target = $region44
      $region43: #{preact_block.4} parent=35 // pred_region
        %p315 = scmp.lt.s32.totalorder %s15, 1
        %s316 = scalar_select %p315, %s15, 1
        %s317 = scalar_lea.vmem %s2, %s316
      $region44: #{preact_block.4} parent=35 // pred_fallthru
        _
    $region36: #{preact_block.4} parent=5 // pred_fallthru
      _
  $region6: #{preact_block.4} parent=0 // loop_footer
    %s13 = sadd.s32 1, %s9
  $region7: #{preact_block.4} parent=0 // loop_footer_branch
    %8 = sbr.rel target = $region3
  $region8: #{preact_block.4} parent=0 // loop_exit
    _

// kernel: preact_block.6
$region0: #{preact_block.6}
  #allocation0 [shape = 'u32[]', space=smem, size = 0x4, offset = 0x4, fixed_abs, tag = 'smem constant byte address 0x4 - core index']
  #allocation1 [shape = 'u32[144,128]{1,0:T(1,128)}', space=vmem, size = 0x12000, scoped, tag = 'internal scratch']
  %s0 = inlined_call_operand.vmem [shape: bf16[2,256,128], index: 0, kind: input, shape index: {}]
  %s1 = inlined_call_operand.vmem [shape: f32[2,1,128], index: 1, kind: output, shape index: {0}]
  %s2 = inlined_call_operand.vmem [shape: f32[2,1,128], index: 2, kind: output, shape index: {1}]
  %3 = xla_tuple %s1, %s2
  %s4 = sld [smem:[#allocation0]]
  $region45: #{preact_block.6} parent=0
    _
  %s6 = ssub.s32 1, %s4
  %s7 = scalar_select 0, %s6, %s4
  loop: start=0, step=1, limit=4
  $region2: #{preact_block.6} parent=0 // loop_pre_header
    _
  $region3: #{preact_block.6} parent=0 // loop_header
    %s9 = sphi 0, %s13
    %p10 = scmp.ge.s32.totalorder %s9, 4
    %s19 = sphi 0, %s21
    %s22 = sphi 0, %s19
    %s23 = sphi 0, %s22
    %s39 = sphi 0, %s23
    %s45 = sphi 0, %s47
    %s48 = sphi 0, %s45
    %s49 = sphi 0, %s48
    %s65 = sphi 0, %s49
    %s71 = sphi 0, %s73
    %s74 = sphi 0, %s71
    %s75 = sphi 0, %s74
    %s91 = sphi 0, %s75
  $region4: #{preact_block.6} parent=0 // loop_header_branch
    %12 = sbr.rel (%p10) target = $region8
  $region5: #{preact_block.6} parent=0 // loop_body
    %s14 = ssub.s32 %s9, 1
    %s15 = ssub.s32 %s9, 2
    %s16 = sadd.s32 %s9, 1
    %s17 = ssub.s32 %s9, %s16
    %p18 = scmp.eq.s32.totalorder %s17, 0
    %s20 = sadd.s32 %s19, 1
    %s21 = scalar_select %p18, %s19, %s20
    %p24 = pneg %p18
    %p25 = scmp.eq.s32.totalorder %s9, 1
    %p26 = por %p24, %p25
    %p27 = scmp.ne.s32.totalorder %s19, %s22
    %p28 = scmp.eq.s32.totalorder %s9, 0
    %p29 = por %p27, %p28
    %p30 = scmp.ne.s32.totalorder %s19, %s22
    %p31 = scmp.eq.s32.totalorder %s14, 1
    %p32 = por %p30, %p31
    %p33 = scmp.ne.s32.totalorder %s22, %s23
    %p34 = scmp.eq.s32.totalorder %s14, 0
    %p35 = por %p33, %p34
    %p36 = scmp.ne.s32.totalorder %s22, %s23
    %p37 = scmp.eq.s32.totalorder %s15, 1
    %p38 = por %p36, %p37
    %p40 = scmp.ne.s32.totalorder %s23, %s39
    %p41 = scmp.eq.s32.totalorder %s15, 0
    %p42 = por %p40, %p41
    %s43 = ssub.s32 %s9, %s16
    %p44 = scmp.eq.s32.totalorder %s43, 0
    %s46 = sadd.s32 %s45, 1
    %s47 = scalar_select %p44, %s45, %s46
    %p50 = pneg %p44
    %p51 = scmp.eq.s32.totalorder %s9, 1
    %p52 = por %p50, %p51
    %p53 = scmp.ne.s32.totalorder %s45, %s48
    %p54 = scmp.eq.s32.totalorder %s9, 0
    %p55 = por %p53, %p54
    %p56 = scmp.ne.s32.totalorder %s45, %s48
    %p57 = scmp.eq.s32.totalorder %s14, 1
    %p58 = por %p56, %p57
    %p59 = scmp.ne.s32.totalorder %s48, %s49
    %p60 = scmp.eq.s32.totalorder %s14, 0
    %p61 = por %p59, %p60
    %p62 = scmp.ne.s32.totalorder %s48, %s49
    %p63 = scmp.eq.s32.totalorder %s15, 1
    %p64 = por %p62, %p63
    %p66 = scmp.ne.s32.totalorder %s49, %s65
    %p67 = scmp.eq.s32.totalorder %s15, 0
    %p68 = por %p66, %p67
    %s69 = ssub.s32 %s9, %s16
    %p70 = scmp.eq.s32.totalorder %s69, 0
    %s72 = sadd.s32 %s71, 1
    %s73 = scalar_select %p70, %s71, %s72
    %p76 = pneg %p70
    %p77 = scmp.eq.s32.totalorder %s9, 1
    %p78 = por %p76, %p77
    %p79 = scmp.ne.s32.totalorder %s71, %s74
    %p80 = scmp.eq.s32.totalorder %s9, 0
    %p81 = por %p79, %p80
    %p82 = scmp.ne.s32.totalorder %s71, %s74
    %p83 = scmp.eq.s32.totalorder %s14, 1
    %p84 = por %p82, %p83
    %p85 = scmp.ne.s32.totalorder %s74, %s75
    %p86 = scmp.eq.s32.totalorder %s14, 0
    %p87 = por %p85, %p86
    %p88 = scmp.ne.s32.totalorder %s74, %s75
    %p89 = scmp.eq.s32.totalorder %s15, 1
    %p90 = por %p88, %p89
    %p92 = scmp.ne.s32.totalorder %s75, %s91
    %p93 = scmp.eq.s32.totalorder %s15, 0
    %p94 = por %p92, %p93
    %p95 = scmp.le.s32.totalorder 1, %s9
    %p96 = scmp.lt.s32.totalorder %s9, 3
    %p97 = pnand %p95, %p96
    %p98 = pneg %p97
    // Predicated region
    $region9: #{preact_block.6} parent=5 // pred_check
      _
    $region10: #{preact_block.6} parent=5 // pred_check_branch
      %100 = sbr.rel (%p97) target = $region12
    $region11: #{preact_block.6} parent=5 // pred_region
      %s101 = ssub.s32 %s9, 1
    $region12: #{preact_block.6} parent=5 // pred_fallthru
      _
    %p102 = scmp.lt.s32.totalorder %s9, 2
    // Predicated region
    $region13: #{preact_block.6} parent=5 // pred_check
      %p103 = pneg %p102
    $region14: #{preact_block.6} parent=5 // pred_check_branch
      %105 = sbr.rel (%p103) target = $region16
    $region15: #{preact_block.6} parent=5 // pred_region
      // Predicated region
      $region17: #{preact_block.6} parent=15 // pred_check
        %p106 = pneg %p29
      $region18: #{preact_block.6} parent=15 // pred_check_branch
        %108 = sbr.rel (%p106) target = $region20
      $region19: #{preact_block.6} parent=15 // pred_region
        %p109 = scmp.lt.s32.totalorder %s9, 1
        %s110 = scalar_select %p109, %s9, 1
        %s111 = smul.addr %s110, 32
        %s112 = smul.addr %s111, 4
        %s113 = scalar_lea.vmem %s0, %s112
      $region20: #{preact_block.6} parent=15 // pred_fallthru
        _
    $region16: #{preact_block.6} parent=5 // pred_fallthru
      _
    %p114 = scmp.le.s32.totalorder 1, %s9
    %p115 = scmp.lt.s32.totalorder %s9, 3
    %p116 = pnand %p114, %p115
    %p117 = pneg %p116
    // Predicated region
    $region21: #{preact_block.6} parent=5 // pred_check
      _
    $region22: #{preact_block.6} parent=5 // pred_check_branch
      %119 = sbr.rel (%p116) target = $region24
    $region23: #{preact_block.6} parent=5 // pred_region
      %s120 = ssub.s32 %s9, 1
      %p121 = scmp.lt.s32.totalorder %s14, 1
      %s122 = scalar_select %p121, %s14, 1
      %s123 = smul.addr %s122, 32
      %s124 = smul.addr %s123, 4
      %s125 = scalar_lea.vmem %s0, %s124
      %p126 = pneg %p35
      %p127 = pneg %p32
      %p128 = pneg %p61
      %p129 = pneg %p58
      %p130 = scmp.lt.s32.totalorder %s14, 1
      %s131 = scalar_select %p130, %s14, 1
      %s132 = scalar_lea.vmem %s1, %s131
      %p133 = pneg %p87
      %p134 = pneg %p84
      %p135 = scmp.lt.s32.totalorder %s14, 1
      %s136 = scalar_select %p135, %s14, 1
      %s137 = scalar_lea.vmem %s2, %s136
      %p138 = scmp.lt.s32.totalorder %s14, 1
      %s139 = scalar_select %p138, %s14, 1
      %s140 = smul.addr %s139, 32
      %s141 = smul.addr %s140, 4
      %s142 = scalar_lea.vmem %s0, %s141
      %p143 = scmp.lt.s32.totalorder %s14, 1
      %s144 = scalar_select %p143, %s14, 1
      %s145 = scalar_lea.vmem %s1, %s144
      %p146 = scmp.lt.s32.totalorder %s14, 1
      %s147 = scalar_select %p146, %s14, 1
      %s148 = scalar_lea.vmem %s2, %s147
      %v149 = vld [vmem:[%s142] sm:$0xf]
      %v150 = vld [vmem:[%s142 + $0x4] sm:$0xf]
      %v151 = vld [vmem:[%s142 + $0x8] sm:$0xf]
      %v152 = vld [vmem:[%s142 + $0xc] sm:$0xf]
      %v153 = vld [vmem:[%s142 + $0x10] sm:$0xf]
      %v154 = vld [vmem:[%s142 + $0x14] sm:$0xf]
      %v155 = vld [vmem:[%s142 + $0x18] sm:$0xf]
      %v156 = vld [vmem:[%s142 + $0x1c] sm:$0xf]
      %v157 = vld [vmem:[%s142 + $0x20] sm:$0xf]
      %v158 = vld [vmem:[%s142 + $0x24] sm:$0xf]
      %v159 = vld [vmem:[%s142 + $0x28] sm:$0xf]
      %v160 = vld [vmem:[%s142 + $0x2c] sm:$0xf]
      %v161 = vld [vmem:[%s142 + $0x30] sm:$0xf]
      %v162 = vld [vmem:[%s142 + $0x34] sm:$0xf]
      %v163 = vld [vmem:[%s142 + $0x38] sm:$0xf]
      %v164 = vld [vmem:[%s142 + $0x3c] sm:$0xf]
      %v165 = vld [vmem:[%s142 + $0x40] sm:$0xf]
      %v166 = vld [vmem:[%s142 + $0x44] sm:$0xf]
      %v167 = vld [vmem:[%s142 + $0x48] sm:$0xf]
      %v168 = vld [vmem:[%s142 + $0x4c] sm:$0xf]
      %v169 = vld [vmem:[%s142 + $0x50] sm:$0xf]
      %v170 = vld [vmem:[%s142 + $0x54] sm:$0xf]
      %v171 = vld [vmem:[%s142 + $0x58] sm:$0xf]
      %v172 = vld [vmem:[%s142 + $0x5c] sm:$0xf]
      %v173 = vld [vmem:[%s142 + $0x60] sm:$0xf]
      %v174 = vld [vmem:[%s142 + $0x64] sm:$0xf]
      %v175 = vld [vmem:[%s142 + $0x68] sm:$0xf]
      %v176 = vld [vmem:[%s142 + $0x6c] sm:$0xf]
      %v177 = vld [vmem:[%s142 + $0x70] sm:$0xf]
      %v178 = vld [vmem:[%s142 + $0x74] sm:$0xf]
      %v179 = vld [vmem:[%s142 + $0x78] sm:$0xf]
      %v180 = vld [vmem:[%s142 + $0x7c] sm:$0xf]
      %v181 = vunpack.c.l.bf16 %v149
      %v182 = vunpack.c.l.bf16 %v150
      %v183 = vunpack.c.l.bf16 %v151
      %v184 = vunpack.c.l.bf16 %v152
      %v185 = vunpack.c.l.bf16 %v153
      %v186 = vunpack.c.l.bf16 %v154
      %v187 = vunpack.c.l.bf16 %v155
      %v188 = vunpack.c.l.bf16 %v156
      %v189 = vunpack.c.l.bf16 %v157
      %v190 = vunpack.c.l.bf16 %v158
      %v191 = vunpack.c.l.bf16 %v159
      %v192 = vunpack.c.l.bf16 %v160
      %v193 = vunpack.c.l.bf16 %v161
      %v194 = vunpack.c.l.bf16 %v162
      %v195 = vunpack.c.l.bf16 %v163
      %v196 = vunpack.c.l.bf16 %v164
      %v197 = vunpack.c.l.bf16 %v165
      %v198 = vunpack.c.l.bf16 %v166
      %v199 = vunpack.c.l.bf16 %v167
      %v200 = vunpack.c.l.bf16 %v168
      %v201 = vunpack.c.l.bf16 %v169
      %v202 = vunpack.c.l.bf16 %v170
      %v203 = vunpack.c.l.bf16 %v171
      %v204 = vunpack.c.l.bf16 %v172
      %v205 = vunpack.c.l.bf16 %v173
      %v206 = vunpack.c.l.bf16 %v174
      %v207 = vunpack.c.l.bf16 %v175
      %v208 = vunpack.c.l.bf16 %v176
      %v209 = vunpack.c.l.bf16 %v177
      %v210 = vunpack.c.l.bf16 %v178
      %v211 = vunpack.c.l.bf16 %v179
      %v212 = vunpack.c.l.bf16 %v180
      %v213 = vadd.f32 %v181, %v182
      %v214 = vadd.f32 %v213, %v183
      %v215 = vadd.f32 %v214, %v184
      %v216 = vadd.f32 %v215, %v185
      %v217 = vadd.f32 %v216, %v186
      %v218 = vadd.f32 %v217, %v187
      %v219 = vadd.f32 %v218, %v188
      %v220 = vadd.f32 %v219, %v189
      %v221 = vadd.f32 %v220, %v190
      %v222 = vadd.f32 %v221, %v191
      %v223 = vadd.f32 %v222, %v192
      %v224 = vadd.f32 %v223, %v193
      %v225 = vadd.f32 %v224, %v194
      %v226 = vadd.f32 %v225, %v195
      %v227 = vadd.f32 %v226, %v196
      %v228 = vadd.f32 %v227, %v197
      %v229 = vadd.f32 %v228, %v198
      %v230 = vadd.f32 %v229, %v199
      %v231 = vadd.f32 %v230, %v200
      %v232 = vadd.f32 %v231, %v201
      %v233 = vadd.f32 %v232, %v202
      %v234 = vadd.f32 %v233, %v203
      %v235 = vadd.f32 %v234, %v204
      %v236 = vadd.f32 %v235, %v205
      %v237 = vadd.f32 %v236, %v206
      %v238 = vadd.f32 %v237, %v207
      %v239 = vadd.f32 %v238, %v208
      %v240 = vadd.f32 %v239, %v209
      %v241 = vadd.f32 %v240, %v210
      %v242 = vadd.f32 %v241, %v211
      %v243 = vadd.f32 %v242, %v212
      %v244 = vrot.slane %v243, 4
      %v245 = vadd.f32 %v243, %v244
      %v246 = vrot.slane %v245, 2
      %v247 = vadd.f32 %v245, %v246
      %v248 = vrot.slane %v247, 1
      %v249 = vadd.f32 %v247, %v248
      %250 = vst [vmem:[%s145] sm:$0x1] %v249
      %v251 = vmul.f32 %v181, %v181
      %v252 = vmul.f32 %v182, %v182
      %v253 = vmul.f32 %v183, %v183
      %v254 = vmul.f32 %v184, %v184
      %v255 = vmul.f32 %v185, %v185
      %v256 = vmul.f32 %v186, %v186
      %v257 = vmul.f32 %v187, %v187
      %v258 = vmul.f32 %v188, %v188
      %v259 = vmul.f32 %v189, %v189
      %v260 = vmul.f32 %v190, %v190
      %v261 = vmul.f32 %v191, %v191
      %v262 = vmul.f32 %v192, %v192
      %v263 = vmul.f32 %v193, %v193
      %v264 = vmul.f32 %v194, %v194
      %v265 = vmul.f32 %v195, %v195
      %v266 = vmul.f32 %v196, %v196
      %v267 = vmul.f32 %v197, %v197
      %v268 = vmul.f32 %v198, %v198
      %v269 = vmul.f32 %v199, %v199
      %v270 = vmul.f32 %v200, %v200
      %v271 = vmul.f32 %v201, %v201
      %v272 = vmul.f32 %v202, %v202
      %v273 = vmul.f32 %v203, %v203
      %v274 = vmul.f32 %v204, %v204
      %v275 = vmul.f32 %v205, %v205
      %v276 = vmul.f32 %v206, %v206
      %v277 = vmul.f32 %v207, %v207
      %v278 = vmul.f32 %v208, %v208
      %v279 = vmul.f32 %v209, %v209
      %v280 = vmul.f32 %v210, %v210
      %v281 = vmul.f32 %v211, %v211
      %v282 = vmul.f32 %v212, %v212
      %v283 = vadd.f32 %v251, %v252
      %v284 = vadd.f32 %v283, %v253
      %v285 = vadd.f32 %v284, %v254
      %v286 = vadd.f32 %v285, %v255
      %v287 = vadd.f32 %v286, %v256
      %v288 = vadd.f32 %v287, %v257
      %v289 = vadd.f32 %v288, %v258
      %v290 = vadd.f32 %v289, %v259
      %v291 = vadd.f32 %v290, %v260
      %v292 = vadd.f32 %v291, %v261
      %v293 = vadd.f32 %v292, %v262
      %v294 = vadd.f32 %v293, %v263
      %v295 = vadd.f32 %v294, %v264
      %v296 = vadd.f32 %v295, %v265
      %v297 = vadd.f32 %v296, %v266
      %v298 = vadd.f32 %v297, %v267
      %v299 = vadd.f32 %v298, %v268
      %v300 = vadd.f32 %v299, %v269
      %v301 = vadd.f32 %v300, %v270
      %v302 = vadd.f32 %v301, %v271
      %v303 = vadd.f32 %v302, %v272
      %v304 = vadd.f32 %v303, %v273
      %v305 = vadd.f32 %v304, %v274
      %v306 = vadd.f32 %v305, %v275
      %v307 = vadd.f32 %v306, %v276
      %v308 = vadd.f32 %v307, %v277
      %v309 = vadd.f32 %v308, %v278
      %v310 = vadd.f32 %v309, %v279
      %v311 = vadd.f32 %v310, %v280
      %v312 = vadd.f32 %v311, %v281
      %v313 = vadd.f32 %v312, %v282
      %v314 = vrot.slane %v313, 4
      %v315 = vadd.f32 %v313, %v314
      %v316 = vrot.slane %v315, 2
      %v317 = vadd.f32 %v315, %v316
      %v318 = vrot.slane %v317, 1
      %v319 = vadd.f32 %v317, %v318
      %320 = vst [vmem:[%s148] sm:$0x1] %v319
      %p321 = scmp.lt.s32.totalorder %s14, 1
      %s322 = scalar_select %p321, %s14, 1
      %s323 = scalar_lea.vmem %s1, %s322
      %p324 = scmp.lt.s32.totalorder %s14, 1
      %s325 = scalar_select %p324, %s14, 1
      %s326 = scalar_lea.vmem %s2, %s325
      // Predicated region
      $region25: #{preact_block.6} parent=23 // pred_check
        %p327 = pneg %p58
      $region26: #{preact_block.6} parent=23 // pred_check_branch
        %329 = sbr.rel (%p327) target = $region28
      $region27: #{preact_block.6} parent=23 // pred_region
        _
      $region28: #{preact_block.6} parent=23 // pred_fallthru
        _
      // Predicated region
      $region29: #{preact_block.6} parent=23 // pred_check
        %p330 = pneg %p84
      $region30: #{preact_block.6} parent=23 // pred_check_branch
        %332 = sbr.rel (%p330) target = $region32
      $region31: #{preact_block.6} parent=23 // pred_region
        _
      $region32: #{preact_block.6} parent=23 // pred_fallthru
        _
    $region24: #{preact_block.6} parent=5 // pred_fallthru
      _
    %p333 = scmp.le.s32.totalorder 2, %s9
    // Predicated region
    $region33: #{preact_block.6} parent=5 // pred_check
      %p334 = pneg %p333
    $region34: #{preact_block.6} parent=5 // pred_check_branch
      %336 = sbr.rel (%p334) target = $region36
    $region35: #{preact_block.6} parent=5 // pred_region
      %s337 = ssub.s32 %s9, 2
      // Predicated region
      $region37: #{preact_block.6} parent=35 // pred_check
        %p338 = pneg %p64
      $region38: #{preact_block.6} parent=35 // pred_check_branch
        %340 = sbr.rel (%p338) target = $region40
      $region39: #{preact_block.6} parent=35 // pred_region
        %p341 = scmp.lt.s32.totalorder %s15, 1
        %s342 = scalar_select %p341, %s15, 1
        %s343 = scalar_lea.vmem %s1, %s342
      $region40: #{preact_block.6} parent=35 // pred_fallthru
        _
      // Predicated region
      $region41: #{preact_block.6} parent=35 // pred_check
        %p344 = pneg %p90
      $region42: #{preact_block.6} parent=35 // pred_check_branch
        %346 = sbr.rel (%p344) target = $region44
      $region43: #{preact_block.6} parent=35 // pred_region
        %p347 = scmp.lt.s32.totalorder %s15, 1
        %s348 = scalar_select %p347, %s15, 1
        %s349 = scalar_lea.vmem %s2, %s348
      $region44: #{preact_block.6} parent=35 // pred_fallthru
        _
    $region36: #{preact_block.6} parent=5 // pred_fallthru
      _
  $region6: #{preact_block.6} parent=0 // loop_footer
    %s13 = sadd.s32 1, %s9
  $region7: #{preact_block.6} parent=0 // loop_footer_branch
    %8 = sbr.rel target = $region3
  $region8: #{preact_block.6} parent=0 // loop_exit
    _

// kernel: preact_block.5
$region0: #{preact_block.5}
  #allocation0 [shape = 'u32[]', space=smem, size = 0x4, offset = 0x4, fixed_abs, tag = 'smem constant byte address 0x4 - core index']
  #allocation1 [shape = 'u32[144,128]{1,0:T(1,128)}', space=vmem, size = 0x12000, scoped, tag = 'internal scratch']
  #allocation2 [shape = 'bf16[256,1152]{1,0:T(16,128)(2,1)}', space=vmem, size = 0x90000, scoped, tag = 'scratch operand']
  %s0 = inlined_call_operand.vmem [shape: f32[2,16,16,128], index: 0, kind: input, shape index: {}]
  %s1 = inlined_call_operand.vmem [shape: f32[1,128], index: 1, kind: input, shape index: {}]
  %s2 = inlined_call_operand.vmem [shape: f32[1,128], index: 2, kind: input, shape index: {}]
  %s3 = inlined_call_operand.vmem [shape: bf16[1152,256], index: 3, kind: input, shape index: {}]
  %s4 = inlined_call_operand.vmem [shape: bf16[2,256,128], index: 4, kind: output, shape index: {0}]
  %s5 = inlined_call_operand.vmem [shape: bf16[2,256,128], index: 5, kind: output, shape index: {1}]
  %6 = xla_tuple %s4, %s5
  %s7 = sld [smem:[#allocation0]]
  $region57: #{preact_block.5} parent=0
    _
  %s9 = ssub.s32 1, %s7
  %s10 = scalar_select 0, %s9, %s7
  loop: start=0, step=1, limit=4
  $region2: #{preact_block.5} parent=0 // loop_pre_header
    _
  $region3: #{preact_block.5} parent=0 // loop_header
    %s12 = sphi 0, %s16
    %p13 = scmp.ge.s32.totalorder %s12, 4
    %s22 = sphi 0, %s24
    %s25 = sphi 0, %s22
    %s26 = sphi 0, %s25
    %s42 = sphi 0, %s26
    %s46 = sphi 0, %s46
    %s48 = sphi 0, %s46
    %s49 = sphi 0, %s48
    %s63 = sphi 0, %s49
    %s67 = sphi 0, %s67
    %s69 = sphi 0, %s67
    %s70 = sphi 0, %s69
    %s84 = sphi 0, %s70
    %s88 = sphi 0, %s88
    %s90 = sphi 0, %s88
    %s91 = sphi 0, %s90
    %s105 = sphi 0, %s91
    %s111 = sphi 0, %s113
    %s114 = sphi 0, %s111
    %s115 = sphi 0, %s114
    %s131 = sphi 0, %s115
    %s137 = sphi 0, %s139
    %s140 = sphi 0, %s137
    %s141 = sphi 0, %s140
    %s157 = sphi 0, %s141
  $region4: #{preact_block.5} parent=0 // loop_header_branch
    %15 = sbr.rel (%p13) target = $region8
  $region5: #{preact_block.5} parent=0 // loop_body
    %s17 = ssub.s32 %s12, 1
    %s18 = ssub.s32 %s12, 2
    %s19 = sadd.s32 %s12, 1
    %s20 = ssub.s32 %s12, %s19
    %p21 = scmp.eq.s32.totalorder %s20, 0
    %s23 = sadd.s32 %s22, 1
    %s24 = scalar_select %p21, %s22, %s23
    %p27 = pneg %p21
    %p28 = scmp.eq.s32.totalorder %s12, 1
    %p29 = por %p27, %p28
    %p30 = scmp.ne.s32.totalorder %s22, %s25
    %p31 = scmp.eq.s32.totalorder %s12, 0
    %p32 = por %p30, %p31
    %p33 = scmp.ne.s32.totalorder %s22, %s25
    %p34 = scmp.eq.s32.totalorder %s17, 1
    %p35 = por %p33, %p34
    %p36 = scmp.ne.s32.totalorder %s25, %s26
    %p37 = scmp.eq.s32.totalorder %s17, 0
    %p38 = por %p36, %p37
    %p39 = scmp.ne.s32.totalorder %s25, %s26
    %p40 = scmp.eq.s32.totalorder %s18, 1
    %p41 = por %p39, %p40
    %p43 = scmp.ne.s32.totalorder %s26, %s42
    %p44 = scmp.eq.s32.totalorder %s18, 0
    %p45 = por %p43, %p44
    %s47 = sadd.s32 %s46, 1
    %p50 = scmp.eq.s32.totalorder %s12, 1
    %p51 = scmp.ne.s32.totalorder %s46, %s48
    %p52 = scmp.eq.s32.totalorder %s12, 0
    %p53 = por %p51, %p52
    %p54 = scmp.ne.s32.totalorder %s46, %s48
    %p55 = scmp.eq.s32.totalorder %s17, 1
    %p56 = por %p54, %p55
    %p57 = scmp.ne.s32.totalorder %s48, %s49
    %p58 = scmp.eq.s32.totalorder %s17, 0
    %p59 = por %p57, %p58
    %p60 = scmp.ne.s32.totalorder %s48, %s49
    %p61 = scmp.eq.s32.totalorder %s18, 1
    %p62 = por %p60, %p61
    %p64 = scmp.ne.s32.totalorder %s49, %s63
    %p65 = scmp.eq.s32.totalorder %s18, 0
    %p66 = por %p64, %p65
    %s68 = sadd.s32 %s67, 1
    %p71 = scmp.eq.s32.totalorder %s12, 1
    %p72 = scmp.ne.s32.totalorder %s67, %s69
    %p73 = scmp.eq.s32.totalorder %s12, 0
    %p74 = por %p72, %p73
    %p75 = scmp.ne.s32.totalorder %s67, %s69
    %p76 = scmp.eq.s32.totalorder %s17, 1
    %p77 = por %p75, %p76
    %p78 = scmp.ne.s32.totalorder %s69, %s70
    %p79 = scmp.eq.s32.totalorder %s17, 0
    %p80 = por %p78, %p79
    %p81 = scmp.ne.s32.totalorder %s69, %s70
    %p82 = scmp.eq.s32.totalorder %s18, 1
    %p83 = por %p81, %p82
    %p85 = scmp.ne.s32.totalorder %s70, %s84
    %p86 = scmp.eq.s32.totalorder %s18, 0
    %p87 = por %p85, %p86
    %s89 = sadd.s32 %s88, 1
    %p92 = scmp.eq.s32.totalorder %s12, 1
    %p93 = scmp.ne.s32.totalorder %s88, %s90
    %p94 = scmp.eq.s32.totalorder %s12, 0
    %p95 = por %p93, %p94
    %p96 = scmp.ne.s32.totalorder %s88, %s90
    %p97 = scmp.eq.s32.totalorder %s17, 1
    %p98 = por %p96, %p97
    %p99 = scmp.ne.s32.totalorder %s90, %s91
    %p100 = scmp.eq.s32.totalorder %s17, 0
    %p101 = por %p99, %p100
    %p102 = scmp.ne.s32.totalorder %s90, %s91
    %p103 = scmp.eq.s32.totalorder %s18, 1
    %p104 = por %p102, %p103
    %p106 = scmp.ne.s32.totalorder %s91, %s105
    %p107 = scmp.eq.s32.totalorder %s18, 0
    %p108 = por %p106, %p107
    %s109 = ssub.s32 %s12, %s19
    %p110 = scmp.eq.s32.totalorder %s109, 0
    %s112 = sadd.s32 %s111, 1
    %s113 = scalar_select %p110, %s111, %s112
    %p116 = pneg %p110
    %p117 = scmp.eq.s32.totalorder %s12, 1
    %p118 = por %p116, %p117
    %p119 = scmp.ne.s32.totalorder %s111, %s114
    %p120 = scmp.eq.s32.totalorder %s12, 0
    %p121 = por %p119, %p120
    %p122 = scmp.ne.s32.totalorder %s111, %s114
    %p123 = scmp.eq.s32.totalorder %s17, 1
    %p124 = por %p122, %p123
    %p125 = scmp.ne.s32.totalorder %s114, %s115
    %p126 = scmp.eq.s32.totalorder %s17, 0
    %p127 = por %p125, %p126
    %p128 = scmp.ne.s32.totalorder %s114, %s115
    %p129 = scmp.eq.s32.totalorder %s18, 1
    %p130 = por %p128, %p129
    %p132 = scmp.ne.s32.totalorder %s115, %s131
    %p133 = scmp.eq.s32.totalorder %s18, 0
    %p134 = por %p132, %p133
    %s135 = ssub.s32 %s12, %s19
    %p136 = scmp.eq.s32.totalorder %s135, 0
    %s138 = sadd.s32 %s137, 1
    %s139 = scalar_select %p136, %s137, %s138
    %p142 = pneg %p136
    %p143 = scmp.eq.s32.totalorder %s12, 1
    %p144 = por %p142, %p143
    %p145 = scmp.ne.s32.totalorder %s137, %s140
    %p146 = scmp.eq.s32.totalorder %s12, 0
    %p147 = por %p145, %p146
    %p148 = scmp.ne.s32.totalorder %s137, %s140
    %p149 = scmp.eq.s32.totalorder %s17, 1
    %p150 = por %p148, %p149
    %p151 = scmp.ne.s32.totalorder %s140, %s141
    %p152 = scmp.eq.s32.totalorder %s17, 0
    %p153 = por %p151, %p152
    %p154 = scmp.ne.s32.totalorder %s140, %s141
    %p155 = scmp.eq.s32.totalorder %s18, 1
    %p156 = por %p154, %p155
    %p158 = scmp.ne.s32.totalorder %s141, %s157
    %p159 = scmp.eq.s32.totalorder %s18, 0
    %p160 = por %p158, %p159
    %p161 = scmp.le.s32.totalorder 1, %s12
    %p162 = scmp.lt.s32.totalorder %s12, 3
    %p163 = pnand %p161, %p162
    %p164 = pneg %p163
    // Predicated region
    $region9: #{preact_block.5} parent=5 // pred_check
      _
    $region10: #{preact_block.5} parent=5 // pred_check_branch
      %166 = sbr.rel (%p163) target = $region12
    $region11: #{preact_block.5} parent=5 // pred_region
      %s167 = ssub.s32 %s12, 1
      // Predicated region
      $region13: #{preact_block.5} parent=11 // pred_check
        %p168 = pneg %p59
      $region14: #{preact_block.5} parent=11 // pred_check_branch
        %170 = sbr.rel (%p168) target = $region16
      $region15: #{preact_block.5} parent=11 // pred_region
        _
      $region16: #{preact_block.5} parent=11 // pred_fallthru
        _
      // Predicated region
      $region17: #{preact_block.5} parent=11 // pred_check
        %p171 = pneg %p80
      $region18: #{preact_block.5} parent=11 // pred_check_branch
        %173 = sbr.rel (%p171) target = $region20
      $region19: #{preact_block.5} parent=11 // pred_region
        _
      $region20: #{preact_block.5} parent=11 // pred_fallthru
        _
      // Predicated region
      $region21: #{preact_block.5} parent=11 // pred_check
        %p174 = pneg %p101
      $region22: #{preact_block.5} parent=11 // pred_check_branch
        %176 = sbr.rel (%p174) target = $region24
      $region23: #{preact_block.5} parent=11 // pred_region
        _
      $region24: #{preact_block.5} parent=11 // pred_fallthru
        _
    $region12: #{preact_block.5} parent=5 // pred_fallthru
      _
    %p177 = scmp.lt.s32.totalorder %s12, 2
    // Predicated region
    $region25: #{preact_block.5} parent=5 // pred_check
      %p178 = pneg %p177
    $region26: #{preact_block.5} parent=5 // pred_check_branch
      %180 = sbr.rel (%p178) target = $region28
    $region27: #{preact_block.5} parent=5 // pred_region
      // Predicated region
      $region29: #{preact_block.5} parent=27 // pred_check
        %p181 = pneg %p32
      $region30: #{preact_block.5} parent=27 // pred_check_branch
        %183 = sbr.rel (%p181) target = $region32
      $region31: #{preact_block.5} parent=27 // pred_region
        %p184 = scmp.lt.s32.totalorder %s12, 1
        %s185 = scalar_select %p184, %s12, 1
        %s186 = smul.addr %s185, 32
        %s187 = smul.addr %s186, 8
        %s188 = scalar_lea.vmem %s0, %s187
      $region32: #{preact_block.5} parent=27 // pred_fallthru
        _
    $region28: #{preact_block.5} parent=5 // pred_fallthru
      _
    %p189 = scmp.le.s32.totalorder 1, %s12
    %p190 = scmp.lt.s32.totalorder %s12, 3
    %p191 = pnand %p189, %p190
    %p192 = pneg %p191
    // Predicated region
    $region33: #{preact_block.5} parent=5 // pred_check
      _
    $region34: #{preact_block.5} parent=5 // pred_check_branch
      %194 = sbr.rel (%p191) target = $region36
    $region35: #{preact_block.5} parent=5 // pred_region
      %s195 = ssub.s32 %s12, 1
      %p196 = scmp.lt.s32.totalorder %s17, 1
      %s197 = scalar_select %p196, %s17, 1
      %s198 = smul.addr %s197, 32
      %s199 = smul.addr %s198, 8
      %s200 = scalar_lea.vmem %s0, %s199
      %p201 = pneg %p38
      %p202 = pneg %p35
      %p203 = pneg %p59
      %p204 = pneg %p56
      %p205 = pneg %p80
      %p206 = pneg %p77
      %p207 = pneg %p101
      %p208 = pneg %p98
      %p209 = pneg %p127
      %p210 = pneg %p124
      %p211 = scmp.lt.s32.totalorder %s17, 1
      %s212 = scalar_select %p211, %s17, 1
      %s213 = smul.addr %s212, 32
      %s214 = smul.addr %s213, 4
      %s215 = scalar_lea.vmem %s4, %s214
      %p216 = pneg %p153
      %p217 = pneg %p150
      %p218 = scmp.lt.s32.totalorder %s17, 1
      %s219 = scalar_select %p218, %s17, 1
      %s220 = smul.addr %s219, 32
      %s221 = smul.addr %s220, 4
      %s222 = scalar_lea.vmem %s5, %s221
      %p223 = scmp.lt.s32.totalorder %s17, 1
      %s224 = scalar_select %p223, %s17, 1
      %s225 = smul.addr %s224, 32
      %s226 = smul.addr %s225, 8
      %s227 = scalar_lea.vmem %s0, %s226
      %p228 = scmp.lt.s32.totalorder %s17, 1
      %s229 = scalar_select %p228, %s17, 1
      %s230 = smul.addr %s229, 32
      %s231 = smul.addr %s230, 4
      %s232 = scalar_lea.vmem %s4, %s231
      %p233 = scmp.lt.s32.totalorder %s17, 1
      %s234 = scalar_select %p233, %s17, 1
      %s235 = smul.addr %s234, 32
      %s236 = smul.addr %s235, 4
      %s237 = scalar_lea.vmem %s5, %s236
      %v239 = vld [vmem:[%s1] sm:$0x1]
      %v241 = vlaneseq
      %v242 = vshrl.u32 %v241, 7
      %v243 = vsub.s32 0, %v242
      %v244 = vrot.slane %v239, %v243
      %v246 = vld [vmem:[%s2] sm:$0x1]
      %v248 = vlaneseq
      %v249 = vshrl.u32 %v248, 7
      %v250 = vsub.s32 0, %v249
      %v251 = vrot.slane %v246, %v250
      %253 = vst [vmem:[#allocation2] sm:$0xff] 0
      %254 = vst [vmem:[#allocation2 + $0x8] sm:$0xff] 0
      %255 = vst [vmem:[#allocation2 + $0x10] sm:$0xff] 0
      %v256 = vld [vmem:[%s227] sm:$0xff]
      %v257 = vld [vmem:[%s227 + $0x8] sm:$0xff]
      %v258 = vmul.f32 %v256, %v244
      %v259 = vmul.f32 %v257, %v244
      %v260 = vadd.f32 %v258, %v251
      %v261 = vadd.f32 %v259, %v251
      %v262 = vmax.f32 %v260, 0.0
      %v263 = vmax.f32 %v261, 0.0
      %v264 = vpack.c.bf16 %v263, %v262
      %v266 = vshrl.u32 %v264, 16
      %v268 = vrot.slane %v266, 7
      %v269 = vshll.u32 %v264, 16
      %v271 = vor.u32 %v268, %v269
      %vm274 = vcmask 1040384
      %vm275 = vsmask.f32 256
      %vm276 = vmand %vm274, %vm275
      %v277 = vsel %vm276, 0, %v271
      %v278 = vsel %vm276, %v268, 0
      %279 = vst [vmem:[#allocation2 + $0x48] sm:$0xff] %v277
      %vm280 = vsmask.f32 7424
      %v282 = vshrl.u32 %v277, 16
      %v284 = vshll.u32 %v277, 16
      %v286 = vrot.slane %v284, 1
      %v287 = vor.u32 %v282, %v286
      %v289 = vshll.u32 %v278, 16
      %v291 = vrot.slane %v289, 1
      %v292 = vsel %vm280, %v287, %v291
      %294 = vst [vmem:[#allocation2 + $0x50] sm:$0xff] %v292
      %vm297 = vcmask 1046528
      %v298 = vrot.slane %v277, 1
      %v299 = vrot.slane %v278, 1
      %v300 = vsel %vm297, %v298, %v299
      %302 = vst [vmem:[#allocation2 + $0x58] sm:$0xff] %v300
      %303 = vst [vmem:[#allocation2 + $0x18] sm:$0xff] %v277
      %304 = vst [vmem:[#allocation2 + $0x20] sm:$0xff] %v292
      %305 = vst [vmem:[#allocation2 + $0x28] sm:$0xff] %v300
      %s306 = scalar_lea.vmem %s227, 16
      %v307 = vld [vmem:[%s306] sm:$0xff]
      %v308 = vld [vmem:[%s306 + $0x8] sm:$0xff]
      %v309 = vmul.f32 %v307, %v244
      %v310 = vmul.f32 %v308, %v244
      %v311 = vadd.f32 %v309, %v251
      %v312 = vadd.f32 %v310, %v251
      %v313 = vmax.f32 %v311, 0.0
      %v314 = vmax.f32 %v312, 0.0
      %v315 = vpack.c.bf16 %v314, %v313
      %v317 = vshrl.u32 %v315, 16
      %v319 = vrot.slane %v317, 7
      %v320 = vshll.u32 %v315, 16
      %v322 = vor.u32 %v319, %v320
      %v325 = vsel %vm276, 0, %v322
      %v326 = vsel %vm276, %v319, 0
      %327 = vst [vmem:[#allocation2 + $0x90] sm:$0xff] %v325
      %v329 = vshrl.u32 %v325, 16
      %v331 = vshll.u32 %v325, 16
      %v333 = vrot.slane %v331, 1
      %v334 = vor.u32 %v329, %v333
      %v336 = vshll.u32 %v326, 16
      %v338 = vrot.slane %v336, 1
      %v339 = vsel %vm280, %v334, %v338
      %341 = vst [vmem:[#allocation2 + $0x98] sm:$0xff] %v339
      %v344 = vrot.slane %v325, 1
      %v345 = vrot.slane %v326, 1
      %v346 = vsel %vm297, %v344, %v345
      %348 = vst [vmem:[#allocation2 + $0xa0] sm:$0xff] %v346
      %349 = vst [vmem:[#allocation2 + $0x60] sm:$0xff] %v325
      %350 = vst [vmem:[#allocation2 + $0x68] sm:$0xff] %v339
      %351 = vst [vmem:[#allocation2 + $0x70] sm:$0xff] %v346
      %352 = vst [vmem:[#allocation2 + $0x30] sm:$0xff] %v325
      %353 = vst [vmem:[#allocation2 + $0x38] sm:$0xff] %v339
      %354 = vst [vmem:[#allocation2 + $0x40] sm:$0xff] %v346
      %s355 = scalar_lea.vmem %s227, 32
      %v356 = vld [vmem:[%s355] sm:$0xff]
      %v357 = vld [vmem:[%s355 + $0x8] sm:$0xff]
      %v358 = vmul.f32 %v356, %v244
      %v359 = vmul.f32 %v357, %v244
      %v360 = vadd.f32 %v358, %v251
      %v361 = vadd.f32 %v359, %v251
      %v362 = vmax.f32 %v360, 0.0
      %v363 = vmax.f32 %v361, 0.0
      %v364 = vpack.c.bf16 %v363, %v362
      %v366 = vshrl.u32 %v364, 16
      %v368 = vrot.slane %v366, 7
      %v369 = vshll.u32 %v364, 16
      %v371 = vor.u32 %v368, %v369
      %v374 = vsel %vm276, 0, %v371
      %v375 = vsel %vm276, %v368, 0
      %376 = vst [vmem:[#allocation2 + $0xd8] sm:$0xff] %v374
      %v378 = vshrl.u32 %v374, 16
      %v380 = vshll.u32 %v374, 16
      %v382 = vrot.slane %v380, 1
      %v383 = vor.u32 %v378, %v382
      %v385 = vshll.u32 %v375, 16
      %v387 = vrot.slane %v385, 1
      %v388 = vsel %vm280, %v383, %v387
      %390 = vst [vmem:[#allocation2 + $0xe0] sm:$0xff] %v388
      %v393 = vrot.slane %v374, 1
      %v394 = vrot.slane %v375, 1
      %v395 = vsel %vm297, %v393, %v394
      %397 = vst [vmem:[#allocation2 + $0xe8] sm:$0xff] %v395
      %398 = vst [vmem:[#allocation2 + $0xa8] sm:$0xff] %v374
      %399 = vst [vmem:[#allocation2 + $0xb0] sm:$0xff] %v388
      %400 = vst [vmem:[#allocation2 + $0xb8] sm:$0xff] %v395
      %401 = vst [vmem:[#allocation2 + $0x78] sm:$0xff] %v374
      %402 = vst [vmem:[#allocation2 + $0x80] sm:$0xff] %v388
      %403 = vst [vmem:[#allocation2 + $0x88] sm:$0xff] %v395
      %s404 = scalar_lea.vmem %s227, 48
      %v405 = vld [vmem:[%s404] sm:$0xff]
      %v406 = vld [vmem:[%s404 + $0x8] sm:$0xff]
      %v407 = vmul.f32 %v405, %v244
      %v408 = vmul.f32 %v406, %v244
      %v409 = vadd.f32 %v407, %v251
      %v410 = vadd.f32 %v408, %v251
      %v411 = vmax.f32 %v409, 0.0
      %v412 = vmax.f32 %v410, 0.0
      %v413 = vpack.c.bf16 %v412, %v411
      %v415 = vshrl.u32 %v413, 16
      %v417 = vrot.slane %v415, 7
      %v418 = vshll.u32 %v413, 16
      %v420 = vor.u32 %v417, %v418
      %v423 = vsel %vm276, 0, %v420
      %v424 = vsel %vm276, %v417, 0
      %425 = vst [vmem:[#allocation2 + $0x120] sm:$0xff] %v423
      %v427 = vshrl.u32 %v423, 16
      %v429 = vshll.u32 %v423, 16
      %v431 = vrot.slane %v429, 1
      %v432 = vor.u32 %v427, %v431
      %v434 = vshll.u32 %v424, 16
      %v436 = vrot.slane %v434, 1
      %v437 = vsel %vm280, %v432, %v436
      %439 = vst [vmem:[#allocation2 + $0x128] sm:$0xff] %v437
      %v442 = vrot.slane %v423, 1
      %v443 = vrot.slane %v424, 1
      %v444 = vsel %vm297, %v442, %v443
      %446 = vst [vmem:[#allocation2 + $0x130] sm:$0xff] %v444
      %447 = vst [vmem:[#allocation2 + $0xf0] sm:$0xff] %v423
      %448 = vst [vmem:[#allocation2 + $0xf8] sm:$0xff] %v437
      %449 = vst [vmem:[#allocation2 + $0x100] sm:$0xff] %v444
      %450 = vst [vmem:[#allocation2 + $0xc0] sm:$0xff] %v423
      %451 = vst [vmem:[#allocation2 + $0xc8] sm:$0xff] %v437
      %452 = vst [vmem:[#allocation2 + $0xd0] sm:$0xff] %v444
      %s453 = scalar_lea.vmem %s227, 64
      %v454 = vld [vmem:[%s453] sm:$0xff]
      %v455 = vld [vmem:[%s453 + $0x8] sm:$0xff]
      %v456 = vmul.f32 %v454, %v244
      %v457 = vmul.f32 %v455, %v244
      %v458 = vadd.f32 %v456, %v251
      %v459 = vadd.f32 %v457, %v251
      %v460 = vmax.f32 %v458, 0.0
      %v461 = vmax.f32 %v459, 0.0
      %v462 = vpack.c.bf16 %v461, %v460
      %v464 = vshrl.u32 %v462, 16
      %v466 = vrot.slane %v464, 7
      %v467 = vshll.u32 %v462, 16
      %v469 = vor.u32 %v466, %v467
      %v472 = vsel %vm276, 0, %v469
      %v473 = vsel %vm276, %v466, 0
      %474 = vst [vmem:[#allocation2 + $0x168] sm:$0xff] %v472
      %v476 = vshrl.u32 %v472, 16
      %v478 = vshll.u32 %v472, 16
      %v480 = vrot.slane %v478, 1
      %v481 = vor.u32 %v476, %v480
      %v483 = vshll.u32 %v473, 16
      %v485 = vrot.slane %v483, 1
      %v486 = vsel %vm280, %v481, %v485
      %488 = vst [vmem:[#allocation2 + $0x170] sm:$0xff] %v486
      %v491 = vrot.slane %v472, 1
      %v492 = vrot.slane %v473, 1
      %v493 = vsel %vm297, %v491, %v492
      %495 = vst [vmem:[#allocation2 + $0x178] sm:$0xff] %v493
      %496 = vst [vmem:[#allocation2 + $0x138] sm:$0xff] %v472
      %497 = vst [vmem:[#allocation2 + $0x140] sm:$0xff] %v486
      %498 = vst [vmem:[#allocation2 + $0x148] sm:$0xff] %v493
      %499 = vst [vmem:[#allocation2 + $0x108] sm:$0xff] %v472
      %500 = vst [vmem:[#allocation2 + $0x110] sm:$0xff] %v486
      %501 = vst [vmem:[#allocation2 + $0x118] sm:$0xff] %v493
      %s502 = scalar_lea.vmem %s227, 80
      %v503 = vld [vmem:[%s502] sm:$0xff]
      %v504 = vld [vmem:[%s502 + $0x8] sm:$0xff]
      %v505 = vmul.f32 %v503, %v244
      %v506 = vmul.f32 %v504, %v244
      %v507 = vadd.f32 %v505, %v251
      %v508 = vadd.f32 %v506, %v251
      %v509 = vmax.f32 %v507, 0.0
      %v510 = vmax.f32 %v508, 0.0
      %v511 = vpack.c.bf16 %v510, %v509
      %v513 = vshrl.u32 %v511, 16
      %v515 = vrot.slane %v513, 7
      %v516 = vshll.u32 %v511, 16
      %v518 = vor.u32 %v515, %v516
      %v521 = vsel %vm276, 0, %v518
      %v522 = vsel %vm276, %v515, 0
      %523 = vst [vmem:[#allocation2 + $0x1b0] sm:$0xff] %v521
      %v525 = vshrl.u32 %v521, 16
      %v527 = vshll.u32 %v521, 16
      %v529 = vrot.slane %v527, 1
      %v530 = vor.u32 %v525, %v529
      %v532 = vshll.u32 %v522, 16
      %v534 = vrot.slane %v532, 1
      %v535 = vsel %vm280, %v530, %v534
      %537 = vst [vmem:[#allocation2 + $0x1b8] sm:$0xff] %v535
      %v540 = vrot.slane %v521, 1
      %v541 = vrot.slane %v522, 1
      %v542 = vsel %vm297, %v540, %v541
      %544 = vst [vmem:[#allocation2 + $0x1c0] sm:$0xff] %v542
      %545 = vst [vmem:[#allocation2 + $0x180] sm:$0xff] %v521
      %546 = vst [vmem:[#allocation2 + $0x188] sm:$0xff] %v535
      %547 = vst [vmem:[#allocation2 + $0x190] sm:$0xff] %v542
      %548 = vst [vmem:[#allocation2 + $0x150] sm:$0xff] %v521
      %549 = vst [vmem:[#allocation2 + $0x158] sm:$0xff] %v535
      %550 = vst [vmem:[#allocation2 + $0x160] sm:$0xff] %v542
      %s551 = scalar_lea.vmem %s227, 96
      %v552 = vld [vmem:[%s551] sm:$0xff]
      %v553 = vld [vmem:[%s551 + $0x8] sm:$0xff]
      %v554 = vmul.f32 %v552, %v244
      %v555 = vmul.f32 %v553, %v244
      %v556 = vadd.f32 %v554, %v251
      %v557 = vadd.f32 %v555, %v251
      %v558 = vmax.f32 %v556, 0.0
      %v559 = vmax.f32 %v557, 0.0
      %v560 = vpack.c.bf16 %v559, %v558
      %v562 = vshrl.u32 %v560, 16
      %v564 = vrot.slane %v562, 7
      %v565 = vshll.u32 %v560, 16
      %v567 = vor.u32 %v564, %v565
      %v570 = vsel %vm276, 0, %v567
      %v571 = vsel %vm276, %v564, 0
      %572 = vst [vmem:[#allocation2 + $0x1f8] sm:$0xff] %v570
      %v574 = vshrl.u32 %v570, 16
      %v576 = vshll.u32 %v570, 16
      %v578 = vrot.slane %v576, 1
      %v579 = vor.u32 %v574, %v578
      %v581 = vshll.u32 %v571, 16
      %v583 = vrot.slane %v581, 1
      %v584 = vsel %vm280, %v579, %v583
      %586 = vst [vmem:[#allocation2 + $0x200] sm:$0xff] %v584
      %v589 = vrot.slane %v570, 1
      %v590 = vrot.slane %v571, 1
      %v591 = vsel %vm297, %v589, %v590
      %593 = vst [vmem:[#allocation2 + $0x208] sm:$0xff] %v591
      %594 = vst [vmem:[#allocation2 + $0x1c8] sm:$0xff] %v570
      %595 = vst [vmem:[#allocation2 + $0x1d0] sm:$0xff] %v584
      %596 = vst [vmem:[#allocation2 + $0x1d8] sm:$0xff] %v591
      %597 = vst [vmem:[#allocation2 + $0x198] sm:$0xff] %v570
      %598 = vst [vmem:[#allocation2 + $0x1a0] sm:$0xff] %v584
      %599 = vst [vmem:[#allocation2 + $0x1a8] sm:$0xff] %v591
      %s600 = scalar_lea.vmem %s227, 112
      %v601 = vld [vmem:[%s600] sm:$0xff]
      %v602 = vld [vmem:[%s600 + $0x8] sm:$0xff]
      %v603 = vmul.f32 %v601, %v244
      %v604 = vmul.f32 %v602, %v244
      %v605 = vadd.f32 %v603, %v251
      %v606 = vadd.f32 %v604, %v251
      %v607 = vmax.f32 %v605, 0.0
      %v608 = vmax.f32 %v606, 0.0
      %v609 = vpack.c.bf16 %v608, %v607
      %v611 = vshrl.u32 %v609, 16
      %v613 = vrot.slane %v611, 7
      %v614 = vshll.u32 %v609, 16
      %v616 = vor.u32 %v613, %v614
      %v619 = vsel %vm276, 0, %v616
      %v620 = vsel %vm276, %v613, 0
      %621 = vst [vmem:[#allocation2 + $0x240] sm:$0xff] %v619
      %v623 = vshrl.u32 %v619, 16
      %v625 = vshll.u32 %v619, 16
      %v627 = vrot.slane %v625, 1
      %v628 = vor.u32 %v623, %v627
      %v630 = vshll.u32 %v620, 16
      %v632 = vrot.slane %v630, 1
      %v633 = vsel %vm280, %v628, %v632
      %635 = vst [vmem:[#allocation2 + $0x248] sm:$0xff] %v633
      %v638 = vrot.slane %v619, 1
      %v639 = vrot.slane %v620, 1
      %v640 = vsel %vm297, %v638, %v639
      %642 = vst [vmem:[#allocation2 + $0x250] sm:$0xff] %v640
      %643 = vst [vmem:[#allocation2 + $0x210] sm:$0xff] %v619
      %644 = vst [vmem:[#allocation2 + $0x218] sm:$0xff] %v633
      %645 = vst [vmem:[#allocation2 + $0x220] sm:$0xff] %v640
      %646 = vst [vmem:[#allocation2 + $0x1e0] sm:$0xff] %v619
      %647 = vst [vmem:[#allocation2 + $0x1e8] sm:$0xff] %v633
      %648 = vst [vmem:[#allocation2 + $0x1f0] sm:$0xff] %v640
      %s649 = scalar_lea.vmem %s227, 128
      %v650 = vld [vmem:[%s649] sm:$0xff]
      %v651 = vld [vmem:[%s649 + $0x8] sm:$0xff]
      %v652 = vmul.f32 %v650, %v244
      %v653 = vmul.f32 %v651, %v244
      %v654 = vadd.f32 %v652, %v251
      %v655 = vadd.f32 %v653, %v251
      %v656 = vmax.f32 %v654, 0.0
      %v657 = vmax.f32 %v655, 0.0
      %v658 = vpack.c.bf16 %v657, %v656
      %v660 = vshrl.u32 %v658, 16
      %v662 = vrot.slane %v660, 7
      %v663 = vshll.u32 %v658, 16
      %v665 = vor.u32 %v662, %v663
      %v668 = vsel %vm276, 0, %v665
      %v669 = vsel %vm276, %v662, 0
      %670 = vst [vmem:[#allocation2 + $0x288] sm:$0xff] %v668
      %v672 = vshrl.u32 %v668, 16
      %v674 = vshll.u32 %v668, 16
      %v676 = vrot.slane %v674, 1
      %v677 = vor.u32 %v672, %v676
      %v679 = vshll.u32 %v669, 16
      %v681 = vrot.slane %v679, 1
      %v682 = vsel %vm280, %v677, %v681
      %684 = vst [vmem:[#allocation2 + $0x290] sm:$0xff] %v682
      %v687 = vrot.slane %v668, 1
      %v688 = vrot.slane %v669, 1
      %v689 = vsel %vm297, %v687, %v688
      %691 = vst [vmem:[#allocation2 + $0x298] sm:$0xff] %v689
      %692 = vst [vmem:[#allocation2 + $0x258] sm:$0xff] %v668
      %693 = vst [vmem:[#allocation2 + $0x260] sm:$0xff] %v682
      %694 = vst [vmem:[#allocation2 + $0x268] sm:$0xff] %v689
      %695 = vst [vmem:[#allocation2 + $0x228] sm:$0xff] %v668
      %696 = vst [vmem:[#allocation2 + $0x230] sm:$0xff] %v682
      %697 = vst [vmem:[#allocation2 + $0x238] sm:$0xff] %v689
      %s698 = scalar_lea.vmem %s227, 144
      %v699 = vld [vmem:[%s698] sm:$0xff]
      %v700 = vld [vmem:[%s698 + $0x8] sm:$0xff]
      %v701 = vmul.f32 %v699, %v244
      %v702 = vmul.f32 %v700, %v244
      %v703 = vadd.f32 %v701, %v251
      %v704 = vadd.f32 %v702, %v251
      %v705 = vmax.f32 %v703, 0.0
      %v706 = vmax.f32 %v704, 0.0
      %v707 = vpack.c.bf16 %v706, %v705
      %v709 = vshrl.u32 %v707, 16
      %v711 = vrot.slane %v709, 7
      %v712 = vshll.u32 %v707, 16
      %v714 = vor.u32 %v711, %v712
      %v717 = vsel %vm276, 0, %v714
      %v718 = vsel %vm276, %v711, 0
      %719 = vst [vmem:[#allocation2 + $0x2d0] sm:$0xff] %v717
      %v721 = vshrl.u32 %v717, 16
      %v723 = vshll.u32 %v717, 16
      %v725 = vrot.slane %v723, 1
      %v726 = vor.u32 %v721, %v725
      %v728 = vshll.u32 %v718, 16
      %v730 = vrot.slane %v728, 1
      %v731 = vsel %vm280, %v726, %v730
      %733 = vst [vmem:[#allocation2 + $0x2d8] sm:$0xff] %v731
      %v736 = vrot.slane %v717, 1
      %v737 = vrot.slane %v718, 1
      %v738 = vsel %vm297, %v736, %v737
      %740 = vst [vmem:[#allocation2 + $0x2e0] sm:$0xff] %v738
      %741 = vst [vmem:[#allocation2 + $0x2a0] sm:$0xff] %v717
      %742 = vst [vmem:[#allocation2 + $0x2a8] sm:$0xff] %v731
      %743 = vst [vmem:[#allocation2 + $0x2b0] sm:$0xff] %v738
      %744 = vst [vmem:[#allocation2 + $0x270] sm:$0xff] %v717
      %745 = vst [vmem:[#allocation2 + $0x278] sm:$0xff] %v731
      %746 = vst [vmem:[#allocation2 + $0x280] sm:$0xff] %v738
      %s747 = scalar_lea.vmem %s227, 160
      %v748 = vld [vmem:[%s747] sm:$0xff]
      %v749 = vld [vmem:[%s747 + $0x8] sm:$0xff]
      %v750 = vmul.f32 %v748, %v244
      %v751 = vmul.f32 %v749, %v244
      %v752 = vadd.f32 %v750, %v251
      %v753 = vadd.f32 %v751, %v251
      %v754 = vmax.f32 %v752, 0.0
      %v755 = vmax.f32 %v753, 0.0
      %v756 = vpack.c.bf16 %v755, %v754
      %v758 = vshrl.u32 %v756, 16
      %v760 = vrot.slane %v758, 7
      %v761 = vshll.u32 %v756, 16
      %v763 = vor.u32 %v760, %v761
      %v766 = vsel %vm276, 0, %v763
      %v767 = vsel %vm276, %v760, 0
      %768 = vst [vmem:[#allocation2 + $0x318] sm:$0xff] %v766
      %v770 = vshrl.u32 %v766, 16
      %v772 = vshll.u32 %v766, 16
      %v774 = vrot.slane %v772, 1
      %v775 = vor.u32 %v770, %v774
      %v777 = vshll.u32 %v767, 16
      %v779 = vrot.slane %v777, 1
      %v780 = vsel %vm280, %v775, %v779
      %782 = vst [vmem:[#allocation2 + $0x320] sm:$0xff] %v780
      %v785 = vrot.slane %v766, 1
      %v786 = vrot.slane %v767, 1
      %v787 = vsel %vm297, %v785, %v786
      %789 = vst [vmem:[#allocation2 + $0x328] sm:$0xff] %v787
      %790 = vst [vmem:[#allocation2 + $0x2e8] sm:$0xff] %v766
      %791 = vst [vmem:[#allocation2 + $0x2f0] sm:$0xff] %v780
      %792 = vst [vmem:[#allocation2 + $0x2f8] sm:$0xff] %v787
      %793 = vst [vmem:[#allocation2 + $0x2b8] sm:$0xff] %v766
      %794 = vst [vmem:[#allocation2 + $0x2c0] sm:$0xff] %v780
      %795 = vst [vmem:[#allocation2 + $0x2c8] sm:$0xff] %v787
      %s796 = scalar_lea.vmem %s227, 176
      %v797 = vld [vmem:[%s796] sm:$0xff]
      %v798 = vld [vmem:[%s796 + $0x8] sm:$0xff]
      %v799 = vmul.f32 %v797, %v244
      %v800 = vmul.f32 %v798, %v244
      %v801 = vadd.f32 %v799, %v251
      %v802 = vadd.f32 %v800, %v251
      %v803 = vmax.f32 %v801, 0.0
      %v804 = vmax.f32 %v802, 0.0
      %v805 = vpack.c.bf16 %v804, %v803
      %v807 = vshrl.u32 %v805, 16
      %v809 = vrot.slane %v807, 7
      %v810 = vshll.u32 %v805, 16
      %v812 = vor.u32 %v809, %v810
      %v815 = vsel %vm276, 0, %v812
      %v816 = vsel %vm276, %v809, 0
      %817 = vst [vmem:[#allocation2 + $0x360] sm:$0xff] %v815
      %v819 = vshrl.u32 %v815, 16
      %v821 = vshll.u32 %v815, 16
      %v823 = vrot.slane %v821, 1
      %v824 = vor.u32 %v819, %v823
      %v826 = vshll.u32 %v816, 16
      %v828 = vrot.slane %v826, 1
      %v829 = vsel %vm280, %v824, %v828
      %831 = vst [vmem:[#allocation2 + $0x368] sm:$0xff] %v829
      %v834 = vrot.slane %v815, 1
      %v835 = vrot.slane %v816, 1
      %v836 = vsel %vm297, %v834, %v835
      %838 = vst [vmem:[#allocation2 + $0x370] sm:$0xff] %v836
      %839 = vst [vmem:[#allocation2 + $0x330] sm:$0xff] %v815
      %840 = vst [vmem:[#allocation2 + $0x338] sm:$0xff] %v829
      %841 = vst [vmem:[#allocation2 + $0x340] sm:$0xff] %v836
      %842 = vst [vmem:[#allocation2 + $0x300] sm:$0xff] %v815
      %843 = vst [vmem:[#allocation2 + $0x308] sm:$0xff] %v829
      %844 = vst [vmem:[#allocation2 + $0x310] sm:$0xff] %v836
      %s845 = scalar_lea.vmem %s227, 192
      %v846 = vld [vmem:[%s845] sm:$0xff]
      %v847 = vld [vmem:[%s845 + $0x8] sm:$0xff]
      %v848 = vmul.f32 %v846, %v244
      %v849 = vmul.f32 %v847, %v244
      %v850 = vadd.f32 %v848, %v251
      %v851 = vadd.f32 %v849, %v251
      %v852 = vmax.f32 %v850, 0.0
      %v853 = vmax.f32 %v851, 0.0
      %v854 = vpack.c.bf16 %v853, %v852
      %v856 = vshrl.u32 %v854, 16
      %v858 = vrot.slane %v856, 7
      %v859 = vshll.u32 %v854, 16
      %v861 = vor.u32 %v858, %v859
      %v864 = vsel %vm276, 0, %v861
      %v865 = vsel %vm276, %v858, 0
      %866 = vst [vmem:[#allocation2 + $0x3a8] sm:$0xff] %v864
      %v868 = vshrl.u32 %v864, 16
      %v870 = vshll.u32 %v864, 16
      %v872 = vrot.slane %v870, 1
      %v873 = vor.u32 %v868, %v872
      %v875 = vshll.u32 %v865, 16
      %v877 = vrot.slane %v875, 1
      %v878 = vsel %vm280, %v873, %v877
      %880 = vst [vmem:[#allocation2 + $0x3b0] sm:$0xff] %v878
      %v883 = vrot.slane %v864, 1
      %v884 = vrot.slane %v865, 1
      %v885 = vsel %vm297, %v883, %v884
      %887 = vst [vmem:[#allocation2 + $0x3b8] sm:$0xff] %v885
      %888 = vst [vmem:[#allocation2 + $0x378] sm:$0xff] %v864
      %889 = vst [vmem:[#allocation2 + $0x380] sm:$0xff] %v878
      %890 = vst [vmem:[#allocation2 + $0x388] sm:$0xff] %v885
      %891 = vst [vmem:[#allocation2 + $0x348] sm:$0xff] %v864
      %892 = vst [vmem:[#allocation2 + $0x350] sm:$0xff] %v878
      %893 = vst [vmem:[#allocation2 + $0x358] sm:$0xff] %v885
      %s894 = scalar_lea.vmem %s227, 208
      %v895 = vld [vmem:[%s894] sm:$0xff]
      %v896 = vld [vmem:[%s894 + $0x8] sm:$0xff]
      %v897 = vmul.f32 %v895, %v244
      %v898 = vmul.f32 %v896, %v244
      %v899 = vadd.f32 %v897, %v251
      %v900 = vadd.f32 %v898, %v251
      %v901 = vmax.f32 %v899, 0.0
      %v902 = vmax.f32 %v900, 0.0
      %v903 = vpack.c.bf16 %v902, %v901
      %v905 = vshrl.u32 %v903, 16
      %v907 = vrot.slane %v905, 7
      %v908 = vshll.u32 %v903, 16
      %v910 = vor.u32 %v907, %v908
      %v913 = vsel %vm276, 0, %v910
      %v914 = vsel %vm276, %v907, 0
      %915 = vst [vmem:[#allocation2 + $0x3f0] sm:$0xff] %v913
      %v917 = vshrl.u32 %v913, 16
      %v919 = vshll.u32 %v913, 16
      %v921 = vrot.slane %v919, 1
      %v922 = vor.u32 %v917, %v921
      %v924 = vshll.u32 %v914, 16
      %v926 = vrot.slane %v924, 1
      %v927 = vsel %vm280, %v922, %v926
      %929 = vst [vmem:[#allocation2 + $0x3f8] sm:$0xff] %v927
      %v932 = vrot.slane %v913, 1
      %v933 = vrot.slane %v914, 1
      %v934 = vsel %vm297, %v932, %v933
      %936 = vst [vmem:[#allocation2 + $0x400] sm:$0xff] %v934
      %937 = vst [vmem:[#allocation2 + $0x3c0] sm:$0xff] %v913
      %938 = vst [vmem:[#allocation2 + $0x3c8] sm:$0xff] %v927
      %939 = vst [vmem:[#allocation2 + $0x3d0] sm:$0xff] %v934
      %940 = vst [vmem:[#allocation2 + $0x390] sm:$0xff] %v913
      %941 = vst [vmem:[#allocation2 + $0x398] sm:$0xff] %v927
      %942 = vst [vmem:[#allocation2 + $0x3a0] sm:$0xff] %v934
      %s943 = scalar_lea.vmem %s227, 224
      %v944 = vld [vmem:[%s943] sm:$0xff]
      %v945 = vld [vmem:[%s943 + $0x8] sm:$0xff]
      %v946 = vmul.f32 %v944, %v244
      %v947 = vmul.f32 %v945, %v244
      %v948 = vadd.f32 %v946, %v251
      %v949 = vadd.f32 %v947, %v251
      %v950 = vmax.f32 %v948, 0.0
      %v951 = vmax.f32 %v949, 0.0
      %v952 = vpack.c.bf16 %v951, %v950
      %v954 = vshrl.u32 %v952, 16
      %v956 = vrot.slane %v954, 7
      %v957 = vshll.u32 %v952, 16
      %v959 = vor.u32 %v956, %v957
      %v962 = vsel %vm276, 0, %v959
      %v963 = vsel %vm276, %v956, 0
      %964 = vst [vmem:[#allocation2 + $0x438] sm:$0xff] %v962
      %v966 = vshrl.u32 %v962, 16
      %v968 = vshll.u32 %v962, 16
      %v970 = vrot.slane %v968, 1
      %v971 = vor.u32 %v966, %v970
      %v973 = vshll.u32 %v963, 16
      %v975 = vrot.slane %v973, 1
      %v976 = vsel %vm280, %v971, %v975
      %978 = vst [vmem:[#allocation2 + $0x440] sm:$0xff] %v976
      %v981 = vrot.slane %v962, 1
      %v982 = vrot.slane %v963, 1
      %v983 = vsel %vm297, %v981, %v982
      %985 = vst [vmem:[#allocation2 + $0x448] sm:$0xff] %v983
      %986 = vst [vmem:[#allocation2 + $0x408] sm:$0xff] %v962
      %987 = vst [vmem:[#allocation2 + $0x410] sm:$0xff] %v976
      %988 = vst [vmem:[#allocation2 + $0x418] sm:$0xff] %v983
      %989 = vst [vmem:[#allocation2 + $0x3d8] sm:$0xff] %v962
      %990 = vst [vmem:[#allocation2 + $0x3e0] sm:$0xff] %v976
      %991 = vst [vmem:[#allocation2 + $0x3e8] sm:$0xff] %v983
      %s992 = scalar_lea.vmem %s227, 240
      %v993 = vld [vmem:[%s992] sm:$0xff]
      %v994 = vld [vmem:[%s992 + $0x8] sm:$0xff]
      %v995 = vmul.f32 %v993, %v244
      %v996 = vmul.f32 %v994, %v244
      %v997 = vadd.f32 %v995, %v251
      %v998 = vadd.f32 %v996, %v251
      %v999 = vmax.f32 %v997, 0.0
      %v1000 = vmax.f32 %v998, 0.0
      %v1001 = vpack.c.bf16 %v1000, %v999
      %v1003 = vshrl.u32 %v1001, 16
      %v1005 = vrot.slane %v1003, 7
      %v1006 = vshll.u32 %v1001, 16
      %v1008 = vor.u32 %v1005, %v1006
      %v1011 = vsel %vm276, 0, %v1008
      %v1012 = vsel %vm276, %v1005, 0
      %1013 = vst [vmem:[#allocation2 + $0x450] sm:$0xff] %v1011
      %v1015 = vshrl.u32 %v1011, 16
      %v1017 = vshll.u32 %v1011, 16
      %v1019 = vrot.slane %v1017, 1
      %v1020 = vor.u32 %v1015, %v1019
      %v1022 = vshll.u32 %v1012, 16
      %v1024 = vrot.slane %v1022, 1
      %v1025 = vsel %vm280, %v1020, %v1024
      %1027 = vst [vmem:[#allocation2 + $0x458] sm:$0xff] %v1025
      %v1030 = vrot.slane %v1011, 1
      %v1031 = vrot.slane %v1012, 1
      %v1032 = vsel %vm297, %v1030, %v1031
      %1034 = vst [vmem:[#allocation2 + $0x460] sm:$0xff] %v1032
      %1035 = vst [vmem:[#allocation2 + $0x420] sm:$0xff] %v1011
      %1036 = vst [vmem:[#allocation2 + $0x428] sm:$0xff] %v1025
      %1037 = vst [vmem:[#allocation2 + $0x430] sm:$0xff] %v1032
      %1038 = vst [vmem:[#allocation2 + $0x468] sm:$0xff] 0
      %1039 = vst [vmem:[#allocation2 + $0x470] sm:$0xff] 0
      %1040 = vst [vmem:[#allocation2 + $0x478] sm:$0xff] 0
      %v1041 = vld [vmem:[#allocation2] sm:$0xff]
      %v1042 = vld [vmem:[#allocation2 + $0x8] sm:$0xff]
      %v1043 = vld [vmem:[#allocation2 + $0x10] sm:$0xff]
      %v1044 = vld [vmem:[#allocation2 + $0x18] sm:$0xff]
      %v1045 = vld [vmem:[#allocation2 + $0x20] sm:$0xff]
      %v1046 = vld [vmem:[#allocation2 + $0x28] sm:$0xff]
      %v1047 = vld [vmem:[#allocation2 + $0x30] sm:$0xff]
      %v1048 = vld [vmem:[#allocation2 + $0x38] sm:$0xff]
      %v1049 = vld [vmem:[#allocation2 + $0x40] sm:$0xff]
      %v1050 = vld [vmem:[#allocation2 + $0x48] sm:$0xff]
      %v1051 = vld [vmem:[#allocation2 + $0x50] sm:$0xff]
      %v1052 = vld [vmem:[#allocation2 + $0x58] sm:$0xff]
      %v1053 = vld [vmem:[#allocation2 + $0x60] sm:$0xff]
      %v1054 = vld [vmem:[#allocation2 + $0x68] sm:$0xff]
      %v1055 = vld [vmem:[#allocation2 + $0x70] sm:$0xff]
      %v1056 = vld [vmem:[#allocation2 + $0x78] sm:$0xff]
      %v1057 = vld [vmem:[#allocation2 + $0x80] sm:$0xff]
      %v1058 = vld [vmem:[#allocation2 + $0x88] sm:$0xff]
      %v1059 = vld [vmem:[#allocation2 + $0x90] sm:$0xff]
      %v1060 = vld [vmem:[#allocation2 + $0x98] sm:$0xff]
      %v1061 = vld [vmem:[#allocation2 + $0xa0] sm:$0xff]
      %v1062 = vld [vmem:[#allocation2 + $0xa8] sm:$0xff]
      %v1063 = vld [vmem:[#allocation2 + $0xb0] sm:$0xff]
      %v1064 = vld [vmem:[#allocation2 + $0xb8] sm:$0xff]
      %v1065 = vld [vmem:[#allocation2 + $0xc0] sm:$0xff]
      %v1066 = vld [vmem:[#allocation2 + $0xc8] sm:$0xff]
      %v1067 = vld [vmem:[#allocation2 + $0xd0] sm:$0xff]
      %v1068 = vld [vmem:[#allocation2 + $0xd8] sm:$0xff]
      %v1069 = vld [vmem:[#allocation2 + $0xe0] sm:$0xff]
      %v1070 = vld [vmem:[#allocation2 + $0xe8] sm:$0xff]
      %v1071 = vld [vmem:[#allocation2 + $0xf0] sm:$0xff]
      %v1072 = vld [vmem:[#allocation2 + $0xf8] sm:$0xff]
      %v1073 = vld [vmem:[#allocation2 + $0x100] sm:$0xff]
      %v1074 = vld [vmem:[#allocation2 + $0x108] sm:$0xff]
      %v1075 = vld [vmem:[#allocation2 + $0x110] sm:$0xff]
      %v1076 = vld [vmem:[#allocation2 + $0x118] sm:$0xff]
      %v1077 = vld [vmem:[#allocation2 + $0x120] sm:$0xff]
      %v1078 = vld [vmem:[#allocation2 + $0x128] sm:$0xff]
      %v1079 = vld [vmem:[#allocation2 + $0x130] sm:$0xff]
      %v1080 = vld [vmem:[#allocation2 + $0x138] sm:$0xff]
      %v1081 = vld [vmem:[#allocation2 + $0x140] sm:$0xff]
      %v1082 = vld [vmem:[#allocation2 + $0x148] sm:$0xff]
      %v1083 = vld [vmem:[#allocation2 + $0x150] sm:$0xff]
      %v1084 = vld [vmem:[#allocation2 + $0x158] sm:$0xff]
      %v1085 = vld [vmem:[#allocation2 + $0x160] sm:$0xff]
      %v1086 = vld [vmem:[#allocation2 + $0x168] sm:$0xff]
      %v1087 = vld [vmem:[#allocation2 + $0x170] sm:$0xff]
      %v1088 = vld [vmem:[#allocation2 + $0x178] sm:$0xff]
      %v1089 = vld [vmem:[#allocation2 + $0x180] sm:$0xff]
      %v1090 = vld [vmem:[#allocation2 + $0x188] sm:$0xff]
      %v1091 = vld [vmem:[#allocation2 + $0x190] sm:$0xff]
      %v1092 = vld [vmem:[#allocation2 + $0x198] sm:$0xff]
      %v1093 = vld [vmem:[#allocation2 + $0x1a0] sm:$0xff]
      %v1094 = vld [vmem:[#allocation2 + $0x1a8] sm:$0xff]
      %v1095 = vld [vmem:[#allocation2 + $0x1b0] sm:$0xff]
      %v1096 = vld [vmem:[#allocation2 + $0x1b8] sm:$0xff]
      %v1097 = vld [vmem:[#allocation2 + $0x1c0] sm:$0xff]
      %v1098 = vld [vmem:[#allocation2 + $0x1c8] sm:$0xff]
      %v1099 = vld [vmem:[#allocation2 + $0x1d0] sm:$0xff]
      %v1100 = vld [vmem:[#allocation2 + $0x1d8] sm:$0xff]
      %v1101 = vld [vmem:[#allocation2 + $0x1e0] sm:$0xff]
      %v1102 = vld [vmem:[#allocation2 + $0x1e8] sm:$0xff]
      %v1103 = vld [vmem:[#allocation2 + $0x1f0] sm:$0xff]
      %v1104 = vld [vmem:[#allocation2 + $0x1f8] sm:$0xff]
      %v1105 = vld [vmem:[#allocation2 + $0x200] sm:$0xff]
      %v1106 = vld [vmem:[#allocation2 + $0x208] sm:$0xff]
      %v1107 = vld [vmem:[#allocation2 + $0x210] sm:$0xff]
      %v1108 = vld [vmem:[#allocation2 + $0x218] sm:$0xff]
      %v1109 = vld [vmem:[#allocation2 + $0x220] sm:$0xff]
      %v1110 = vld [vmem:[#allocation2 + $0x228] sm:$0xff]
      %v1111 = vld [vmem:[#allocation2 + $0x230] sm:$0xff]
      %v1112 = vld [vmem:[#allocation2 + $0x238] sm:$0xff]
      %v1113 = vld [vmem:[#allocation2 + $0x240] sm:$0xff]
      %v1114 = vld [vmem:[#allocation2 + $0x248] sm:$0xff]
      %v1115 = vld [vmem:[#allocation2 + $0x250] sm:$0xff]
      %v1116 = vld [vmem:[#allocation2 + $0x258] sm:$0xff]
      %v1117 = vld [vmem:[#allocation2 + $0x260] sm:$0xff]
      %v1118 = vld [vmem:[#allocation2 + $0x268] sm:$0xff]
      %v1119 = vld [vmem:[#allocation2 + $0x270] sm:$0xff]
      %v1120 = vld [vmem:[#allocation2 + $0x278] sm:$0xff]
      %v1121 = vld [vmem:[#allocation2 + $0x280] sm:$0xff]
      %v1122 = vld [vmem:[#allocation2 + $0x288] sm:$0xff]
      %v1123 = vld [vmem:[#allocation2 + $0x290] sm:$0xff]
      %v1124 = vld [vmem:[#allocation2 + $0x298] sm:$0xff]
      %v1125 = vld [vmem:[#allocation2 + $0x2a0] sm:$0xff]
      %v1126 = vld [vmem:[#allocation2 + $0x2a8] sm:$0xff]
      %v1127 = vld [vmem:[#allocation2 + $0x2b0] sm:$0xff]
      %v1128 = vld [vmem:[#allocation2 + $0x2b8] sm:$0xff]
      %v1129 = vld [vmem:[#allocation2 + $0x2c0] sm:$0xff]
      %v1130 = vld [vmem:[#allocation2 + $0x2c8] sm:$0xff]
      %v1131 = vld [vmem:[#allocation2 + $0x2d0] sm:$0xff]
      %v1132 = vld [vmem:[#allocation2 + $0x2d8] sm:$0xff]
      %v1133 = vld [vmem:[#allocation2 + $0x2e0] sm:$0xff]
      %v1134 = vld [vmem:[#allocation2 + $0x2e8] sm:$0xff]
      %v1135 = vld [vmem:[#allocation2 + $0x2f0] sm:$0xff]
      %v1136 = vld [vmem:[#allocation2 + $0x2f8] sm:$0xff]
      %v1137 = vld [vmem:[#allocation2 + $0x300] sm:$0xff]
      %v1138 = vld [vmem:[#allocation2 + $0x308] sm:$0xff]
      %v1139 = vld [vmem:[#allocation2 + $0x310] sm:$0xff]
      %v1140 = vld [vmem:[#allocation2 + $0x318] sm:$0xff]
      %v1141 = vld [vmem:[#allocation2 + $0x320] sm:$0xff]
      %v1142 = vld [vmem:[#allocation2 + $0x328] sm:$0xff]
      %v1143 = vld [vmem:[#allocation2 + $0x330] sm:$0xff]
      %v1144 = vld [vmem:[#allocation2 + $0x338] sm:$0xff]
      %v1145 = vld [vmem:[#allocation2 + $0x340] sm:$0xff]
      %v1146 = vld [vmem:[#allocation2 + $0x348] sm:$0xff]
      %v1147 = vld [vmem:[#allocation2 + $0x350] sm:$0xff]
      %v1148 = vld [vmem:[#allocation2 + $0x358] sm:$0xff]
      %v1149 = vld [vmem:[#allocation2 + $0x360] sm:$0xff]
      %v1150 = vld [vmem:[#allocation2 + $0x368] sm:$0xff]
      %v1151 = vld [vmem:[#allocation2 + $0x370] sm:$0xff]
      %v1152 = vld [vmem:[#allocation2 + $0x378] sm:$0xff]
      %v1153 = vld [vmem:[#allocation2 + $0x380] sm:$0xff]
      %v1154 = vld [vmem:[#allocation2 + $0x388] sm:$0xff]
      %v1155 = vld [vmem:[#allocation2 + $0x390] sm:$0xff]
      %v1156 = vld [vmem:[#allocation2 + $0x398] sm:$0xff]
      %v1157 = vld [vmem:[#allocation2 + $0x3a0] sm:$0xff]
      %v1158 = vld [vmem:[#allocation2 + $0x3a8] sm:$0xff]
      %v1159 = vld [vmem:[#allocation2 + $0x3b0] sm:$0xff]
      %v1160 = vld [vmem:[#allocation2 + $0x3b8] sm:$0xff]
      %v1161 = vld [vmem:[#allocation2 + $0x3c0] sm:$0xff]
      %v1162 = vld [vmem:[#allocation2 + $0x3c8] sm:$0xff]
      %v1163 = vld [vmem:[#allocation2 + $0x3d0] sm:$0xff]
      %v1164 = vld [vmem:[#allocation2 + $0x3d8] sm:$0xff]
      %v1165 = vld [vmem:[#allocation2 + $0x3e0] sm:$0xff]
      %v1166 = vld [vmem:[#allocation2 + $0x3e8] sm:$0xff]
      %v1167 = vld [vmem:[#allocation2 + $0x3f0] sm:$0xff]
      %v1168 = vld [vmem:[#allocation2 + $0x3f8] sm:$0xff]
      %v1169 = vld [vmem:[#allocation2 + $0x400] sm:$0xff]
      %v1170 = vld [vmem:[#allocation2 + $0x408] sm:$0xff]
      %v1171 = vld [vmem:[#allocation2 + $0x410] sm:$0xff]
      %v1172 = vld [vmem:[#allocation2 + $0x418] sm:$0xff]
      %v1173 = vld [vmem:[#allocation2 + $0x420] sm:$0xff]
      %v1174 = vld [vmem:[#allocation2 + $0x428] sm:$0xff]
      %v1175 = vld [vmem:[#allocation2 + $0x430] sm:$0xff]
      %v1176 = vld [vmem:[#allocation2 + $0x438] sm:$0xff]
      %v1177 = vld [vmem:[#allocation2 + $0x440] sm:$0xff]
      %v1178 = vld [vmem:[#allocation2 + $0x448] sm:$0xff]
      %v1179 = vld [vmem:[#allocation2 + $0x450] sm:$0xff]
      %v1180 = vld [vmem:[#allocation2 + $0x458] sm:$0xff]
      %v1181 = vld [vmem:[#allocation2 + $0x460] sm:$0xff]
      %v1182 = vld [vmem:[#allocation2 + $0x468] sm:$0xff]
      %v1183 = vld [vmem:[#allocation2 + $0x470] sm:$0xff]
      %v1184 = vld [vmem:[#allocation2 + $0x478] sm:$0xff]
      %v1185 = vld [vmem:[%s3] sm:$0xff]
      %v1186 = vld [vmem:[%s3 + $0x8] sm:$0xff]
      %v1187 = vld [vmem:[%s3 + $0x10] sm:$0xff]
      %v1188 = vld [vmem:[%s3 + $0x18] sm:$0xff]
      %v1189 = vld [vmem:[%s3 + $0x20] sm:$0xff]
      %v1190 = vld [vmem:[%s3 + $0x28] sm:$0xff]
      %v1191 = vld [vmem:[%s3 + $0x30] sm:$0xff]
      %v1192 = vld [vmem:[%s3 + $0x38] sm:$0xff]
      %v1193 = vld [vmem:[%s3 + $0x40] sm:$0xff]
      %v1194 = vld [vmem:[%s3 + $0x48] sm:$0xff]
      %v1195 = vld [vmem:[%s3 + $0x50] sm:$0xff]
      %v1196 = vld [vmem:[%s3 + $0x58] sm:$0xff]
      %v1197 = vld [vmem:[%s3 + $0x60] sm:$0xff]
      %v1198 = vld [vmem:[%s3 + $0x68] sm:$0xff]
      %v1199 = vld [vmem:[%s3 + $0x70] sm:$0xff]
      %v1200 = vld [vmem:[%s3 + $0x78] sm:$0xff]
      %v1201 = vld [vmem:[%s3 + $0x80] sm:$0xff]
      %v1202 = vld [vmem:[%s3 + $0x88] sm:$0xff]
      %v1203 = vld [vmem:[%s3 + $0x90] sm:$0xff]
      %v1204 = vld [vmem:[%s3 + $0x98] sm:$0xff]
      %v1205 = vld [vmem:[%s3 + $0xa0] sm:$0xff]
      %v1206 = vld [vmem:[%s3 + $0xa8] sm:$0xff]
      %v1207 = vld [vmem:[%s3 + $0xb0] sm:$0xff]
      %v1208 = vld [vmem:[%s3 + $0xb8] sm:$0xff]
      %v1209 = vld [vmem:[%s3 + $0xc0] sm:$0xff]
      %v1210 = vld [vmem:[%s3 + $0xc8] sm:$0xff]
      %v1211 = vld [vmem:[%s3 + $0xd0] sm:$0xff]
      %v1212 = vld [vmem:[%s3 + $0xd8] sm:$0xff]
      %v1213 = vld [vmem:[%s3 + $0xe0] sm:$0xff]
      %v1214 = vld [vmem:[%s3 + $0xe8] sm:$0xff]
      %v1215 = vld [vmem:[%s3 + $0xf0] sm:$0xff]
      %v1216 = vld [vmem:[%s3 + $0xf8] sm:$0xff]
      %v1217 = vld [vmem:[%s3 + $0x100] sm:$0xff]
      %v1218 = vld [vmem:[%s3 + $0x108] sm:$0xff]
      %v1219 = vld [vmem:[%s3 + $0x110] sm:$0xff]
      %v1220 = vld [vmem:[%s3 + $0x118] sm:$0xff]
      %v1221 = vld [vmem:[%s3 + $0x120] sm:$0xff]
      %v1222 = vld [vmem:[%s3 + $0x128] sm:$0xff]
      %v1223 = vld [vmem:[%s3 + $0x130] sm:$0xff]
      %v1224 = vld [vmem:[%s3 + $0x138] sm:$0xff]
      %v1225 = vld [vmem:[%s3 + $0x140] sm:$0xff]
      %v1226 = vld [vmem:[%s3 + $0x148] sm:$0xff]
      %v1227 = vld [vmem:[%s3 + $0x150] sm:$0xff]
      %v1228 = vld [vmem:[%s3 + $0x158] sm:$0xff]
      %v1229 = vld [vmem:[%s3 + $0x160] sm:$0xff]
      %v1230 = vld [vmem:[%s3 + $0x168] sm:$0xff]
      %v1231 = vld [vmem:[%s3 + $0x170] sm:$0xff]
      %v1232 = vld [vmem:[%s3 + $0x178] sm:$0xff]
      %v1233 = vld [vmem:[%s3 + $0x180] sm:$0xff]
      %v1234 = vld [vmem:[%s3 + $0x188] sm:$0xff]
      %v1235 = vld [vmem:[%s3 + $0x190] sm:$0xff]
      %v1236 = vld [vmem:[%s3 + $0x198] sm:$0xff]
      %v1237 = vld [vmem:[%s3 + $0x1a0] sm:$0xff]
      %v1238 = vld [vmem:[%s3 + $0x1a8] sm:$0xff]
      %v1239 = vld [vmem:[%s3 + $0x1b0] sm:$0xff]
      %v1240 = vld [vmem:[%s3 + $0x1b8] sm:$0xff]
      %v1241 = vld [vmem:[%s3 + $0x1c0] sm:$0xff]
      %v1242 = vld [vmem:[%s3 + $0x1c8] sm:$0xff]
      %v1243 = vld [vmem:[%s3 + $0x1d0] sm:$0xff]
      %v1244 = vld [vmem:[%s3 + $0x1d8] sm:$0xff]
      %v1245 = vld [vmem:[%s3 + $0x1e0] sm:$0xff]
      %v1246 = vld [vmem:[%s3 + $0x1e8] sm:$0xff]
      %v1247 = vld [vmem:[%s3 + $0x1f0] sm:$0xff]
      %v1248 = vld [vmem:[%s3 + $0x1f8] sm:$0xff]
      %v1249 = vld [vmem:[%s3 + $0x200] sm:$0xff]
      %v1250 = vld [vmem:[%s3 + $0x208] sm:$0xff]
      %v1251 = vld [vmem:[%s3 + $0x210] sm:$0xff]
      %v1252 = vld [vmem:[%s3 + $0x218] sm:$0xff]
      %v1253 = vld [vmem:[%s3 + $0x220] sm:$0xff]
      %v1254 = vld [vmem:[%s3 + $0x228] sm:$0xff]
      %v1255 = vld [vmem:[%s3 + $0x230] sm:$0xff]
      %v1256 = vld [vmem:[%s3 + $0x238] sm:$0xff]
      %v1257 = vld [vmem:[%s3 + $0x240] sm:$0xff]
      %v1258 = vld [vmem:[%s3 + $0x248] sm:$0xff]
      %v1259 = vld [vmem:[%s3 + $0x250] sm:$0xff]
      %v1260 = vld [vmem:[%s3 + $0x258] sm:$0xff]
      %v1261 = vld [vmem:[%s3 + $0x260] sm:$0xff]
      %v1262 = vld [vmem:[%s3 + $0x268] sm:$0xff]
      %v1263 = vld [vmem:[%s3 + $0x270] sm:$0xff]
      %v1264 = vld [vmem:[%s3 + $0x278] sm:$0xff]
      %v1265 = vld [vmem:[%s3 + $0x280] sm:$0xff]
      %v1266 = vld [vmem:[%s3 + $0x288] sm:$0xff]
      %v1267 = vld [vmem:[%s3 + $0x290] sm:$0xff]
      %v1268 = vld [vmem:[%s3 + $0x298] sm:$0xff]
      %v1269 = vld [vmem:[%s3 + $0x2a0] sm:$0xff]
      %v1270 = vld [vmem:[%s3 + $0x2a8] sm:$0xff]
      %v1271 = vld [vmem:[%s3 + $0x2b0] sm:$0xff]
      %v1272 = vld [vmem:[%s3 + $0x2b8] sm:$0xff]
      %v1273 = vld [vmem:[%s3 + $0x2c0] sm:$0xff]
      %v1274 = vld [vmem:[%s3 + $0x2c8] sm:$0xff]
      %v1275 = vld [vmem:[%s3 + $0x2d0] sm:$0xff]
      %v1276 = vld [vmem:[%s3 + $0x2d8] sm:$0xff]
      %v1277 = vld [vmem:[%s3 + $0x2e0] sm:$0xff]
      %v1278 = vld [vmem:[%s3 + $0x2e8] sm:$0xff]
      %v1279 = vld [vmem:[%s3 + $0x2f0] sm:$0xff]
      %v1280 = vld [vmem:[%s3 + $0x2f8] sm:$0xff]
      %v1281 = vld [vmem:[%s3 + $0x300] sm:$0xff]
      %v1282 = vld [vmem:[%s3 + $0x308] sm:$0xff]
      %v1283 = vld [vmem:[%s3 + $0x310] sm:$0xff]
      %v1284 = vld [vmem:[%s3 + $0x318] sm:$0xff]
      %v1285 = vld [vmem:[%s3 + $0x320] sm:$0xff]
      %v1286 = vld [vmem:[%s3 + $0x328] sm:$0xff]
      %v1287 = vld [vmem:[%s3 + $0x330] sm:$0xff]
      %v1288 = vld [vmem:[%s3 + $0x338] sm:$0xff]
      %v1289 = vld [vmem:[%s3 + $0x340] sm:$0xff]
      %v1290 = vld [vmem:[%s3 + $0x348] sm:$0xff]
      %v1291 = vld [vmem:[%s3 + $0x350] sm:$0xff]
      %v1292 = vld [vmem:[%s3 + $0x358] sm:$0xff]
      %v1293 = vld [vmem:[%s3 + $0x360] sm:$0xff]
      %v1294 = vld [vmem:[%s3 + $0x368] sm:$0xff]
      %v1295 = vld [vmem:[%s3 + $0x370] sm:$0xff]
      %v1296 = vld [vmem:[%s3 + $0x378] sm:$0xff]
      %v1297 = vld [vmem:[%s3 + $0x380] sm:$0xff]
      %v1298 = vld [vmem:[%s3 + $0x388] sm:$0xff]
      %v1299 = vld [vmem:[%s3 + $0x390] sm:$0xff]
      %v1300 = vld [vmem:[%s3 + $0x398] sm:$0xff]
      %v1301 = vld [vmem:[%s3 + $0x3a0] sm:$0xff]
      %v1302 = vld [vmem:[%s3 + $0x3a8] sm:$0xff]
      %v1303 = vld [vmem:[%s3 + $0x3b0] sm:$0xff]
      %v1304 = vld [vmem:[%s3 + $0x3b8] sm:$0xff]
      %v1305 = vld [vmem:[%s3 + $0x3c0] sm:$0xff]
      %v1306 = vld [vmem:[%s3 + $0x3c8] sm:$0xff]
      %v1307 = vld [vmem:[%s3 + $0x3d0] sm:$0xff]
      %v1308 = vld [vmem:[%s3 + $0x3d8] sm:$0xff]
      %v1309 = vld [vmem:[%s3 + $0x3e0] sm:$0xff]
      %v1310 = vld [vmem:[%s3 + $0x3e8] sm:$0xff]
      %v1311 = vld [vmem:[%s3 + $0x3f0] sm:$0xff]
      %v1312 = vld [vmem:[%s3 + $0x3f8] sm:$0xff]
      %v1313 = vld [vmem:[%s3 + $0x400] sm:$0xff]
      %v1314 = vld [vmem:[%s3 + $0x408] sm:$0xff]
      %v1315 = vld [vmem:[%s3 + $0x410] sm:$0xff]
      %v1316 = vld [vmem:[%s3 + $0x418] sm:$0xff]
      %v1317 = vld [vmem:[%s3 + $0x420] sm:$0xff]
      %v1318 = vld [vmem:[%s3 + $0x428] sm:$0xff]
      %v1319 = vld [vmem:[%s3 + $0x430] sm:$0xff]
      %v1320 = vld [vmem:[%s3 + $0x438] sm:$0xff]
      %v1321 = vld [vmem:[%s3 + $0x440] sm:$0xff]
      %v1322 = vld [vmem:[%s3 + $0x448] sm:$0xff]
      %v1323 = vld [vmem:[%s3 + $0x450] sm:$0xff]
      %v1324 = vld [vmem:[%s3 + $0x458] sm:$0xff]
      %v1325 = vld [vmem:[%s3 + $0x460] sm:$0xff]
      %v1326 = vld [vmem:[%s3 + $0x468] sm:$0xff]
      %v1327 = vld [vmem:[%s3 + $0x470] sm:$0xff]
      %v1328 = vld [vmem:[%s3 + $0x478] sm:$0xff]
      %v1473 = vunpack.c.l.b16 %v1185
      %v1474 = vunpack.c.h.b16 %v1185
      %v1475 = vunpack.c.l.b16 %v1186
      %v1476 = vunpack.c.h.b16 %v1186
      %v1477 = vunpack.c.l.b16 %v1187
      %v1478 = vunpack.c.h.b16 %v1187
      %v1479 = vunpack.c.l.b16 %v1188
      %v1480 = vunpack.c.h.b16 %v1188
      %v1481 = vunpack.c.l.b16 %v1189
      %v1482 = vunpack.c.h.b16 %v1189
      %v1483 = vunpack.c.l.b16 %v1190
      %v1484 = vunpack.c.h.b16 %v1190
      %v1485 = vunpack.c.l.b16 %v1191
      %v1486 = vunpack.c.h.b16 %v1191
      %v1487 = vunpack.c.l.b16 %v1192
      %v1488 = vunpack.c.h.b16 %v1192
      %v1489 = vunpack.c.l.b16 %v1193
      %v1490 = vunpack.c.h.b16 %v1193
      %v1491 = vunpack.c.l.b16 %v1194
      %v1492 = vunpack.c.h.b16 %v1194
      %v1493 = vunpack.c.l.b16 %v1195
      %v1494 = vunpack.c.h.b16 %v1195
      %v1495 = vunpack.c.l.b16 %v1196
      %v1496 = vunpack.c.h.b16 %v1196
      %v1497 = vunpack.c.l.b16 %v1197
      %v1498 = vunpack.c.h.b16 %v1197
      %v1499 = vunpack.c.l.b16 %v1198
      %v1500 = vunpack.c.h.b16 %v1198
      %v1501 = vunpack.c.l.b16 %v1199
      %v1502 = vunpack.c.h.b16 %v1199
      %v1503 = vunpack.c.l.b16 %v1200
      %v1504 = vunpack.c.h.b16 %v1200
      %v1505 = vunpack.c.l.b16 %v1201
      %v1506 = vunpack.c.h.b16 %v1201
      %v1507 = vunpack.c.l.b16 %v1202
      %v1508 = vunpack.c.h.b16 %v1202
      %v1509 = vunpack.c.l.b16 %v1203
      %v1510 = vunpack.c.h.b16 %v1203
      %v1511 = vunpack.c.l.b16 %v1204
      %v1512 = vunpack.c.h.b16 %v1204
      %v1513 = vunpack.c.l.b16 %v1205
      %v1514 = vunpack.c.h.b16 %v1205
      %v1515 = vunpack.c.l.b16 %v1206
      %v1516 = vunpack.c.h.b16 %v1206
      %v1517 = vunpack.c.l.b16 %v1207
      %v1518 = vunpack.c.h.b16 %v1207
      %v1519 = vunpack.c.l.b16 %v1208
      %v1520 = vunpack.c.h.b16 %v1208
      %v1521 = vunpack.c.l.b16 %v1209
      %v1522 = vunpack.c.h.b16 %v1209
      %v1523 = vunpack.c.l.b16 %v1210
      %v1524 = vunpack.c.h.b16 %v1210
      %v1525 = vunpack.c.l.b16 %v1211
      %v1526 = vunpack.c.h.b16 %v1211
      %v1527 = vunpack.c.l.b16 %v1212
      %v1528 = vunpack.c.h.b16 %v1212
      %v1529 = vunpack.c.l.b16 %v1213
      %v1530 = vunpack.c.h.b16 %v1213
      %v1531 = vunpack.c.l.b16 %v1214
      %v1532 = vunpack.c.h.b16 %v1214
      %v1533 = vunpack.c.l.b16 %v1215
      %v1534 = vunpack.c.h.b16 %v1215
      %v1535 = vunpack.c.l.b16 %v1216
      %v1536 = vunpack.c.h.b16 %v1216
      %v1537 = vunpack.c.l.b16 %v1217
      %v1538 = vunpack.c.h.b16 %v1217
      %v1539 = vunpack.c.l.b16 %v1218
      %v1540 = vunpack.c.h.b16 %v1218
      %v1541 = vunpack.c.l.b16 %v1219
      %v1542 = vunpack.c.h.b16 %v1219
      %v1543 = vunpack.c.l.b16 %v1220
      %v1544 = vunpack.c.h.b16 %v1220
      %v1545 = vunpack.c.l.b16 %v1221
      %v1546 = vunpack.c.h.b16 %v1221
      %v1547 = vunpack.c.l.b16 %v1222
      %v1548 = vunpack.c.h.b16 %v1222
      %v1549 = vunpack.c.l.b16 %v1223
      %v1550 = vunpack.c.h.b16 %v1223
      %v1551 = vunpack.c.l.b16 %v1224
      %v1552 = vunpack.c.h.b16 %v1224
      %v1553 = vunpack.c.l.b16 %v1225
      %v1554 = vunpack.c.h.b16 %v1225
      %v1555 = vunpack.c.l.b16 %v1226
      %v1556 = vunpack.c.h.b16 %v1226
      %v1557 = vunpack.c.l.b16 %v1227
      %v1558 = vunpack.c.h.b16 %v1227
      %v1559 = vunpack.c.l.b16 %v1228
      %v1560 = vunpack.c.h.b16 %v1228
      %v1561 = vunpack.c.l.b16 %v1229
      %v1562 = vunpack.c.h.b16 %v1229
      %v1563 = vunpack.c.l.b16 %v1230
      %v1564 = vunpack.c.h.b16 %v1230
      %v1565 = vunpack.c.l.b16 %v1231
      %v1566 = vunpack.c.h.b16 %v1231
      %v1567 = vunpack.c.l.b16 %v1232
      %v1568 = vunpack.c.h.b16 %v1232
      %v1569 = vunpack.c.l.b16 %v1233
      %v1570 = vunpack.c.h.b16 %v1233
      %v1571 = vunpack.c.l.b16 %v1234
      %v1572 = vunpack.c.h.b16 %v1234
      %v1573 = vunpack.c.l.b16 %v1235
      %v1574 = vunpack.c.h.b16 %v1235
      %v1575 = vunpack.c.l.b16 %v1236
      %v1576 = vunpack.c.h.b16 %v1236
      %v1577 = vunpack.c.l.b16 %v1237
      %v1578 = vunpack.c.h.b16 %v1237
      %v1579 = vunpack.c.l.b16 %v1238
      %v1580 = vunpack.c.h.b16 %v1238
      %v1581 = vunpack.c.l.b16 %v1239
      %v1582 = vunpack.c.h.b16 %v1239
      %v1583 = vunpack.c.l.b16 %v1240
      %v1584 = vunpack.c.h.b16 %v1240
      %v1585 = vunpack.c.l.b16 %v1241
      %v1586 = vunpack.c.h.b16 %v1241
      %v1587 = vunpack.c.l.b16 %v1242
      %v1588 = vunpack.c.h.b16 %v1242
      %v1589 = vunpack.c.l.b16 %v1243
      %v1590 = vunpack.c.h.b16 %v1243
      %v1591 = vunpack.c.l.b16 %v1244
      %v1592 = vunpack.c.h.b16 %v1244
      %v1593 = vunpack.c.l.b16 %v1245
      %v1594 = vunpack.c.h.b16 %v1245
      %v1595 = vunpack.c.l.b16 %v1246
      %v1596 = vunpack.c.h.b16 %v1246
      %v1597 = vunpack.c.l.b16 %v1247
      %v1598 = vunpack.c.h.b16 %v1247
      %v1599 = vunpack.c.l.b16 %v1248
      %v1600 = vunpack.c.h.b16 %v1248
      %v1601 = vunpack.c.l.b16 %v1249
      %v1602 = vunpack.c.h.b16 %v1249
      %v1603 = vunpack.c.l.b16 %v1250
      %v1604 = vunpack.c.h.b16 %v1250
      %v1605 = vunpack.c.l.b16 %v1251
      %v1606 = vunpack.c.h.b16 %v1251
      %v1607 = vunpack.c.l.b16 %v1252
      %v1608 = vunpack.c.h.b16 %v1252
      %v1609 = vunpack.c.l.b16 %v1253
      %v1610 = vunpack.c.h.b16 %v1253
      %v1611 = vunpack.c.l.b16 %v1254
      %v1612 = vunpack.c.h.b16 %v1254
      %v1613 = vunpack.c.l.b16 %v1255
      %v1614 = vunpack.c.h.b16 %v1255
      %v1615 = vunpack.c.l.b16 %v1256
      %v1616 = vunpack.c.h.b16 %v1256
      %v1617 = vunpack.c.l.b16 %v1257
      %v1618 = vunpack.c.h.b16 %v1257
      %v1619 = vunpack.c.l.b16 %v1258
      %v1620 = vunpack.c.h.b16 %v1258
      %v1621 = vunpack.c.l.b16 %v1259
      %v1622 = vunpack.c.h.b16 %v1259
      %v1623 = vunpack.c.l.b16 %v1260
      %v1624 = vunpack.c.h.b16 %v1260
      %v1625 = vunpack.c.l.b16 %v1261
      %v1626 = vunpack.c.h.b16 %v1261
      %v1627 = vunpack.c.l.b16 %v1262
      %v1628 = vunpack.c.h.b16 %v1262
      %v1629 = vunpack.c.l.b16 %v1263
      %v1630 = vunpack.c.h.b16 %v1263
      %v1631 = vunpack.c.l.b16 %v1264
      %v1632 = vunpack.c.h.b16 %v1264
      %v1633 = vunpack.c.l.b16 %v1265
      %v1634 = vunpack.c.h.b16 %v1265
      %v1635 = vunpack.c.l.b16 %v1266
      %v1636 = vunpack.c.h.b16 %v1266
      %v1637 = vunpack.c.l.b16 %v1267
      %v1638 = vunpack.c.h.b16 %v1267
      %v1639 = vunpack.c.l.b16 %v1268
      %v1640 = vunpack.c.h.b16 %v1268
      %v1641 = vunpack.c.l.b16 %v1269
      %v1642 = vunpack.c.h.b16 %v1269
      %v1643 = vunpack.c.l.b16 %v1270
      %v1644 = vunpack.c.h.b16 %v1270
      %v1645 = vunpack.c.l.b16 %v1271
      %v1646 = vunpack.c.h.b16 %v1271
      %v1647 = vunpack.c.l.b16 %v1272
      %v1648 = vunpack.c.h.b16 %v1272
      %v1649 = vunpack.c.l.b16 %v1273
      %v1650 = vunpack.c.h.b16 %v1273
      %v1651 = vunpack.c.l.b16 %v1274
      %v1652 = vunpack.c.h.b16 %v1274
      %v1653 = vunpack.c.l.b16 %v1275
      %v1654 = vunpack.c.h.b16 %v1275
      %v1655 = vunpack.c.l.b16 %v1276
      %v1656 = vunpack.c.h.b16 %v1276
      %v1657 = vunpack.c.l.b16 %v1277
      %v1658 = vunpack.c.h.b16 %v1277
      %v1659 = vunpack.c.l.b16 %v1278
      %v1660 = vunpack.c.h.b16 %v1278
      %v1661 = vunpack.c.l.b16 %v1279
      %v1662 = vunpack.c.h.b16 %v1279
      %v1663 = vunpack.c.l.b16 %v1280
      %v1664 = vunpack.c.h.b16 %v1280
      %v1665 = vunpack.c.l.b16 %v1281
      %v1666 = vunpack.c.h.b16 %v1281
      %v1667 = vunpack.c.l.b16 %v1282
      %v1668 = vunpack.c.h.b16 %v1282
      %v1669 = vunpack.c.l.b16 %v1283
      %v1670 = vunpack.c.h.b16 %v1283
      %v1671 = vunpack.c.l.b16 %v1284
      %v1672 = vunpack.c.h.b16 %v1284
      %v1673 = vunpack.c.l.b16 %v1285
      %v1674 = vunpack.c.h.b16 %v1285
      %v1675 = vunpack.c.l.b16 %v1286
      %v1676 = vunpack.c.h.b16 %v1286
      %v1677 = vunpack.c.l.b16 %v1287
      %v1678 = vunpack.c.h.b16 %v1287
      %v1679 = vunpack.c.l.b16 %v1288
      %v1680 = vunpack.c.h.b16 %v1288
      %v1681 = vunpack.c.l.b16 %v1289
      %v1682 = vunpack.c.h.b16 %v1289
      %v1683 = vunpack.c.l.b16 %v1290
      %v1684 = vunpack.c.h.b16 %v1290
      %v1685 = vunpack.c.l.b16 %v1291
      %v1686 = vunpack.c.h.b16 %v1291
      %v1687 = vunpack.c.l.b16 %v1292
      %v1688 = vunpack.c.h.b16 %v1292
      %v1689 = vunpack.c.l.b16 %v1293
      %v1690 = vunpack.c.h.b16 %v1293
      %v1691 = vunpack.c.l.b16 %v1294
      %v1692 = vunpack.c.h.b16 %v1294
      %v1693 = vunpack.c.l.b16 %v1295
      %v1694 = vunpack.c.h.b16 %v1295
      %v1695 = vunpack.c.l.b16 %v1296
      %v1696 = vunpack.c.h.b16 %v1296
      %v1697 = vunpack.c.l.b16 %v1297
      %v1698 = vunpack.c.h.b16 %v1297
      %v1699 = vunpack.c.l.b16 %v1298
      %v1700 = vunpack.c.h.b16 %v1298
      %v1701 = vunpack.c.l.b16 %v1299
      %v1702 = vunpack.c.h.b16 %v1299
      %v1703 = vunpack.c.l.b16 %v1300
      %v1704 = vunpack.c.h.b16 %v1300
      %v1705 = vunpack.c.l.b16 %v1301
      %v1706 = vunpack.c.h.b16 %v1301
      %v1707 = vunpack.c.l.b16 %v1302
      %v1708 = vunpack.c.h.b16 %v1302
      %v1709 = vunpack.c.l.b16 %v1303
      %v1710 = vunpack.c.h.b16 %v1303
      %v1711 = vunpack.c.l.b16 %v1304
      %v1712 = vunpack.c.h.b16 %v1304
      %v1713 = vunpack.c.l.b16 %v1305
      %v1714 = vunpack.c.h.b16 %v1305
      %v1715 = vunpack.c.l.b16 %v1306
      %v1716 = vunpack.c.h.b16 %v1306
      %v1717 = vunpack.c.l.b16 %v1307
      %v1718 = vunpack.c.h.b16 %v1307
      %v1719 = vunpack.c.l.b16 %v1308
      %v1720 = vunpack.c.h.b16 %v1308
      %v1721 = vunpack.c.l.b16 %v1309
      %v1722 = vunpack.c.h.b16 %v1309
      %v1723 = vunpack.c.l.b16 %v1310
      %v1724 = vunpack.c.h.b16 %v1310
      %v1725 = vunpack.c.l.b16 %v1311
      %v1726 = vunpack.c.h.b16 %v1311
      %v1727 = vunpack.c.l.b16 %v1312
      %v1728 = vunpack.c.h.b16 %v1312
      %v1729 = vunpack.c.l.b16 %v1313
      %v1730 = vunpack.c.h.b16 %v1313
      %v1731 = vunpack.c.l.b16 %v1314
      %v1732 = vunpack.c.h.b16 %v1314
      %v1733 = vunpack.c.l.b16 %v1315
      %v1734 = vunpack.c.h.b16 %v1315
      %v1735 = vunpack.c.l.b16 %v1316
      %v1736 = vunpack.c.h.b16 %v1316
      %v1737 = vunpack.c.l.b16 %v1317
      %v1738 = vunpack.c.h.b16 %v1317
      %v1739 = vunpack.c.l.b16 %v1318
      %v1740 = vunpack.c.h.b16 %v1318
      %v1741 = vunpack.c.l.b16 %v1319
      %v1742 = vunpack.c.h.b16 %v1319
      %v1743 = vunpack.c.l.b16 %v1320
      %v1744 = vunpack.c.h.b16 %v1320
      %v1745 = vunpack.c.l.b16 %v1321
      %v1746 = vunpack.c.h.b16 %v1321
      %v1747 = vunpack.c.l.b16 %v1322
      %v1748 = vunpack.c.h.b16 %v1322
      %v1749 = vunpack.c.l.b16 %v1323
      %v1750 = vunpack.c.h.b16 %v1323
      %v1751 = vunpack.c.l.b16 %v1324
      %v1752 = vunpack.c.h.b16 %v1324
      %v1753 = vunpack.c.l.b16 %v1325
      %v1754 = vunpack.c.h.b16 %v1325
      %v1755 = vunpack.c.l.b16 %v1326
      %v1756 = vunpack.c.h.b16 %v1326
      %v1757 = vunpack.c.l.b16 %v1327
      %v1758 = vunpack.c.h.b16 %v1327
      %v1759 = vunpack.c.l.b16 %v1328
      %v1760 = vunpack.c.h.b16 %v1328
      %v1761 = vpack.c.b16 %v1475, %v1473
      %v1762 = vpack.c.b16 %v1476, %v1474
      %v1763 = vpack.c.b16 %v1479, %v1477
      %v1764 = vpack.c.b16 %v1480, %v1478
      %v1765 = vpack.c.b16 %v1483, %v1481
      %v1766 = vpack.c.b16 %v1484, %v1482
      %v1767 = vpack.c.b16 %v1487, %v1485
      %v1768 = vpack.c.b16 %v1488, %v1486
      %v1769 = vpack.c.b16 %v1491, %v1489
      %v1770 = vpack.c.b16 %v1492, %v1490
      %v1771 = vpack.c.b16 %v1495, %v1493
      %v1772 = vpack.c.b16 %v1496, %v1494
      %v1773 = vpack.c.b16 %v1499, %v1497
      %v1774 = vpack.c.b16 %v1500, %v1498
      %v1775 = vpack.c.b16 %v1503, %v1501
      %v1776 = vpack.c.b16 %v1504, %v1502
      %v1777 = vpack.c.b16 %v1507, %v1505
      %v1778 = vpack.c.b16 %v1508, %v1506
      %v1779 = vpack.c.b16 %v1511, %v1509
      %v1780 = vpack.c.b16 %v1512, %v1510
      %v1781 = vpack.c.b16 %v1515, %v1513
      %v1782 = vpack.c.b16 %v1516, %v1514
      %v1783 = vpack.c.b16 %v1519, %v1517
      %v1784 = vpack.c.b16 %v1520, %v1518
      %v1785 = vpack.c.b16 %v1523, %v1521
      %v1786 = vpack.c.b16 %v1524, %v1522
      %v1787 = vpack.c.b16 %v1527, %v1525
      %v1788 = vpack.c.b16 %v1528, %v1526
      %v1789 = vpack.c.b16 %v1531, %v1529
      %v1790 = vpack.c.b16 %v1532, %v1530
      %v1791 = vpack.c.b16 %v1535, %v1533
      %v1792 = vpack.c.b16 %v1536, %v1534
      %v1793 = vpack.c.b16 %v1539, %v1537
      %v1794 = vpack.c.b16 %v1540, %v1538
      %v1795 = vpack.c.b16 %v1543, %v1541
      %v1796 = vpack.c.b16 %v1544, %v1542
      %v1797 = vpack.c.b16 %v1547, %v1545
      %v1798 = vpack.c.b16 %v1548, %v1546
      %v1799 = vpack.c.b16 %v1551, %v1549
      %v1800 = vpack.c.b16 %v1552, %v1550
      %v1801 = vpack.c.b16 %v1555, %v1553
      %v1802 = vpack.c.b16 %v1556, %v1554
      %v1803 = vpack.c.b16 %v1559, %v1557
      %v1804 = vpack.c.b16 %v1560, %v1558
      %v1805 = vpack.c.b16 %v1563, %v1561
      %v1806 = vpack.c.b16 %v1564, %v1562
      %v1807 = vpack.c.b16 %v1567, %v1565
      %v1808 = vpack.c.b16 %v1568, %v1566
      %v1809 = vpack.c.b16 %v1571, %v1569
      %v1810 = vpack.c.b16 %v1572, %v1570
      %v1811 = vpack.c.b16 %v1575, %v1573
      %v1812 = vpack.c.b16 %v1576, %v1574
      %v1813 = vpack.c.b16 %v1579, %v1577
      %v1814 = vpack.c.b16 %v1580, %v1578
      %v1815 = vpack.c.b16 %v1583, %v1581
      %v1816 = vpack.c.b16 %v1584, %v1582
      %v1817 = vpack.c.b16 %v1587, %v1585
      %v1818 = vpack.c.b16 %v1588, %v1586
      %v1819 = vpack.c.b16 %v1591, %v1589
      %v1820 = vpack.c.b16 %v1592, %v1590
      %v1821 = vpack.c.b16 %v1595, %v1593
      %v1822 = vpack.c.b16 %v1596, %v1594
      %v1823 = vpack.c.b16 %v1599, %v1597
      %v1824 = vpack.c.b16 %v1600, %v1598
      %v1825 = vpack.c.b16 %v1603, %v1601
      %v1826 = vpack.c.b16 %v1604, %v1602
      %v1827 = vpack.c.b16 %v1607, %v1605
      %v1828 = vpack.c.b16 %v1608, %v1606
      %v1829 = vpack.c.b16 %v1611, %v1609
      %v1830 = vpack.c.b16 %v1612, %v1610
      %v1831 = vpack.c.b16 %v1615, %v1613
      %v1832 = vpack.c.b16 %v1616, %v1614
      %v1833 = vpack.c.b16 %v1619, %v1617
      %v1834 = vpack.c.b16 %v1620, %v1618
      %v1835 = vpack.c.b16 %v1623, %v1621
      %v1836 = vpack.c.b16 %v1624, %v1622
      %v1837 = vpack.c.b16 %v1627, %v1625
      %v1838 = vpack.c.b16 %v1628, %v1626
      %v1839 = vpack.c.b16 %v1631, %v1629
      %v1840 = vpack.c.b16 %v1632, %v1630
      %v1841 = vpack.c.b16 %v1635, %v1633
      %v1842 = vpack.c.b16 %v1636, %v1634
      %v1843 = vpack.c.b16 %v1639, %v1637
      %v1844 = vpack.c.b16 %v1640, %v1638
      %v1845 = vpack.c.b16 %v1643, %v1641
      %v1846 = vpack.c.b16 %v1644, %v1642
      %v1847 = vpack.c.b16 %v1647, %v1645
      %v1848 = vpack.c.b16 %v1648, %v1646
      %v1849 = vpack.c.b16 %v1651, %v1649
      %v1850 = vpack.c.b16 %v1652, %v1650
      %v1851 = vpack.c.b16 %v1655, %v1653
      %v1852 = vpack.c.b16 %v1656, %v1654
      %v1853 = vpack.c.b16 %v1659, %v1657
      %v1854 = vpack.c.b16 %v1660, %v1658
      %v1855 = vpack.c.b16 %v1663, %v1661
      %v1856 = vpack.c.b16 %v1664, %v1662
      %v1857 = vpack.c.b16 %v1667, %v1665
      %v1858 = vpack.c.b16 %v1668, %v1666
      %v1859 = vpack.c.b16 %v1671, %v1669
      %v1860 = vpack.c.b16 %v1672, %v1670
      %v1861 = vpack.c.b16 %v1675, %v1673
      %v1862 = vpack.c.b16 %v1676, %v1674
      %v1863 = vpack.c.b16 %v1679, %v1677
      %v1864 = vpack.c.b16 %v1680, %v1678
      %v1865 = vpack.c.b16 %v1683, %v1681
      %v1866 = vpack.c.b16 %v1684, %v1682
      %v1867 = vpack.c.b16 %v1687, %v1685
      %v1868 = vpack.c.b16 %v1688, %v1686
      %v1869 = vpack.c.b16 %v1691, %v1689
      %v1870 = vpack.c.b16 %v1692, %v1690
      %v1871 = vpack.c.b16 %v1695, %v1693
      %v1872 = vpack.c.b16 %v1696, %v1694
      %v1873 = vpack.c.b16 %v1699, %v1697
      %v1874 = vpack.c.b16 %v1700, %v1698
      %v1875 = vpack.c.b16 %v1703, %v1701
      %v1876 = vpack.c.b16 %v1704, %v1702
      %v1877 = vpack.c.b16 %v1707, %v1705
      %v1878 = vpack.c.b16 %v1708, %v1706
      %v1879 = vpack.c.b16 %v1711, %v1709
      %v1880 = vpack.c.b16 %v1712, %v1710
      %v1881 = vpack.c.b16 %v1715, %v1713
      %v1882 = vpack.c.b16 %v1716, %v1714
      %v1883 = vpack.c.b16 %v1719, %v1717
      %v1884 = vpack.c.b16 %v1720, %v1718
      %v1885 = vpack.c.b16 %v1723, %v1721
      %v1886 = vpack.c.b16 %v1724, %v1722
      %v1887 = vpack.c.b16 %v1727, %v1725
      %v1888 = vpack.c.b16 %v1728, %v1726
      %v1889 = vpack.c.b16 %v1731, %v1729
      %v1890 = vpack.c.b16 %v1732, %v1730
      %v1891 = vpack.c.b16 %v1735, %v1733
      %v1892 = vpack.c.b16 %v1736, %v1734
      %v1893 = vpack.c.b16 %v1739, %v1737
      %v1894 = vpack.c.b16 %v1740, %v1738
      %v1895 = vpack.c.b16 %v1743, %v1741
      %v1896 = vpack.c.b16 %v1744, %v1742
      %v1897 = vpack.c.b16 %v1747, %v1745
      %v1898 = vpack.c.b16 %v1748, %v1746
      %v1899 = vpack.c.b16 %v1751, %v1749
      %v1900 = vpack.c.b16 %v1752, %v1750
      %v1901 = vpack.c.b16 %v1755, %v1753
      %v1902 = vpack.c.b16 %v1756, %v1754
      %v1903 = vpack.c.b16 %v1759, %v1757
      %v1904 = vpack.c.b16 %v1760, %v1758
      %2049 = vmatprep.subr.bf16.mxu0 %v1762
      %2050 = vmatpush1.bf16.msra.mxu0 %v1761
      %2051 = vmatprep.subr.bf16.mxu0 %v1764
      %2052 = vmatpush1.bf16.msra.mxu0 %v1763
      %2053 = vmatprep.subr.bf16.mxu0 %v1766
      %2054 = vmatpush1.bf16.msra.mxu0 %v1765
      %2055 = vmatprep.subr.bf16.mxu0 %v1768
      %2056 = vmatpush1.bf16.msra.mxu0 %v1767
      %2057 = vmatprep.subr.bf16.mxu0 %v1770
      %2058 = vmatpush1.bf16.msra.mxu0 %v1769
      %2059 = vmatprep.subr.bf16.mxu0 %v1772
      %2060 = vmatpush1.bf16.msra.mxu0 %v1771
      %2061 = vmatprep.subr.bf16.mxu0 %v1774
      %2062 = vmatpush1.bf16.msra.mxu0 %v1773
      %2063 = vmatprep.subr.bf16.mxu0 %v1776
      %2064 = vmatpush1.bf16.msra.mxu0 %v1775
      %2065 = vmatprep.subr.bf16.mxu0 %v1778
      %2066 = vmatpush1.bf16.msra.mxu0 %v1777
      %2067 = vmatprep.subr.bf16.mxu0 %v1780
      %2068 = vmatpush1.bf16.msra.mxu0 %v1779
      %2069 = vmatprep.subr.bf16.mxu0 %v1782
      %2070 = vmatpush1.bf16.msra.mxu0 %v1781
      %2071 = vmatprep.subr.bf16.mxu0 %v1784
      %2072 = vmatpush1.bf16.msra.mxu0 %v1783
      %2073 = vmatprep.subr.bf16.mxu0 %v1786
      %2074 = vmatpush1.bf16.msra.mxu0 %v1785
      %2075 = vmatprep.subr.bf16.mxu0 %v1788
      %2076 = vmatpush1.bf16.msra.mxu0 %v1787
      %2077 = vmatprep.subr.bf16.mxu0 %v1790
      %2078 = vmatpush1.bf16.msra.mxu0 %v1789
      %2079 = vmatprep.subr.bf16.mxu0 %v1792
      %2080 = vmatpush1.bf16.msra.mxu0 %v1791
      %2081 = vmatprep.mubr.bf16.mxu0 %v1042
      %2082 = vmatmul.mubr.bf16.gmra.mrb[0].mxu0 %v1041
      %v2083 = vpop.f32.mrb[0].mxu0
      %v2084 = vadd.f32 0.0, %v2083
      %v2085 = vpop.f32.mrb[0].mxu0
      %v2086 = vadd.f32 0.0, %v2085
      %v2087 = vpop.f32.mrb[0].mxu0
      %v2088 = vadd.f32 0.0, %v2087
      %v2089 = vpop.f32.mrb[0].mxu0
      %v2090 = vadd.f32 0.0, %v2089
      %2091 = vmatprep.mubr.bf16.mxu0 %v1051
      %2092 = vmatmul.mubr.bf16.gmra.mrb[0].mxu0 %v1050
      %v2093 = vpop.f32.mrb[0].mxu0
      %v2094 = vadd.f32 0.0, %v2093
      %v2095 = vpop.f32.mrb[0].mxu0
      %v2096 = vadd.f32 0.0, %v2095
      %v2097 = vpop.f32.mrb[0].mxu0
      %v2098 = vadd.f32 0.0, %v2097
      %v2099 = vpop.f32.mrb[0].mxu0
      %v2100 = vadd.f32 0.0, %v2099
      %2101 = vmatprep.mubr.bf16.mxu0 %v1060
      %2102 = vmatmul.mubr.bf16.gmra.mrb[0].mxu0 %v1059
      %v2103 = vpop.f32.mrb[0].mxu0
      %v2104 = vadd.f32 0.0, %v2103
      %v2105 = vpop.f32.mrb[0].mxu0
      %v2106 = vadd.f32 0.0, %v2105
      %v2107 = vpop.f32.mrb[0].mxu0
      %v2108 = vadd.f32 0.0, %v2107
      %v2109 = vpop.f32.mrb[0].mxu0
      %v2110 = vadd.f32 0.0, %v2109
      %2111 = vmatprep.mubr.bf16.mxu0 %v1069
      %2112 = vmatmul.mubr.bf16.gmra.mrb[0].mxu0 %v1068
      %v2113 = vpop.f32.mrb[0].mxu0
      %v2114 = vadd.f32 0.0, %v2113
      %v2115 = vpop.f32.mrb[0].mxu0
      %v2116 = vadd.f32 0.0, %v2115
      %v2117 = vpop.f32.mrb[0].mxu0
      %v2118 = vadd.f32 0.0, %v2117
      %v2119 = vpop.f32.mrb[0].mxu0
      %v2120 = vadd.f32 0.0, %v2119
      %2121 = vmatprep.mubr.bf16.mxu0 %v1078
      %2122 = vmatmul.mubr.bf16.gmra.mrb[0].mxu0 %v1077
      %v2123 = vpop.f32.mrb[0].mxu0
      %v2124 = vadd.f32 0.0, %v2123
      %v2125 = vpop.f32.mrb[0].mxu0
      %v2126 = vadd.f32 0.0, %v2125
      %v2127 = vpop.f32.mrb[0].mxu0
      %v2128 = vadd.f32 0.0, %v2127
      %v2129 = vpop.f32.mrb[0].mxu0
      %v2130 = vadd.f32 0.0, %v2129
      %2131 = vmatprep.mubr.bf16.mxu0 %v1087
      %2132 = vmatmul.mubr.bf16.gmra.mrb[0].mxu0 %v1086
      %v2133 = vpop.f32.mrb[0].mxu0
      %v2134 = vadd.f32 0.0, %v2133
      %v2135 = vpop.f32.mrb[0].mxu0
      %v2136 = vadd.f32 0.0, %v2135
      %v2137 = vpop.f32.mrb[0].mxu0
      %v2138 = vadd.f32 0.0, %v2137
      %v2139 = vpop.f32.mrb[0].mxu0
      %v2140 = vadd.f32 0.0, %v2139
      %2141 = vmatprep.mubr.bf16.mxu0 %v1096
      %2142 = vmatmul.mubr.bf16.gmra.mrb[0].mxu0 %v1095
      %v2143 = vpop.f32.mrb[0].mxu0
      %v2144 = vadd.f32 0.0, %v2143
      %v2145 = vpop.f32.mrb[0].mxu0
      %v2146 = vadd.f32 0.0, %v2145
      %v2147 = vpop.f32.mrb[0].mxu0
      %v2148 = vadd.f32 0.0, %v2147
      %v2149 = vpop.f32.mrb[0].mxu0
      %v2150 = vadd.f32 0.0, %v2149
      %2151 = vmatprep.mubr.bf16.mxu0 %v1105
      %2152 = vmatmul.mubr.bf16.gmra.mrb[0].mxu0 %v1104
      %v2153 = vpop.f32.mrb[0].mxu0
      %v2154 = vadd.f32 0.0, %v2153
      %v2155 = vpop.f32.mrb[0].mxu0
      %v2156 = vadd.f32 0.0, %v2155
      %v2157 = vpop.f32.mrb[0].mxu0
      %v2158 = vadd.f32 0.0, %v2157
      %v2159 = vpop.f32.mrb[0].mxu0
      %v2160 = vadd.f32 0.0, %v2159
      %2161 = vmatprep.mubr.bf16.mxu0 %v1114
      %2162 = vmatmul.mubr.bf16.gmra.mrb[0].mxu0 %v1113
      %v2163 = vpop.f32.mrb[0].mxu0
      %v2164 = vadd.f32 0.0, %v2163
      %v2165 = vpop.f32.mrb[0].mxu0
      %v2166 = vadd.f32 0.0, %v2165
      %v2167 = vpop.f32.mrb[0].mxu0
      %v2168 = vadd.f32 0.0, %v2167
      %v2169 = vpop.f32.mrb[0].mxu0
      %v2170 = vadd.f32 0.0, %v2169
      %2171 = vmatprep.mubr.bf16.mxu0 %v1123
      %2172 = vmatmul.mubr.bf16.gmra.mrb[0].mxu0 %v1122
      %v2173 = vpop.f32.mrb[0].mxu0
      %v2174 = vadd.f32 0.0, %v2173
      %v2175 = vpop.f32.mrb[0].mxu0
      %v2176 = vadd.f32 0.0, %v2175
      %v2177 = vpop.f32.mrb[0].mxu0
      %v2178 = vadd.f32 0.0, %v2177
      %v2179 = vpop.f32.mrb[0].mxu0
      %v2180 = vadd.f32 0.0, %v2179
      %2181 = vmatprep.mubr.bf16.mxu0 %v1132
      %2182 = vmatmul.mubr.bf16.gmra.mrb[0].mxu0 %v1131
      %v2183 = vpop.f32.mrb[0].mxu0
      %v2184 = vadd.f32 0.0, %v2183
      %v2185 = vpop.f32.mrb[0].mxu0
      %v2186 = vadd.f32 0.0, %v2185
      %v2187 = vpop.f32.mrb[0].mxu0
      %v2188 = vadd.f32 0.0, %v2187
      %v2189 = vpop.f32.mrb[0].mxu0
      %v2190 = vadd.f32 0.0, %v2189
      %2191 = vmatprep.mubr.bf16.mxu0 %v1141
      %2192 = vmatmul.mubr.bf16.gmra.mrb[0].mxu0 %v1140
      %v2193 = vpop.f32.mrb[0].mxu0
      %v2194 = vadd.f32 0.0, %v2193
      %v2195 = vpop.f32.mrb[0].mxu0
      %v2196 = vadd.f32 0.0, %v2195
      %v2197 = vpop.f32.mrb[0].mxu0
      %v2198 = vadd.f32 0.0, %v2197
      %v2199 = vpop.f32.mrb[0].mxu0
      %v2200 = vadd.f32 0.0, %v2199
      %2201 = vmatprep.mubr.bf16.mxu0 %v1150
      %2202 = vmatmul.mubr.bf16.gmra.mrb[0].mxu0 %v1149
      %v2203 = vpop.f32.mrb[0].mxu0
      %v2204 = vadd.f32 0.0, %v2203
      %v2205 = vpop.f32.mrb[0].mxu0
      %v2206 = vadd.f32 0.0, %v2205
      %v2207 = vpop.f32.mrb[0].mxu0
      %v2208 = vadd.f32 0.0, %v2207
      %v2209 = vpop.f32.mrb[0].mxu0
      %v2210 = vadd.f32 0.0, %v2209
      %2211 = vmatprep.mubr.bf16.mxu0 %v1159
      %2212 = vmatmul.mubr.bf16.gmra.mrb[0].mxu0 %v1158
      %v2213 = vpop.f32.mrb[0].mxu0
      %v2214 = vadd.f32 0.0, %v2213
      %v2215 = vpop.f32.mrb[0].mxu0
      %v2216 = vadd.f32 0.0, %v2215
      %v2217 = vpop.f32.mrb[0].mxu0
      %v2218 = vadd.f32 0.0, %v2217
      %v2219 = vpop.f32.mrb[0].mxu0
      %v2220 = vadd.f32 0.0, %v2219
      %2221 = vmatprep.mubr.bf16.mxu0 %v1168
      %2222 = vmatmul.mubr.bf16.gmra.mrb[0].mxu0 %v1167
      %v2223 = vpop.f32.mrb[0].mxu0
      %v2224 = vadd.f32 0.0, %v2223
      %v2225 = vpop.f32.mrb[0].mxu0
      %v2226 = vadd.f32 0.0, %v2225
      %v2227 = vpop.f32.mrb[0].mxu0
      %v2228 = vadd.f32 0.0, %v2227
      %v2229 = vpop.f32.mrb[0].mxu0
      %v2230 = vadd.f32 0.0, %v2229
      %2231 = vmatprep.mubr.bf16.mxu0 %v1177
      %2232 = vmatmul.mubr.bf16.gmra.mrb[0].mxu0 %v1176
      %v2233 = vpop.f32.mrb[0].mxu0
      %v2234 = vadd.f32 0.0, %v2233
      %v2235 = vpop.f32.mrb[0].mxu0
      %v2236 = vadd.f32 0.0, %v2235
      %v2237 = vpop.f32.mrb[0].mxu0
      %v2238 = vadd.f32 0.0, %v2237
      %v2239 = vpop.f32.mrb[0].mxu0
      %v2240 = vadd.f32 0.0, %v2239
      %2241 = vdwg.mxu0
      %2242 = vmatprep.subr.bf16.mxu0 %v1794
      %2243 = vmatpush1.bf16.msra.mxu0 %v1793
      %2244 = vmatprep.subr.bf16.mxu0 %v1796
      %2245 = vmatpush1.bf16.msra.mxu0 %v1795
      %2246 = vmatprep.subr.bf16.mxu0 %v1798
      %2247 = vmatpush1.bf16.msra.mxu0 %v1797
      %2248 = vmatprep.subr.bf16.mxu0 %v1800
      %2249 = vmatpush1.bf16.msra.mxu0 %v1799
      %2250 = vmatprep.subr.bf16.mxu0 %v1802
      %2251 = vmatpush1.bf16.msra.mxu0 %v1801
      %2252 = vmatprep.subr.bf16.mxu0 %v1804
      %2253 = vmatpush1.bf16.msra.mxu0 %v1803
      %2254 = vmatprep.subr.bf16.mxu0 %v1806
      %2255 = vmatpush1.bf16.msra.mxu0 %v1805
      %2256 = vmatprep.subr.bf16.mxu0 %v1808
      %2257 = vmatpush1.bf16.msra.mxu0 %v1807
      %2258 = vmatprep.subr.bf16.mxu0 %v1810
      %2259 = vmatpush1.bf16.msra.mxu0 %v1809
      %2260 = vmatprep.subr.bf16.mxu0 %v1812
      %2261 = vmatpush1.bf16.msra.mxu0 %v1811
      %2262 = vmatprep.subr.bf16.mxu0 %v1814
      %2263 = vmatpush1.bf16.msra.mxu0 %v1813
      %2264 = vmatprep.subr.bf16.mxu0 %v1816
      %2265 = vmatpush1.bf16.msra.mxu0 %v1815
      %2266 = vmatprep.subr.bf16.mxu0 %v1818
      %2267 = vmatpush1.bf16.msra.mxu0 %v1817
      %2268 = vmatprep.subr.bf16.mxu0 %v1820
      %2269 = vmatpush1.bf16.msra.mxu0 %v1819
      %2270 = vmatprep.subr.bf16.mxu0 %v1822
      %2271 = vmatpush1.bf16.msra.mxu0 %v1821
      %2272 = vmatprep.subr.bf16.mxu0 %v1824
      %2273 = vmatpush1.bf16.msra.mxu0 %v1823
      %2274 = vmatprep.mubr.bf16.mxu0 %v1044
      %2275 = vmatmul.mubr.bf16.gmra.mrb[0].mxu0 %v1043
      %v2276 = vpop.f32.mrb[0].mxu0
      %v2277 = vadd.f32 %v2084, %v2276
      %v2278 = vpop.f32.mrb[0].mxu0
      %v2279 = vadd.f32 %v2086, %v2278
      %v2280 = vpop.f32.mrb[0].mxu0
      %v2281 = vadd.f32 %v2088, %v2280
      %v2282 = vpop.f32.mrb[0].mxu0
      %v2283 = vadd.f32 %v2090, %v2282
      %2284 = vmatprep.mubr.bf16.mxu0 %v1053
      %2285 = vmatmul.mubr.bf16.gmra.mrb[0].mxu0 %v1052
      %v2286 = vpop.f32.mrb[0].mxu0
      %v2287 = vadd.f32 %v2094, %v2286
      %v2288 = vpop.f32.mrb[0].mxu0
      %v2289 = vadd.f32 %v2096, %v2288
      %v2290 = vpop.f32.mrb[0].mxu0
      %v2291 = vadd.f32 %v2098, %v2290
      %v2292 = vpop.f32.mrb[0].mxu0
      %v2293 = vadd.f32 %v2100, %v2292
      %2294 = vmatprep.mubr.bf16.mxu0 %v1062
      %2295 = vmatmul.mubr.bf16.gmra.mrb[0].mxu0 %v1061
      %v2296 = vpop.f32.mrb[0].mxu0
      %v2297 = vadd.f32 %v2104, %v2296
      %v2298 = vpop.f32.mrb[0].mxu0
      %v2299 = vadd.f32 %v2106, %v2298
      %v2300 = vpop.f32.mrb[0].mxu0
      %v2301 = vadd.f32 %v2108, %v2300
      %v2302 = vpop.f32.mrb[0].mxu0
      %v2303 = vadd.f32 %v2110, %v2302
      %2304 = vmatprep.mubr.bf16.mxu0 %v1071
      %2305 = vmatmul.mubr.bf16.gmra.mrb[0].mxu0 %v1070
      %v2306 = vpop.f32.mrb[0].mxu0
      %v2307 = vadd.f32 %v2114, %v2306
      %v2308 = vpop.f32.mrb[0].mxu0
      %v2309 = vadd.f32 %v2116, %v2308
      %v2310 = vpop.f32.mrb[0].mxu0
      %v2311 = vadd.f32 %v2118, %v2310
      %v2312 = vpop.f32.mrb[0].mxu0
      %v2313 = vadd.f32 %v2120, %v2312
      %2314 = vmatprep.mubr.bf16.mxu0 %v1080
      %2315 = vmatmul.mubr.bf16.gmra.mrb[0].mxu0 %v1079
      %v2316 = vpop.f32.mrb[0].mxu0
      %v2317 = vadd.f32 %v2124, %v2316
      %v2318 = vpop.f32.mrb[0].mxu0
      %v2319 = vadd.f32 %v2126, %v2318
      %v2320 = vpop.f32.mrb[0].mxu0
      %v2321 = vadd.f32 %v2128, %v2320
      %v2322 = vpop.f32.mrb[0].mxu0
      %v2323 = vadd.f32 %v2130, %v2322
      %2324 = vmatprep.mubr.bf16.mxu0 %v1089
      %2325 = vmatmul.mubr.bf16.gmra.mrb[0].mxu0 %v1088
      %v2326 = vpop.f32.mrb[0].mxu0
      %v2327 = vadd.f32 %v2134, %v2326
      %v2328 = vpop.f32.mrb[0].mxu0
      %v2329 = vadd.f32 %v2136, %v2328
      %v2330 = vpop.f32.mrb[0].mxu0
      %v2331 = vadd.f32 %v2138, %v2330
      %v2332 = vpop.f32.mrb[0].mxu0
      %v2333 = vadd.f32 %v2140, %v2332
      %2334 = vmatprep.mubr.bf16.mxu0 %v1098
      %2335 = vmatmul.mubr.bf16.gmra.mrb[0].mxu0 %v1097
      %v2336 = vpop.f32.mrb[0].mxu0
      %v2337 = vadd.f32 %v2144, %v2336
      %v2338 = vpop.f32.mrb[0].mxu0
      %v2339 = vadd.f32 %v2146, %v2338
      %v2340 = vpop.f32.mrb[0].mxu0
      %v2341 = vadd.f32 %v2148, %v2340
      %v2342 = vpop.f32.mrb[0].mxu0
      %v2343 = vadd.f32 %v2150, %v2342
      %2344 = vmatprep.mubr.bf16.mxu0 %v1107
      %2345 = vmatmul.mubr.bf16.gmra.mrb[0].mxu0 %v1106
      %v2346 = vpop.f32.mrb[0].mxu0
      %v2347 = vadd.f32 %v2154, %v2346
      %v2348 = vpop.f32.mrb[0].mxu0
      %v2349 = vadd.f32 %v2156, %v2348
      %v2350 = vpop.f32.mrb[0].mxu0
      %v2351 = vadd.f32 %v2158, %v2350
      %v2352 = vpop.f32.mrb[0].mxu0
      %v2353 = vadd.f32 %v2160, %v2352
      %2354 = vmatprep.mubr.bf16.mxu0 %v1116
      %2355 = vmatmul.mubr.bf16.gmra.mrb[0].mxu0 %v1115
      %v2356 = vpop.f32.mrb[0].mxu0
      %v2357 = vadd.f32 %v2164, %v2356
      %v2358 = vpop.f32.mrb[0].mxu0
      %v2359 = vadd.f32 %v2166, %v2358
      %v2360 = vpop.f32.mrb[0].mxu0
      %v2361 = vadd.f32 %v2168, %v2360
      %v2362 = vpop.f32.mrb[0].mxu0
      %v2363 = vadd.f32 %v2170, %v2362
      %2364 = vmatprep.mubr.bf16.mxu0 %v1125
      %2365 = vmatmul.mubr.bf16.gmra.mrb[0].mxu0 %v1124
      %v2366 = vpop.f32.mrb[0].mxu0
      %v2367 = vadd.f32 %v2174, %v2366
      %v2368 = vpop.f32.mrb[0].mxu0
      %v2369 = vadd.f32 %v2176, %v2368
      %v2370 = vpop.f32.mrb[0].mxu0
      %v2371 = vadd.f32 %v2178, %v2370
      %v2372 = vpop.f32.mrb[0].mxu0
      %v2373 = vadd.f32 %v2180, %v2372
      %2374 = vmatprep.mubr.bf16.mxu0 %v1134
      %2375 = vmatmul.mubr.bf16.gmra.mrb[0].mxu0 %v1133
      %v2376 = vpop.f32.mrb[0].mxu0
      %v2377 = vadd.f32 %v2184, %v2376
      %v2378 = vpop.f32.mrb[0].mxu0
      %v2379 = vadd.f32 %v2186, %v2378
      %v2380 = vpop.f32.mrb[0].mxu0
      %v2381 = vadd.f32 %v2188, %v2380
      %v2382 = vpop.f32.mrb[0].mxu0
      %v2383 = vadd.f32 %v2190, %v2382
      %2384 = vmatprep.mubr.bf16.mxu0 %v1143
      %2385 = vmatmul.mubr.bf16.gmra.mrb[0].mxu0 %v1142
      %v2386 = vpop.f32.mrb[0].mxu0
      %v2387 = vadd.f32 %v2194, %v2386
      %v2388 = vpop.f32.mrb[0].mxu0
      %v2389 = vadd.f32 %v2196, %v2388
      %v2390 = vpop.f32.mrb[0].mxu0
      %v2391 = vadd.f32 %v2198, %v2390
      %v2392 = vpop.f32.mrb[0].mxu0
      %v2393 = vadd.f32 %v2200, %v2392
      %2394 = vmatprep.mubr.bf16.mxu0 %v1152
      %2395 = vmatmul.mubr.bf16.gmra.mrb[0].mxu0 %v1151
      %v2396 = vpop.f32.mrb[0].mxu0
      %v2397 = vadd.f32 %v2204, %v2396
      %v2398 = vpop.f32.mrb[0].mxu0
      %v2399 = vadd.f32 %v2206, %v2398
      %v2400 = vpop.f32.mrb[0].mxu0
      %v2401 = vadd.f32 %v2208, %v2400
      %v2402 = vpop.f32.mrb[0].mxu0
      %v2403 = vadd.f32 %v2210, %v2402
      %2404 = vmatprep.mubr.bf16.mxu0 %v1161
      %2405 = vmatmul.mubr.bf16.gmra.mrb[0].mxu0 %v1160
      %v2406 = vpop.f32.mrb[0].mxu0
      %v2407 = vadd.f32 %v2214, %v2406
      %v2408 = vpop.f32.mrb[0].mxu0
      %v2409 = vadd.f32 %v2216, %v2408
      %v2410 = vpop.f32.mrb[0].mxu0
      %v2411 = vadd.f32 %v2218, %v2410
      %v2412 = vpop.f32.mrb[0].mxu0
      %v2413 = vadd.f32 %v2220, %v2412
      %2414 = vmatprep.mubr.bf16.mxu0 %v1170
      %2415 = vmatmul.mubr.bf16.gmra.mrb[0].mxu0 %v1169
      %v2416 = vpop.f32.mrb[0].mxu0
      %v2417 = vadd.f32 %v2224, %v2416
      %v2418 = vpop.f32.mrb[0].mxu0
      %v2419 = vadd.f32 %v2226, %v2418
      %v2420 = vpop.f32.mrb[0].mxu0
      %v2421 = vadd.f32 %v2228, %v2420
      %v2422 = vpop.f32.mrb[0].mxu0
      %v2423 = vadd.f32 %v2230, %v2422
      %2424 = vmatprep.mubr.bf16.mxu0 %v1179
      %2425 = vmatmul.mubr.bf16.gmra.mrb[0].mxu0 %v1178
      %v2426 = vpop.f32.mrb[0].mxu0
      %v2427 = vadd.f32 %v2234, %v2426
      %v2428 = vpop.f32.mrb[0].mxu0
      %v2429 = vadd.f32 %v2236, %v2428
      %v2430 = vpop.f32.mrb[0].mxu0
      %v2431 = vadd.f32 %v2238, %v2430
      %v2432 = vpop.f32.mrb[0].mxu0
      %v2433 = vadd.f32 %v2240, %v2432
      %2434 = vdwg.mxu0
      %2435 = vmatprep.subr.bf16.mxu0 %v1826
      %2436 = vmatpush1.bf16.msra.mxu0 %v1825
      %2437 = vmatprep.subr.bf16.mxu0 %v1828
      %2438 = vmatpush1.bf16.msra.mxu0 %v1827
      %2439 = vmatprep.subr.bf16.mxu0 %v1830
      %2440 = vmatpush1.bf16.msra.mxu0 %v1829
      %2441 = vmatprep.subr.bf16.mxu0 %v1832
      %2442 = vmatpush1.bf16.msra.mxu0 %v1831
      %2443 = vmatprep.subr.bf16.mxu0 %v1834
      %2444 = vmatpush1.bf16.msra.mxu0 %v1833
      %2445 = vmatprep.subr.bf16.mxu0 %v1836
      %2446 = vmatpush1.bf16.msra.mxu0 %v1835
      %2447 = vmatprep.subr.bf16.mxu0 %v1838
      %2448 = vmatpush1.bf16.msra.mxu0 %v1837
      %2449 = vmatprep.subr.bf16.mxu0 %v1840
      %2450 = vmatpush1.bf16.msra.mxu0 %v1839
      %2451 = vmatprep.subr.bf16.mxu0 %v1842
      %2452 = vmatpush1.bf16.msra.mxu0 %v1841
      %2453 = vmatprep.subr.bf16.mxu0 %v1844
      %2454 = vmatpush1.bf16.msra.mxu0 %v1843
      %2455 = vmatprep.subr.bf16.mxu0 %v1846
      %2456 = vmatpush1.bf16.msra.mxu0 %v1845
      %2457 = vmatprep.subr.bf16.mxu0 %v1848
      %2458 = vmatpush1.bf16.msra.mxu0 %v1847
      %2459 = vmatprep.subr.bf16.mxu0 %v1850
      %2460 = vmatpush1.bf16.msra.mxu0 %v1849
      %2461 = vmatprep.subr.bf16.mxu0 %v1852
      %2462 = vmatpush1.bf16.msra.mxu0 %v1851
      %2463 = vmatprep.subr.bf16.mxu0 %v1854
      %2464 = vmatpush1.bf16.msra.mxu0 %v1853
      %2465 = vmatprep.subr.bf16.mxu0 %v1856
      %2466 = vmatpush1.bf16.msra.mxu0 %v1855
      %2467 = vmatprep.mubr.bf16.mxu0 %v1046
      %2468 = vmatmul.mubr.bf16.gmra.mrb[0].mxu0 %v1045
      %v2469 = vpop.f32.mrb[0].mxu0
      %v2470 = vadd.f32 %v2277, %v2469
      %v2471 = vpop.f32.mrb[0].mxu0
      %v2472 = vadd.f32 %v2279, %v2471
      %v2473 = vpop.f32.mrb[0].mxu0
      %v2474 = vadd.f32 %v2281, %v2473
      %v2475 = vpop.f32.mrb[0].mxu0
      %v2476 = vadd.f32 %v2283, %v2475
      %2477 = vmatprep.mubr.bf16.mxu0 %v1055
      %2478 = vmatmul.mubr.bf16.gmra.mrb[0].mxu0 %v1054
      %v2479 = vpop.f32.mrb[0].mxu0
      %v2480 = vadd.f32 %v2287, %v2479
      %v2481 = vpop.f32.mrb[0].mxu0
      %v2482 = vadd.f32 %v2289, %v2481
      %v2483 = vpop.f32.mrb[0].mxu0
      %v2484 = vadd.f32 %v2291, %v2483
      %v2485 = vpop.f32.mrb[0].mxu0
      %v2486 = vadd.f32 %v2293, %v2485
      %2487 = vmatprep.mubr.bf16.mxu0 %v1064
      %2488 = vmatmul.mubr.bf16.gmra.mrb[0].mxu0 %v1063
      %v2489 = vpop.f32.mrb[0].mxu0
      %v2490 = vadd.f32 %v2297, %v2489
      %v2491 = vpop.f32.mrb[0].mxu0
      %v2492 = vadd.f32 %v2299, %v2491
      %v2493 = vpop.f32.mrb[0].mxu0
      %v2494 = vadd.f32 %v2301, %v2493
      %v2495 = vpop.f32.mrb[0].mxu0
      %v2496 = vadd.f32 %v2303, %v2495
      %2497 = vmatprep.mubr.bf16.mxu0 %v1073
      %2498 = vmatmul.mubr.bf16.gmra.mrb[0].mxu0 %v1072
      %v2499 = vpop.f32.mrb[0].mxu0
      %v2500 = vadd.f32 %v2307, %v2499
      %v2501 = vpop.f32.mrb[0].mxu0
      %v2502 = vadd.f32 %v2309, %v2501
      %v2503 = vpop.f32.mrb[0].mxu0
      %v2504 = vadd.f32 %v2311, %v2503
      %v2505 = vpop.f32.mrb[0].mxu0
      %v2506 = vadd.f32 %v2313, %v2505
      %2507 = vmatprep.mubr.bf16.mxu0 %v1082
      %2508 = vmatmul.mubr.bf16.gmra.mrb[0].mxu0 %v1081
      %v2509 = vpop.f32.mrb[0].mxu0
      %v2510 = vadd.f32 %v2317, %v2509
      %v2511 = vpop.f32.mrb[0].mxu0
      %v2512 = vadd.f32 %v2319, %v2511
      %v2513 = vpop.f32.mrb[0].mxu0
      %v2514 = vadd.f32 %v2321, %v2513
      %v2515 = vpop.f32.mrb[0].mxu0
      %v2516 = vadd.f32 %v2323, %v2515
      %2517 = vmatprep.mubr.bf16.mxu0 %v1091
      %2518 = vmatmul.mubr.bf16.gmra.mrb[0].mxu0 %v1090
      %v2519 = vpop.f32.mrb[0].mxu0
      %v2520 = vadd.f32 %v2327, %v2519
      %v2521 = vpop.f32.mrb[0].mxu0
      %v2522 = vadd.f32 %v2329, %v2521
      %v2523 = vpop.f32.mrb[0].mxu0
      %v2524 = vadd.f32 %v2331, %v2523
      %v2525 = vpop.f32.mrb[0].mxu0
      %v2526 = vadd.f32 %v2333, %v2525
      %2527 = vmatprep.mubr.bf16.mxu0 %v1100
      %2528 = vmatmul.mubr.bf16.gmra.mrb[0].mxu0 %v1099
      %v2529 = vpop.f32.mrb[0].mxu0
      %v2530 = vadd.f32 %v2337, %v2529
      %v2531 = vpop.f32.mrb[0].mxu0
      %v2532 = vadd.f32 %v2339, %v2531
      %v2533 = vpop.f32.mrb[0].mxu0
      %v2534 = vadd.f32 %v2341, %v2533
      %v2535 = vpop.f32.mrb[0].mxu0
      %v2536 = vadd.f32 %v2343, %v2535
      %2537 = vmatprep.mubr.bf16.mxu0 %v1109
      %2538 = vmatmul.mubr.bf16.gmra.mrb[0].mxu0 %v1108
      %v2539 = vpop.f32.mrb[0].mxu0
      %v2540 = vadd.f32 %v2347, %v2539
      %v2541 = vpop.f32.mrb[0].mxu0
      %v2542 = vadd.f32 %v2349, %v2541
      %v2543 = vpop.f32.mrb[0].mxu0
      %v2544 = vadd.f32 %v2351, %v2543
      %v2545 = vpop.f32.mrb[0].mxu0
      %v2546 = vadd.f32 %v2353, %v2545
      %2547 = vmatprep.mubr.bf16.mxu0 %v1118
      %2548 = vmatmul.mubr.bf16.gmra.mrb[0].mxu0 %v1117
      %v2549 = vpop.f32.mrb[0].mxu0
      %v2550 = vadd.f32 %v2357, %v2549
      %v2551 = vpop.f32.mrb[0].mxu0
      %v2552 = vadd.f32 %v2359, %v2551
      %v2553 = vpop.f32.mrb[0].mxu0
      %v2554 = vadd.f32 %v2361, %v2553
      %v2555 = vpop.f32.mrb[0].mxu0
      %v2556 = vadd.f32 %v2363, %v2555
      %2557 = vmatprep.mubr.bf16.mxu0 %v1127
      %2558 = vmatmul.mubr.bf16.gmra.mrb[0].mxu0 %v1126
      %v2559 = vpop.f32.mrb[0].mxu0
      %v2560 = vadd.f32 %v2367, %v2559
      %v2561 = vpop.f32.mrb[0].mxu0
      %v2562 = vadd.f32 %v2369, %v2561
      %v2563 = vpop.f32.mrb[0].mxu0
      %v2564 = vadd.f32 %v2371, %v2563
      %v2565 = vpop.f32.mrb[0].mxu0
      %v2566 = vadd.f32 %v2373, %v2565
      %2567 = vmatprep.mubr.bf16.mxu0 %v1136
      %2568 = vmatmul.mubr.bf16.gmra.mrb[0].mxu0 %v1135
      %v2569 = vpop.f32.mrb[0].mxu0
      %v2570 = vadd.f32 %v2377, %v2569
      %v2571 = vpop.f32.mrb[0].mxu0
      %v2572 = vadd.f32 %v2379, %v2571
      %v2573 = vpop.f32.mrb[0].mxu0
      %v2574 = vadd.f32 %v2381, %v2573
      %v2575 = vpop.f32.mrb[0].mxu0
      %v2576 = vadd.f32 %v2383, %v2575
      %2577 = vmatprep.mubr.bf16.mxu0 %v1145
      %2578 = vmatmul.mubr.bf16.gmra.mrb[0].mxu0 %v1144
      %v2579 = vpop.f32.mrb[0].mxu0
      %v2580 = vadd.f32 %v2387, %v2579
      %v2581 = vpop.f32.mrb[0].mxu0
      %v2582 = vadd.f32 %v2389, %v2581
      %v2583 = vpop.f32.mrb[0].mxu0
      %v2584 = vadd.f32 %v2391, %v2583
      %v2585 = vpop.f32.mrb[0].mxu0
      %v2586 = vadd.f32 %v2393, %v2585
      %2587 = vmatprep.mubr.bf16.mxu0 %v1154
      %2588 = vmatmul.mubr.bf16.gmra.mrb[0].mxu0 %v1153
      %v2589 = vpop.f32.mrb[0].mxu0
      %v2590 = vadd.f32 %v2397, %v2589
      %v2591 = vpop.f32.mrb[0].mxu0
      %v2592 = vadd.f32 %v2399, %v2591
      %v2593 = vpop.f32.mrb[0].mxu0
      %v2594 = vadd.f32 %v2401, %v2593
      %v2595 = vpop.f32.mrb[0].mxu0
      %v2596 = vadd.f32 %v2403, %v2595
      %2597 = vmatprep.mubr.bf16.mxu0 %v1163
      %2598 = vmatmul.mubr.bf16.gmra.mrb[0].mxu0 %v1162
      %v2599 = vpop.f32.mrb[0].mxu0
      %v2600 = vadd.f32 %v2407, %v2599
      %v2601 = vpop.f32.mrb[0].mxu0
      %v2602 = vadd.f32 %v2409, %v2601
      %v2603 = vpop.f32.mrb[0].mxu0
      %v2604 = vadd.f32 %v2411, %v2603
      %v2605 = vpop.f32.mrb[0].mxu0
      %v2606 = vadd.f32 %v2413, %v2605
      %2607 = vmatprep.mubr.bf16.mxu0 %v1172
      %2608 = vmatmul.mubr.bf16.gmra.mrb[0].mxu0 %v1171
      %v2609 = vpop.f32.mrb[0].mxu0
      %v2610 = vadd.f32 %v2417, %v2609
      %v2611 = vpop.f32.mrb[0].mxu0
      %v2612 = vadd.f32 %v2419, %v2611
      %v2613 = vpop.f32.mrb[0].mxu0
      %v2614 = vadd.f32 %v2421, %v2613
      %v2615 = vpop.f32.mrb[0].mxu0
      %v2616 = vadd.f32 %v2423, %v2615
      %2617 = vmatprep.mubr.bf16.mxu0 %v1181
      %2618 = vmatmul.mubr.bf16.gmra.mrb[0].mxu0 %v1180
      %v2619 = vpop.f32.mrb[0].mxu0
      %v2620 = vadd.f32 %v2427, %v2619
      %v2621 = vpop.f32.mrb[0].mxu0
      %v2622 = vadd.f32 %v2429, %v2621
      %v2623 = vpop.f32.mrb[0].mxu0
      %v2624 = vadd.f32 %v2431, %v2623
      %v2625 = vpop.f32.mrb[0].mxu0
      %v2626 = vadd.f32 %v2433, %v2625
      %2627 = vdwg.mxu0
      %2628 = vmatprep.subr.bf16.mxu0 %v1858
      %2629 = vmatpush1.bf16.msra.mxu0 %v1857
      %2630 = vmatprep.subr.bf16.mxu0 %v1860
      %2631 = vmatpush1.bf16.msra.mxu0 %v1859
      %2632 = vmatprep.subr.bf16.mxu0 %v1862
      %2633 = vmatpush1.bf16.msra.mxu0 %v1861
      %2634 = vmatprep.subr.bf16.mxu0 %v1864
      %2635 = vmatpush1.bf16.msra.mxu0 %v1863
      %2636 = vmatprep.subr.bf16.mxu0 %v1866
      %2637 = vmatpush1.bf16.msra.mxu0 %v1865
      %2638 = vmatprep.subr.bf16.mxu0 %v1868
      %2639 = vmatpush1.bf16.msra.mxu0 %v1867
      %2640 = vmatprep.subr.bf16.mxu0 %v1870
      %2641 = vmatpush1.bf16.msra.mxu0 %v1869
      %2642 = vmatprep.subr.bf16.mxu0 %v1872
      %2643 = vmatpush1.bf16.msra.mxu0 %v1871
      %2644 = vmatprep.subr.bf16.mxu0 %v1874
      %2645 = vmatpush1.bf16.msra.mxu0 %v1873
      %2646 = vmatprep.subr.bf16.mxu0 %v1876
      %2647 = vmatpush1.bf16.msra.mxu0 %v1875
      %2648 = vmatprep.subr.bf16.mxu0 %v1878
      %2649 = vmatpush1.bf16.msra.mxu0 %v1877
      %2650 = vmatprep.subr.bf16.mxu0 %v1880
      %2651 = vmatpush1.bf16.msra.mxu0 %v1879
      %2652 = vmatprep.subr.bf16.mxu0 %v1882
      %2653 = vmatpush1.bf16.msra.mxu0 %v1881
      %2654 = vmatprep.subr.bf16.mxu0 %v1884
      %2655 = vmatpush1.bf16.msra.mxu0 %v1883
      %2656 = vmatprep.subr.bf16.mxu0 %v1886
      %2657 = vmatpush1.bf16.msra.mxu0 %v1885
      %2658 = vmatprep.subr.bf16.mxu0 %v1888
      %2659 = vmatpush1.bf16.msra.mxu0 %v1887
      %2660 = vmatprep.mubr.bf16.mxu0 %v1048
      %2661 = vmatmul.mubr.bf16.gmra.mrb[0].mxu0 %v1047
      %v2662 = vpop.f32.mrb[0].mxu0
      %v2663 = vadd.f32 %v2470, %v2662
      %v2664 = vpop.f32.mrb[0].mxu0
      %v2665 = vadd.f32 %v2472, %v2664
      %v2666 = vpop.f32.mrb[0].mxu0
      %v2667 = vadd.f32 %v2474, %v2666
      %v2668 = vpop.f32.mrb[0].mxu0
      %v2669 = vadd.f32 %v2476, %v2668
      %2670 = vmatprep.mubr.bf16.mxu0 %v1057
      %2671 = vmatmul.mubr.bf16.gmra.mrb[0].mxu0 %v1056
      %v2672 = vpop.f32.mrb[0].mxu0
      %v2673 = vadd.f32 %v2480, %v2672
      %v2674 = vpop.f32.mrb[0].mxu0
      %v2675 = vadd.f32 %v2482, %v2674
      %v2676 = vpop.f32.mrb[0].mxu0
      %v2677 = vadd.f32 %v2484, %v2676
      %v2678 = vpop.f32.mrb[0].mxu0
      %v2679 = vadd.f32 %v2486, %v2678
      %2680 = vmatprep.mubr.bf16.mxu0 %v1066
      %2681 = vmatmul.mubr.bf16.gmra.mrb[0].mxu0 %v1065
      %v2682 = vpop.f32.mrb[0].mxu0
      %v2683 = vadd.f32 %v2490, %v2682
      %v2684 = vpop.f32.mrb[0].mxu0
      %v2685 = vadd.f32 %v2492, %v2684
      %v2686 = vpop.f32.mrb[0].mxu0
      %v2687 = vadd.f32 %v2494, %v2686
      %v2688 = vpop.f32.mrb[0].mxu0
      %v2689 = vadd.f32 %v2496, %v2688
      %2690 = vmatprep.mubr.bf16.mxu0 %v1075
      %2691 = vmatmul.mubr.bf16.gmra.mrb[0].mxu0 %v1074
      %v2692 = vpop.f32.mrb[0].mxu0
      %v2693 = vadd.f32 %v2500, %v2692
      %v2694 = vpop.f32.mrb[0].mxu0
      %v2695 = vadd.f32 %v2502, %v2694
      %v2696 = vpop.f32.mrb[0].mxu0
      %v2697 = vadd.f32 %v2504, %v2696
      %v2698 = vpop.f32.mrb[0].mxu0
      %v2699 = vadd.f32 %v2506, %v2698
      %2700 = vmatprep.mubr.bf16.mxu0 %v1084
      %2701 = vmatmul.mubr.bf16.gmra.mrb[0].mxu0 %v1083
      %v2702 = vpop.f32.mrb[0].mxu0
      %v2703 = vadd.f32 %v2510, %v2702
      %v2704 = vpop.f32.mrb[0].mxu0
      %v2705 = vadd.f32 %v2512, %v2704
      %v2706 = vpop.f32.mrb[0].mxu0
      %v2707 = vadd.f32 %v2514, %v2706
      %v2708 = vpop.f32.mrb[0].mxu0
      %v2709 = vadd.f32 %v2516, %v2708
      %2710 = vmatprep.mubr.bf16.mxu0 %v1093
      %2711 = vmatmul.mubr.bf16.gmra.mrb[0].mxu0 %v1092
      %v2712 = vpop.f32.mrb[0].mxu0
      %v2713 = vadd.f32 %v2520, %v2712
      %v2714 = vpop.f32.mrb[0].mxu0
      %v2715 = vadd.f32 %v2522, %v2714
      %v2716 = vpop.f32.mrb[0].mxu0
      %v2717 = vadd.f32 %v2524, %v2716
      %v2718 = vpop.f32.mrb[0].mxu0
      %v2719 = vadd.f32 %v2526, %v2718
      %2720 = vmatprep.mubr.bf16.mxu0 %v1102
      %2721 = vmatmul.mubr.bf16.gmra.mrb[0].mxu0 %v1101
      %v2722 = vpop.f32.mrb[0].mxu0
      %v2723 = vadd.f32 %v2530, %v2722
      %v2724 = vpop.f32.mrb[0].mxu0
      %v2725 = vadd.f32 %v2532, %v2724
      %v2726 = vpop.f32.mrb[0].mxu0
      %v2727 = vadd.f32 %v2534, %v2726
      %v2728 = vpop.f32.mrb[0].mxu0
      %v2729 = vadd.f32 %v2536, %v2728
      %2730 = vmatprep.mubr.bf16.mxu0 %v1111
      %2731 = vmatmul.mubr.bf16.gmra.mrb[0].mxu0 %v1110
      %v2732 = vpop.f32.mrb[0].mxu0
      %v2733 = vadd.f32 %v2540, %v2732
      %v2734 = vpop.f32.mrb[0].mxu0
      %v2735 = vadd.f32 %v2542, %v2734
      %v2736 = vpop.f32.mrb[0].mxu0
      %v2737 = vadd.f32 %v2544, %v2736
      %v2738 = vpop.f32.mrb[0].mxu0
      %v2739 = vadd.f32 %v2546, %v2738
      %2740 = vmatprep.mubr.bf16.mxu0 %v1120
      %2741 = vmatmul.mubr.bf16.gmra.mrb[0].mxu0 %v1119
      %v2742 = vpop.f32.mrb[0].mxu0
      %v2743 = vadd.f32 %v2550, %v2742
      %v2744 = vpop.f32.mrb[0].mxu0
      %v2745 = vadd.f32 %v2552, %v2744
      %v2746 = vpop.f32.mrb[0].mxu0
      %v2747 = vadd.f32 %v2554, %v2746
      %v2748 = vpop.f32.mrb[0].mxu0
      %v2749 = vadd.f32 %v2556, %v2748
      %2750 = vmatprep.mubr.bf16.mxu0 %v1129
      %2751 = vmatmul.mubr.bf16.gmra.mrb[0].mxu0 %v1128
      %v2752 = vpop.f32.mrb[0].mxu0
      %v2753 = vadd.f32 %v2560, %v2752
      %v2754 = vpop.f32.mrb[0].mxu0
      %v2755 = vadd.f32 %v2562, %v2754
      %v2756 = vpop.f32.mrb[0].mxu0
      %v2757 = vadd.f32 %v2564, %v2756
      %v2758 = vpop.f32.mrb[0].mxu0
      %v2759 = vadd.f32 %v2566, %v2758
      %2760 = vmatprep.mubr.bf16.mxu0 %v1138
      %2761 = vmatmul.mubr.bf16.gmra.mrb[0].mxu0 %v1137
      %v2762 = vpop.f32.mrb[0].mxu0
      %v2763 = vadd.f32 %v2570, %v2762
      %v2764 = vpop.f32.mrb[0].mxu0
      %v2765 = vadd.f32 %v2572, %v2764
      %v2766 = vpop.f32.mrb[0].mxu0
      %v2767 = vadd.f32 %v2574, %v2766
      %v2768 = vpop.f32.mrb[0].mxu0
      %v2769 = vadd.f32 %v2576, %v2768
      %2770 = vmatprep.mubr.bf16.mxu0 %v1147
      %2771 = vmatmul.mubr.bf16.gmra.mrb[0].mxu0 %v1146
      %v2772 = vpop.f32.mrb[0].mxu0
      %v2773 = vadd.f32 %v2580, %v2772
      %v2774 = vpop.f32.mrb[0].mxu0
      %v2775 = vadd.f32 %v2582, %v2774
      %v2776 = vpop.f32.mrb[0].mxu0
      %v2777 = vadd.f32 %v2584, %v2776
      %v2778 = vpop.f32.mrb[0].mxu0
      %v2779 = vadd.f32 %v2586, %v2778
      %2780 = vmatprep.mubr.bf16.mxu0 %v1156
      %2781 = vmatmul.mubr.bf16.gmra.mrb[0].mxu0 %v1155
      %v2782 = vpop.f32.mrb[0].mxu0
      %v2783 = vadd.f32 %v2590, %v2782
      %v2784 = vpop.f32.mrb[0].mxu0
      %v2785 = vadd.f32 %v2592, %v2784
      %v2786 = vpop.f32.mrb[0].mxu0
      %v2787 = vadd.f32 %v2594, %v2786
      %v2788 = vpop.f32.mrb[0].mxu0
      %v2789 = vadd.f32 %v2596, %v2788
      %2790 = vmatprep.mubr.bf16.mxu0 %v1165
      %2791 = vmatmul.mubr.bf16.gmra.mrb[0].mxu0 %v1164
      %v2792 = vpop.f32.mrb[0].mxu0
      %v2793 = vadd.f32 %v2600, %v2792
      %v2794 = vpop.f32.mrb[0].mxu0
      %v2795 = vadd.f32 %v2602, %v2794
      %v2796 = vpop.f32.mrb[0].mxu0
      %v2797 = vadd.f32 %v2604, %v2796
      %v2798 = vpop.f32.mrb[0].mxu0
      %v2799 = vadd.f32 %v2606, %v2798
      %2800 = vmatprep.mubr.bf16.mxu0 %v1174
      %2801 = vmatmul.mubr.bf16.gmra.mrb[0].mxu0 %v1173
      %v2802 = vpop.f32.mrb[0].mxu0
      %v2803 = vadd.f32 %v2610, %v2802
      %v2804 = vpop.f32.mrb[0].mxu0
      %v2805 = vadd.f32 %v2612, %v2804
      %v2806 = vpop.f32.mrb[0].mxu0
      %v2807 = vadd.f32 %v2614, %v2806
      %v2808 = vpop.f32.mrb[0].mxu0
      %v2809 = vadd.f32 %v2616, %v2808
      %2810 = vmatprep.mubr.bf16.mxu0 %v1183
      %2811 = vmatmul.mubr.bf16.gmra.mrb[0].mxu0 %v1182
      %v2812 = vpop.f32.mrb[0].mxu0
      %v2813 = vadd.f32 %v2620, %v2812
      %v2814 = vpop.f32.mrb[0].mxu0
      %v2815 = vadd.f32 %v2622, %v2814
      %v2816 = vpop.f32.mrb[0].mxu0
      %v2817 = vadd.f32 %v2624, %v2816
      %v2818 = vpop.f32.mrb[0].mxu0
      %v2819 = vadd.f32 %v2626, %v2818
      %2820 = vdwg.mxu0
      %2821 = vmatprep.subr.bf16.mxu0 %v1890
      %2822 = vmatpush1.bf16.msra.mxu0 %v1889
      %2823 = vmatprep.subr.bf16.mxu0 %v1892
      %2824 = vmatpush1.bf16.msra.mxu0 %v1891
      %2825 = vmatprep.subr.bf16.mxu0 %v1894
      %2826 = vmatpush1.bf16.msra.mxu0 %v1893
      %2827 = vmatprep.subr.bf16.mxu0 %v1896
      %2828 = vmatpush1.bf16.msra.mxu0 %v1895
      %2829 = vmatprep.subr.bf16.mxu0 %v1898
      %2830 = vmatpush1.bf16.msra.mxu0 %v1897
      %2831 = vmatprep.subr.bf16.mxu0 %v1900
      %2832 = vmatpush1.bf16.msra.mxu0 %v1899
      %2833 = vmatprep.subr.bf16.mxu0 %v1902
      %2834 = vmatpush1.bf16.msra.mxu0 %v1901
      %2835 = vmatprep.subr.bf16.mxu0 %v1904
      %2836 = vmatpush1.bf16.msra.mxu0 %v1903
      %2837 = vmatprep.subr.bf16.mxu0 0
      %2838 = vmatpush1.bf16.msra.mxu0 0
      %2839 = vmatprep.subr.bf16.mxu0 0
      %2840 = vmatpush1.bf16.msra.mxu0 0
      %2841 = vmatprep.subr.bf16.mxu0 0
      %2842 = vmatpush1.bf16.msra.mxu0 0
      %2843 = vmatprep.subr.bf16.mxu0 0
      %2844 = vmatpush1.bf16.msra.mxu0 0
      %2845 = vmatprep.subr.bf16.mxu0 0
      %2846 = vmatpush1.bf16.msra.mxu0 0
      %2847 = vmatprep.subr.bf16.mxu0 0
      %2848 = vmatpush1.bf16.msra.mxu0 0
      %2849 = vmatprep.subr.bf16.mxu0 0
      %2850 = vmatpush1.bf16.msra.mxu0 0
      %2851 = vmatprep.subr.bf16.mxu0 0
      %2852 = vmatpush1.bf16.msra.mxu0 0
      %2853 = vmatprep.mubr.bf16.mxu0 0
      %2854 = vmatmul.mubr.bf16.gmra.mrb[0].mxu0 %v1049
      %v2855 = vpop.f32.mrb[0].mxu0
      %v2856 = vadd.f32 %v2663, %v2855
      %v2857 = vpop.f32.mrb[0].mxu0
      %v2858 = vadd.f32 %v2665, %v2857
      %v2859 = vpop.f32.mrb[0].mxu0
      %v2860 = vadd.f32 %v2667, %v2859
      %v2861 = vpop.f32.mrb[0].mxu0
      %v2862 = vadd.f32 %v2669, %v2861
      %2863 = vmatprep.mubr.bf16.mxu0 0
      %2864 = vmatmul.mubr.bf16.gmra.mrb[0].mxu0 %v1058
      %v2865 = vpop.f32.mrb[0].mxu0
      %v2866 = vadd.f32 %v2673, %v2865
      %v2867 = vpop.f32.mrb[0].mxu0
      %v2868 = vadd.f32 %v2675, %v2867
      %v2869 = vpop.f32.mrb[0].mxu0
      %v2870 = vadd.f32 %v2677, %v2869
      %v2871 = vpop.f32.mrb[0].mxu0
      %v2872 = vadd.f32 %v2679, %v2871
      %2873 = vmatprep.mubr.bf16.mxu0 0
      %2874 = vmatmul.mubr.bf16.gmra.mrb[0].mxu0 %v1067
      %v2875 = vpop.f32.mrb[0].mxu0
      %v2876 = vadd.f32 %v2683, %v2875
      %v2877 = vpop.f32.mrb[0].mxu0
      %v2878 = vadd.f32 %v2685, %v2877
      %v2879 = vpop.f32.mrb[0].mxu0
      %v2880 = vadd.f32 %v2687, %v2879
      %v2881 = vpop.f32.mrb[0].mxu0
      %v2882 = vadd.f32 %v2689, %v2881
      %2883 = vmatprep.mubr.bf16.mxu0 0
      %2884 = vmatmul.mubr.bf16.gmra.mrb[0].mxu0 %v1076
      %v2885 = vpop.f32.mrb[0].mxu0
      %v2886 = vadd.f32 %v2693, %v2885
      %v2887 = vpop.f32.mrb[0].mxu0
      %v2888 = vadd.f32 %v2695, %v2887
      %v2889 = vpop.f32.mrb[0].mxu0
      %v2890 = vadd.f32 %v2697, %v2889
      %v2891 = vpop.f32.mrb[0].mxu0
      %v2892 = vadd.f32 %v2699, %v2891
      %2893 = vmatprep.mubr.bf16.mxu0 0
      %2894 = vmatmul.mubr.bf16.gmra.mrb[0].mxu0 %v1085
      %v2895 = vpop.f32.mrb[0].mxu0
      %v2896 = vadd.f32 %v2703, %v2895
      %v2897 = vpop.f32.mrb[0].mxu0
      %v2898 = vadd.f32 %v2705, %v2897
      %v2899 = vpop.f32.mrb[0].mxu0
      %v2900 = vadd.f32 %v2707, %v2899
      %v2901 = vpop.f32.mrb[0].mxu0
      %v2902 = vadd.f32 %v2709, %v2901
      %2903 = vmatprep.mubr.bf16.mxu0 0
      %2904 = vmatmul.mubr.bf16.gmra.mrb[0].mxu0 %v1094
      %v2905 = vpop.f32.mrb[0].mxu0
      %v2906 = vadd.f32 %v2713, %v2905
      %v2907 = vpop.f32.mrb[0].mxu0
      %v2908 = vadd.f32 %v2715, %v2907
      %v2909 = vpop.f32.mrb[0].mxu0
      %v2910 = vadd.f32 %v2717, %v2909
      %v2911 = vpop.f32.mrb[0].mxu0
      %v2912 = vadd.f32 %v2719, %v2911
      %2913 = vmatprep.mubr.bf16.mxu0 0
      %2914 = vmatmul.mubr.bf16.gmra.mrb[0].mxu0 %v1103
      %v2915 = vpop.f32.mrb[0].mxu0
      %v2916 = vadd.f32 %v2723, %v2915
      %v2917 = vpop.f32.mrb[0].mxu0
      %v2918 = vadd.f32 %v2725, %v2917
      %v2919 = vpop.f32.mrb[0].mxu0
      %v2920 = vadd.f32 %v2727, %v2919
      %v2921 = vpop.f32.mrb[0].mxu0
      %v2922 = vadd.f32 %v2729, %v2921
      %2923 = vmatprep.mubr.bf16.mxu0 0
      %2924 = vmatmul.mubr.bf16.gmra.mrb[0].mxu0 %v1112
      %v2925 = vpop.f32.mrb[0].mxu0
      %v2926 = vadd.f32 %v2733, %v2925
      %v2927 = vpop.f32.mrb[0].mxu0
      %v2928 = vadd.f32 %v2735, %v2927
      %v2929 = vpop.f32.mrb[0].mxu0
      %v2930 = vadd.f32 %v2737, %v2929
      %v2931 = vpop.f32.mrb[0].mxu0
      %v2932 = vadd.f32 %v2739, %v2931
      %2933 = vmatprep.mubr.bf16.mxu0 0
      %2934 = vmatmul.mubr.bf16.gmra.mrb[0].mxu0 %v1121
      %v2935 = vpop.f32.mrb[0].mxu0
      %v2936 = vadd.f32 %v2743, %v2935
      %v2937 = vpop.f32.mrb[0].mxu0
      %v2938 = vadd.f32 %v2745, %v2937
      %v2939 = vpop.f32.mrb[0].mxu0
      %v2940 = vadd.f32 %v2747, %v2939
      %v2941 = vpop.f32.mrb[0].mxu0
      %v2942 = vadd.f32 %v2749, %v2941
      %2943 = vmatprep.mubr.bf16.mxu0 0
      %2944 = vmatmul.mubr.bf16.gmra.mrb[0].mxu0 %v1130
      %v2945 = vpop.f32.mrb[0].mxu0
      %v2946 = vadd.f32 %v2753, %v2945
      %v2947 = vpop.f32.mrb[0].mxu0
      %v2948 = vadd.f32 %v2755, %v2947
      %v2949 = vpop.f32.mrb[0].mxu0
      %v2950 = vadd.f32 %v2757, %v2949
      %v2951 = vpop.f32.mrb[0].mxu0
      %v2952 = vadd.f32 %v2759, %v2951
      %2953 = vmatprep.mubr.bf16.mxu0 0
      %2954 = vmatmul.mubr.bf16.gmra.mrb[0].mxu0 %v1139
      %v2955 = vpop.f32.mrb[0].mxu0
      %v2956 = vadd.f32 %v2763, %v2955
      %v2957 = vpop.f32.mrb[0].mxu0
      %v2958 = vadd.f32 %v2765, %v2957
      %v2959 = vpop.f32.mrb[0].mxu0
      %v2960 = vadd.f32 %v2767, %v2959
      %v2961 = vpop.f32.mrb[0].mxu0
      %v2962 = vadd.f32 %v2769, %v2961
      %2963 = vmatprep.mubr.bf16.mxu0 0
      %2964 = vmatmul.mubr.bf16.gmra.mrb[0].mxu0 %v1148
      %v2965 = vpop.f32.mrb[0].mxu0
      %v2966 = vadd.f32 %v2773, %v2965
      %v2967 = vpop.f32.mrb[0].mxu0
      %v2968 = vadd.f32 %v2775, %v2967
      %v2969 = vpop.f32.mrb[0].mxu0
      %v2970 = vadd.f32 %v2777, %v2969
      %v2971 = vpop.f32.mrb[0].mxu0
      %v2972 = vadd.f32 %v2779, %v2971
      %2973 = vmatprep.mubr.bf16.mxu0 0
      %2974 = vmatmul.mubr.bf16.gmra.mrb[0].mxu0 %v1157
      %v2975 = vpop.f32.mrb[0].mxu0
      %v2976 = vadd.f32 %v2783, %v2975
      %v2977 = vpop.f32.mrb[0].mxu0
      %v2978 = vadd.f32 %v2785, %v2977
      %v2979 = vpop.f32.mrb[0].mxu0
      %v2980 = vadd.f32 %v2787, %v2979
      %v2981 = vpop.f32.mrb[0].mxu0
      %v2982 = vadd.f32 %v2789, %v2981
      %2983 = vmatprep.mubr.bf16.mxu0 0
      %2984 = vmatmul.mubr.bf16.gmra.mrb[0].mxu0 %v1166
      %v2985 = vpop.f32.mrb[0].mxu0
      %v2986 = vadd.f32 %v2793, %v2985
      %v2987 = vpop.f32.mrb[0].mxu0
      %v2988 = vadd.f32 %v2795, %v2987
      %v2989 = vpop.f32.mrb[0].mxu0
      %v2990 = vadd.f32 %v2797, %v2989
      %v2991 = vpop.f32.mrb[0].mxu0
      %v2992 = vadd.f32 %v2799, %v2991
      %2993 = vmatprep.mubr.bf16.mxu0 0
      %2994 = vmatmul.mubr.bf16.gmra.mrb[0].mxu0 %v1175
      %v2995 = vpop.f32.mrb[0].mxu0
      %v2996 = vadd.f32 %v2803, %v2995
      %v2997 = vpop.f32.mrb[0].mxu0
      %v2998 = vadd.f32 %v2805, %v2997
      %v2999 = vpop.f32.mrb[0].mxu0
      %v3000 = vadd.f32 %v2807, %v2999
      %v3001 = vpop.f32.mrb[0].mxu0
      %v3002 = vadd.f32 %v2809, %v3001
      %3003 = vmatprep.mubr.bf16.mxu0 0
      %3004 = vmatmul.mubr.bf16.gmra.mrb[0].mxu0 %v1184
      %v3005 = vpop.f32.mrb[0].mxu0
      %v3006 = vadd.f32 %v2813, %v3005
      %v3007 = vpop.f32.mrb[0].mxu0
      %v3008 = vadd.f32 %v2815, %v3007
      %v3009 = vpop.f32.mrb[0].mxu0
      %v3010 = vadd.f32 %v2817, %v3009
      %v3011 = vpop.f32.mrb[0].mxu0
      %v3012 = vadd.f32 %v2819, %v3011
      %3013 = vdwg.mxu0
      %v3014 = vpack.c.bf16 %v2860, %v2856
      %v3015 = vpack.c.bf16 %v2870, %v2866
      %v3016 = vpack.c.bf16 %v2880, %v2876
      %v3017 = vpack.c.bf16 %v2890, %v2886
      %v3018 = vpack.c.bf16 %v2900, %v2896
      %v3019 = vpack.c.bf16 %v2910, %v2906
      %v3020 = vpack.c.bf16 %v2920, %v2916
      %v3021 = vpack.c.bf16 %v2930, %v2926
      %v3022 = vpack.c.bf16 %v2940, %v2936
      %v3023 = vpack.c.bf16 %v2950, %v2946
      %v3024 = vpack.c.bf16 %v2960, %v2956
      %v3025 = vpack.c.bf16 %v2970, %v2966
      %v3026 = vpack.c.bf16 %v2980, %v2976
      %v3027 = vpack.c.bf16 %v2990, %v2986
      %v3028 = vpack.c.bf16 %v3000, %v2996
      %v3029 = vpack.c.bf16 %v3010, %v3006
      %v3046 = vunpack.c.l.b16 %v3014
      %v3047 = vunpack.c.h.b16 %v3014
      %v3048 = vunpack.c.l.b16 %v3015
      %v3049 = vunpack.c.h.b16 %v3015
      %v3050 = vunpack.c.l.b16 %v3016
      %v3051 = vunpack.c.h.b16 %v3016
      %v3052 = vunpack.c.l.b16 %v3017
      %v3053 = vunpack.c.h.b16 %v3017
      %v3054 = vunpack.c.l.b16 %v3018
      %v3055 = vunpack.c.h.b16 %v3018
      %v3056 = vunpack.c.l.b16 %v3019
      %v3057 = vunpack.c.h.b16 %v3019
      %v3058 = vunpack.c.l.b16 %v3020
      %v3059 = vunpack.c.h.b16 %v3020
      %v3060 = vunpack.c.l.b16 %v3021
      %v3061 = vunpack.c.h.b16 %v3021
      %v3062 = vunpack.c.l.b16 %v3022
      %v3063 = vunpack.c.h.b16 %v3022
      %v3064 = vunpack.c.l.b16 %v3023
      %v3065 = vunpack.c.h.b16 %v3023
      %v3066 = vunpack.c.l.b16 %v3024
      %v3067 = vunpack.c.h.b16 %v3024
      %v3068 = vunpack.c.l.b16 %v3025
      %v3069 = vunpack.c.h.b16 %v3025
      %v3070 = vunpack.c.l.b16 %v3026
      %v3071 = vunpack.c.h.b16 %v3026
      %v3072 = vunpack.c.l.b16 %v3027
      %v3073 = vunpack.c.h.b16 %v3027
      %v3074 = vunpack.c.l.b16 %v3028
      %v3075 = vunpack.c.h.b16 %v3028
      %v3076 = vunpack.c.l.b16 %v3029
      %v3077 = vunpack.c.h.b16 %v3029
      %v3078 = vpack.c.b16 %v3046, %v3046
      %v3079 = vpack.c.b16 %v3047, %v3047
      %v3080 = vpack.c.b16 %v3048, %v3048
      %v3081 = vpack.c.b16 %v3049, %v3049
      %v3082 = vpack.c.b16 %v3050, %v3050
      %v3083 = vpack.c.b16 %v3051, %v3051
      %v3084 = vpack.c.b16 %v3052, %v3052
      %v3085 = vpack.c.b16 %v3053, %v3053
      %v3086 = vpack.c.b16 %v3054, %v3054
      %v3087 = vpack.c.b16 %v3055, %v3055
      %v3088 = vpack.c.b16 %v3056, %v3056
      %v3089 = vpack.c.b16 %v3057, %v3057
      %v3090 = vpack.c.b16 %v3058, %v3058
      %v3091 = vpack.c.b16 %v3059, %v3059
      %v3092 = vpack.c.b16 %v3060, %v3060
      %v3093 = vpack.c.b16 %v3061, %v3061
      %v3094 = vpack.c.b16 %v3062, %v3062
      %v3095 = vpack.c.b16 %v3063, %v3063
      %v3096 = vpack.c.b16 %v3064, %v3064
      %v3097 = vpack.c.b16 %v3065, %v3065
      %v3098 = vpack.c.b16 %v3066, %v3066
      %v3099 = vpack.c.b16 %v3067, %v3067
      %v3100 = vpack.c.b16 %v3068, %v3068
      %v3101 = vpack.c.b16 %v3069, %v3069
      %v3102 = vpack.c.b16 %v3070, %v3070
      %v3103 = vpack.c.b16 %v3071, %v3071
      %v3104 = vpack.c.b16 %v3072, %v3072
      %v3105 = vpack.c.b16 %v3073, %v3073
      %v3106 = vpack.c.b16 %v3074, %v3074
      %v3107 = vpack.c.b16 %v3075, %v3075
      %v3108 = vpack.c.b16 %v3076, %v3076
      %v3109 = vpack.c.b16 %v3077, %v3077
      %3142 = vst [vmem:[%s232] sm:$0xf] %v3078
      %3143 = vst [vmem:[%s232 + $0x4] sm:$0xf] %v3079
      %3144 = vst [vmem:[%s232 + $0x8] sm:$0xf] %v3080
      %3145 = vst [vmem:[%s232 + $0xc] sm:$0xf] %v3081
      %3146 = vst [vmem:[%s232 + $0x10] sm:$0xf] %v3082
      %3147 = vst [vmem:[%s232 + $0x14] sm:$0xf] %v3083
      %3148 = vst [vmem:[%s232 + $0x18] sm:$0xf] %v3084
      %3149 = vst [vmem:[%s232 + $0x1c] sm:$0xf] %v3085
      %3150 = vst [vmem:[%s232 + $0x20] sm:$0xf] %v3086
      %3151 = vst [vmem:[%s232 + $0x24] sm:$0xf] %v3087
      %3152 = vst [vmem:[%s232 + $0x28] sm:$0xf] %v3088
      %3153 = vst [vmem:[%s232 + $0x2c] sm:$0xf] %v3089
      %3154 = vst [vmem:[%s232 + $0x30] sm:$0xf] %v3090
      %3155 = vst [vmem:[%s232 + $0x34] sm:$0xf] %v3091
      %3156 = vst [vmem:[%s232 + $0x38] sm:$0xf] %v3092
      %3157 = vst [vmem:[%s232 + $0x3c] sm:$0xf] %v3093
      %3158 = vst [vmem:[%s232 + $0x40] sm:$0xf] %v3094
      %3159 = vst [vmem:[%s232 + $0x44] sm:$0xf] %v3095
      %3160 = vst [vmem:[%s232 + $0x48] sm:$0xf] %v3096
      %3161 = vst [vmem:[%s232 + $0x4c] sm:$0xf] %v3097
      %3162 = vst [vmem:[%s232 + $0x50] sm:$0xf] %v3098
      %3163 = vst [vmem:[%s232 + $0x54] sm:$0xf] %v3099
      %3164 = vst [vmem:[%s232 + $0x58] sm:$0xf] %v3100
      %3165 = vst [vmem:[%s232 + $0x5c] sm:$0xf] %v3101
      %3166 = vst [vmem:[%s232 + $0x60] sm:$0xf] %v3102
      %3167 = vst [vmem:[%s232 + $0x64] sm:$0xf] %v3103
      %3168 = vst [vmem:[%s232 + $0x68] sm:$0xf] %v3104
      %3169 = vst [vmem:[%s232 + $0x6c] sm:$0xf] %v3105
      %3170 = vst [vmem:[%s232 + $0x70] sm:$0xf] %v3106
      %3171 = vst [vmem:[%s232 + $0x74] sm:$0xf] %v3107
      %3172 = vst [vmem:[%s232 + $0x78] sm:$0xf] %v3108
      %3173 = vst [vmem:[%s232 + $0x7c] sm:$0xf] %v3109
      %v3174 = vpack.c.bf16 %v2862, %v2858
      %v3175 = vpack.c.bf16 %v2872, %v2868
      %v3176 = vpack.c.bf16 %v2882, %v2878
      %v3177 = vpack.c.bf16 %v2892, %v2888
      %v3178 = vpack.c.bf16 %v2902, %v2898
      %v3179 = vpack.c.bf16 %v2912, %v2908
      %v3180 = vpack.c.bf16 %v2922, %v2918
      %v3181 = vpack.c.bf16 %v2932, %v2928
      %v3182 = vpack.c.bf16 %v2942, %v2938
      %v3183 = vpack.c.bf16 %v2952, %v2948
      %v3184 = vpack.c.bf16 %v2962, %v2958
      %v3185 = vpack.c.bf16 %v2972, %v2968
      %v3186 = vpack.c.bf16 %v2982, %v2978
      %v3187 = vpack.c.bf16 %v2992, %v2988
      %v3188 = vpack.c.bf16 %v3002, %v2998
      %v3189 = vpack.c.bf16 %v3012, %v3008
      %v3206 = vunpack.c.l.b16 %v3174
      %v3207 = vunpack.c.h.b16 %v3174
      %v3208 = vunpack.c.l.b16 %v3175
      %v3209 = vunpack.c.h.b16 %v3175
      %v3210 = vunpack.c.l.b16 %v3176
      %v3211 = vunpack.c.h.b16 %v3176
      %v3212 = vunpack.c.l.b16 %v3177
      %v3213 = vunpack.c.h.b16 %v3177
      %v3214 = vunpack.c.l.b16 %v3178
      %v3215 = vunpack.c.h.b16 %v3178
      %v3216 = vunpack.c.l.b16 %v3179
      %v3217 = vunpack.c.h.b16 %v3179
      %v3218 = vunpack.c.l.b16 %v3180
      %v3219 = vunpack.c.h.b16 %v3180
      %v3220 = vunpack.c.l.b16 %v3181
      %v3221 = vunpack.c.h.b16 %v3181
      %v3222 = vunpack.c.l.b16 %v3182
      %v3223 = vunpack.c.h.b16 %v3182
      %v3224 = vunpack.c.l.b16 %v3183
      %v3225 = vunpack.c.h.b16 %v3183
      %v3226 = vunpack.c.l.b16 %v3184
      %v3227 = vunpack.c.h.b16 %v3184
      %v3228 = vunpack.c.l.b16 %v3185
      %v3229 = vunpack.c.h.b16 %v3185
      %v3230 = vunpack.c.l.b16 %v3186
      %v3231 = vunpack.c.h.b16 %v3186
      %v3232 = vunpack.c.l.b16 %v3187
      %v3233 = vunpack.c.h.b16 %v3187
      %v3234 = vunpack.c.l.b16 %v3188
      %v3235 = vunpack.c.h.b16 %v3188
      %v3236 = vunpack.c.l.b16 %v3189
      %v3237 = vunpack.c.h.b16 %v3189
      %v3238 = vpack.c.b16 %v3206, %v3206
      %v3239 = vpack.c.b16 %v3207, %v3207
      %v3240 = vpack.c.b16 %v3208, %v3208
      %v3241 = vpack.c.b16 %v3209, %v3209
      %v3242 = vpack.c.b16 %v3210, %v3210
      %v3243 = vpack.c.b16 %v3211, %v3211
      %v3244 = vpack.c.b16 %v3212, %v3212
      %v3245 = vpack.c.b16 %v3213, %v3213
      %v3246 = vpack.c.b16 %v3214, %v3214
      %v3247 = vpack.c.b16 %v3215, %v3215
      %v3248 = vpack.c.b16 %v3216, %v3216
      %v3249 = vpack.c.b16 %v3217, %v3217
      %v3250 = vpack.c.b16 %v3218, %v3218
      %v3251 = vpack.c.b16 %v3219, %v3219
      %v3252 = vpack.c.b16 %v3220, %v3220
      %v3253 = vpack.c.b16 %v3221, %v3221
      %v3254 = vpack.c.b16 %v3222, %v3222
      %v3255 = vpack.c.b16 %v3223, %v3223
      %v3256 = vpack.c.b16 %v3224, %v3224
      %v3257 = vpack.c.b16 %v3225, %v3225
      %v3258 = vpack.c.b16 %v3226, %v3226
      %v3259 = vpack.c.b16 %v3227, %v3227
      %v3260 = vpack.c.b16 %v3228, %v3228
      %v3261 = vpack.c.b16 %v3229, %v3229
      %v3262 = vpack.c.b16 %v3230, %v3230
      %v3263 = vpack.c.b16 %v3231, %v3231
      %v3264 = vpack.c.b16 %v3232, %v3232
      %v3265 = vpack.c.b16 %v3233, %v3233
      %v3266 = vpack.c.b16 %v3234, %v3234
      %v3267 = vpack.c.b16 %v3235, %v3235
      %v3268 = vpack.c.b16 %v3236, %v3236
      %v3269 = vpack.c.b16 %v3237, %v3237
      %3302 = vst [vmem:[%s237] sm:$0xf] %v3238
      %3303 = vst [vmem:[%s237 + $0x4] sm:$0xf] %v3239
      %3304 = vst [vmem:[%s237 + $0x8] sm:$0xf] %v3240
      %3305 = vst [vmem:[%s237 + $0xc] sm:$0xf] %v3241
      %3306 = vst [vmem:[%s237 + $0x10] sm:$0xf] %v3242
      %3307 = vst [vmem:[%s237 + $0x14] sm:$0xf] %v3243
      %3308 = vst [vmem:[%s237 + $0x18] sm:$0xf] %v3244
      %3309 = vst [vmem:[%s237 + $0x1c] sm:$0xf] %v3245
      %3310 = vst [vmem:[%s237 + $0x20] sm:$0xf] %v3246
      %3311 = vst [vmem:[%s237 + $0x24] sm:$0xf] %v3247
      %3312 = vst [vmem:[%s237 + $0x28] sm:$0xf] %v3248
      %3313 = vst [vmem:[%s237 + $0x2c] sm:$0xf] %v3249
      %3314 = vst [vmem:[%s237 + $0x30] sm:$0xf] %v3250
      %3315 = vst [vmem:[%s237 + $0x34] sm:$0xf] %v3251
      %3316 = vst [vmem:[%s237 + $0x38] sm:$0xf] %v3252
      %3317 = vst [vmem:[%s237 + $0x3c] sm:$0xf] %v3253
      %3318 = vst [vmem:[%s237 + $0x40] sm:$0xf] %v3254
      %3319 = vst [vmem:[%s237 + $0x44] sm:$0xf] %v3255
      %3320 = vst [vmem:[%s237 + $0x48] sm:$0xf] %v3256
      %3321 = vst [vmem:[%s237 + $0x4c] sm:$0xf] %v3257
      %3322 = vst [vmem:[%s237 + $0x50] sm:$0xf] %v3258
      %3323 = vst [vmem:[%s237 + $0x54] sm:$0xf] %v3259
      %3324 = vst [vmem:[%s237 + $0x58] sm:$0xf] %v3260
      %3325 = vst [vmem:[%s237 + $0x5c] sm:$0xf] %v3261
      %3326 = vst [vmem:[%s237 + $0x60] sm:$0xf] %v3262
      %3327 = vst [vmem:[%s237 + $0x64] sm:$0xf] %v3263
      %3328 = vst [vmem:[%s237 + $0x68] sm:$0xf] %v3264
      %3329 = vst [vmem:[%s237 + $0x6c] sm:$0xf] %v3265
      %3330 = vst [vmem:[%s237 + $0x70] sm:$0xf] %v3266
      %3331 = vst [vmem:[%s237 + $0x74] sm:$0xf] %v3267
      %3332 = vst [vmem:[%s237 + $0x78] sm:$0xf] %v3268
      %3333 = vst [vmem:[%s237 + $0x7c] sm:$0xf] %v3269
      %p3334 = scmp.lt.s32.totalorder %s17, 1
      %s3335 = scalar_select %p3334, %s17, 1
      %s3336 = smul.addr %s3335, 32
      %s3337 = smul.addr %s3336, 4
      %s3338 = scalar_lea.vmem %s4, %s3337
      %p3339 = scmp.lt.s32.totalorder %s17, 1
      %s3340 = scalar_select %p3339, %s17, 1
      %s3341 = smul.addr %s3340, 32
      %s3342 = smul.addr %s3341, 4
      %s3343 = scalar_lea.vmem %s5, %s3342
      // Predicated region
      $region37: #{preact_block.5} parent=35 // pred_check
        %p3344 = pneg %p124
      $region38: #{preact_block.5} parent=35 // pred_check_branch
        %3346 = sbr.rel (%p3344) target = $region40
      $region39: #{preact_block.5} parent=35 // pred_region
        _
      $region40: #{preact_block.5} parent=35 // pred_fallthru
        _
      // Predicated region
      $region41: #{preact_block.5} parent=35 // pred_check
        %p3347 = pneg %p150
      $region42: #{preact_block.5} parent=35 // pred_check_branch
        %3349 = sbr.rel (%p3347) target = $region44
      $region43: #{preact_block.5} parent=35 // pred_region
        _
      $region44: #{preact_block.5} parent=35 // pred_fallthru
        _
    $region36: #{preact_block.5} parent=5 // pred_fallthru
      _
    %p3350 = scmp.le.s32.totalorder 2, %s12
    // Predicated region
    $region45: #{preact_block.5} parent=5 // pred_check
      %p3351 = pneg %p3350
    $region46: #{preact_block.5} parent=5 // pred_check_branch
      %3353 = sbr.rel (%p3351) target = $region48
    $region47: #{preact_block.5} parent=5 // pred_region
      %s3354 = ssub.s32 %s12, 2
      // Predicated region
      $region49: #{preact_block.5} parent=47 // pred_check
        %p3355 = pneg %p130
      $region50: #{preact_block.5} parent=47 // pred_check_branch
        %3357 = sbr.rel (%p3355) target = $region52
      $region51: #{preact_block.5} parent=47 // pred_region
        %p3358 = scmp.lt.s32.totalorder %s18, 1
        %s3359 = scalar_select %p3358, %s18, 1
        %s3360 = smul.addr %s3359, 32
        %s3361 = smul.addr %s3360, 4
        %s3362 = scalar_lea.vmem %s4, %s3361
      $region52: #{preact_block.5} parent=47 // pred_fallthru
        _
      // Predicated region
      $region53: #{preact_block.5} parent=47 // pred_check
        %p3363 = pneg %p156
      $region54: #{preact_block.5} parent=47 // pred_check_branch
        %3365 = sbr.rel (%p3363) target = $region56
      $region55: #{preact_block.5} parent=47 // pred_region
        %p3366 = scmp.lt.s32.totalorder %s18, 1
        %s3367 = scalar_select %p3366, %s18, 1
        %s3368 = smul.addr %s3367, 32
        %s3369 = smul.addr %s3368, 4
        %s3370 = scalar_lea.vmem %s5, %s3369
      $region56: #{preact_block.5} parent=47 // pred_fallthru
        _
    $region48: #{preact_block.5} parent=5 // pred_fallthru
      _
  $region6: #{preact_block.5} parent=0 // loop_footer
    %s16 = sadd.s32 1, %s12
  $region7: #{preact_block.5} parent=0 // loop_footer_branch
    %11 = sbr.rel target = $region3
  $region8: #{preact_block.5} parent=0 // loop_exit
    _

// kernel: preact_block.7
$region0: #{preact_block.7}
  #allocation0 [shape = 'u32[]', space=smem, size = 0x4, offset = 0x4, fixed_abs, tag = 'smem constant byte address 0x4 - core index']
  #allocation1 [shape = 'u32[144,128]{1,0:T(1,128)}', space=vmem, size = 0x12000, scoped, tag = 'internal scratch']
  #allocation2 [shape = 'bf16[256,1152]{1,0:T(16,128)(2,1)}', space=vmem, size = 0x90000, scoped, tag = 'scratch operand']
  %s0 = inlined_call_operand.vmem [shape: bf16[2,16,16,128], index: 0, kind: input, shape index: {}]
  %s1 = inlined_call_operand.vmem [shape: f32[1,128], index: 1, kind: input, shape index: {}]
  %s2 = inlined_call_operand.vmem [shape: f32[1,128], index: 2, kind: input, shape index: {}]
  %s3 = inlined_call_operand.vmem [shape: bf16[1152,128], index: 3, kind: input, shape index: {}]
  %s4 = inlined_call_operand.vmem [shape: bf16[2,256,128], index: 4, kind: input, shape index: {}]
  %s5 = inlined_call_operand.vmem [shape: f32[2,256,128], index: 5, kind: output, shape index: {}]
  %s6 = sld [smem:[#allocation0]]
  $region53: #{preact_block.7} parent=0
    _
  %s8 = ssub.s32 1, %s6
  %s9 = scalar_select 0, %s8, %s6
  loop: start=0, step=1, limit=4
  $region2: #{preact_block.7} parent=0 // loop_pre_header
    _
  $region3: #{preact_block.7} parent=0 // loop_header
    %s11 = sphi 0, %s15
    %p12 = scmp.ge.s32.totalorder %s11, 4
    %s21 = sphi 0, %s23
    %s24 = sphi 0, %s21
    %s25 = sphi 0, %s24
    %s41 = sphi 0, %s25
    %s45 = sphi 0, %s45
    %s47 = sphi 0, %s45
    %s48 = sphi 0, %s47
    %s62 = sphi 0, %s48
    %s66 = sphi 0, %s66
    %s68 = sphi 0, %s66
    %s69 = sphi 0, %s68
    %s83 = sphi 0, %s69
    %s87 = sphi 0, %s87
    %s89 = sphi 0, %s87
    %s90 = sphi 0, %s89
    %s104 = sphi 0, %s90
    %s110 = sphi 0, %s112
    %s113 = sphi 0, %s110
    %s114 = sphi 0, %s113
    %s130 = sphi 0, %s114
    %s136 = sphi 0, %s138
    %s139 = sphi 0, %s136
    %s140 = sphi 0, %s139
    %s156 = sphi 0, %s140
  $region4: #{preact_block.7} parent=0 // loop_header_branch
    %14 = sbr.rel (%p12) target = $region8
  $region5: #{preact_block.7} parent=0 // loop_body
    %s16 = ssub.s32 %s11, 1
    %s17 = ssub.s32 %s11, 2
    %s18 = sadd.s32 %s11, 1
    %s19 = ssub.s32 %s11, %s18
    %p20 = scmp.eq.s32.totalorder %s19, 0
    %s22 = sadd.s32 %s21, 1
    %s23 = scalar_select %p20, %s21, %s22
    %p26 = pneg %p20
    %p27 = scmp.eq.s32.totalorder %s11, 1
    %p28 = por %p26, %p27
    %p29 = scmp.ne.s32.totalorder %s21, %s24
    %p30 = scmp.eq.s32.totalorder %s11, 0
    %p31 = por %p29, %p30
    %p32 = scmp.ne.s32.totalorder %s21, %s24
    %p33 = scmp.eq.s32.totalorder %s16, 1
    %p34 = por %p32, %p33
    %p35 = scmp.ne.s32.totalorder %s24, %s25
    %p36 = scmp.eq.s32.totalorder %s16, 0
    %p37 = por %p35, %p36
    %p38 = scmp.ne.s32.totalorder %s24, %s25
    %p39 = scmp.eq.s32.totalorder %s17, 1
    %p40 = por %p38, %p39
    %p42 = scmp.ne.s32.totalorder %s25, %s41
    %p43 = scmp.eq.s32.totalorder %s17, 0
    %p44 = por %p42, %p43
    %s46 = sadd.s32 %s45, 1
    %p49 = scmp.eq.s32.totalorder %s11, 1
    %p50 = scmp.ne.s32.totalorder %s45, %s47
    %p51 = scmp.eq.s32.totalorder %s11, 0
    %p52 = por %p50, %p51
    %p53 = scmp.ne.s32.totalorder %s45, %s47
    %p54 = scmp.eq.s32.totalorder %s16, 1
    %p55 = por %p53, %p54
    %p56 = scmp.ne.s32.totalorder %s47, %s48
    %p57 = scmp.eq.s32.totalorder %s16, 0
    %p58 = por %p56, %p57
    %p59 = scmp.ne.s32.totalorder %s47, %s48
    %p60 = scmp.eq.s32.totalorder %s17, 1
    %p61 = por %p59, %p60
    %p63 = scmp.ne.s32.totalorder %s48, %s62
    %p64 = scmp.eq.s32.totalorder %s17, 0
    %p65 = por %p63, %p64
    %s67 = sadd.s32 %s66, 1
    %p70 = scmp.eq.s32.totalorder %s11, 1
    %p71 = scmp.ne.s32.totalorder %s66, %s68
    %p72 = scmp.eq.s32.totalorder %s11, 0
    %p73 = por %p71, %p72
    %p74 = scmp.ne.s32.totalorder %s66, %s68
    %p75 = scmp.eq.s32.totalorder %s16, 1
    %p76 = por %p74, %p75
    %p77 = scmp.ne.s32.totalorder %s68, %s69
    %p78 = scmp.eq.s32.totalorder %s16, 0
    %p79 = por %p77, %p78
    %p80 = scmp.ne.s32.totalorder %s68, %s69
    %p81 = scmp.eq.s32.totalorder %s17, 1
    %p82 = por %p80, %p81
    %p84 = scmp.ne.s32.totalorder %s69, %s83
    %p85 = scmp.eq.s32.totalorder %s17, 0
    %p86 = por %p84, %p85
    %s88 = sadd.s32 %s87, 1
    %p91 = scmp.eq.s32.totalorder %s11, 1
    %p92 = scmp.ne.s32.totalorder %s87, %s89
    %p93 = scmp.eq.s32.totalorder %s11, 0
    %p94 = por %p92, %p93
    %p95 = scmp.ne.s32.totalorder %s87, %s89
    %p96 = scmp.eq.s32.totalorder %s16, 1
    %p97 = por %p95, %p96
    %p98 = scmp.ne.s32.totalorder %s89, %s90
    %p99 = scmp.eq.s32.totalorder %s16, 0
    %p100 = por %p98, %p99
    %p101 = scmp.ne.s32.totalorder %s89, %s90
    %p102 = scmp.eq.s32.totalorder %s17, 1
    %p103 = por %p101, %p102
    %p105 = scmp.ne.s32.totalorder %s90, %s104
    %p106 = scmp.eq.s32.totalorder %s17, 0
    %p107 = por %p105, %p106
    %s108 = ssub.s32 %s11, %s18
    %p109 = scmp.eq.s32.totalorder %s108, 0
    %s111 = sadd.s32 %s110, 1
    %s112 = scalar_select %p109, %s110, %s111
    %p115 = pneg %p109
    %p116 = scmp.eq.s32.totalorder %s11, 1
    %p117 = por %p115, %p116
    %p118 = scmp.ne.s32.totalorder %s110, %s113
    %p119 = scmp.eq.s32.totalorder %s11, 0
    %p120 = por %p118, %p119
    %p121 = scmp.ne.s32.totalorder %s110, %s113
    %p122 = scmp.eq.s32.totalorder %s16, 1
    %p123 = por %p121, %p122
    %p124 = scmp.ne.s32.totalorder %s113, %s114
    %p125 = scmp.eq.s32.totalorder %s16, 0
    %p126 = por %p124, %p125
    %p127 = scmp.ne.s32.totalorder %s113, %s114
    %p128 = scmp.eq.s32.totalorder %s17, 1
    %p129 = por %p127, %p128
    %p131 = scmp.ne.s32.totalorder %s114, %s130
    %p132 = scmp.eq.s32.totalorder %s17, 0
    %p133 = por %p131, %p132
    %s134 = ssub.s32 %s11, %s18
    %p135 = scmp.eq.s32.totalorder %s134, 0
    %s137 = sadd.s32 %s136, 1
    %s138 = scalar_select %p135, %s136, %s137
    %p141 = pneg %p135
    %p142 = scmp.eq.s32.totalorder %s11, 1
    %p143 = por %p141, %p142
    %p144 = scmp.ne.s32.totalorder %s136, %s139
    %p145 = scmp.eq.s32.totalorder %s11, 0
    %p146 = por %p144, %p145
    %p147 = scmp.ne.s32.totalorder %s136, %s139
    %p148 = scmp.eq.s32.totalorder %s16, 1
    %p149 = por %p147, %p148
    %p150 = scmp.ne.s32.totalorder %s139, %s140
    %p151 = scmp.eq.s32.totalorder %s16, 0
    %p152 = por %p150, %p151
    %p153 = scmp.ne.s32.totalorder %s139, %s140
    %p154 = scmp.eq.s32.totalorder %s17, 1
    %p155 = por %p153, %p154
    %p157 = scmp.ne.s32.totalorder %s140, %s156
    %p158 = scmp.eq.s32.totalorder %s17, 0
    %p159 = por %p157, %p158
    %p160 = scmp.le.s32.totalorder 1, %s11
    %p161 = scmp.lt.s32.totalorder %s11, 3
    %p162 = pnand %p160, %p161
    %p163 = pneg %p162
    // Predicated region
    $region9: #{preact_block.7} parent=5 // pred_check
      _
    $region10: #{preact_block.7} parent=5 // pred_check_branch
      %165 = sbr.rel (%p162) target = $region12
    $region11: #{preact_block.7} parent=5 // pred_region
      %s166 = ssub.s32 %s11, 1
      // Predicated region
      $region13: #{preact_block.7} parent=11 // pred_check
        %p167 = pneg %p58
      $region14: #{preact_block.7} parent=11 // pred_check_branch
        %169 = sbr.rel (%p167) target = $region16
      $region15: #{preact_block.7} parent=11 // pred_region
        _
      $region16: #{preact_block.7} parent=11 // pred_fallthru
        _
      // Predicated region
      $region17: #{preact_block.7} parent=11 // pred_check
        %p170 = pneg %p79
      $region18: #{preact_block.7} parent=11 // pred_check_branch
        %172 = sbr.rel (%p170) target = $region20
      $region19: #{preact_block.7} parent=11 // pred_region
        _
      $region20: #{preact_block.7} parent=11 // pred_fallthru
        _
      // Predicated region
      $region21: #{preact_block.7} parent=11 // pred_check
        %p173 = pneg %p100
      $region22: #{preact_block.7} parent=11 // pred_check_branch
        %175 = sbr.rel (%p173) target = $region24
      $region23: #{preact_block.7} parent=11 // pred_region
        _
      $region24: #{preact_block.7} parent=11 // pred_fallthru
        _
    $region12: #{preact_block.7} parent=5 // pred_fallthru
      _
    %p176 = scmp.lt.s32.totalorder %s11, 2
    // Predicated region
    $region25: #{preact_block.7} parent=5 // pred_check
      %p177 = pneg %p176
    $region26: #{preact_block.7} parent=5 // pred_check_branch
      %179 = sbr.rel (%p177) target = $region28
    $region27: #{preact_block.7} parent=5 // pred_region
      // Predicated region
      $region29: #{preact_block.7} parent=27 // pred_check
        %p180 = pneg %p31
      $region30: #{preact_block.7} parent=27 // pred_check_branch
        %182 = sbr.rel (%p180) target = $region32
      $region31: #{preact_block.7} parent=27 // pred_region
        %p183 = scmp.lt.s32.totalorder %s11, 1
        %s184 = scalar_select %p183, %s11, 1
        %s185 = smul.addr %s184, 32
        %s186 = smul.addr %s185, 4
        %s187 = scalar_lea.vmem %s0, %s186
      $region32: #{preact_block.7} parent=27 // pred_fallthru
        _
      // Predicated region
      $region33: #{preact_block.7} parent=27 // pred_check
        %p188 = pneg %p120
      $region34: #{preact_block.7} parent=27 // pred_check_branch
        %190 = sbr.rel (%p188) target = $region36
      $region35: #{preact_block.7} parent=27 // pred_region
        %p191 = scmp.lt.s32.totalorder %s11, 1
        %s192 = scalar_select %p191, %s11, 1
        %s193 = smul.addr %s192, 32
        %s194 = smul.addr %s193, 4
        %s195 = scalar_lea.vmem %s4, %s194
      $region36: #{preact_block.7} parent=27 // pred_fallthru
        _
    $region28: #{preact_block.7} parent=5 // pred_fallthru
      _
    %p196 = scmp.le.s32.totalorder 1, %s11
    %p197 = scmp.lt.s32.totalorder %s11, 3
    %p198 = pnand %p196, %p197
    %p199 = pneg %p198
    // Predicated region
    $region37: #{preact_block.7} parent=5 // pred_check
      _
    $region38: #{preact_block.7} parent=5 // pred_check_branch
      %201 = sbr.rel (%p198) target = $region40
    $region39: #{preact_block.7} parent=5 // pred_region
      %s202 = ssub.s32 %s11, 1
      %p203 = scmp.lt.s32.totalorder %s16, 1
      %s204 = scalar_select %p203, %s16, 1
      %s205 = smul.addr %s204, 32
      %s206 = smul.addr %s205, 4
      %s207 = scalar_lea.vmem %s0, %s206
      %p208 = pneg %p37
      %p209 = pneg %p34
      %p210 = pneg %p58
      %p211 = pneg %p55
      %p212 = pneg %p79
      %p213 = pneg %p76
      %p214 = pneg %p100
      %p215 = pneg %p97
      %p216 = scmp.lt.s32.totalorder %s16, 1
      %s217 = scalar_select %p216, %s16, 1
      %s218 = smul.addr %s217, 32
      %s219 = smul.addr %s218, 4
      %s220 = scalar_lea.vmem %s4, %s219
      %p221 = pneg %p126
      %p222 = pneg %p123
      %p223 = pneg %p152
      %p224 = pneg %p149
      %p225 = scmp.lt.s32.totalorder %s16, 1
      %s226 = scalar_select %p225, %s16, 1
      %s227 = smul.addr %s226, 32
      %s228 = smul.addr %s227, 8
      %s229 = scalar_lea.vmem %s5, %s228
      %p230 = scmp.lt.s32.totalorder %s16, 1
      %s231 = scalar_select %p230, %s16, 1
      %s232 = smul.addr %s231, 32
      %s233 = smul.addr %s232, 4
      %s234 = scalar_lea.vmem %s0, %s233
      %p235 = scmp.lt.s32.totalorder %s16, 1
      %s236 = scalar_select %p235, %s16, 1
      %s237 = smul.addr %s236, 32
      %s238 = smul.addr %s237, 4
      %s239 = scalar_lea.vmem %s4, %s238
      %p240 = scmp.lt.s32.totalorder %s16, 1
      %s241 = scalar_select %p240, %s16, 1
      %s242 = smul.addr %s241, 32
      %s243 = smul.addr %s242, 8
      %s244 = scalar_lea.vmem %s5, %s243
      %v246 = vld [vmem:[%s1] sm:$0x1]
      %v248 = vlaneseq
      %v249 = vshrl.u32 %v248, 7
      %v250 = vsub.s32 0, %v249
      %v251 = vrot.slane %v246, %v250
      %v253 = vld [vmem:[%s2] sm:$0x1]
      %v255 = vlaneseq
      %v256 = vshrl.u32 %v255, 7
      %v257 = vsub.s32 0, %v256
      %v258 = vrot.slane %v253, %v257
      %260 = vst [vmem:[#allocation2] sm:$0xff] 0
      %261 = vst [vmem:[#allocation2 + $0x8] sm:$0xff] 0
      %262 = vst [vmem:[#allocation2 + $0x10] sm:$0xff] 0
      %v263 = vld [vmem:[%s234] sm:$0xf]
      %v264 = vld [vmem:[%s234 + $0x4] sm:$0xf]
      %v265 = vunpack.c.l.bf16 %v263
      %v266 = vunpack.c.l.bf16 %v264
      %v267 = vmul.f32 %v265, %v251
      %v268 = vmul.f32 %v266, %v251
      %v269 = vadd.f32 %v267, %v258
      %v270 = vadd.f32 %v268, %v258
      %v271 = vmax.f32 %v269, 0.0
      %v272 = vmax.f32 %v270, 0.0
      %v273 = vpack.c.bf16 %v272, %v271
      %v275 = vshrl.u32 %v273, 16
      %v277 = vrot.slane %v275, 7
      %v278 = vshll.u32 %v273, 16
      %v280 = vor.u32 %v277, %v278
      %vm283 = vcmask 1040384
      %vm284 = vsmask.f32 256
      %vm285 = vmand %vm283, %vm284
      %v286 = vsel %vm285, 0, %v280
      %v287 = vsel %vm285, %v277, 0
      %288 = vst [vmem:[#allocation2 + $0x48] sm:$0xff] %v286
      %vm289 = vsmask.f32 7424
      %v291 = vshrl.u32 %v286, 16
      %v293 = vshll.u32 %v286, 16
      %v295 = vrot.slane %v293, 1
      %v296 = vor.u32 %v291, %v295
      %v298 = vshll.u32 %v287, 16
      %v300 = vrot.slane %v298, 1
      %v301 = vsel %vm289, %v296, %v300
      %303 = vst [vmem:[#allocation2 + $0x50] sm:$0xff] %v301
      %vm306 = vcmask 1046528
      %v307 = vrot.slane %v286, 1
      %v308 = vrot.slane %v287, 1
      %v309 = vsel %vm306, %v307, %v308
      %311 = vst [vmem:[#allocation2 + $0x58] sm:$0xff] %v309
      %312 = vst [vmem:[#allocation2 + $0x18] sm:$0xff] %v286
      %313 = vst [vmem:[#allocation2 + $0x20] sm:$0xff] %v301
      %314 = vst [vmem:[#allocation2 + $0x28] sm:$0xff] %v309
      %s315 = scalar_lea.vmem %s234, 8
      %v316 = vld [vmem:[%s315] sm:$0xf]
      %v317 = vld [vmem:[%s315 + $0x4] sm:$0xf]
      %v318 = vunpack.c.l.bf16 %v316
      %v319 = vunpack.c.l.bf16 %v317
      %v320 = vmul.f32 %v318, %v251
      %v321 = vmul.f32 %v319, %v251
      %v322 = vadd.f32 %v320, %v258
      %v323 = vadd.f32 %v321, %v258
      %v324 = vmax.f32 %v322, 0.0
      %v325 = vmax.f32 %v323, 0.0
      %v326 = vpack.c.bf16 %v325, %v324
      %v328 = vshrl.u32 %v326, 16
      %v330 = vrot.slane %v328, 7
      %v331 = vshll.u32 %v326, 16
      %v333 = vor.u32 %v330, %v331
      %v336 = vsel %vm285, 0, %v333
      %v337 = vsel %vm285, %v330, 0
      %338 = vst [vmem:[#allocation2 + $0x90] sm:$0xff] %v336
      %v340 = vshrl.u32 %v336, 16
      %v342 = vshll.u32 %v336, 16
      %v344 = vrot.slane %v342, 1
      %v345 = vor.u32 %v340, %v344
      %v347 = vshll.u32 %v337, 16
      %v349 = vrot.slane %v347, 1
      %v350 = vsel %vm289, %v345, %v349
      %352 = vst [vmem:[#allocation2 + $0x98] sm:$0xff] %v350
      %v355 = vrot.slane %v336, 1
      %v356 = vrot.slane %v337, 1
      %v357 = vsel %vm306, %v355, %v356
      %359 = vst [vmem:[#allocation2 + $0xa0] sm:$0xff] %v357
      %360 = vst [vmem:[#allocation2 + $0x60] sm:$0xff] %v336
      %361 = vst [vmem:[#allocation2 + $0x68] sm:$0xff] %v350
      %362 = vst [vmem:[#allocation2 + $0x70] sm:$0xff] %v357
      %363 = vst [vmem:[#allocation2 + $0x30] sm:$0xff] %v336
      %364 = vst [vmem:[#allocation2 + $0x38] sm:$0xff] %v350
      %365 = vst [vmem:[#allocation2 + $0x40] sm:$0xff] %v357
      %s366 = scalar_lea.vmem %s234, 16
      %v367 = vld [vmem:[%s366] sm:$0xf]
      %v368 = vld [vmem:[%s366 + $0x4] sm:$0xf]
      %v369 = vunpack.c.l.bf16 %v367
      %v370 = vunpack.c.l.bf16 %v368
      %v371 = vmul.f32 %v369, %v251
      %v372 = vmul.f32 %v370, %v251
      %v373 = vadd.f32 %v371, %v258
      %v374 = vadd.f32 %v372, %v258
      %v375 = vmax.f32 %v373, 0.0
      %v376 = vmax.f32 %v374, 0.0
      %v377 = vpack.c.bf16 %v376, %v375
      %v379 = vshrl.u32 %v377, 16
      %v381 = vrot.slane %v379, 7
      %v382 = vshll.u32 %v377, 16
      %v384 = vor.u32 %v381, %v382
      %v387 = vsel %vm285, 0, %v384
      %v388 = vsel %vm285, %v381, 0
      %389 = vst [vmem:[#allocation2 + $0xd8] sm:$0xff] %v387
      %v391 = vshrl.u32 %v387, 16
      %v393 = vshll.u32 %v387, 16
      %v395 = vrot.slane %v393, 1
      %v396 = vor.u32 %v391, %v395
      %v398 = vshll.u32 %v388, 16
      %v400 = vrot.slane %v398, 1
      %v401 = vsel %vm289, %v396, %v400
      %403 = vst [vmem:[#allocation2 + $0xe0] sm:$0xff] %v401
      %v406 = vrot.slane %v387, 1
      %v407 = vrot.slane %v388, 1
      %v408 = vsel %vm306, %v406, %v407
      %410 = vst [vmem:[#allocation2 + $0xe8] sm:$0xff] %v408
      %411 = vst [vmem:[#allocation2 + $0xa8] sm:$0xff] %v387
      %412 = vst [vmem:[#allocation2 + $0xb0] sm:$0xff] %v401
      %413 = vst [vmem:[#allocation2 + $0xb8] sm:$0xff] %v408
      %414 = vst [vmem:[#allocation2 + $0x78] sm:$0xff] %v387
      %415 = vst [vmem:[#allocation2 + $0x80] sm:$0xff] %v401
      %416 = vst [vmem:[#allocation2 + $0x88] sm:$0xff] %v408
      %s417 = scalar_lea.vmem %s234, 24
      %v418 = vld [vmem:[%s417] sm:$0xf]
      %v419 = vld [vmem:[%s417 + $0x4] sm:$0xf]
      %v420 = vunpack.c.l.bf16 %v418
      %v421 = vunpack.c.l.bf16 %v419
      %v422 = vmul.f32 %v420, %v251
      %v423 = vmul.f32 %v421, %v251
      %v424 = vadd.f32 %v422, %v258
      %v425 = vadd.f32 %v423, %v258
      %v426 = vmax.f32 %v424, 0.0
      %v427 = vmax.f32 %v425, 0.0
      %v428 = vpack.c.bf16 %v427, %v426
      %v430 = vshrl.u32 %v428, 16
      %v432 = vrot.slane %v430, 7
      %v433 = vshll.u32 %v428, 16
      %v435 = vor.u32 %v432, %v433
      %v438 = vsel %vm285, 0, %v435
      %v439 = vsel %vm285, %v432, 0
      %440 = vst [vmem:[#allocation2 + $0x120] sm:$0xff] %v438
      %v442 = vshrl.u32 %v438, 16
      %v444 = vshll.u32 %v438, 16
      %v446 = vrot.slane %v444, 1
      %v447 = vor.u32 %v442, %v446
      %v449 = vshll.u32 %v439, 16
      %v451 = vrot.slane %v449, 1
      %v452 = vsel %vm289, %v447, %v451
      %454 = vst [vmem:[#allocation2 + $0x128] sm:$0xff] %v452
      %v457 = vrot.slane %v438, 1
      %v458 = vrot.slane %v439, 1
      %v459 = vsel %vm306, %v457, %v458
      %461 = vst [vmem:[#allocation2 + $0x130] sm:$0xff] %v459
      %462 = vst [vmem:[#allocation2 + $0xf0] sm:$0xff] %v438
      %463 = vst [vmem:[#allocation2 + $0xf8] sm:$0xff] %v452
      %464 = vst [vmem:[#allocation2 + $0x100] sm:$0xff] %v459
      %465 = vst [vmem:[#allocation2 + $0xc0] sm:$0xff] %v438
      %466 = vst [vmem:[#allocation2 + $0xc8] sm:$0xff] %v452
      %467 = vst [vmem:[#allocation2 + $0xd0] sm:$0xff] %v459
      %s468 = scalar_lea.vmem %s234, 32
      %v469 = vld [vmem:[%s468] sm:$0xf]
      %v470 = vld [vmem:[%s468 + $0x4] sm:$0xf]
      %v471 = vunpack.c.l.bf16 %v469
      %v472 = vunpack.c.l.bf16 %v470
      %v473 = vmul.f32 %v471, %v251
      %v474 = vmul.f32 %v472, %v251
      %v475 = vadd.f32 %v473, %v258
      %v476 = vadd.f32 %v474, %v258
      %v477 = vmax.f32 %v475, 0.0
      %v478 = vmax.f32 %v476, 0.0
      %v479 = vpack.c.bf16 %v478, %v477
      %v481 = vshrl.u32 %v479, 16
      %v483 = vrot.slane %v481, 7
      %v484 = vshll.u32 %v479, 16
      %v486 = vor.u32 %v483, %v484
      %v489 = vsel %vm285, 0, %v486
      %v490 = vsel %vm285, %v483, 0
      %491 = vst [vmem:[#allocation2 + $0x168] sm:$0xff] %v489
      %v493 = vshrl.u32 %v489, 16
      %v495 = vshll.u32 %v489, 16
      %v497 = vrot.slane %v495, 1
      %v498 = vor.u32 %v493, %v497
      %v500 = vshll.u32 %v490, 16
      %v502 = vrot.slane %v500, 1
      %v503 = vsel %vm289, %v498, %v502
      %505 = vst [vmem:[#allocation2 + $0x170] sm:$0xff] %v503
      %v508 = vrot.slane %v489, 1
      %v509 = vrot.slane %v490, 1
      %v510 = vsel %vm306, %v508, %v509
      %512 = vst [vmem:[#allocation2 + $0x178] sm:$0xff] %v510
      %513 = vst [vmem:[#allocation2 + $0x138] sm:$0xff] %v489
      %514 = vst [vmem:[#allocation2 + $0x140] sm:$0xff] %v503
      %515 = vst [vmem:[#allocation2 + $0x148] sm:$0xff] %v510
      %516 = vst [vmem:[#allocation2 + $0x108] sm:$0xff] %v489
      %517 = vst [vmem:[#allocation2 + $0x110] sm:$0xff] %v503
      %518 = vst [vmem:[#allocation2 + $0x118] sm:$0xff] %v510
      %s519 = scalar_lea.vmem %s234, 40
      %v520 = vld [vmem:[%s519] sm:$0xf]
      %v521 = vld [vmem:[%s519 + $0x4] sm:$0xf]
      %v522 = vunpack.c.l.bf16 %v520
      %v523 = vunpack.c.l.bf16 %v521
      %v524 = vmul.f32 %v522, %v251
      %v525 = vmul.f32 %v523, %v251
      %v526 = vadd.f32 %v524, %v258
      %v527 = vadd.f32 %v525, %v258
      %v528 = vmax.f32 %v526, 0.0
      %v529 = vmax.f32 %v527, 0.0
      %v530 = vpack.c.bf16 %v529, %v528
      %v532 = vshrl.u32 %v530, 16
      %v534 = vrot.slane %v532, 7
      %v535 = vshll.u32 %v530, 16
      %v537 = vor.u32 %v534, %v535
      %v540 = vsel %vm285, 0, %v537
      %v541 = vsel %vm285, %v534, 0
      %542 = vst [vmem:[#allocation2 + $0x1b0] sm:$0xff] %v540
      %v544 = vshrl.u32 %v540, 16
      %v546 = vshll.u32 %v540, 16
      %v548 = vrot.slane %v546, 1
      %v549 = vor.u32 %v544, %v548
      %v551 = vshll.u32 %v541, 16
      %v553 = vrot.slane %v551, 1
      %v554 = vsel %vm289, %v549, %v553
      %556 = vst [vmem:[#allocation2 + $0x1b8] sm:$0xff] %v554
      %v559 = vrot.slane %v540, 1
      %v560 = vrot.slane %v541, 1
      %v561 = vsel %vm306, %v559, %v560
      %563 = vst [vmem:[#allocation2 + $0x1c0] sm:$0xff] %v561
      %564 = vst [vmem:[#allocation2 + $0x180] sm:$0xff] %v540
      %565 = vst [vmem:[#allocation2 + $0x188] sm:$0xff] %v554
      %566 = vst [vmem:[#allocation2 + $0x190] sm:$0xff] %v561
      %567 = vst [vmem:[#allocation2 + $0x150] sm:$0xff] %v540
      %568 = vst [vmem:[#allocation2 + $0x158] sm:$0xff] %v554
      %569 = vst [vmem:[#allocation2 + $0x160] sm:$0xff] %v561
      %s570 = scalar_lea.vmem %s234, 48
      %v571 = vld [vmem:[%s570] sm:$0xf]
      %v572 = vld [vmem:[%s570 + $0x4] sm:$0xf]
      %v573 = vunpack.c.l.bf16 %v571
      %v574 = vunpack.c.l.bf16 %v572
      %v575 = vmul.f32 %v573, %v251
      %v576 = vmul.f32 %v574, %v251
      %v577 = vadd.f32 %v575, %v258
      %v578 = vadd.f32 %v576, %v258
      %v579 = vmax.f32 %v577, 0.0
      %v580 = vmax.f32 %v578, 0.0
      %v581 = vpack.c.bf16 %v580, %v579
      %v583 = vshrl.u32 %v581, 16
      %v585 = vrot.slane %v583, 7
      %v586 = vshll.u32 %v581, 16
      %v588 = vor.u32 %v585, %v586
      %v591 = vsel %vm285, 0, %v588
      %v592 = vsel %vm285, %v585, 0
      %593 = vst [vmem:[#allocation2 + $0x1f8] sm:$0xff] %v591
      %v595 = vshrl.u32 %v591, 16
      %v597 = vshll.u32 %v591, 16
      %v599 = vrot.slane %v597, 1
      %v600 = vor.u32 %v595, %v599
      %v602 = vshll.u32 %v592, 16
      %v604 = vrot.slane %v602, 1
      %v605 = vsel %vm289, %v600, %v604
      %607 = vst [vmem:[#allocation2 + $0x200] sm:$0xff] %v605
      %v610 = vrot.slane %v591, 1
      %v611 = vrot.slane %v592, 1
      %v612 = vsel %vm306, %v610, %v611
      %614 = vst [vmem:[#allocation2 + $0x208] sm:$0xff] %v612
      %615 = vst [vmem:[#allocation2 + $0x1c8] sm:$0xff] %v591
      %616 = vst [vmem:[#allocation2 + $0x1d0] sm:$0xff] %v605
      %617 = vst [vmem:[#allocation2 + $0x1d8] sm:$0xff] %v612
      %618 = vst [vmem:[#allocation2 + $0x198] sm:$0xff] %v591
      %619 = vst [vmem:[#allocation2 + $0x1a0] sm:$0xff] %v605
      %620 = vst [vmem:[#allocation2 + $0x1a8] sm:$0xff] %v612
      %s621 = scalar_lea.vmem %s234, 56
      %v622 = vld [vmem:[%s621] sm:$0xf]
      %v623 = vld [vmem:[%s621 + $0x4] sm:$0xf]
      %v624 = vunpack.c.l.bf16 %v622
      %v625 = vunpack.c.l.bf16 %v623
      %v626 = vmul.f32 %v624, %v251
      %v627 = vmul.f32 %v625, %v251
      %v628 = vadd.f32 %v626, %v258
      %v629 = vadd.f32 %v627, %v258
      %v630 = vmax.f32 %v628, 0.0
      %v631 = vmax.f32 %v629, 0.0
      %v632 = vpack.c.bf16 %v631, %v630
      %v634 = vshrl.u32 %v632, 16
      %v636 = vrot.slane %v634, 7
      %v637 = vshll.u32 %v632, 16
      %v639 = vor.u32 %v636, %v637
      %v642 = vsel %vm285, 0, %v639
      %v643 = vsel %vm285, %v636, 0
      %644 = vst [vmem:[#allocation2 + $0x240] sm:$0xff] %v642
      %v646 = vshrl.u32 %v642, 16
      %v648 = vshll.u32 %v642, 16
      %v650 = vrot.slane %v648, 1
      %v651 = vor.u32 %v646, %v650
      %v653 = vshll.u32 %v643, 16
      %v655 = vrot.slane %v653, 1
      %v656 = vsel %vm289, %v651, %v655
      %658 = vst [vmem:[#allocation2 + $0x248] sm:$0xff] %v656
      %v661 = vrot.slane %v642, 1
      %v662 = vrot.slane %v643, 1
      %v663 = vsel %vm306, %v661, %v662
      %665 = vst [vmem:[#allocation2 + $0x250] sm:$0xff] %v663
      %666 = vst [vmem:[#allocation2 + $0x210] sm:$0xff] %v642
      %667 = vst [vmem:[#allocation2 + $0x218] sm:$0xff] %v656
      %668 = vst [vmem:[#allocation2 + $0x220] sm:$0xff] %v663
      %669 = vst [vmem:[#allocation2 + $0x1e0] sm:$0xff] %v642
      %670 = vst [vmem:[#allocation2 + $0x1e8] sm:$0xff] %v656
      %671 = vst [vmem:[#allocation2 + $0x1f0] sm:$0xff] %v663
      %s672 = scalar_lea.vmem %s234, 64
      %v673 = vld [vmem:[%s672] sm:$0xf]
      %v674 = vld [vmem:[%s672 + $0x4] sm:$0xf]
      %v675 = vunpack.c.l.bf16 %v673
      %v676 = vunpack.c.l.bf16 %v674
      %v677 = vmul.f32 %v675, %v251
      %v678 = vmul.f32 %v676, %v251
      %v679 = vadd.f32 %v677, %v258
      %v680 = vadd.f32 %v678, %v258
      %v681 = vmax.f32 %v679, 0.0
      %v682 = vmax.f32 %v680, 0.0
      %v683 = vpack.c.bf16 %v682, %v681
      %v685 = vshrl.u32 %v683, 16
      %v687 = vrot.slane %v685, 7
      %v688 = vshll.u32 %v683, 16
      %v690 = vor.u32 %v687, %v688
      %v693 = vsel %vm285, 0, %v690
      %v694 = vsel %vm285, %v687, 0
      %695 = vst [vmem:[#allocation2 + $0x288] sm:$0xff] %v693
      %v697 = vshrl.u32 %v693, 16
      %v699 = vshll.u32 %v693, 16
      %v701 = vrot.slane %v699, 1
      %v702 = vor.u32 %v697, %v701
      %v704 = vshll.u32 %v694, 16
      %v706 = vrot.slane %v704, 1
      %v707 = vsel %vm289, %v702, %v706
      %709 = vst [vmem:[#allocation2 + $0x290] sm:$0xff] %v707
      %v712 = vrot.slane %v693, 1
      %v713 = vrot.slane %v694, 1
      %v714 = vsel %vm306, %v712, %v713
      %716 = vst [vmem:[#allocation2 + $0x298] sm:$0xff] %v714
      %717 = vst [vmem:[#allocation2 + $0x258] sm:$0xff] %v693
      %718 = vst [vmem:[#allocation2 + $0x260] sm:$0xff] %v707
      %719 = vst [vmem:[#allocation2 + $0x268] sm:$0xff] %v714
      %720 = vst [vmem:[#allocation2 + $0x228] sm:$0xff] %v693
      %721 = vst [vmem:[#allocation2 + $0x230] sm:$0xff] %v707
      %722 = vst [vmem:[#allocation2 + $0x238] sm:$0xff] %v714
      %s723 = scalar_lea.vmem %s234, 72
      %v724 = vld [vmem:[%s723] sm:$0xf]
      %v725 = vld [vmem:[%s723 + $0x4] sm:$0xf]
      %v726 = vunpack.c.l.bf16 %v724
      %v727 = vunpack.c.l.bf16 %v725
      %v728 = vmul.f32 %v726, %v251
      %v729 = vmul.f32 %v727, %v251
      %v730 = vadd.f32 %v728, %v258
      %v731 = vadd.f32 %v729, %v258
      %v732 = vmax.f32 %v730, 0.0
      %v733 = vmax.f32 %v731, 0.0
      %v734 = vpack.c.bf16 %v733, %v732
      %v736 = vshrl.u32 %v734, 16
      %v738 = vrot.slane %v736, 7
      %v739 = vshll.u32 %v734, 16
      %v741 = vor.u32 %v738, %v739
      %v744 = vsel %vm285, 0, %v741
      %v745 = vsel %vm285, %v738, 0
      %746 = vst [vmem:[#allocation2 + $0x2d0] sm:$0xff] %v744
      %v748 = vshrl.u32 %v744, 16
      %v750 = vshll.u32 %v744, 16
      %v752 = vrot.slane %v750, 1
      %v753 = vor.u32 %v748, %v752
      %v755 = vshll.u32 %v745, 16
      %v757 = vrot.slane %v755, 1
      %v758 = vsel %vm289, %v753, %v757
      %760 = vst [vmem:[#allocation2 + $0x2d8] sm:$0xff] %v758
      %v763 = vrot.slane %v744, 1
      %v764 = vrot.slane %v745, 1
      %v765 = vsel %vm306, %v763, %v764
      %767 = vst [vmem:[#allocation2 + $0x2e0] sm:$0xff] %v765
      %768 = vst [vmem:[#allocation2 + $0x2a0] sm:$0xff] %v744
      %769 = vst [vmem:[#allocation2 + $0x2a8] sm:$0xff] %v758
      %770 = vst [vmem:[#allocation2 + $0x2b0] sm:$0xff] %v765
      %771 = vst [vmem:[#allocation2 + $0x270] sm:$0xff] %v744
      %772 = vst [vmem:[#allocation2 + $0x278] sm:$0xff] %v758
      %773 = vst [vmem:[#allocation2 + $0x280] sm:$0xff] %v765
      %s774 = scalar_lea.vmem %s234, 80
      %v775 = vld [vmem:[%s774] sm:$0xf]
      %v776 = vld [vmem:[%s774 + $0x4] sm:$0xf]
      %v777 = vunpack.c.l.bf16 %v775
      %v778 = vunpack.c.l.bf16 %v776
      %v779 = vmul.f32 %v777, %v251
      %v780 = vmul.f32 %v778, %v251
      %v781 = vadd.f32 %v779, %v258
      %v782 = vadd.f32 %v780, %v258
      %v783 = vmax.f32 %v781, 0.0
      %v784 = vmax.f32 %v782, 0.0
      %v785 = vpack.c.bf16 %v784, %v783
      %v787 = vshrl.u32 %v785, 16
      %v789 = vrot.slane %v787, 7
      %v790 = vshll.u32 %v785, 16
      %v792 = vor.u32 %v789, %v790
      %v795 = vsel %vm285, 0, %v792
      %v796 = vsel %vm285, %v789, 0
      %797 = vst [vmem:[#allocation2 + $0x318] sm:$0xff] %v795
      %v799 = vshrl.u32 %v795, 16
      %v801 = vshll.u32 %v795, 16
      %v803 = vrot.slane %v801, 1
      %v804 = vor.u32 %v799, %v803
      %v806 = vshll.u32 %v796, 16
      %v808 = vrot.slane %v806, 1
      %v809 = vsel %vm289, %v804, %v808
      %811 = vst [vmem:[#allocation2 + $0x320] sm:$0xff] %v809
      %v814 = vrot.slane %v795, 1
      %v815 = vrot.slane %v796, 1
      %v816 = vsel %vm306, %v814, %v815
      %818 = vst [vmem:[#allocation2 + $0x328] sm:$0xff] %v816
      %819 = vst [vmem:[#allocation2 + $0x2e8] sm:$0xff] %v795
      %820 = vst [vmem:[#allocation2 + $0x2f0] sm:$0xff] %v809
      %821 = vst [vmem:[#allocation2 + $0x2f8] sm:$0xff] %v816
      %822 = vst [vmem:[#allocation2 + $0x2b8] sm:$0xff] %v795
      %823 = vst [vmem:[#allocation2 + $0x2c0] sm:$0xff] %v809
      %824 = vst [vmem:[#allocation2 + $0x2c8] sm:$0xff] %v816
      %s825 = scalar_lea.vmem %s234, 88
      %v826 = vld [vmem:[%s825] sm:$0xf]
      %v827 = vld [vmem:[%s825 + $0x4] sm:$0xf]
      %v828 = vunpack.c.l.bf16 %v826
      %v829 = vunpack.c.l.bf16 %v827
      %v830 = vmul.f32 %v828, %v251
      %v831 = vmul.f32 %v829, %v251
      %v832 = vadd.f32 %v830, %v258
      %v833 = vadd.f32 %v831, %v258
      %v834 = vmax.f32 %v832, 0.0
      %v835 = vmax.f32 %v833, 0.0
      %v836 = vpack.c.bf16 %v835, %v834
      %v838 = vshrl.u32 %v836, 16
      %v840 = vrot.slane %v838, 7
      %v841 = vshll.u32 %v836, 16
      %v843 = vor.u32 %v840, %v841
      %v846 = vsel %vm285, 0, %v843
      %v847 = vsel %vm285, %v840, 0
      %848 = vst [vmem:[#allocation2 + $0x360] sm:$0xff] %v846
      %v850 = vshrl.u32 %v846, 16
      %v852 = vshll.u32 %v846, 16
      %v854 = vrot.slane %v852, 1
      %v855 = vor.u32 %v850, %v854
      %v857 = vshll.u32 %v847, 16
      %v859 = vrot.slane %v857, 1
      %v860 = vsel %vm289, %v855, %v859
      %862 = vst [vmem:[#allocation2 + $0x368] sm:$0xff] %v860
      %v865 = vrot.slane %v846, 1
      %v866 = vrot.slane %v847, 1
      %v867 = vsel %vm306, %v865, %v866
      %869 = vst [vmem:[#allocation2 + $0x370] sm:$0xff] %v867
      %870 = vst [vmem:[#allocation2 + $0x330] sm:$0xff] %v846
      %871 = vst [vmem:[#allocation2 + $0x338] sm:$0xff] %v860
      %872 = vst [vmem:[#allocation2 + $0x340] sm:$0xff] %v867
      %873 = vst [vmem:[#allocation2 + $0x300] sm:$0xff] %v846
      %874 = vst [vmem:[#allocation2 + $0x308] sm:$0xff] %v860
      %875 = vst [vmem:[#allocation2 + $0x310] sm:$0xff] %v867
      %s876 = scalar_lea.vmem %s234, 96
      %v877 = vld [vmem:[%s876] sm:$0xf]
      %v878 = vld [vmem:[%s876 + $0x4] sm:$0xf]
      %v879 = vunpack.c.l.bf16 %v877
      %v880 = vunpack.c.l.bf16 %v878
      %v881 = vmul.f32 %v879, %v251
      %v882 = vmul.f32 %v880, %v251
      %v883 = vadd.f32 %v881, %v258
      %v884 = vadd.f32 %v882, %v258
      %v885 = vmax.f32 %v883, 0.0
      %v886 = vmax.f32 %v884, 0.0
      %v887 = vpack.c.bf16 %v886, %v885
      %v889 = vshrl.u32 %v887, 16
      %v891 = vrot.slane %v889, 7
      %v892 = vshll.u32 %v887, 16
      %v894 = vor.u32 %v891, %v892
      %v897 = vsel %vm285, 0, %v894
      %v898 = vsel %vm285, %v891, 0
      %899 = vst [vmem:[#allocation2 + $0x3a8] sm:$0xff] %v897
      %v901 = vshrl.u32 %v897, 16
      %v903 = vshll.u32 %v897, 16
      %v905 = vrot.slane %v903, 1
      %v906 = vor.u32 %v901, %v905
      %v908 = vshll.u32 %v898, 16
      %v910 = vrot.slane %v908, 1
      %v911 = vsel %vm289, %v906, %v910
      %913 = vst [vmem:[#allocation2 + $0x3b0] sm:$0xff] %v911
      %v916 = vrot.slane %v897, 1
      %v917 = vrot.slane %v898, 1
      %v918 = vsel %vm306, %v916, %v917
      %920 = vst [vmem:[#allocation2 + $0x3b8] sm:$0xff] %v918
      %921 = vst [vmem:[#allocation2 + $0x378] sm:$0xff] %v897
      %922 = vst [vmem:[#allocation2 + $0x380] sm:$0xff] %v911
      %923 = vst [vmem:[#allocation2 + $0x388] sm:$0xff] %v918
      %924 = vst [vmem:[#allocation2 + $0x348] sm:$0xff] %v897
      %925 = vst [vmem:[#allocation2 + $0x350] sm:$0xff] %v911
      %926 = vst [vmem:[#allocation2 + $0x358] sm:$0xff] %v918
      %s927 = scalar_lea.vmem %s234, 104
      %v928 = vld [vmem:[%s927] sm:$0xf]
      %v929 = vld [vmem:[%s927 + $0x4] sm:$0xf]
      %v930 = vunpack.c.l.bf16 %v928
      %v931 = vunpack.c.l.bf16 %v929
      %v932 = vmul.f32 %v930, %v251
      %v933 = vmul.f32 %v931, %v251
      %v934 = vadd.f32 %v932, %v258
      %v935 = vadd.f32 %v933, %v258
      %v936 = vmax.f32 %v934, 0.0
      %v937 = vmax.f32 %v935, 0.0
      %v938 = vpack.c.bf16 %v937, %v936
      %v940 = vshrl.u32 %v938, 16
      %v942 = vrot.slane %v940, 7
      %v943 = vshll.u32 %v938, 16
      %v945 = vor.u32 %v942, %v943
      %v948 = vsel %vm285, 0, %v945
      %v949 = vsel %vm285, %v942, 0
      %950 = vst [vmem:[#allocation2 + $0x3f0] sm:$0xff] %v948
      %v952 = vshrl.u32 %v948, 16
      %v954 = vshll.u32 %v948, 16
      %v956 = vrot.slane %v954, 1
      %v957 = vor.u32 %v952, %v956
      %v959 = vshll.u32 %v949, 16
      %v961 = vrot.slane %v959, 1
      %v962 = vsel %vm289, %v957, %v961
      %964 = vst [vmem:[#allocation2 + $0x3f8] sm:$0xff] %v962
      %v967 = vrot.slane %v948, 1
      %v968 = vrot.slane %v949, 1
      %v969 = vsel %vm306, %v967, %v968
      %971 = vst [vmem:[#allocation2 + $0x400] sm:$0xff] %v969
      %972 = vst [vmem:[#allocation2 + $0x3c0] sm:$0xff] %v948
      %973 = vst [vmem:[#allocation2 + $0x3c8] sm:$0xff] %v962
      %974 = vst [vmem:[#allocation2 + $0x3d0] sm:$0xff] %v969
      %975 = vst [vmem:[#allocation2 + $0x390] sm:$0xff] %v948
      %976 = vst [vmem:[#allocation2 + $0x398] sm:$0xff] %v962
      %977 = vst [vmem:[#allocation2 + $0x3a0] sm:$0xff] %v969
      %s978 = scalar_lea.vmem %s234, 112
      %v979 = vld [vmem:[%s978] sm:$0xf]
      %v980 = vld [vmem:[%s978 + $0x4] sm:$0xf]
      %v981 = vunpack.c.l.bf16 %v979
      %v982 = vunpack.c.l.bf16 %v980
      %v983 = vmul.f32 %v981, %v251
      %v984 = vmul.f32 %v982, %v251
      %v985 = vadd.f32 %v983, %v258
      %v986 = vadd.f32 %v984, %v258
      %v987 = vmax.f32 %v985, 0.0
      %v988 = vmax.f32 %v986, 0.0
      %v989 = vpack.c.bf16 %v988, %v987
      %v991 = vshrl.u32 %v989, 16
      %v993 = vrot.slane %v991, 7
      %v994 = vshll.u32 %v989, 16
      %v996 = vor.u32 %v993, %v994
      %v999 = vsel %vm285, 0, %v996
      %v1000 = vsel %vm285, %v993, 0
      %1001 = vst [vmem:[#allocation2 + $0x438] sm:$0xff] %v999
      %v1003 = vshrl.u32 %v999, 16
      %v1005 = vshll.u32 %v999, 16
      %v1007 = vrot.slane %v1005, 1
      %v1008 = vor.u32 %v1003, %v1007
      %v1010 = vshll.u32 %v1000, 16
      %v1012 = vrot.slane %v1010, 1
      %v1013 = vsel %vm289, %v1008, %v1012
      %1015 = vst [vmem:[#allocation2 + $0x440] sm:$0xff] %v1013
      %v1018 = vrot.slane %v999, 1
      %v1019 = vrot.slane %v1000, 1
      %v1020 = vsel %vm306, %v1018, %v1019
      %1022 = vst [vmem:[#allocation2 + $0x448] sm:$0xff] %v1020
      %1023 = vst [vmem:[#allocation2 + $0x408] sm:$0xff] %v999
      %1024 = vst [vmem:[#allocation2 + $0x410] sm:$0xff] %v1013
      %1025 = vst [vmem:[#allocation2 + $0x418] sm:$0xff] %v1020
      %1026 = vst [vmem:[#allocation2 + $0x3d8] sm:$0xff] %v999
      %1027 = vst [vmem:[#allocation2 + $0x3e0] sm:$0xff] %v1013
      %1028 = vst [vmem:[#allocation2 + $0x3e8] sm:$0xff] %v1020
      %s1029 = scalar_lea.vmem %s234, 120
      %v1030 = vld [vmem:[%s1029] sm:$0xf]
      %v1031 = vld [vmem:[%s1029 + $0x4] sm:$0xf]
      %v1032 = vunpack.c.l.bf16 %v1030
      %v1033 = vunpack.c.l.bf16 %v1031
      %v1034 = vmul.f32 %v1032, %v251
      %v1035 = vmul.f32 %v1033, %v251
      %v1036 = vadd.f32 %v1034, %v258
      %v1037 = vadd.f32 %v1035, %v258
      %v1038 = vmax.f32 %v1036, 0.0
      %v1039 = vmax.f32 %v1037, 0.0
      %v1040 = vpack.c.bf16 %v1039, %v1038
      %v1042 = vshrl.u32 %v1040, 16
      %v1044 = vrot.slane %v1042, 7
      %v1045 = vshll.u32 %v1040, 16
      %v1047 = vor.u32 %v1044, %v1045
      %v1050 = vsel %vm285, 0, %v1047
      %v1051 = vsel %vm285, %v1044, 0
      %1052 = vst [vmem:[#allocation2 + $0x450] sm:$0xff] %v1050
      %v1054 = vshrl.u32 %v1050, 16
      %v1056 = vshll.u32 %v1050, 16
      %v1058 = vrot.slane %v1056, 1
      %v1059 = vor.u32 %v1054, %v1058
      %v1061 = vshll.u32 %v1051, 16
      %v1063 = vrot.slane %v1061, 1
      %v1064 = vsel %vm289, %v1059, %v1063
      %1066 = vst [vmem:[#allocation2 + $0x458] sm:$0xff] %v1064
      %v1069 = vrot.slane %v1050, 1
      %v1070 = vrot.slane %v1051, 1
      %v1071 = vsel %vm306, %v1069, %v1070
      %1073 = vst [vmem:[#allocation2 + $0x460] sm:$0xff] %v1071
      %1074 = vst [vmem:[#allocation2 + $0x420] sm:$0xff] %v1050
      %1075 = vst [vmem:[#allocation2 + $0x428] sm:$0xff] %v1064
      %1076 = vst [vmem:[#allocation2 + $0x430] sm:$0xff] %v1071
      %1077 = vst [vmem:[#allocation2 + $0x468] sm:$0xff] 0
      %1078 = vst [vmem:[#allocation2 + $0x470] sm:$0xff] 0
      %1079 = vst [vmem:[#allocation2 + $0x478] sm:$0xff] 0
      %v1080 = vld [vmem:[#allocation2] sm:$0xff]
      %v1081 = vld [vmem:[#allocation2 + $0x8] sm:$0xff]
      %v1082 = vld [vmem:[#allocation2 + $0x10] sm:$0xff]
      %v1083 = vld [vmem:[#allocation2 + $0x18] sm:$0xff]
      %v1084 = vld [vmem:[#allocation2 + $0x20] sm:$0xff]
      %v1085 = vld [vmem:[#allocation2 + $0x28] sm:$0xff]
      %v1086 = vld [vmem:[#allocation2 + $0x30] sm:$0xff]
      %v1087 = vld [vmem:[#allocation2 + $0x38] sm:$0xff]
      %v1088 = vld [vmem:[#allocation2 + $0x40] sm:$0xff]
      %v1089 = vld [vmem:[#allocation2 + $0x48] sm:$0xff]
      %v1090 = vld [vmem:[#allocation2 + $0x50] sm:$0xff]
      %v1091 = vld [vmem:[#allocation2 + $0x58] sm:$0xff]
      %v1092 = vld [vmem:[#allocation2 + $0x60] sm:$0xff]
      %v1093 = vld [vmem:[#allocation2 + $0x68] sm:$0xff]
      %v1094 = vld [vmem:[#allocation2 + $0x70] sm:$0xff]
      %v1095 = vld [vmem:[#allocation2 + $0x78] sm:$0xff]
      %v1096 = vld [vmem:[#allocation2 + $0x80] sm:$0xff]
      %v1097 = vld [vmem:[#allocation2 + $0x88] sm:$0xff]
      %v1098 = vld [vmem:[#allocation2 + $0x90] sm:$0xff]
      %v1099 = vld [vmem:[#allocation2 + $0x98] sm:$0xff]
      %v1100 = vld [vmem:[#allocation2 + $0xa0] sm:$0xff]
      %v1101 = vld [vmem:[#allocation2 + $0xa8] sm:$0xff]
      %v1102 = vld [vmem:[#allocation2 + $0xb0] sm:$0xff]
      %v1103 = vld [vmem:[#allocation2 + $0xb8] sm:$0xff]
      %v1104 = vld [vmem:[#allocation2 + $0xc0] sm:$0xff]
      %v1105 = vld [vmem:[#allocation2 + $0xc8] sm:$0xff]
      %v1106 = vld [vmem:[#allocation2 + $0xd0] sm:$0xff]
      %v1107 = vld [vmem:[#allocation2 + $0xd8] sm:$0xff]
      %v1108 = vld [vmem:[#allocation2 + $0xe0] sm:$0xff]
      %v1109 = vld [vmem:[#allocation2 + $0xe8] sm:$0xff]
      %v1110 = vld [vmem:[#allocation2 + $0xf0] sm:$0xff]
      %v1111 = vld [vmem:[#allocation2 + $0xf8] sm:$0xff]
      %v1112 = vld [vmem:[#allocation2 + $0x100] sm:$0xff]
      %v1113 = vld [vmem:[#allocation2 + $0x108] sm:$0xff]
      %v1114 = vld [vmem:[#allocation2 + $0x110] sm:$0xff]
      %v1115 = vld [vmem:[#allocation2 + $0x118] sm:$0xff]
      %v1116 = vld [vmem:[#allocation2 + $0x120] sm:$0xff]
      %v1117 = vld [vmem:[#allocation2 + $0x128] sm:$0xff]
      %v1118 = vld [vmem:[#allocation2 + $0x130] sm:$0xff]
      %v1119 = vld [vmem:[#allocation2 + $0x138] sm:$0xff]
      %v1120 = vld [vmem:[#allocation2 + $0x140] sm:$0xff]
      %v1121 = vld [vmem:[#allocation2 + $0x148] sm:$0xff]
      %v1122 = vld [vmem:[#allocation2 + $0x150] sm:$0xff]
      %v1123 = vld [vmem:[#allocation2 + $0x158] sm:$0xff]
      %v1124 = vld [vmem:[#allocation2 + $0x160] sm:$0xff]
      %v1125 = vld [vmem:[#allocation2 + $0x168] sm:$0xff]
      %v1126 = vld [vmem:[#allocation2 + $0x170] sm:$0xff]
      %v1127 = vld [vmem:[#allocation2 + $0x178] sm:$0xff]
      %v1128 = vld [vmem:[#allocation2 + $0x180] sm:$0xff]
      %v1129 = vld [vmem:[#allocation2 + $0x188] sm:$0xff]
      %v1130 = vld [vmem:[#allocation2 + $0x190] sm:$0xff]
      %v1131 = vld [vmem:[#allocation2 + $0x198] sm:$0xff]
      %v1132 = vld [vmem:[#allocation2 + $0x1a0] sm:$0xff]
      %v1133 = vld [vmem:[#allocation2 + $0x1a8] sm:$0xff]
      %v1134 = vld [vmem:[#allocation2 + $0x1b0] sm:$0xff]
      %v1135 = vld [vmem:[#allocation2 + $0x1b8] sm:$0xff]
      %v1136 = vld [vmem:[#allocation2 + $0x1c0] sm:$0xff]
      %v1137 = vld [vmem:[#allocation2 + $0x1c8] sm:$0xff]
      %v1138 = vld [vmem:[#allocation2 + $0x1d0] sm:$0xff]
      %v1139 = vld [vmem:[#allocation2 + $0x1d8] sm:$0xff]
      %v1140 = vld [vmem:[#allocation2 + $0x1e0] sm:$0xff]
      %v1141 = vld [vmem:[#allocation2 + $0x1e8] sm:$0xff]
      %v1142 = vld [vmem:[#allocation2 + $0x1f0] sm:$0xff]
      %v1143 = vld [vmem:[#allocation2 + $0x1f8] sm:$0xff]
      %v1144 = vld [vmem:[#allocation2 + $0x200] sm:$0xff]
      %v1145 = vld [vmem:[#allocation2 + $0x208] sm:$0xff]
      %v1146 = vld [vmem:[#allocation2 + $0x210] sm:$0xff]
      %v1147 = vld [vmem:[#allocation2 + $0x218] sm:$0xff]
      %v1148 = vld [vmem:[#allocation2 + $0x220] sm:$0xff]
      %v1149 = vld [vmem:[#allocation2 + $0x228] sm:$0xff]
      %v1150 = vld [vmem:[#allocation2 + $0x230] sm:$0xff]
      %v1151 = vld [vmem:[#allocation2 + $0x238] sm:$0xff]
      %v1152 = vld [vmem:[#allocation2 + $0x240] sm:$0xff]
      %v1153 = vld [vmem:[#allocation2 + $0x248] sm:$0xff]
      %v1154 = vld [vmem:[#allocation2 + $0x250] sm:$0xff]
      %v1155 = vld [vmem:[#allocation2 + $0x258] sm:$0xff]
      %v1156 = vld [vmem:[#allocation2 + $0x260] sm:$0xff]
      %v1157 = vld [vmem:[#allocation2 + $0x268] sm:$0xff]
      %v1158 = vld [vmem:[#allocation2 + $0x270] sm:$0xff]
      %v1159 = vld [vmem:[#allocation2 + $0x278] sm:$0xff]
      %v1160 = vld [vmem:[#allocation2 + $0x280] sm:$0xff]
      %v1161 = vld [vmem:[#allocation2 + $0x288] sm:$0xff]
      %v1162 = vld [vmem:[#allocation2 + $0x290] sm:$0xff]
      %v1163 = vld [vmem:[#allocation2 + $0x298] sm:$0xff]
      %v1164 = vld [vmem:[#allocation2 + $0x2a0] sm:$0xff]
      %v1165 = vld [vmem:[#allocation2 + $0x2a8] sm:$0xff]
      %v1166 = vld [vmem:[#allocation2 + $0x2b0] sm:$0xff]
      %v1167 = vld [vmem:[#allocation2 + $0x2b8] sm:$0xff]
      %v1168 = vld [vmem:[#allocation2 + $0x2c0] sm:$0xff]
      %v1169 = vld [vmem:[#allocation2 + $0x2c8] sm:$0xff]
      %v1170 = vld [vmem:[#allocation2 + $0x2d0] sm:$0xff]
      %v1171 = vld [vmem:[#allocation2 + $0x2d8] sm:$0xff]
      %v1172 = vld [vmem:[#allocation2 + $0x2e0] sm:$0xff]
      %v1173 = vld [vmem:[#allocation2 + $0x2e8] sm:$0xff]
      %v1174 = vld [vmem:[#allocation2 + $0x2f0] sm:$0xff]
      %v1175 = vld [vmem:[#allocation2 + $0x2f8] sm:$0xff]
      %v1176 = vld [vmem:[#allocation2 + $0x300] sm:$0xff]
      %v1177 = vld [vmem:[#allocation2 + $0x308] sm:$0xff]
      %v1178 = vld [vmem:[#allocation2 + $0x310] sm:$0xff]
      %v1179 = vld [vmem:[#allocation2 + $0x318] sm:$0xff]
      %v1180 = vld [vmem:[#allocation2 + $0x320] sm:$0xff]
      %v1181 = vld [vmem:[#allocation2 + $0x328] sm:$0xff]
      %v1182 = vld [vmem:[#allocation2 + $0x330] sm:$0xff]
      %v1183 = vld [vmem:[#allocation2 + $0x338] sm:$0xff]
      %v1184 = vld [vmem:[#allocation2 + $0x340] sm:$0xff]
      %v1185 = vld [vmem:[#allocation2 + $0x348] sm:$0xff]
      %v1186 = vld [vmem:[#allocation2 + $0x350] sm:$0xff]
      %v1187 = vld [vmem:[#allocation2 + $0x358] sm:$0xff]
      %v1188 = vld [vmem:[#allocation2 + $0x360] sm:$0xff]
      %v1189 = vld [vmem:[#allocation2 + $0x368] sm:$0xff]
      %v1190 = vld [vmem:[#allocation2 + $0x370] sm:$0xff]
      %v1191 = vld [vmem:[#allocation2 + $0x378] sm:$0xff]
      %v1192 = vld [vmem:[#allocation2 + $0x380] sm:$0xff]
      %v1193 = vld [vmem:[#allocation2 + $0x388] sm:$0xff]
      %v1194 = vld [vmem:[#allocation2 + $0x390] sm:$0xff]
      %v1195 = vld [vmem:[#allocation2 + $0x398] sm:$0xff]
      %v1196 = vld [vmem:[#allocation2 + $0x3a0] sm:$0xff]
      %v1197 = vld [vmem:[#allocation2 + $0x3a8] sm:$0xff]
      %v1198 = vld [vmem:[#allocation2 + $0x3b0] sm:$0xff]
      %v1199 = vld [vmem:[#allocation2 + $0x3b8] sm:$0xff]
      %v1200 = vld [vmem:[#allocation2 + $0x3c0] sm:$0xff]
      %v1201 = vld [vmem:[#allocation2 + $0x3c8] sm:$0xff]
      %v1202 = vld [vmem:[#allocation2 + $0x3d0] sm:$0xff]
      %v1203 = vld [vmem:[#allocation2 + $0x3d8] sm:$0xff]
      %v1204 = vld [vmem:[#allocation2 + $0x3e0] sm:$0xff]
      %v1205 = vld [vmem:[#allocation2 + $0x3e8] sm:$0xff]
      %v1206 = vld [vmem:[#allocation2 + $0x3f0] sm:$0xff]
      %v1207 = vld [vmem:[#allocation2 + $0x3f8] sm:$0xff]
      %v1208 = vld [vmem:[#allocation2 + $0x400] sm:$0xff]
      %v1209 = vld [vmem:[#allocation2 + $0x408] sm:$0xff]
      %v1210 = vld [vmem:[#allocation2 + $0x410] sm:$0xff]
      %v1211 = vld [vmem:[#allocation2 + $0x418] sm:$0xff]
      %v1212 = vld [vmem:[#allocation2 + $0x420] sm:$0xff]
      %v1213 = vld [vmem:[#allocation2 + $0x428] sm:$0xff]
      %v1214 = vld [vmem:[#allocation2 + $0x430] sm:$0xff]
      %v1215 = vld [vmem:[#allocation2 + $0x438] sm:$0xff]
      %v1216 = vld [vmem:[#allocation2 + $0x440] sm:$0xff]
      %v1217 = vld [vmem:[#allocation2 + $0x448] sm:$0xff]
      %v1218 = vld [vmem:[#allocation2 + $0x450] sm:$0xff]
      %v1219 = vld [vmem:[#allocation2 + $0x458] sm:$0xff]
      %v1220 = vld [vmem:[#allocation2 + $0x460] sm:$0xff]
      %v1221 = vld [vmem:[#allocation2 + $0x468] sm:$0xff]
      %v1222 = vld [vmem:[#allocation2 + $0x470] sm:$0xff]
      %v1223 = vld [vmem:[#allocation2 + $0x478] sm:$0xff]
      %v1224 = vld [vmem:[%s3] sm:$0xf]
      %v1225 = vld [vmem:[%s3 + $0x4] sm:$0xf]
      %v1226 = vld [vmem:[%s3 + $0x8] sm:$0xf]
      %v1227 = vld [vmem:[%s3 + $0xc] sm:$0xf]
      %v1228 = vld [vmem:[%s3 + $0x10] sm:$0xf]
      %v1229 = vld [vmem:[%s3 + $0x14] sm:$0xf]
      %v1230 = vld [vmem:[%s3 + $0x18] sm:$0xf]
      %v1231 = vld [vmem:[%s3 + $0x1c] sm:$0xf]
      %v1232 = vld [vmem:[%s3 + $0x20] sm:$0xf]
      %v1233 = vld [vmem:[%s3 + $0x24] sm:$0xf]
      %v1234 = vld [vmem:[%s3 + $0x28] sm:$0xf]
      %v1235 = vld [vmem:[%s3 + $0x2c] sm:$0xf]
      %v1236 = vld [vmem:[%s3 + $0x30] sm:$0xf]
      %v1237 = vld [vmem:[%s3 + $0x34] sm:$0xf]
      %v1238 = vld [vmem:[%s3 + $0x38] sm:$0xf]
      %v1239 = vld [vmem:[%s3 + $0x3c] sm:$0xf]
      %v1240 = vld [vmem:[%s3 + $0x40] sm:$0xf]
      %v1241 = vld [vmem:[%s3 + $0x44] sm:$0xf]
      %v1242 = vld [vmem:[%s3 + $0x48] sm:$0xf]
      %v1243 = vld [vmem:[%s3 + $0x4c] sm:$0xf]
      %v1244 = vld [vmem:[%s3 + $0x50] sm:$0xf]
      %v1245 = vld [vmem:[%s3 + $0x54] sm:$0xf]
      %v1246 = vld [vmem:[%s3 + $0x58] sm:$0xf]
      %v1247 = vld [vmem:[%s3 + $0x5c] sm:$0xf]
      %v1248 = vld [vmem:[%s3 + $0x60] sm:$0xf]
      %v1249 = vld [vmem:[%s3 + $0x64] sm:$0xf]
      %v1250 = vld [vmem:[%s3 + $0x68] sm:$0xf]
      %v1251 = vld [vmem:[%s3 + $0x6c] sm:$0xf]
      %v1252 = vld [vmem:[%s3 + $0x70] sm:$0xf]
      %v1253 = vld [vmem:[%s3 + $0x74] sm:$0xf]
      %v1254 = vld [vmem:[%s3 + $0x78] sm:$0xf]
      %v1255 = vld [vmem:[%s3 + $0x7c] sm:$0xf]
      %v1256 = vld [vmem:[%s3 + $0x80] sm:$0xf]
      %v1257 = vld [vmem:[%s3 + $0x84] sm:$0xf]
      %v1258 = vld [vmem:[%s3 + $0x88] sm:$0xf]
      %v1259 = vld [vmem:[%s3 + $0x8c] sm:$0xf]
      %v1260 = vld [vmem:[%s3 + $0x90] sm:$0xf]
      %v1261 = vld [vmem:[%s3 + $0x94] sm:$0xf]
      %v1262 = vld [vmem:[%s3 + $0x98] sm:$0xf]
      %v1263 = vld [vmem:[%s3 + $0x9c] sm:$0xf]
      %v1264 = vld [vmem:[%s3 + $0xa0] sm:$0xf]
      %v1265 = vld [vmem:[%s3 + $0xa4] sm:$0xf]
      %v1266 = vld [vmem:[%s3 + $0xa8] sm:$0xf]
      %v1267 = vld [vmem:[%s3 + $0xac] sm:$0xf]
      %v1268 = vld [vmem:[%s3 + $0xb0] sm:$0xf]
      %v1269 = vld [vmem:[%s3 + $0xb4] sm:$0xf]
      %v1270 = vld [vmem:[%s3 + $0xb8] sm:$0xf]
      %v1271 = vld [vmem:[%s3 + $0xbc] sm:$0xf]
      %v1272 = vld [vmem:[%s3 + $0xc0] sm:$0xf]
      %v1273 = vld [vmem:[%s3 + $0xc4] sm:$0xf]
      %v1274 = vld [vmem:[%s3 + $0xc8] sm:$0xf]
      %v1275 = vld [vmem:[%s3 + $0xcc] sm:$0xf]
      %v1276 = vld [vmem:[%s3 + $0xd0] sm:$0xf]
      %v1277 = vld [vmem:[%s3 + $0xd4] sm:$0xf]
      %v1278 = vld [vmem:[%s3 + $0xd8] sm:$0xf]
      %v1279 = vld [vmem:[%s3 + $0xdc] sm:$0xf]
      %v1280 = vld [vmem:[%s3 + $0xe0] sm:$0xf]
      %v1281 = vld [vmem:[%s3 + $0xe4] sm:$0xf]
      %v1282 = vld [vmem:[%s3 + $0xe8] sm:$0xf]
      %v1283 = vld [vmem:[%s3 + $0xec] sm:$0xf]
      %v1284 = vld [vmem:[%s3 + $0xf0] sm:$0xf]
      %v1285 = vld [vmem:[%s3 + $0xf4] sm:$0xf]
      %v1286 = vld [vmem:[%s3 + $0xf8] sm:$0xf]
      %v1287 = vld [vmem:[%s3 + $0xfc] sm:$0xf]
      %v1288 = vld [vmem:[%s3 + $0x100] sm:$0xf]
      %v1289 = vld [vmem:[%s3 + $0x104] sm:$0xf]
      %v1290 = vld [vmem:[%s3 + $0x108] sm:$0xf]
      %v1291 = vld [vmem:[%s3 + $0x10c] sm:$0xf]
      %v1292 = vld [vmem:[%s3 + $0x110] sm:$0xf]
      %v1293 = vld [vmem:[%s3 + $0x114] sm:$0xf]
      %v1294 = vld [vmem:[%s3 + $0x118] sm:$0xf]
      %v1295 = vld [vmem:[%s3 + $0x11c] sm:$0xf]
      %v1296 = vld [vmem:[%s3 + $0x120] sm:$0xf]
      %v1297 = vld [vmem:[%s3 + $0x124] sm:$0xf]
      %v1298 = vld [vmem:[%s3 + $0x128] sm:$0xf]
      %v1299 = vld [vmem:[%s3 + $0x12c] sm:$0xf]
      %v1300 = vld [vmem:[%s3 + $0x130] sm:$0xf]
      %v1301 = vld [vmem:[%s3 + $0x134] sm:$0xf]
      %v1302 = vld [vmem:[%s3 + $0x138] sm:$0xf]
      %v1303 = vld [vmem:[%s3 + $0x13c] sm:$0xf]
      %v1304 = vld [vmem:[%s3 + $0x140] sm:$0xf]
      %v1305 = vld [vmem:[%s3 + $0x144] sm:$0xf]
      %v1306 = vld [vmem:[%s3 + $0x148] sm:$0xf]
      %v1307 = vld [vmem:[%s3 + $0x14c] sm:$0xf]
      %v1308 = vld [vmem:[%s3 + $0x150] sm:$0xf]
      %v1309 = vld [vmem:[%s3 + $0x154] sm:$0xf]
      %v1310 = vld [vmem:[%s3 + $0x158] sm:$0xf]
      %v1311 = vld [vmem:[%s3 + $0x15c] sm:$0xf]
      %v1312 = vld [vmem:[%s3 + $0x160] sm:$0xf]
      %v1313 = vld [vmem:[%s3 + $0x164] sm:$0xf]
      %v1314 = vld [vmem:[%s3 + $0x168] sm:$0xf]
      %v1315 = vld [vmem:[%s3 + $0x16c] sm:$0xf]
      %v1316 = vld [vmem:[%s3 + $0x170] sm:$0xf]
      %v1317 = vld [vmem:[%s3 + $0x174] sm:$0xf]
      %v1318 = vld [vmem:[%s3 + $0x178] sm:$0xf]
      %v1319 = vld [vmem:[%s3 + $0x17c] sm:$0xf]
      %v1320 = vld [vmem:[%s3 + $0x180] sm:$0xf]
      %v1321 = vld [vmem:[%s3 + $0x184] sm:$0xf]
      %v1322 = vld [vmem:[%s3 + $0x188] sm:$0xf]
      %v1323 = vld [vmem:[%s3 + $0x18c] sm:$0xf]
      %v1324 = vld [vmem:[%s3 + $0x190] sm:$0xf]
      %v1325 = vld [vmem:[%s3 + $0x194] sm:$0xf]
      %v1326 = vld [vmem:[%s3 + $0x198] sm:$0xf]
      %v1327 = vld [vmem:[%s3 + $0x19c] sm:$0xf]
      %v1328 = vld [vmem:[%s3 + $0x1a0] sm:$0xf]
      %v1329 = vld [vmem:[%s3 + $0x1a4] sm:$0xf]
      %v1330 = vld [vmem:[%s3 + $0x1a8] sm:$0xf]
      %v1331 = vld [vmem:[%s3 + $0x1ac] sm:$0xf]
      %v1332 = vld [vmem:[%s3 + $0x1b0] sm:$0xf]
      %v1333 = vld [vmem:[%s3 + $0x1b4] sm:$0xf]
      %v1334 = vld [vmem:[%s3 + $0x1b8] sm:$0xf]
      %v1335 = vld [vmem:[%s3 + $0x1bc] sm:$0xf]
      %v1336 = vld [vmem:[%s3 + $0x1c0] sm:$0xf]
      %v1337 = vld [vmem:[%s3 + $0x1c4] sm:$0xf]
      %v1338 = vld [vmem:[%s3 + $0x1c8] sm:$0xf]
      %v1339 = vld [vmem:[%s3 + $0x1cc] sm:$0xf]
      %v1340 = vld [vmem:[%s3 + $0x1d0] sm:$0xf]
      %v1341 = vld [vmem:[%s3 + $0x1d4] sm:$0xf]
      %v1342 = vld [vmem:[%s3 + $0x1d8] sm:$0xf]
      %v1343 = vld [vmem:[%s3 + $0x1dc] sm:$0xf]
      %v1344 = vld [vmem:[%s3 + $0x1e0] sm:$0xf]
      %v1345 = vld [vmem:[%s3 + $0x1e4] sm:$0xf]
      %v1346 = vld [vmem:[%s3 + $0x1e8] sm:$0xf]
      %v1347 = vld [vmem:[%s3 + $0x1ec] sm:$0xf]
      %v1348 = vld [vmem:[%s3 + $0x1f0] sm:$0xf]
      %v1349 = vld [vmem:[%s3 + $0x1f4] sm:$0xf]
      %v1350 = vld [vmem:[%s3 + $0x1f8] sm:$0xf]
      %v1351 = vld [vmem:[%s3 + $0x1fc] sm:$0xf]
      %v1352 = vld [vmem:[%s3 + $0x200] sm:$0xf]
      %v1353 = vld [vmem:[%s3 + $0x204] sm:$0xf]
      %v1354 = vld [vmem:[%s3 + $0x208] sm:$0xf]
      %v1355 = vld [vmem:[%s3 + $0x20c] sm:$0xf]
      %v1356 = vld [vmem:[%s3 + $0x210] sm:$0xf]
      %v1357 = vld [vmem:[%s3 + $0x214] sm:$0xf]
      %v1358 = vld [vmem:[%s3 + $0x218] sm:$0xf]
      %v1359 = vld [vmem:[%s3 + $0x21c] sm:$0xf]
      %v1360 = vld [vmem:[%s3 + $0x220] sm:$0xf]
      %v1361 = vld [vmem:[%s3 + $0x224] sm:$0xf]
      %v1362 = vld [vmem:[%s3 + $0x228] sm:$0xf]
      %v1363 = vld [vmem:[%s3 + $0x22c] sm:$0xf]
      %v1364 = vld [vmem:[%s3 + $0x230] sm:$0xf]
      %v1365 = vld [vmem:[%s3 + $0x234] sm:$0xf]
      %v1366 = vld [vmem:[%s3 + $0x238] sm:$0xf]
      %v1367 = vld [vmem:[%s3 + $0x23c] sm:$0xf]
      %v1368 = vld [vmem:[%s239] sm:$0xf]
      %v1369 = vld [vmem:[%s239 + $0x4] sm:$0xf]
      %v1370 = vld [vmem:[%s239 + $0x8] sm:$0xf]
      %v1371 = vld [vmem:[%s239 + $0xc] sm:$0xf]
      %v1372 = vld [vmem:[%s239 + $0x10] sm:$0xf]
      %v1373 = vld [vmem:[%s239 + $0x14] sm:$0xf]
      %v1374 = vld [vmem:[%s239 + $0x18] sm:$0xf]
      %v1375 = vld [vmem:[%s239 + $0x1c] sm:$0xf]
      %v1376 = vld [vmem:[%s239 + $0x20] sm:$0xf]
      %v1377 = vld [vmem:[%s239 + $0x24] sm:$0xf]
      %v1378 = vld [vmem:[%s239 + $0x28] sm:$0xf]
      %v1379 = vld [vmem:[%s239 + $0x2c] sm:$0xf]
      %v1380 = vld [vmem:[%s239 + $0x30] sm:$0xf]
      %v1381 = vld [vmem:[%s239 + $0x34] sm:$0xf]
      %v1382 = vld [vmem:[%s239 + $0x38] sm:$0xf]
      %v1383 = vld [vmem:[%s239 + $0x3c] sm:$0xf]
      %v1384 = vld [vmem:[%s239 + $0x40] sm:$0xf]
      %v1385 = vld [vmem:[%s239 + $0x44] sm:$0xf]
      %v1386 = vld [vmem:[%s239 + $0x48] sm:$0xf]
      %v1387 = vld [vmem:[%s239 + $0x4c] sm:$0xf]
      %v1388 = vld [vmem:[%s239 + $0x50] sm:$0xf]
      %v1389 = vld [vmem:[%s239 + $0x54] sm:$0xf]
      %v1390 = vld [vmem:[%s239 + $0x58] sm:$0xf]
      %v1391 = vld [vmem:[%s239 + $0x5c] sm:$0xf]
      %v1392 = vld [vmem:[%s239 + $0x60] sm:$0xf]
      %v1393 = vld [vmem:[%s239 + $0x64] sm:$0xf]
      %v1394 = vld [vmem:[%s239 + $0x68] sm:$0xf]
      %v1395 = vld [vmem:[%s239 + $0x6c] sm:$0xf]
      %v1396 = vld [vmem:[%s239 + $0x70] sm:$0xf]
      %v1397 = vld [vmem:[%s239 + $0x74] sm:$0xf]
      %v1398 = vld [vmem:[%s239 + $0x78] sm:$0xf]
      %v1399 = vld [vmem:[%s239 + $0x7c] sm:$0xf]
      %v1400 = vunpack.c.l.bf16 %v1368
      %v1401 = vunpack.c.l.bf16 %v1369
      %v1402 = vunpack.c.l.bf16 %v1370
      %v1403 = vunpack.c.l.bf16 %v1371
      %v1404 = vunpack.c.l.bf16 %v1372
      %v1405 = vunpack.c.l.bf16 %v1373
      %v1406 = vunpack.c.l.bf16 %v1374
      %v1407 = vunpack.c.l.bf16 %v1375
      %v1408 = vunpack.c.l.bf16 %v1376
      %v1409 = vunpack.c.l.bf16 %v1377
      %v1410 = vunpack.c.l.bf16 %v1378
      %v1411 = vunpack.c.l.bf16 %v1379
      %v1412 = vunpack.c.l.bf16 %v1380
      %v1413 = vunpack.c.l.bf16 %v1381
      %v1414 = vunpack.c.l.bf16 %v1382
      %v1415 = vunpack.c.l.bf16 %v1383
      %v1416 = vunpack.c.l.bf16 %v1384
      %v1417 = vunpack.c.l.bf16 %v1385
      %v1418 = vunpack.c.l.bf16 %v1386
      %v1419 = vunpack.c.l.bf16 %v1387
      %v1420 = vunpack.c.l.bf16 %v1388
      %v1421 = vunpack.c.l.bf16 %v1389
      %v1422 = vunpack.c.l.bf16 %v1390
      %v1423 = vunpack.c.l.bf16 %v1391
      %v1424 = vunpack.c.l.bf16 %v1392
      %v1425 = vunpack.c.l.bf16 %v1393
      %v1426 = vunpack.c.l.bf16 %v1394
      %v1427 = vunpack.c.l.bf16 %v1395
      %v1428 = vunpack.c.l.bf16 %v1396
      %v1429 = vunpack.c.l.bf16 %v1397
      %v1430 = vunpack.c.l.bf16 %v1398
      %v1431 = vunpack.c.l.bf16 %v1399
      %v1576 = vunpack.c.l.b16 %v1224
      %v1577 = vunpack.c.l.b16 %v1225
      %v1578 = vunpack.c.l.b16 %v1226
      %v1579 = vunpack.c.l.b16 %v1227
      %v1580 = vunpack.c.l.b16 %v1228
      %v1581 = vunpack.c.l.b16 %v1229
      %v1582 = vunpack.c.l.b16 %v1230
      %v1583 = vunpack.c.l.b16 %v1231
      %v1584 = vunpack.c.l.b16 %v1232
      %v1585 = vunpack.c.l.b16 %v1233
      %v1586 = vunpack.c.l.b16 %v1234
      %v1587 = vunpack.c.l.b16 %v1235
      %v1588 = vunpack.c.l.b16 %v1236
      %v1589 = vunpack.c.l.b16 %v1237
      %v1590 = vunpack.c.l.b16 %v1238
      %v1591 = vunpack.c.l.b16 %v1239
      %v1592 = vunpack.c.l.b16 %v1240
      %v1593 = vunpack.c.l.b16 %v1241
      %v1594 = vunpack.c.l.b16 %v1242
      %v1595 = vunpack.c.l.b16 %v1243
      %v1596 = vunpack.c.l.b16 %v1244
      %v1597 = vunpack.c.l.b16 %v1245
      %v1598 = vunpack.c.l.b16 %v1246
      %v1599 = vunpack.c.l.b16 %v1247
      %v1600 = vunpack.c.l.b16 %v1248
      %v1601 = vunpack.c.l.b16 %v1249
      %v1602 = vunpack.c.l.b16 %v1250
      %v1603 = vunpack.c.l.b16 %v1251
      %v1604 = vunpack.c.l.b16 %v1252
      %v1605 = vunpack.c.l.b16 %v1253
      %v1606 = vunpack.c.l.b16 %v1254
      %v1607 = vunpack.c.l.b16 %v1255
      %v1608 = vunpack.c.l.b16 %v1256
      %v1609 = vunpack.c.l.b16 %v1257
      %v1610 = vunpack.c.l.b16 %v1258
      %v1611 = vunpack.c.l.b16 %v1259
      %v1612 = vunpack.c.l.b16 %v1260
      %v1613 = vunpack.c.l.b16 %v1261
      %v1614 = vunpack.c.l.b16 %v1262
      %v1615 = vunpack.c.l.b16 %v1263
      %v1616 = vunpack.c.l.b16 %v1264
      %v1617 = vunpack.c.l.b16 %v1265
      %v1618 = vunpack.c.l.b16 %v1266
      %v1619 = vunpack.c.l.b16 %v1267
      %v1620 = vunpack.c.l.b16 %v1268
      %v1621 = vunpack.c.l.b16 %v1269
      %v1622 = vunpack.c.l.b16 %v1270
      %v1623 = vunpack.c.l.b16 %v1271
      %v1624 = vunpack.c.l.b16 %v1272
      %v1625 = vunpack.c.l.b16 %v1273
      %v1626 = vunpack.c.l.b16 %v1274
      %v1627 = vunpack.c.l.b16 %v1275
      %v1628 = vunpack.c.l.b16 %v1276
      %v1629 = vunpack.c.l.b16 %v1277
      %v1630 = vunpack.c.l.b16 %v1278
      %v1631 = vunpack.c.l.b16 %v1279
      %v1632 = vunpack.c.l.b16 %v1280
      %v1633 = vunpack.c.l.b16 %v1281
      %v1634 = vunpack.c.l.b16 %v1282
      %v1635 = vunpack.c.l.b16 %v1283
      %v1636 = vunpack.c.l.b16 %v1284
      %v1637 = vunpack.c.l.b16 %v1285
      %v1638 = vunpack.c.l.b16 %v1286
      %v1639 = vunpack.c.l.b16 %v1287
      %v1640 = vunpack.c.l.b16 %v1288
      %v1641 = vunpack.c.l.b16 %v1289
      %v1642 = vunpack.c.l.b16 %v1290
      %v1643 = vunpack.c.l.b16 %v1291
      %v1644 = vunpack.c.l.b16 %v1292
      %v1645 = vunpack.c.l.b16 %v1293
      %v1646 = vunpack.c.l.b16 %v1294
      %v1647 = vunpack.c.l.b16 %v1295
      %v1648 = vunpack.c.l.b16 %v1296
      %v1649 = vunpack.c.l.b16 %v1297
      %v1650 = vunpack.c.l.b16 %v1298
      %v1651 = vunpack.c.l.b16 %v1299
      %v1652 = vunpack.c.l.b16 %v1300
      %v1653 = vunpack.c.l.b16 %v1301
      %v1654 = vunpack.c.l.b16 %v1302
      %v1655 = vunpack.c.l.b16 %v1303
      %v1656 = vunpack.c.l.b16 %v1304
      %v1657 = vunpack.c.l.b16 %v1305
      %v1658 = vunpack.c.l.b16 %v1306
      %v1659 = vunpack.c.l.b16 %v1307
      %v1660 = vunpack.c.l.b16 %v1308
      %v1661 = vunpack.c.l.b16 %v1309
      %v1662 = vunpack.c.l.b16 %v1310
      %v1663 = vunpack.c.l.b16 %v1311
      %v1664 = vunpack.c.l.b16 %v1312
      %v1665 = vunpack.c.l.b16 %v1313
      %v1666 = vunpack.c.l.b16 %v1314
      %v1667 = vunpack.c.l.b16 %v1315
      %v1668 = vunpack.c.l.b16 %v1316
      %v1669 = vunpack.c.l.b16 %v1317
      %v1670 = vunpack.c.l.b16 %v1318
      %v1671 = vunpack.c.l.b16 %v1319
      %v1672 = vunpack.c.l.b16 %v1320
      %v1673 = vunpack.c.l.b16 %v1321
      %v1674 = vunpack.c.l.b16 %v1322
      %v1675 = vunpack.c.l.b16 %v1323
      %v1676 = vunpack.c.l.b16 %v1324
      %v1677 = vunpack.c.l.b16 %v1325
      %v1678 = vunpack.c.l.b16 %v1326
      %v1679 = vunpack.c.l.b16 %v1327
      %v1680 = vunpack.c.l.b16 %v1328
      %v1681 = vunpack.c.l.b16 %v1329
      %v1682 = vunpack.c.l.b16 %v1330
      %v1683 = vunpack.c.l.b16 %v1331
      %v1684 = vunpack.c.l.b16 %v1332
      %v1685 = vunpack.c.l.b16 %v1333
      %v1686 = vunpack.c.l.b16 %v1334
      %v1687 = vunpack.c.l.b16 %v1335
      %v1688 = vunpack.c.l.b16 %v1336
      %v1689 = vunpack.c.l.b16 %v1337
      %v1690 = vunpack.c.l.b16 %v1338
      %v1691 = vunpack.c.l.b16 %v1339
      %v1692 = vunpack.c.l.b16 %v1340
      %v1693 = vunpack.c.l.b16 %v1341
      %v1694 = vunpack.c.l.b16 %v1342
      %v1695 = vunpack.c.l.b16 %v1343
      %v1696 = vunpack.c.l.b16 %v1344
      %v1697 = vunpack.c.l.b16 %v1345
      %v1698 = vunpack.c.l.b16 %v1346
      %v1699 = vunpack.c.l.b16 %v1347
      %v1700 = vunpack.c.l.b16 %v1348
      %v1701 = vunpack.c.l.b16 %v1349
      %v1702 = vunpack.c.l.b16 %v1350
      %v1703 = vunpack.c.l.b16 %v1351
      %v1704 = vunpack.c.l.b16 %v1352
      %v1705 = vunpack.c.l.b16 %v1353
      %v1706 = vunpack.c.l.b16 %v1354
      %v1707 = vunpack.c.l.b16 %v1355
      %v1708 = vunpack.c.l.b16 %v1356
      %v1709 = vunpack.c.l.b16 %v1357
      %v1710 = vunpack.c.l.b16 %v1358
      %v1711 = vunpack.c.l.b16 %v1359
      %v1712 = vunpack.c.l.b16 %v1360
      %v1713 = vunpack.c.l.b16 %v1361
      %v1714 = vunpack.c.l.b16 %v1362
      %v1715 = vunpack.c.l.b16 %v1363
      %v1716 = vunpack.c.l.b16 %v1364
      %v1717 = vunpack.c.l.b16 %v1365
      %v1718 = vunpack.c.l.b16 %v1366
      %v1719 = vunpack.c.l.b16 %v1367
      %v1720 = vpack.c.b16 %v1577, %v1576
      %v1721 = vpack.c.b16 %v1579, %v1578
      %v1722 = vpack.c.b16 %v1581, %v1580
      %v1723 = vpack.c.b16 %v1583, %v1582
      %v1724 = vpack.c.b16 %v1585, %v1584
      %v1725 = vpack.c.b16 %v1587, %v1586
      %v1726 = vpack.c.b16 %v1589, %v1588
      %v1727 = vpack.c.b16 %v1591, %v1590
      %v1728 = vpack.c.b16 %v1593, %v1592
      %v1729 = vpack.c.b16 %v1595, %v1594
      %v1730 = vpack.c.b16 %v1597, %v1596
      %v1731 = vpack.c.b16 %v1599, %v1598
      %v1732 = vpack.c.b16 %v1601, %v1600
      %v1733 = vpack.c.b16 %v1603, %v1602
      %v1734 = vpack.c.b16 %v1605, %v1604
      %v1735 = vpack.c.b16 %v1607, %v1606
      %v1736 = vpack.c.b16 %v1609, %v1608
      %v1737 = vpack.c.b16 %v1611, %v1610
      %v1738 = vpack.c.b16 %v1613, %v1612
      %v1739 = vpack.c.b16 %v1615, %v1614
      %v1740 = vpack.c.b16 %v1617, %v1616
      %v1741 = vpack.c.b16 %v1619, %v1618
      %v1742 = vpack.c.b16 %v1621, %v1620
      %v1743 = vpack.c.b16 %v1623, %v1622
      %v1744 = vpack.c.b16 %v1625, %v1624
      %v1745 = vpack.c.b16 %v1627, %v1626
      %v1746 = vpack.c.b16 %v1629, %v1628
      %v1747 = vpack.c.b16 %v1631, %v1630
      %v1748 = vpack.c.b16 %v1633, %v1632
      %v1749 = vpack.c.b16 %v1635, %v1634
      %v1750 = vpack.c.b16 %v1637, %v1636
      %v1751 = vpack.c.b16 %v1639, %v1638
      %v1752 = vpack.c.b16 %v1641, %v1640
      %v1753 = vpack.c.b16 %v1643, %v1642
      %v1754 = vpack.c.b16 %v1645, %v1644
      %v1755 = vpack.c.b16 %v1647, %v1646
      %v1756 = vpack.c.b16 %v1649, %v1648
      %v1757 = vpack.c.b16 %v1651, %v1650
      %v1758 = vpack.c.b16 %v1653, %v1652
      %v1759 = vpack.c.b16 %v1655, %v1654
      %v1760 = vpack.c.b16 %v1657, %v1656
      %v1761 = vpack.c.b16 %v1659, %v1658
      %v1762 = vpack.c.b16 %v1661, %v1660
      %v1763 = vpack.c.b16 %v1663, %v1662
      %v1764 = vpack.c.b16 %v1665, %v1664
      %v1765 = vpack.c.b16 %v1667, %v1666
      %v1766 = vpack.c.b16 %v1669, %v1668
      %v1767 = vpack.c.b16 %v1671, %v1670
      %v1768 = vpack.c.b16 %v1673, %v1672
      %v1769 = vpack.c.b16 %v1675, %v1674
      %v1770 = vpack.c.b16 %v1677, %v1676
      %v1771 = vpack.c.b16 %v1679, %v1678
      %v1772 = vpack.c.b16 %v1681, %v1680
      %v1773 = vpack.c.b16 %v1683, %v1682
      %v1774 = vpack.c.b16 %v1685, %v1684
      %v1775 = vpack.c.b16 %v1687, %v1686
      %v1776 = vpack.c.b16 %v1689, %v1688
      %v1777 = vpack.c.b16 %v1691, %v1690
      %v1778 = vpack.c.b16 %v1693, %v1692
      %v1779 = vpack.c.b16 %v1695, %v1694
      %v1780 = vpack.c.b16 %v1697, %v1696
      %v1781 = vpack.c.b16 %v1699, %v1698
      %v1782 = vpack.c.b16 %v1701, %v1700
      %v1783 = vpack.c.b16 %v1703, %v1702
      %v1784 = vpack.c.b16 %v1705, %v1704
      %v1785 = vpack.c.b16 %v1707, %v1706
      %v1786 = vpack.c.b16 %v1709, %v1708
      %v1787 = vpack.c.b16 %v1711, %v1710
      %v1788 = vpack.c.b16 %v1713, %v1712
      %v1789 = vpack.c.b16 %v1715, %v1714
      %v1790 = vpack.c.b16 %v1717, %v1716
      %v1791 = vpack.c.b16 %v1719, %v1718
      %1864 = vmatprep.subr.bf16.mxu0 0
      %1865 = vmatpush1.bf16.msra.mxu0 %v1720
      %1866 = vmatprep.subr.bf16.mxu0 0
      %1867 = vmatpush1.bf16.msra.mxu0 %v1721
      %1868 = vmatprep.subr.bf16.mxu0 0
      %1869 = vmatpush1.bf16.msra.mxu0 %v1722
      %1870 = vmatprep.subr.bf16.mxu0 0
      %1871 = vmatpush1.bf16.msra.mxu0 %v1723
      %1872 = vmatprep.subr.bf16.mxu0 0
      %1873 = vmatpush1.bf16.msra.mxu0 %v1724
      %1874 = vmatprep.subr.bf16.mxu0 0
      %1875 = vmatpush1.bf16.msra.mxu0 %v1725
      %1876 = vmatprep.subr.bf16.mxu0 0
      %1877 = vmatpush1.bf16.msra.mxu0 %v1726
      %1878 = vmatprep.subr.bf16.mxu0 0
      %1879 = vmatpush1.bf16.msra.mxu0 %v1727
      %1880 = vmatprep.subr.bf16.mxu0 0
      %1881 = vmatpush1.bf16.msra.mxu0 %v1728
      %1882 = vmatprep.subr.bf16.mxu0 0
      %1883 = vmatpush1.bf16.msra.mxu0 %v1729
      %1884 = vmatprep.subr.bf16.mxu0 0
      %1885 = vmatpush1.bf16.msra.mxu0 %v1730
      %1886 = vmatprep.subr.bf16.mxu0 0
      %1887 = vmatpush1.bf16.msra.mxu0 %v1731
      %1888 = vmatprep.subr.bf16.mxu0 0
      %1889 = vmatpush1.bf16.msra.mxu0 %v1732
      %1890 = vmatprep.subr.bf16.mxu0 0
      %1891 = vmatpush1.bf16.msra.mxu0 %v1733
      %1892 = vmatprep.subr.bf16.mxu0 0
      %1893 = vmatpush1.bf16.msra.mxu0 %v1734
      %1894 = vmatprep.subr.bf16.mxu0 0
      %1895 = vmatpush1.bf16.msra.mxu0 %v1735
      %1896 = vmatprep.mubr.bf16.mxu0 %v1081
      %1897 = vmatmul.mubr.bf16.gmra.mrb[0].mxu0 %v1080
      %v1898 = vpop.f32.mrb[0].mxu0
      %v1899 = vadd.f32 %v1400, %v1898
      %v1900 = vpop.f32.mrb[0].mxu0
      %v1901 = vpop.f32.mrb[0].mxu0
      %v1902 = vadd.f32 %v1401, %v1901
      %v1903 = vpop.f32.mrb[0].mxu0
      %1904 = vmatprep.mubr.bf16.mxu0 %v1090
      %1905 = vmatmul.mubr.bf16.gmra.mrb[0].mxu0 %v1089
      %v1906 = vpop.f32.mrb[0].mxu0
      %v1907 = vadd.f32 %v1402, %v1906
      %v1908 = vpop.f32.mrb[0].mxu0
      %v1909 = vpop.f32.mrb[0].mxu0
      %v1910 = vadd.f32 %v1403, %v1909
      %v1911 = vpop.f32.mrb[0].mxu0
      %1912 = vmatprep.mubr.bf16.mxu0 %v1099
      %1913 = vmatmul.mubr.bf16.gmra.mrb[0].mxu0 %v1098
      %v1914 = vpop.f32.mrb[0].mxu0
      %v1915 = vadd.f32 %v1404, %v1914
      %v1916 = vpop.f32.mrb[0].mxu0
      %v1917 = vpop.f32.mrb[0].mxu0
      %v1918 = vadd.f32 %v1405, %v1917
      %v1919 = vpop.f32.mrb[0].mxu0
      %1920 = vmatprep.mubr.bf16.mxu0 %v1108
      %1921 = vmatmul.mubr.bf16.gmra.mrb[0].mxu0 %v1107
      %v1922 = vpop.f32.mrb[0].mxu0
      %v1923 = vadd.f32 %v1406, %v1922
      %v1924 = vpop.f32.mrb[0].mxu0
      %v1925 = vpop.f32.mrb[0].mxu0
      %v1926 = vadd.f32 %v1407, %v1925
      %v1927 = vpop.f32.mrb[0].mxu0
      %1928 = vmatprep.mubr.bf16.mxu0 %v1117
      %1929 = vmatmul.mubr.bf16.gmra.mrb[0].mxu0 %v1116
      %v1930 = vpop.f32.mrb[0].mxu0
      %v1931 = vadd.f32 %v1408, %v1930
      %v1932 = vpop.f32.mrb[0].mxu0
      %v1933 = vpop.f32.mrb[0].mxu0
      %v1934 = vadd.f32 %v1409, %v1933
      %v1935 = vpop.f32.mrb[0].mxu0
      %1936 = vmatprep.mubr.bf16.mxu0 %v1126
      %1937 = vmatmul.mubr.bf16.gmra.mrb[0].mxu0 %v1125
      %v1938 = vpop.f32.mrb[0].mxu0
      %v1939 = vadd.f32 %v1410, %v1938
      %v1940 = vpop.f32.mrb[0].mxu0
      %v1941 = vpop.f32.mrb[0].mxu0
      %v1942 = vadd.f32 %v1411, %v1941
      %v1943 = vpop.f32.mrb[0].mxu0
      %1944 = vmatprep.mubr.bf16.mxu0 %v1135
      %1945 = vmatmul.mubr.bf16.gmra.mrb[0].mxu0 %v1134
      %v1946 = vpop.f32.mrb[0].mxu0
      %v1947 = vadd.f32 %v1412, %v1946
      %v1948 = vpop.f32.mrb[0].mxu0
      %v1949 = vpop.f32.mrb[0].mxu0
      %v1950 = vadd.f32 %v1413, %v1949
      %v1951 = vpop.f32.mrb[0].mxu0
      %1952 = vmatprep.mubr.bf16.mxu0 %v1144
      %1953 = vmatmul.mubr.bf16.gmra.mrb[0].mxu0 %v1143
      %v1954 = vpop.f32.mrb[0].mxu0
      %v1955 = vadd.f32 %v1414, %v1954
      %v1956 = vpop.f32.mrb[0].mxu0
      %v1957 = vpop.f32.mrb[0].mxu0
      %v1958 = vadd.f32 %v1415, %v1957
      %v1959 = vpop.f32.mrb[0].mxu0
      %1960 = vmatprep.mubr.bf16.mxu0 %v1153
      %1961 = vmatmul.mubr.bf16.gmra.mrb[0].mxu0 %v1152
      %v1962 = vpop.f32.mrb[0].mxu0
      %v1963 = vadd.f32 %v1416, %v1962
      %v1964 = vpop.f32.mrb[0].mxu0
      %v1965 = vpop.f32.mrb[0].mxu0
      %v1966 = vadd.f32 %v1417, %v1965
      %v1967 = vpop.f32.mrb[0].mxu0
      %1968 = vmatprep.mubr.bf16.mxu0 %v1162
      %1969 = vmatmul.mubr.bf16.gmra.mrb[0].mxu0 %v1161
      %v1970 = vpop.f32.mrb[0].mxu0
      %v1971 = vadd.f32 %v1418, %v1970
      %v1972 = vpop.f32.mrb[0].mxu0
      %v1973 = vpop.f32.mrb[0].mxu0
      %v1974 = vadd.f32 %v1419, %v1973
      %v1975 = vpop.f32.mrb[0].mxu0
      %1976 = vmatprep.mubr.bf16.mxu0 %v1171
      %1977 = vmatmul.mubr.bf16.gmra.mrb[0].mxu0 %v1170
      %v1978 = vpop.f32.mrb[0].mxu0
      %v1979 = vadd.f32 %v1420, %v1978
      %v1980 = vpop.f32.mrb[0].mxu0
      %v1981 = vpop.f32.mrb[0].mxu0
      %v1982 = vadd.f32 %v1421, %v1981
      %v1983 = vpop.f32.mrb[0].mxu0
      %1984 = vmatprep.mubr.bf16.mxu0 %v1180
      %1985 = vmatmul.mubr.bf16.gmra.mrb[0].mxu0 %v1179
      %v1986 = vpop.f32.mrb[0].mxu0
      %v1987 = vadd.f32 %v1422, %v1986
      %v1988 = vpop.f32.mrb[0].mxu0
      %v1989 = vpop.f32.mrb[0].mxu0
      %v1990 = vadd.f32 %v1423, %v1989
      %v1991 = vpop.f32.mrb[0].mxu0
      %1992 = vmatprep.mubr.bf16.mxu0 %v1189
      %1993 = vmatmul.mubr.bf16.gmra.mrb[0].mxu0 %v1188
      %v1994 = vpop.f32.mrb[0].mxu0
      %v1995 = vadd.f32 %v1424, %v1994
      %v1996 = vpop.f32.mrb[0].mxu0
      %v1997 = vpop.f32.mrb[0].mxu0
      %v1998 = vadd.f32 %v1425, %v1997
      %v1999 = vpop.f32.mrb[0].mxu0
      %2000 = vmatprep.mubr.bf16.mxu0 %v1198
      %2001 = vmatmul.mubr.bf16.gmra.mrb[0].mxu0 %v1197
      %v2002 = vpop.f32.mrb[0].mxu0
      %v2003 = vadd.f32 %v1426, %v2002
      %v2004 = vpop.f32.mrb[0].mxu0
      %v2005 = vpop.f32.mrb[0].mxu0
      %v2006 = vadd.f32 %v1427, %v2005
      %v2007 = vpop.f32.mrb[0].mxu0
      %2008 = vmatprep.mubr.bf16.mxu0 %v1207
      %2009 = vmatmul.mubr.bf16.gmra.mrb[0].mxu0 %v1206
      %v2010 = vpop.f32.mrb[0].mxu0
      %v2011 = vadd.f32 %v1428, %v2010
      %v2012 = vpop.f32.mrb[0].mxu0
      %v2013 = vpop.f32.mrb[0].mxu0
      %v2014 = vadd.f32 %v1429, %v2013
      %v2015 = vpop.f32.mrb[0].mxu0
      %2016 = vmatprep.mubr.bf16.mxu0 %v1216
      %2017 = vmatmul.mubr.bf16.gmra.mrb[0].mxu0 %v1215
      %v2018 = vpop.f32.mrb[0].mxu0
      %v2019 = vadd.f32 %v1430, %v2018
      %v2020 = vpop.f32.mrb[0].mxu0
      %v2021 = vpop.f32.mrb[0].mxu0
      %v2022 = vadd.f32 %v1431, %v2021
      %v2023 = vpop.f32.mrb[0].mxu0
      %2024 = vdwg.mxu0
      %2025 = vmatprep.subr.bf16.mxu0 0
      %2026 = vmatpush1.bf16.msra.mxu0 %v1736
      %2027 = vmatprep.subr.bf16.mxu0 0
      %2028 = vmatpush1.bf16.msra.mxu0 %v1737
      %2029 = vmatprep.subr.bf16.mxu0 0
      %2030 = vmatpush1.bf16.msra.mxu0 %v1738
      %2031 = vmatprep.subr.bf16.mxu0 0
      %2032 = vmatpush1.bf16.msra.mxu0 %v1739
      %2033 = vmatprep.subr.bf16.mxu0 0
      %2034 = vmatpush1.bf16.msra.mxu0 %v1740
      %2035 = vmatprep.subr.bf16.mxu0 0
      %2036 = vmatpush1.bf16.msra.mxu0 %v1741
      %2037 = vmatprep.subr.bf16.mxu0 0
      %2038 = vmatpush1.bf16.msra.mxu0 %v1742
      %2039 = vmatprep.subr.bf16.mxu0 0
      %2040 = vmatpush1.bf16.msra.mxu0 %v1743
      %2041 = vmatprep.subr.bf16.mxu0 0
      %2042 = vmatpush1.bf16.msra.mxu0 %v1744
      %2043 = vmatprep.subr.bf16.mxu0 0
      %2044 = vmatpush1.bf16.msra.mxu0 %v1745
      %2045 = vmatprep.subr.bf16.mxu0 0
      %2046 = vmatpush1.bf16.msra.mxu0 %v1746
      %2047 = vmatprep.subr.bf16.mxu0 0
      %2048 = vmatpush1.bf16.msra.mxu0 %v1747
      %2049 = vmatprep.subr.bf16.mxu0 0
      %2050 = vmatpush1.bf16.msra.mxu0 %v1748
      %2051 = vmatprep.subr.bf16.mxu0 0
      %2052 = vmatpush1.bf16.msra.mxu0 %v1749
      %2053 = vmatprep.subr.bf16.mxu0 0
      %2054 = vmatpush1.bf16.msra.mxu0 %v1750
      %2055 = vmatprep.subr.bf16.mxu0 0
      %2056 = vmatpush1.bf16.msra.mxu0 %v1751
      %2057 = vmatprep.mubr.bf16.mxu0 %v1083
      %2058 = vmatmul.mubr.bf16.gmra.mrb[0].mxu0 %v1082
      %v2059 = vpop.f32.mrb[0].mxu0
      %v2060 = vadd.f32 %v1899, %v2059
      %v2061 = vpop.f32.mrb[0].mxu0
      %v2062 = vpop.f32.mrb[0].mxu0
      %v2063 = vadd.f32 %v1902, %v2062
      %v2064 = vpop.f32.mrb[0].mxu0
      %2065 = vmatprep.mubr.bf16.mxu0 %v1092
      %2066 = vmatmul.mubr.bf16.gmra.mrb[0].mxu0 %v1091
      %v2067 = vpop.f32.mrb[0].mxu0
      %v2068 = vadd.f32 %v1907, %v2067
      %v2069 = vpop.f32.mrb[0].mxu0
      %v2070 = vpop.f32.mrb[0].mxu0
      %v2071 = vadd.f32 %v1910, %v2070
      %v2072 = vpop.f32.mrb[0].mxu0
      %2073 = vmatprep.mubr.bf16.mxu0 %v1101
      %2074 = vmatmul.mubr.bf16.gmra.mrb[0].mxu0 %v1100
      %v2075 = vpop.f32.mrb[0].mxu0
      %v2076 = vadd.f32 %v1915, %v2075
      %v2077 = vpop.f32.mrb[0].mxu0
      %v2078 = vpop.f32.mrb[0].mxu0
      %v2079 = vadd.f32 %v1918, %v2078
      %v2080 = vpop.f32.mrb[0].mxu0
      %2081 = vmatprep.mubr.bf16.mxu0 %v1110
      %2082 = vmatmul.mubr.bf16.gmra.mrb[0].mxu0 %v1109
      %v2083 = vpop.f32.mrb[0].mxu0
      %v2084 = vadd.f32 %v1923, %v2083
      %v2085 = vpop.f32.mrb[0].mxu0
      %v2086 = vpop.f32.mrb[0].mxu0
      %v2087 = vadd.f32 %v1926, %v2086
      %v2088 = vpop.f32.mrb[0].mxu0
      %2089 = vmatprep.mubr.bf16.mxu0 %v1119
      %2090 = vmatmul.mubr.bf16.gmra.mrb[0].mxu0 %v1118
      %v2091 = vpop.f32.mrb[0].mxu0
      %v2092 = vadd.f32 %v1931, %v2091
      %v2093 = vpop.f32.mrb[0].mxu0
      %v2094 = vpop.f32.mrb[0].mxu0
      %v2095 = vadd.f32 %v1934, %v2094
      %v2096 = vpop.f32.mrb[0].mxu0
      %2097 = vmatprep.mubr.bf16.mxu0 %v1128
      %2098 = vmatmul.mubr.bf16.gmra.mrb[0].mxu0 %v1127
      %v2099 = vpop.f32.mrb[0].mxu0
      %v2100 = vadd.f32 %v1939, %v2099
      %v2101 = vpop.f32.mrb[0].mxu0
      %v2102 = vpop.f32.mrb[0].mxu0
      %v2103 = vadd.f32 %v1942, %v2102
      %v2104 = vpop.f32.mrb[0].mxu0
      %2105 = vmatprep.mubr.bf16.mxu0 %v1137
      %2106 = vmatmul.mubr.bf16.gmra.mrb[0].mxu0 %v1136
      %v2107 = vpop.f32.mrb[0].mxu0
      %v2108 = vadd.f32 %v1947, %v2107
      %v2109 = vpop.f32.mrb[0].mxu0
      %v2110 = vpop.f32.mrb[0].mxu0
      %v2111 = vadd.f32 %v1950, %v2110
      %v2112 = vpop.f32.mrb[0].mxu0
      %2113 = vmatprep.mubr.bf16.mxu0 %v1146
      %2114 = vmatmul.mubr.bf16.gmra.mrb[0].mxu0 %v1145
      %v2115 = vpop.f32.mrb[0].mxu0
      %v2116 = vadd.f32 %v1955, %v2115
      %v2117 = vpop.f32.mrb[0].mxu0
      %v2118 = vpop.f32.mrb[0].mxu0
      %v2119 = vadd.f32 %v1958, %v2118
      %v2120 = vpop.f32.mrb[0].mxu0
      %2121 = vmatprep.mubr.bf16.mxu0 %v1155
      %2122 = vmatmul.mubr.bf16.gmra.mrb[0].mxu0 %v1154
      %v2123 = vpop.f32.mrb[0].mxu0
      %v2124 = vadd.f32 %v1963, %v2123
      %v2125 = vpop.f32.mrb[0].mxu0
      %v2126 = vpop.f32.mrb[0].mxu0
      %v2127 = vadd.f32 %v1966, %v2126
      %v2128 = vpop.f32.mrb[0].mxu0
      %2129 = vmatprep.mubr.bf16.mxu0 %v1164
      %2130 = vmatmul.mubr.bf16.gmra.mrb[0].mxu0 %v1163
      %v2131 = vpop.f32.mrb[0].mxu0
      %v2132 = vadd.f32 %v1971, %v2131
      %v2133 = vpop.f32.mrb[0].mxu0
      %v2134 = vpop.f32.mrb[0].mxu0
      %v2135 = vadd.f32 %v1974, %v2134
      %v2136 = vpop.f32.mrb[0].mxu0
      %2137 = vmatprep.mubr.bf16.mxu0 %v1173
      %2138 = vmatmul.mubr.bf16.gmra.mrb[0].mxu0 %v1172
      %v2139 = vpop.f32.mrb[0].mxu0
      %v2140 = vadd.f32 %v1979, %v2139
      %v2141 = vpop.f32.mrb[0].mxu0
      %v2142 = vpop.f32.mrb[0].mxu0
      %v2143 = vadd.f32 %v1982, %v2142
      %v2144 = vpop.f32.mrb[0].mxu0
      %2145 = vmatprep.mubr.bf16.mxu0 %v1182
      %2146 = vmatmul.mubr.bf16.gmra.mrb[0].mxu0 %v1181
      %v2147 = vpop.f32.mrb[0].mxu0
      %v2148 = vadd.f32 %v1987, %v2147
      %v2149 = vpop.f32.mrb[0].mxu0
      %v2150 = vpop.f32.mrb[0].mxu0
      %v2151 = vadd.f32 %v1990, %v2150
      %v2152 = vpop.f32.mrb[0].mxu0
      %2153 = vmatprep.mubr.bf16.mxu0 %v1191
      %2154 = vmatmul.mubr.bf16.gmra.mrb[0].mxu0 %v1190
      %v2155 = vpop.f32.mrb[0].mxu0
      %v2156 = vadd.f32 %v1995, %v2155
      %v2157 = vpop.f32.mrb[0].mxu0
      %v2158 = vpop.f32.mrb[0].mxu0
      %v2159 = vadd.f32 %v1998, %v2158
      %v2160 = vpop.f32.mrb[0].mxu0
      %2161 = vmatprep.mubr.bf16.mxu0 %v1200
      %2162 = vmatmul.mubr.bf16.gmra.mrb[0].mxu0 %v1199
      %v2163 = vpop.f32.mrb[0].mxu0
      %v2164 = vadd.f32 %v2003, %v2163
      %v2165 = vpop.f32.mrb[0].mxu0
      %v2166 = vpop.f32.mrb[0].mxu0
      %v2167 = vadd.f32 %v2006, %v2166
      %v2168 = vpop.f32.mrb[0].mxu0
      %2169 = vmatprep.mubr.bf16.mxu0 %v1209
      %2170 = vmatmul.mubr.bf16.gmra.mrb[0].mxu0 %v1208
      %v2171 = vpop.f32.mrb[0].mxu0
      %v2172 = vadd.f32 %v2011, %v2171
      %v2173 = vpop.f32.mrb[0].mxu0
      %v2174 = vpop.f32.mrb[0].mxu0
      %v2175 = vadd.f32 %v2014, %v2174
      %v2176 = vpop.f32.mrb[0].mxu0
      %2177 = vmatprep.mubr.bf16.mxu0 %v1218
      %2178 = vmatmul.mubr.bf16.gmra.mrb[0].mxu0 %v1217
      %v2179 = vpop.f32.mrb[0].mxu0
      %v2180 = vadd.f32 %v2019, %v2179
      %v2181 = vpop.f32.mrb[0].mxu0
      %v2182 = vpop.f32.mrb[0].mxu0
      %v2183 = vadd.f32 %v2022, %v2182
      %v2184 = vpop.f32.mrb[0].mxu0
      %2185 = vdwg.mxu0
      %2186 = vmatprep.subr.bf16.mxu0 0
      %2187 = vmatpush1.bf16.msra.mxu0 %v1752
      %2188 = vmatprep.subr.bf16.mxu0 0
      %2189 = vmatpush1.bf16.msra.mxu0 %v1753
      %2190 = vmatprep.subr.bf16.mxu0 0
      %2191 = vmatpush1.bf16.msra.mxu0 %v1754
      %2192 = vmatprep.subr.bf16.mxu0 0
      %2193 = vmatpush1.bf16.msra.mxu0 %v1755
      %2194 = vmatprep.subr.bf16.mxu0 0
      %2195 = vmatpush1.bf16.msra.mxu0 %v1756
      %2196 = vmatprep.subr.bf16.mxu0 0
      %2197 = vmatpush1.bf16.msra.mxu0 %v1757
      %2198 = vmatprep.subr.bf16.mxu0 0
      %2199 = vmatpush1.bf16.msra.mxu0 %v1758
      %2200 = vmatprep.subr.bf16.mxu0 0
      %2201 = vmatpush1.bf16.msra.mxu0 %v1759
      %2202 = vmatprep.subr.bf16.mxu0 0
      %2203 = vmatpush1.bf16.msra.mxu0 %v1760
      %2204 = vmatprep.subr.bf16.mxu0 0
      %2205 = vmatpush1.bf16.msra.mxu0 %v1761
      %2206 = vmatprep.subr.bf16.mxu0 0
      %2207 = vmatpush1.bf16.msra.mxu0 %v1762
      %2208 = vmatprep.subr.bf16.mxu0 0
      %2209 = vmatpush1.bf16.msra.mxu0 %v1763
      %2210 = vmatprep.subr.bf16.mxu0 0
      %2211 = vmatpush1.bf16.msra.mxu0 %v1764
      %2212 = vmatprep.subr.bf16.mxu0 0
      %2213 = vmatpush1.bf16.msra.mxu0 %v1765
      %2214 = vmatprep.subr.bf16.mxu0 0
      %2215 = vmatpush1.bf16.msra.mxu0 %v1766
      %2216 = vmatprep.subr.bf16.mxu0 0
      %2217 = vmatpush1.bf16.msra.mxu0 %v1767
      %2218 = vmatprep.mubr.bf16.mxu0 %v1085
      %2219 = vmatmul.mubr.bf16.gmra.mrb[0].mxu0 %v1084
      %v2220 = vpop.f32.mrb[0].mxu0
      %v2221 = vadd.f32 %v2060, %v2220
      %v2222 = vpop.f32.mrb[0].mxu0
      %v2223 = vpop.f32.mrb[0].mxu0
      %v2224 = vadd.f32 %v2063, %v2223
      %v2225 = vpop.f32.mrb[0].mxu0
      %2226 = vmatprep.mubr.bf16.mxu0 %v1094
      %2227 = vmatmul.mubr.bf16.gmra.mrb[0].mxu0 %v1093
      %v2228 = vpop.f32.mrb[0].mxu0
      %v2229 = vadd.f32 %v2068, %v2228
      %v2230 = vpop.f32.mrb[0].mxu0
      %v2231 = vpop.f32.mrb[0].mxu0
      %v2232 = vadd.f32 %v2071, %v2231
      %v2233 = vpop.f32.mrb[0].mxu0
      %2234 = vmatprep.mubr.bf16.mxu0 %v1103
      %2235 = vmatmul.mubr.bf16.gmra.mrb[0].mxu0 %v1102
      %v2236 = vpop.f32.mrb[0].mxu0
      %v2237 = vadd.f32 %v2076, %v2236
      %v2238 = vpop.f32.mrb[0].mxu0
      %v2239 = vpop.f32.mrb[0].mxu0
      %v2240 = vadd.f32 %v2079, %v2239
      %v2241 = vpop.f32.mrb[0].mxu0
      %2242 = vmatprep.mubr.bf16.mxu0 %v1112
      %2243 = vmatmul.mubr.bf16.gmra.mrb[0].mxu0 %v1111
      %v2244 = vpop.f32.mrb[0].mxu0
      %v2245 = vadd.f32 %v2084, %v2244
      %v2246 = vpop.f32.mrb[0].mxu0
      %v2247 = vpop.f32.mrb[0].mxu0
      %v2248 = vadd.f32 %v2087, %v2247
      %v2249 = vpop.f32.mrb[0].mxu0
      %2250 = vmatprep.mubr.bf16.mxu0 %v1121
      %2251 = vmatmul.mubr.bf16.gmra.mrb[0].mxu0 %v1120
      %v2252 = vpop.f32.mrb[0].mxu0
      %v2253 = vadd.f32 %v2092, %v2252
      %v2254 = vpop.f32.mrb[0].mxu0
      %v2255 = vpop.f32.mrb[0].mxu0
      %v2256 = vadd.f32 %v2095, %v2255
      %v2257 = vpop.f32.mrb[0].mxu0
      %2258 = vmatprep.mubr.bf16.mxu0 %v1130
      %2259 = vmatmul.mubr.bf16.gmra.mrb[0].mxu0 %v1129
      %v2260 = vpop.f32.mrb[0].mxu0
      %v2261 = vadd.f32 %v2100, %v2260
      %v2262 = vpop.f32.mrb[0].mxu0
      %v2263 = vpop.f32.mrb[0].mxu0
      %v2264 = vadd.f32 %v2103, %v2263
      %v2265 = vpop.f32.mrb[0].mxu0
      %2266 = vmatprep.mubr.bf16.mxu0 %v1139
      %2267 = vmatmul.mubr.bf16.gmra.mrb[0].mxu0 %v1138
      %v2268 = vpop.f32.mrb[0].mxu0
      %v2269 = vadd.f32 %v2108, %v2268
      %v2270 = vpop.f32.mrb[0].mxu0
      %v2271 = vpop.f32.mrb[0].mxu0
      %v2272 = vadd.f32 %v2111, %v2271
      %v2273 = vpop.f32.mrb[0].mxu0
      %2274 = vmatprep.mubr.bf16.mxu0 %v1148
      %2275 = vmatmul.mubr.bf16.gmra.mrb[0].mxu0 %v1147
      %v2276 = vpop.f32.mrb[0].mxu0
      %v2277 = vadd.f32 %v2116, %v2276
      %v2278 = vpop.f32.mrb[0].mxu0
      %v2279 = vpop.f32.mrb[0].mxu0
      %v2280 = vadd.f32 %v2119, %v2279
      %v2281 = vpop.f32.mrb[0].mxu0
      %2282 = vmatprep.mubr.bf16.mxu0 %v1157
      %2283 = vmatmul.mubr.bf16.gmra.mrb[0].mxu0 %v1156
      %v2284 = vpop.f32.mrb[0].mxu0
      %v2285 = vadd.f32 %v2124, %v2284
      %v2286 = vpop.f32.mrb[0].mxu0
      %v2287 = vpop.f32.mrb[0].mxu0
      %v2288 = vadd.f32 %v2127, %v2287
      %v2289 = vpop.f32.mrb[0].mxu0
      %2290 = vmatprep.mubr.bf16.mxu0 %v1166
      %2291 = vmatmul.mubr.bf16.gmra.mrb[0].mxu0 %v1165
      %v2292 = vpop.f32.mrb[0].mxu0
      %v2293 = vadd.f32 %v2132, %v2292
      %v2294 = vpop.f32.mrb[0].mxu0
      %v2295 = vpop.f32.mrb[0].mxu0
      %v2296 = vadd.f32 %v2135, %v2295
      %v2297 = vpop.f32.mrb[0].mxu0
      %2298 = vmatprep.mubr.bf16.mxu0 %v1175
      %2299 = vmatmul.mubr.bf16.gmra.mrb[0].mxu0 %v1174
      %v2300 = vpop.f32.mrb[0].mxu0
      %v2301 = vadd.f32 %v2140, %v2300
      %v2302 = vpop.f32.mrb[0].mxu0
      %v2303 = vpop.f32.mrb[0].mxu0
      %v2304 = vadd.f32 %v2143, %v2303
      %v2305 = vpop.f32.mrb[0].mxu0
      %2306 = vmatprep.mubr.bf16.mxu0 %v1184
      %2307 = vmatmul.mubr.bf16.gmra.mrb[0].mxu0 %v1183
      %v2308 = vpop.f32.mrb[0].mxu0
      %v2309 = vadd.f32 %v2148, %v2308
      %v2310 = vpop.f32.mrb[0].mxu0
      %v2311 = vpop.f32.mrb[0].mxu0
      %v2312 = vadd.f32 %v2151, %v2311
      %v2313 = vpop.f32.mrb[0].mxu0
      %2314 = vmatprep.mubr.bf16.mxu0 %v1193
      %2315 = vmatmul.mubr.bf16.gmra.mrb[0].mxu0 %v1192
      %v2316 = vpop.f32.mrb[0].mxu0
      %v2317 = vadd.f32 %v2156, %v2316
      %v2318 = vpop.f32.mrb[0].mxu0
      %v2319 = vpop.f32.mrb[0].mxu0
      %v2320 = vadd.f32 %v2159, %v2319
      %v2321 = vpop.f32.mrb[0].mxu0
      %2322 = vmatprep.mubr.bf16.mxu0 %v1202
      %2323 = vmatmul.mubr.bf16.gmra.mrb[0].mxu0 %v1201
      %v2324 = vpop.f32.mrb[0].mxu0
      %v2325 = vadd.f32 %v2164, %v2324
      %v2326 = vpop.f32.mrb[0].mxu0
      %v2327 = vpop.f32.mrb[0].mxu0
      %v2328 = vadd.f32 %v2167, %v2327
      %v2329 = vpop.f32.mrb[0].mxu0
      %2330 = vmatprep.mubr.bf16.mxu0 %v1211
      %2331 = vmatmul.mubr.bf16.gmra.mrb[0].mxu0 %v1210
      %v2332 = vpop.f32.mrb[0].mxu0
      %v2333 = vadd.f32 %v2172, %v2332
      %v2334 = vpop.f32.mrb[0].mxu0
      %v2335 = vpop.f32.mrb[0].mxu0
      %v2336 = vadd.f32 %v2175, %v2335
      %v2337 = vpop.f32.mrb[0].mxu0
      %2338 = vmatprep.mubr.bf16.mxu0 %v1220
      %2339 = vmatmul.mubr.bf16.gmra.mrb[0].mxu0 %v1219
      %v2340 = vpop.f32.mrb[0].mxu0
      %v2341 = vadd.f32 %v2180, %v2340
      %v2342 = vpop.f32.mrb[0].mxu0
      %v2343 = vpop.f32.mrb[0].mxu0
      %v2344 = vadd.f32 %v2183, %v2343
      %v2345 = vpop.f32.mrb[0].mxu0
      %2346 = vdwg.mxu0
      %2347 = vmatprep.subr.bf16.mxu0 0
      %2348 = vmatpush1.bf16.msra.mxu0 %v1768
      %2349 = vmatprep.subr.bf16.mxu0 0
      %2350 = vmatpush1.bf16.msra.mxu0 %v1769
      %2351 = vmatprep.subr.bf16.mxu0 0
      %2352 = vmatpush1.bf16.msra.mxu0 %v1770
      %2353 = vmatprep.subr.bf16.mxu0 0
      %2354 = vmatpush1.bf16.msra.mxu0 %v1771
      %2355 = vmatprep.subr.bf16.mxu0 0
      %2356 = vmatpush1.bf16.msra.mxu0 %v1772
      %2357 = vmatprep.subr.bf16.mxu0 0
      %2358 = vmatpush1.bf16.msra.mxu0 %v1773
      %2359 = vmatprep.subr.bf16.mxu0 0
      %2360 = vmatpush1.bf16.msra.mxu0 %v1774
      %2361 = vmatprep.subr.bf16.mxu0 0
      %2362 = vmatpush1.bf16.msra.mxu0 %v1775
      %2363 = vmatprep.subr.bf16.mxu0 0
      %2364 = vmatpush1.bf16.msra.mxu0 %v1776
      %2365 = vmatprep.subr.bf16.mxu0 0
      %2366 = vmatpush1.bf16.msra.mxu0 %v1777
      %2367 = vmatprep.subr.bf16.mxu0 0
      %2368 = vmatpush1.bf16.msra.mxu0 %v1778
      %2369 = vmatprep.subr.bf16.mxu0 0
      %2370 = vmatpush1.bf16.msra.mxu0 %v1779
      %2371 = vmatprep.subr.bf16.mxu0 0
      %2372 = vmatpush1.bf16.msra.mxu0 %v1780
      %2373 = vmatprep.subr.bf16.mxu0 0
      %2374 = vmatpush1.bf16.msra.mxu0 %v1781
      %2375 = vmatprep.subr.bf16.mxu0 0
      %2376 = vmatpush1.bf16.msra.mxu0 %v1782
      %2377 = vmatprep.subr.bf16.mxu0 0
      %2378 = vmatpush1.bf16.msra.mxu0 %v1783
      %2379 = vmatprep.mubr.bf16.mxu0 %v1087
      %2380 = vmatmul.mubr.bf16.gmra.mrb[0].mxu0 %v1086
      %v2381 = vpop.f32.mrb[0].mxu0
      %v2382 = vadd.f32 %v2221, %v2381
      %v2383 = vpop.f32.mrb[0].mxu0
      %v2384 = vpop.f32.mrb[0].mxu0
      %v2385 = vadd.f32 %v2224, %v2384
      %v2386 = vpop.f32.mrb[0].mxu0
      %2387 = vmatprep.mubr.bf16.mxu0 %v1096
      %2388 = vmatmul.mubr.bf16.gmra.mrb[0].mxu0 %v1095
      %v2389 = vpop.f32.mrb[0].mxu0
      %v2390 = vadd.f32 %v2229, %v2389
      %v2391 = vpop.f32.mrb[0].mxu0
      %v2392 = vpop.f32.mrb[0].mxu0
      %v2393 = vadd.f32 %v2232, %v2392
      %v2394 = vpop.f32.mrb[0].mxu0
      %2395 = vmatprep.mubr.bf16.mxu0 %v1105
      %2396 = vmatmul.mubr.bf16.gmra.mrb[0].mxu0 %v1104
      %v2397 = vpop.f32.mrb[0].mxu0
      %v2398 = vadd.f32 %v2237, %v2397
      %v2399 = vpop.f32.mrb[0].mxu0
      %v2400 = vpop.f32.mrb[0].mxu0
      %v2401 = vadd.f32 %v2240, %v2400
      %v2402 = vpop.f32.mrb[0].mxu0
      %2403 = vmatprep.mubr.bf16.mxu0 %v1114
      %2404 = vmatmul.mubr.bf16.gmra.mrb[0].mxu0 %v1113
      %v2405 = vpop.f32.mrb[0].mxu0
      %v2406 = vadd.f32 %v2245, %v2405
      %v2407 = vpop.f32.mrb[0].mxu0
      %v2408 = vpop.f32.mrb[0].mxu0
      %v2409 = vadd.f32 %v2248, %v2408
      %v2410 = vpop.f32.mrb[0].mxu0
      %2411 = vmatprep.mubr.bf16.mxu0 %v1123
      %2412 = vmatmul.mubr.bf16.gmra.mrb[0].mxu0 %v1122
      %v2413 = vpop.f32.mrb[0].mxu0
      %v2414 = vadd.f32 %v2253, %v2413
      %v2415 = vpop.f32.mrb[0].mxu0
      %v2416 = vpop.f32.mrb[0].mxu0
      %v2417 = vadd.f32 %v2256, %v2416
      %v2418 = vpop.f32.mrb[0].mxu0
      %2419 = vmatprep.mubr.bf16.mxu0 %v1132
      %2420 = vmatmul.mubr.bf16.gmra.mrb[0].mxu0 %v1131
      %v2421 = vpop.f32.mrb[0].mxu0
      %v2422 = vadd.f32 %v2261, %v2421
      %v2423 = vpop.f32.mrb[0].mxu0
      %v2424 = vpop.f32.mrb[0].mxu0
      %v2425 = vadd.f32 %v2264, %v2424
      %v2426 = vpop.f32.mrb[0].mxu0
      %2427 = vmatprep.mubr.bf16.mxu0 %v1141
      %2428 = vmatmul.mubr.bf16.gmra.mrb[0].mxu0 %v1140
      %v2429 = vpop.f32.mrb[0].mxu0
      %v2430 = vadd.f32 %v2269, %v2429
      %v2431 = vpop.f32.mrb[0].mxu0
      %v2432 = vpop.f32.mrb[0].mxu0
      %v2433 = vadd.f32 %v2272, %v2432
      %v2434 = vpop.f32.mrb[0].mxu0
      %2435 = vmatprep.mubr.bf16.mxu0 %v1150
      %2436 = vmatmul.mubr.bf16.gmra.mrb[0].mxu0 %v1149
      %v2437 = vpop.f32.mrb[0].mxu0
      %v2438 = vadd.f32 %v2277, %v2437
      %v2439 = vpop.f32.mrb[0].mxu0
      %v2440 = vpop.f32.mrb[0].mxu0
      %v2441 = vadd.f32 %v2280, %v2440
      %v2442 = vpop.f32.mrb[0].mxu0
      %2443 = vmatprep.mubr.bf16.mxu0 %v1159
      %2444 = vmatmul.mubr.bf16.gmra.mrb[0].mxu0 %v1158
      %v2445 = vpop.f32.mrb[0].mxu0
      %v2446 = vadd.f32 %v2285, %v2445
      %v2447 = vpop.f32.mrb[0].mxu0
      %v2448 = vpop.f32.mrb[0].mxu0
      %v2449 = vadd.f32 %v2288, %v2448
      %v2450 = vpop.f32.mrb[0].mxu0
      %2451 = vmatprep.mubr.bf16.mxu0 %v1168
      %2452 = vmatmul.mubr.bf16.gmra.mrb[0].mxu0 %v1167
      %v2453 = vpop.f32.mrb[0].mxu0
      %v2454 = vadd.f32 %v2293, %v2453
      %v2455 = vpop.f32.mrb[0].mxu0
      %v2456 = vpop.f32.mrb[0].mxu0
      %v2457 = vadd.f32 %v2296, %v2456
      %v2458 = vpop.f32.mrb[0].mxu0
      %2459 = vmatprep.mubr.bf16.mxu0 %v1177
      %2460 = vmatmul.mubr.bf16.gmra.mrb[0].mxu0 %v1176
      %v2461 = vpop.f32.mrb[0].mxu0
      %v2462 = vadd.f32 %v2301, %v2461
      %v2463 = vpop.f32.mrb[0].mxu0
      %v2464 = vpop.f32.mrb[0].mxu0
      %v2465 = vadd.f32 %v2304, %v2464
      %v2466 = vpop.f32.mrb[0].mxu0
      %2467 = vmatprep.mubr.bf16.mxu0 %v1186
      %2468 = vmatmul.mubr.bf16.gmra.mrb[0].mxu0 %v1185
      %v2469 = vpop.f32.mrb[0].mxu0
      %v2470 = vadd.f32 %v2309, %v2469
      %v2471 = vpop.f32.mrb[0].mxu0
      %v2472 = vpop.f32.mrb[0].mxu0
      %v2473 = vadd.f32 %v2312, %v2472
      %v2474 = vpop.f32.mrb[0].mxu0
      %2475 = vmatprep.mubr.bf16.mxu0 %v1195
      %2476 = vmatmul.mubr.bf16.gmra.mrb[0].mxu0 %v1194
      %v2477 = vpop.f32.mrb[0].mxu0
      %v2478 = vadd.f32 %v2317, %v2477
      %v2479 = vpop.f32.mrb[0].mxu0
      %v2480 = vpop.f32.mrb[0].mxu0
      %v2481 = vadd.f32 %v2320, %v2480
      %v2482 = vpop.f32.mrb[0].mxu0
      %2483 = vmatprep.mubr.bf16.mxu0 %v1204
      %2484 = vmatmul.mubr.bf16.gmra.mrb[0].mxu0 %v1203
      %v2485 = vpop.f32.mrb[0].mxu0
      %v2486 = vadd.f32 %v2325, %v2485
      %v2487 = vpop.f32.mrb[0].mxu0
      %v2488 = vpop.f32.mrb[0].mxu0
      %v2489 = vadd.f32 %v2328, %v2488
      %v2490 = vpop.f32.mrb[0].mxu0
      %2491 = vmatprep.mubr.bf16.mxu0 %v1213
      %2492 = vmatmul.mubr.bf16.gmra.mrb[0].mxu0 %v1212
      %v2493 = vpop.f32.mrb[0].mxu0
      %v2494 = vadd.f32 %v2333, %v2493
      %v2495 = vpop.f32.mrb[0].mxu0
      %v2496 = vpop.f32.mrb[0].mxu0
      %v2497 = vadd.f32 %v2336, %v2496
      %v2498 = vpop.f32.mrb[0].mxu0
      %2499 = vmatprep.mubr.bf16.mxu0 %v1222
      %2500 = vmatmul.mubr.bf16.gmra.mrb[0].mxu0 %v1221
      %v2501 = vpop.f32.mrb[0].mxu0
      %v2502 = vadd.f32 %v2341, %v2501
      %v2503 = vpop.f32.mrb[0].mxu0
      %v2504 = vpop.f32.mrb[0].mxu0
      %v2505 = vadd.f32 %v2344, %v2504
      %v2506 = vpop.f32.mrb[0].mxu0
      %2507 = vdwg.mxu0
      %2508 = vmatprep.subr.bf16.mxu0 0
      %2509 = vmatpush1.bf16.msra.mxu0 %v1784
      %2510 = vmatprep.subr.bf16.mxu0 0
      %2511 = vmatpush1.bf16.msra.mxu0 %v1785
      %2512 = vmatprep.subr.bf16.mxu0 0
      %2513 = vmatpush1.bf16.msra.mxu0 %v1786
      %2514 = vmatprep.subr.bf16.mxu0 0
      %2515 = vmatpush1.bf16.msra.mxu0 %v1787
      %2516 = vmatprep.subr.bf16.mxu0 0
      %2517 = vmatpush1.bf16.msra.mxu0 %v1788
      %2518 = vmatprep.subr.bf16.mxu0 0
      %2519 = vmatpush1.bf16.msra.mxu0 %v1789
      %2520 = vmatprep.subr.bf16.mxu0 0
      %2521 = vmatpush1.bf16.msra.mxu0 %v1790
      %2522 = vmatprep.subr.bf16.mxu0 0
      %2523 = vmatpush1.bf16.msra.mxu0 %v1791
      %2524 = vmatprep.subr.bf16.mxu0 0
      %2525 = vmatpush1.bf16.msra.mxu0 0
      %2526 = vmatprep.subr.bf16.mxu0 0
      %2527 = vmatpush1.bf16.msra.mxu0 0
      %2528 = vmatprep.subr.bf16.mxu0 0
      %2529 = vmatpush1.bf16.msra.mxu0 0
      %2530 = vmatprep.subr.bf16.mxu0 0
      %2531 = vmatpush1.bf16.msra.mxu0 0
      %2532 = vmatprep.subr.bf16.mxu0 0
      %2533 = vmatpush1.bf16.msra.mxu0 0
      %2534 = vmatprep.subr.bf16.mxu0 0
      %2535 = vmatpush1.bf16.msra.mxu0 0
      %2536 = vmatprep.subr.bf16.mxu0 0
      %2537 = vmatpush1.bf16.msra.mxu0 0
      %2538 = vmatprep.subr.bf16.mxu0 0
      %2539 = vmatpush1.bf16.msra.mxu0 0
      %2540 = vmatprep.mubr.bf16.mxu0 0
      %2541 = vmatmul.mubr.bf16.gmra.mrb[0].mxu0 %v1088
      %v2542 = vpop.f32.mrb[0].mxu0
      %v2543 = vadd.f32 %v2382, %v2542
      %v2544 = vpop.f32.mrb[0].mxu0
      %v2545 = vpop.f32.mrb[0].mxu0
      %v2546 = vadd.f32 %v2385, %v2545
      %v2547 = vpop.f32.mrb[0].mxu0
      %2548 = vmatprep.mubr.bf16.mxu0 0
      %2549 = vmatmul.mubr.bf16.gmra.mrb[0].mxu0 %v1097
      %v2550 = vpop.f32.mrb[0].mxu0
      %v2551 = vadd.f32 %v2390, %v2550
      %v2552 = vpop.f32.mrb[0].mxu0
      %v2553 = vpop.f32.mrb[0].mxu0
      %v2554 = vadd.f32 %v2393, %v2553
      %v2555 = vpop.f32.mrb[0].mxu0
      %2556 = vmatprep.mubr.bf16.mxu0 0
      %2557 = vmatmul.mubr.bf16.gmra.mrb[0].mxu0 %v1106
      %v2558 = vpop.f32.mrb[0].mxu0
      %v2559 = vadd.f32 %v2398, %v2558
      %v2560 = vpop.f32.mrb[0].mxu0
      %v2561 = vpop.f32.mrb[0].mxu0
      %v2562 = vadd.f32 %v2401, %v2561
      %v2563 = vpop.f32.mrb[0].mxu0
      %2564 = vmatprep.mubr.bf16.mxu0 0
      %2565 = vmatmul.mubr.bf16.gmra.mrb[0].mxu0 %v1115
      %v2566 = vpop.f32.mrb[0].mxu0
      %v2567 = vadd.f32 %v2406, %v2566
      %v2568 = vpop.f32.mrb[0].mxu0
      %v2569 = vpop.f32.mrb[0].mxu0
      %v2570 = vadd.f32 %v2409, %v2569
      %v2571 = vpop.f32.mrb[0].mxu0
      %2572 = vmatprep.mubr.bf16.mxu0 0
      %2573 = vmatmul.mubr.bf16.gmra.mrb[0].mxu0 %v1124
      %v2574 = vpop.f32.mrb[0].mxu0
      %v2575 = vadd.f32 %v2414, %v2574
      %v2576 = vpop.f32.mrb[0].mxu0
      %v2577 = vpop.f32.mrb[0].mxu0
      %v2578 = vadd.f32 %v2417, %v2577
      %v2579 = vpop.f32.mrb[0].mxu0
      %2580 = vmatprep.mubr.bf16.mxu0 0
      %2581 = vmatmul.mubr.bf16.gmra.mrb[0].mxu0 %v1133
      %v2582 = vpop.f32.mrb[0].mxu0
      %v2583 = vadd.f32 %v2422, %v2582
      %v2584 = vpop.f32.mrb[0].mxu0
      %v2585 = vpop.f32.mrb[0].mxu0
      %v2586 = vadd.f32 %v2425, %v2585
      %v2587 = vpop.f32.mrb[0].mxu0
      %2588 = vmatprep.mubr.bf16.mxu0 0
      %2589 = vmatmul.mubr.bf16.gmra.mrb[0].mxu0 %v1142
      %v2590 = vpop.f32.mrb[0].mxu0
      %v2591 = vadd.f32 %v2430, %v2590
      %v2592 = vpop.f32.mrb[0].mxu0
      %v2593 = vpop.f32.mrb[0].mxu0
      %v2594 = vadd.f32 %v2433, %v2593
      %v2595 = vpop.f32.mrb[0].mxu0
      %2596 = vmatprep.mubr.bf16.mxu0 0
      %2597 = vmatmul.mubr.bf16.gmra.mrb[0].mxu0 %v1151
      %v2598 = vpop.f32.mrb[0].mxu0
      %v2599 = vadd.f32 %v2438, %v2598
      %v2600 = vpop.f32.mrb[0].mxu0
      %v2601 = vpop.f32.mrb[0].mxu0
      %v2602 = vadd.f32 %v2441, %v2601
      %v2603 = vpop.f32.mrb[0].mxu0
      %2604 = vmatprep.mubr.bf16.mxu0 0
      %2605 = vmatmul.mubr.bf16.gmra.mrb[0].mxu0 %v1160
      %v2606 = vpop.f32.mrb[0].mxu0
      %v2607 = vadd.f32 %v2446, %v2606
      %v2608 = vpop.f32.mrb[0].mxu0
      %v2609 = vpop.f32.mrb[0].mxu0
      %v2610 = vadd.f32 %v2449, %v2609
      %v2611 = vpop.f32.mrb[0].mxu0
      %2612 = vmatprep.mubr.bf16.mxu0 0
      %2613 = vmatmul.mubr.bf16.gmra.mrb[0].mxu0 %v1169
      %v2614 = vpop.f32.mrb[0].mxu0
      %v2615 = vadd.f32 %v2454, %v2614
      %v2616 = vpop.f32.mrb[0].mxu0
      %v2617 = vpop.f32.mrb[0].mxu0
      %v2618 = vadd.f32 %v2457, %v2617
      %v2619 = vpop.f32.mrb[0].mxu0
      %2620 = vmatprep.mubr.bf16.mxu0 0
      %2621 = vmatmul.mubr.bf16.gmra.mrb[0].mxu0 %v1178
      %v2622 = vpop.f32.mrb[0].mxu0
      %v2623 = vadd.f32 %v2462, %v2622
      %v2624 = vpop.f32.mrb[0].mxu0
      %v2625 = vpop.f32.mrb[0].mxu0
      %v2626 = vadd.f32 %v2465, %v2625
      %v2627 = vpop.f32.mrb[0].mxu0
      %2628 = vmatprep.mubr.bf16.mxu0 0
      %2629 = vmatmul.mubr.bf16.gmra.mrb[0].mxu0 %v1187
      %v2630 = vpop.f32.mrb[0].mxu0
      %v2631 = vadd.f32 %v2470, %v2630
      %v2632 = vpop.f32.mrb[0].mxu0
      %v2633 = vpop.f32.mrb[0].mxu0
      %v2634 = vadd.f32 %v2473, %v2633
      %v2635 = vpop.f32.mrb[0].mxu0
      %2636 = vmatprep.mubr.bf16.mxu0 0
      %2637 = vmatmul.mubr.bf16.gmra.mrb[0].mxu0 %v1196
      %v2638 = vpop.f32.mrb[0].mxu0
      %v2639 = vadd.f32 %v2478, %v2638
      %v2640 = vpop.f32.mrb[0].mxu0
      %v2641 = vpop.f32.mrb[0].mxu0
      %v2642 = vadd.f32 %v2481, %v2641
      %v2643 = vpop.f32.mrb[0].mxu0
      %2644 = vmatprep.mubr.bf16.mxu0 0
      %2645 = vmatmul.mubr.bf16.gmra.mrb[0].mxu0 %v1205
      %v2646 = vpop.f32.mrb[0].mxu0
      %v2647 = vadd.f32 %v2486, %v2646
      %v2648 = vpop.f32.mrb[0].mxu0
      %v2649 = vpop.f32.mrb[0].mxu0
      %v2650 = vadd.f32 %v2489, %v2649
      %v2651 = vpop.f32.mrb[0].mxu0
      %2652 = vmatprep.mubr.bf16.mxu0 0
      %2653 = vmatmul.mubr.bf16.gmra.mrb[0].mxu0 %v1214
      %v2654 = vpop.f32.mrb[0].mxu0
      %v2655 = vadd.f32 %v2494, %v2654
      %v2656 = vpop.f32.mrb[0].mxu0
      %v2657 = vpop.f32.mrb[0].mxu0
      %v2658 = vadd.f32 %v2497, %v2657
      %v2659 = vpop.f32.mrb[0].mxu0
      %2660 = vmatprep.mubr.bf16.mxu0 0
      %2661 = vmatmul.mubr.bf16.gmra.mrb[0].mxu0 %v1223
      %v2662 = vpop.f32.mrb[0].mxu0
      %v2663 = vadd.f32 %v2502, %v2662
      %v2664 = vpop.f32.mrb[0].mxu0
      %v2665 = vpop.f32.mrb[0].mxu0
      %v2666 = vadd.f32 %v2505, %v2665
      %v2667 = vpop.f32.mrb[0].mxu0
      %2668 = vdwg.mxu0
      %2669 = vst [vmem:[%s244] sm:$0xff] %v2543
      %2670 = vst [vmem:[%s244 + $0x8] sm:$0xff] %v2546
      %2671 = vst [vmem:[%s244 + $0x10] sm:$0xff] %v2551
      %2672 = vst [vmem:[%s244 + $0x18] sm:$0xff] %v2554
      %2673 = vst [vmem:[%s244 + $0x20] sm:$0xff] %v2559
      %2674 = vst [vmem:[%s244 + $0x28] sm:$0xff] %v2562
      %2675 = vst [vmem:[%s244 + $0x30] sm:$0xff] %v2567
      %2676 = vst [vmem:[%s244 + $0x38] sm:$0xff] %v2570
      %2677 = vst [vmem:[%s244 + $0x40] sm:$0xff] %v2575
      %2678 = vst [vmem:[%s244 + $0x48] sm:$0xff] %v2578
      %2679 = vst [vmem:[%s244 + $0x50] sm:$0xff] %v2583
      %2680 = vst [vmem:[%s244 + $0x58] sm:$0xff] %v2586
      %2681 = vst [vmem:[%s244 + $0x60] sm:$0xff] %v2591
      %2682 = vst [vmem:[%s244 + $0x68] sm:$0xff] %v2594
      %2683 = vst [vmem:[%s244 + $0x70] sm:$0xff] %v2599
      %2684 = vst [vmem:[%s244 + $0x78] sm:$0xff] %v2602
      %2685 = vst [vmem:[%s244 + $0x80] sm:$0xff] %v2607
      %2686 = vst [vmem:[%s244 + $0x88] sm:$0xff] %v2610
      %2687 = vst [vmem:[%s244 + $0x90] sm:$0xff] %v2615
      %2688 = vst [vmem:[%s244 + $0x98] sm:$0xff] %v2618
      %2689 = vst [vmem:[%s244 + $0xa0] sm:$0xff] %v2623
      %2690 = vst [vmem:[%s244 + $0xa8] sm:$0xff] %v2626
      %2691 = vst [vmem:[%s244 + $0xb0] sm:$0xff] %v2631
      %2692 = vst [vmem:[%s244 + $0xb8] sm:$0xff] %v2634
      %2693 = vst [vmem:[%s244 + $0xc0] sm:$0xff] %v2639
      %2694 = vst [vmem:[%s244 + $0xc8] sm:$0xff] %v2642
      %2695 = vst [vmem:[%s244 + $0xd0] sm:$0xff] %v2647
      %2696 = vst [vmem:[%s244 + $0xd8] sm:$0xff] %v2650
      %2697 = vst [vmem:[%s244 + $0xe0] sm:$0xff] %v2655
      %2698 = vst [vmem:[%s244 + $0xe8] sm:$0xff] %v2658
      %2699 = vst [vmem:[%s244 + $0xf0] sm:$0xff] %v2663
      %2700 = vst [vmem:[%s244 + $0xf8] sm:$0xff] %v2666
      %p2701 = scmp.lt.s32.totalorder %s16, 1
      %s2702 = scalar_select %p2701, %s16, 1
      %s2703 = smul.addr %s2702, 32
      %s2704 = smul.addr %s2703, 8
      %s2705 = scalar_lea.vmem %s5, %s2704
      // Predicated region
      $region41: #{preact_block.7} parent=39 // pred_check
        %p2706 = pneg %p149
      $region42: #{preact_block.7} parent=39 // pred_check_branch
        %2708 = sbr.rel (%p2706) target = $region44
      $region43: #{preact_block.7} parent=39 // pred_region
        _
      $region44: #{preact_block.7} parent=39 // pred_fallthru
        _
    $region40: #{preact_block.7} parent=5 // pred_fallthru
      _
    %p2709 = scmp.le.s32.totalorder 2, %s11
    // Predicated region
    $region45: #{preact_block.7} parent=5 // pred_check
      %p2710 = pneg %p2709
    $region46: #{preact_block.7} parent=5 // pred_check_branch
      %2712 = sbr.rel (%p2710) target = $region48
    $region47: #{preact_block.7} parent=5 // pred_region
      %s2713 = ssub.s32 %s11, 2
      // Predicated region
      $region49: #{preact_block.7} parent=47 // pred_check
        %p2714 = pneg %p155
      $region50: #{preact_block.7} parent=47 // pred_check_branch
        %2716 = sbr.rel (%p2714) target = $region52
      $region51: #{preact_block.7} parent=47 // pred_region
        %p2717 = scmp.lt.s32.totalorder %s17, 1
        %s2718 = scalar_select %p2717, %s17, 1
        %s2719 = smul.addr %s2718, 32
        %s2720 = smul.addr %s2719, 8
        %s2721 = scalar_lea.vmem %s5, %s2720
      $region52: #{preact_block.7} parent=47 // pred_fallthru
        _
    $region48: #{preact_block.7} parent=5 // pred_fallthru
      _
  $region6: #{preact_block.7} parent=0 // loop_footer
    %s15 = sadd.s32 1, %s11
  $region7: #{preact_block.7} parent=0 // loop_footer_branch
    %10 = sbr.rel target = $region3
  $region8: #{preact_block.7} parent=0 // loop_exit
    _

</llo_original>
